<compile_context>
chip_gen: v7x
topology: tpu7x:2x2x1
jax: 0.10.0
libtpu: 0.0.40
codegen_flags: <defaults>
</compile_context>

<pallas_src>
import functools

import jax
import jax.numpy as jnp
from jax import lax
from jax.experimental import pallas as pl
from jax.experimental.pallas import tpu as pltpu

LANE = 128
_NEG_INF = -1e30
_BN_EPS = 1e-5


def _round_up(x, m):
    return ((x + m - 1) // m) * m


def _pick_tile(total, prefs):
    for t in prefs:
        if t <= total and total % t == 0:
            return t
    return total


def _pad_to(a, shape):
    pads = [(0, t - s) for s, t in zip(a.shape, shape)]
    return jnp.pad(a, pads)


# ---------------------------------------------------------------------------
# CCA_Module head — pass 1: energy accumulation over pixel tiles + softmax
# ---------------------------------------------------------------------------
def _cca_attention_kernel(x_ref, att_ref, wk_ref, bk_ref, attn_ref, e_acc, *, Ca):
    t = pl.program_id(1)

    @pl.when(t == 0)
    def _():
        e_acc[...] = jnp.zeros_like(e_acc)

    x = x_ref[0]                        # (THW, Cp)  bf16
    a = att_ref[0]                      # (THW, Cap) bf16

    # key_conv (1x1): key = x @ Wk + bk  (f32 accumulation on the MXU)
    key = jnp.dot(x, wk_ref[...], preferred_element_type=jnp.float32) + bk_ref[...]

    # energy[i, a] = sum_p key[p, i] * att[p, a]  (contract over pixels)
    e_acc[...] += lax.dot_general(
        key.astype(jnp.bfloat16), a,
        dimension_numbers=(((0,), (0,)), ((), ())),
        preferred_element_type=jnp.float32)

    @pl.when(t == pl.num_programs(1) - 1)
    def _():
        energy = e_acc[...]
        # padded att channels must not participate in the softmax
        col = lax.broadcasted_iota(jnp.int32, energy.shape, 1)
        energy = jnp.where(col < Ca, energy, _NEG_INF)
        m = jnp.max(energy, axis=-1, keepdims=True)
        e = jnp.exp(energy - m)
        attn_ref[0] = (e / jnp.sum(e, axis=-1, keepdims=True)).astype(attn_ref.dtype)


# ---------------------------------------------------------------------------
# CCA_Module head — pass 2: apply attention + the two 1x1 convs (BN folded)
# ---------------------------------------------------------------------------
def _cca_apply_kernel(x_ref, att_ref, attn_ref, w1_ref, w2a_ref, w2b_ref,
                      b1_ref, b2_ref, out_ref):
    x = x_ref[0]                                   # (THW, Cp)  bf16
    a = att_ref[0]                                 # (THW, Cap) bf16
    attn = attn_ref[0].astype(jnp.bfloat16)        # (C8p, Cap)

    # out0[p, i] = sum_a att[p, a] * attention[i, a]
    out0 = lax.dot_general(
        a, attn, dimension_numbers=(((1,), (1,)), ((), ())),
        preferred_element_type=jnp.float32)        # (THW, C8p)

    # conv1x1_1 + BN1 + ReLU (BN folded into w1/b1 in the wrapper)
    y1 = jnp.maximum(
        jnp.dot(out0.astype(jnp.bfloat16), w1_ref[...],
                preferred_element_type=jnp.float32) + b1_ref[...], 0.0)

    # cat(out, x) -> conv1x1_2 + BN2 + ReLU, computed as a split matmul
    y2 = (jnp.dot(y1.astype(jnp.bfloat16), w2a_ref[...],
                  preferred_element_type=jnp.float32)
          + jnp.dot(x, w2b_ref[...], preferred_element_type=jnp.float32)
          + b2_ref[...])
    out_ref[0] = jnp.maximum(y2, 0.0).astype(out_ref.dtype)


def cca_module_forward(x_nchw, att_nchw, prm):
    """CCA_Module forward (inference-mode BN).  Returns NHWC features with the
    channel dim zero-padded to a multiple of 128 (ready for the classifier)."""
    B, C, H, W = x_nchw.shape
    Ca = att_nchw.shape[1]
    C8 = C // 8
    HW = H * W
    Cp, C8p, Cap = _round_up(C, LANE), _round_up(C8, LANE), _round_up(Ca, LANE)
    THW = _pick_tile(HW, (128, 256, 512, 64, 32, 16, 8))
    n_t = HW // THW
    f32, bf16 = jnp.float32, jnp.bfloat16

    # activations: NCHW -> (B, HW, C) channel-last, zero-pad channels, bf16
    x_f = _pad_to(jnp.transpose(x_nchw, (0, 2, 3, 1)).reshape(B, HW, C),
                  (B, HW, Cp)).astype(bf16)
    a_f = _pad_to(jnp.transpose(att_nchw, (0, 2, 3, 1)).reshape(B, HW, Ca),
                  (B, HW, Cap)).astype(bf16)

    # key_conv (1x1)
    wk = _pad_to(prm["key_w"][:, :, 0, 0].T, (Cp, C8p)).astype(bf16)
    bk = _pad_to(prm["key_b"], (C8p,)).astype(f32).reshape(1, C8p)

    # conv1x1_1 with BN1 folded (eval-mode running stats)
    s1 = prm["bn1_gamma"] / jnp.sqrt(prm["bn1_var"] + _BN_EPS)
    w1 = _pad_to(prm["w1"][:, :, 0, 0].T * s1[None, :], (C8p, C8p)).astype(bf16)
    b1 = _pad_to((prm["b1"] - prm["bn1_mean"]) * s1 + prm["bn1_beta"],
                 (C8p,)).astype(f32).reshape(1, C8p)

    # conv1x1_2 with BN2 folded, split for the cat(out, x) ordering
    s2 = prm["bn2_gamma"] / jnp.sqrt(prm["bn2_var"] + _BN_EPS)
    w2_t = prm["w2"][:, :, 0, 0].T * s2[None, :]            # (C8 + C, C)
    w2a = _pad_to(w2_t[:C8, :], (C8p, Cp)).astype(bf16)
    w2b = _pad_to(w2_t[C8:, :], (Cp, Cp)).astype(bf16)
    b2 = _pad_to((prm["b2"] - prm["bn2_mean"]) * s2 + prm["bn2_beta"],
                 (Cp,)).astype(f32).reshape(1, Cp)

    attn = pl.pallas_call(
        functools.partial(_cca_attention_kernel, Ca=Ca),
        out_shape=jax.ShapeDtypeStruct((B, C8p, Cap), f32),
        grid_spec=pltpu.PrefetchScalarGridSpec(
            num_scalar_prefetch=0,
            grid=(B, n_t),
            in_specs=[
                pl.BlockSpec((1, THW, Cp), lambda b, t: (b, t, 0)),
                pl.BlockSpec((1, THW, Cap), lambda b, t: (b, t, 0)),
                pl.BlockSpec((Cp, C8p), lambda b, t: (0, 0)),
                pl.BlockSpec((1, C8p), lambda b, t: (0, 0)),
            ],
            out_specs=pl.BlockSpec((1, C8p, Cap), lambda b, t: (b, 0, 0)),
            scratch_shapes=[pltpu.VMEM((C8p, Cap), f32)]),
        compiler_params=pltpu.CompilerParams(
            dimension_semantics=("parallel", "arbitrary"),
            vmem_limit_bytes=32 * 1024 * 1024),
    )(x_f, a_f, wk, bk)

    head = pl.pallas_call(
        _cca_apply_kernel,
        out_shape=jax.ShapeDtypeStruct((B, HW, Cp), bf16),
        grid_spec=pltpu.PrefetchScalarGridSpec(
            num_scalar_prefetch=0,
            grid=(B, n_t),
            in_specs=[
                pl.BlockSpec((1, THW, Cp), lambda b, t: (b, t, 0)),
                pl.BlockSpec((1, THW, Cap), lambda b, t: (b, t, 0)),
                pl.BlockSpec((1, C8p, Cap), lambda b, t: (b, 0, 0)),
                pl.BlockSpec((C8p, C8p), lambda b, t: (0, 0)),
                pl.BlockSpec((C8p, Cp), lambda b, t: (0, 0)),
                pl.BlockSpec((Cp, Cp), lambda b, t: (0, 0)),
                pl.BlockSpec((1, C8p), lambda b, t: (0, 0)),
                pl.BlockSpec((1, Cp), lambda b, t: (0, 0)),
            ],
            out_specs=pl.BlockSpec((1, THW, Cp), lambda b, t: (b, t, 0))),
        compiler_params=pltpu.CompilerParams(
            dimension_semantics=("parallel", "parallel"),
            vmem_limit_bytes=32 * 1024 * 1024),
    )(x_f, a_f, attn, w1, w2a, w2b, b1, b2)

    return head.reshape(B, H, W, Cp)


# ---------------------------------------------------------------------------
# Classifier_Module (ASPP head, conv0 + conv1 only due to the early return)
# ---------------------------------------------------------------------------
def _aspp_kernel(x_hbm, w_ref, b_ref, out_ref, xbuf, sem, *,
                 TH, W, Cp, Kp, dils, pads, pmax):
    n = pl.program_id(0)
    r = pl.program_id(1)
    rows = TH + 2 * pmax
    row0 = pl.multiple_of(r * TH, TH)

    # Manually DMA the halo'd row slab for this (batch, row-tile) from HBM into
    # VMEM.  Neighbouring row tiles overlap by 2*pmax rows, which a Blocked
    # BlockSpec cannot express -> memory_space=ANY input + explicit copy.
    copy_in = pltpu.make_async_copy(x_hbm.at[n, pl.ds(row0, rows)], xbuf, sem.at[0])
    copy_in.start()
    copy_in.wait()

    acc = jnp.zeros((TH * W, Kp), jnp.float32)
    # Only conv 0 and conv 1 contribute (early return in the PyTorch forward).
    for ci in range(2):
        d, p = dils[ci], pads[ci]
        off = pmax - p
        for kh in range(3):
            r0 = off + kh * d
            # row slice hoisted out of the kw loop: one VMEM load per row tap
            row_slab = xbuf[pl.ds(r0, TH), :, :]            # (TH, Wp, Cp) bf16
            for kw in range(3):
                c0 = off + kw * d
                # Cp is lane-aligned (multiple of 128) so this reshape is a
                # tile re-index, not a relayout copy.
                patch = row_slab[:, c0:c0 + W, :].reshape(TH * W, Cp)
                acc += jnp.dot(patch, w_ref[ci * 9 + kh * 3 + kw],
                               preferred_element_type=jnp.float32)
    # both conv biases, pre-summed in the wrapper, added exactly once
    acc += b_ref[...]
    out_ref[0] = acc.reshape(TH, W, Kp).astype(out_ref.dtype)


def classifier_module_forward(feat_nhwc, weights, biases,
                              dilation_series, padding_series):
    """feat_nhwc: (B, H, W, Cp) bf16 with channels >= C zero-padded.
       weights[i]: (K, C, 3, 3); biases[i]: (K,).  Returns (B, K, H, W) f32."""
    B, H, W, Cp = feat_nhwc.shape
    K, C = weights[0].shape[0], weights[0].shape[1]
    Kp = _round_up(K, LANE)

    dils = tuple(int(d) for d in dilation_series[:2])
    pads = tuple(int(q) for q in padding_series[:2])
    # With padding != dilation the PyTorch `out += ...` itself would fail
    # (shape mismatch); require the standard ASPP configuration.
    for d, q in zip(dils, pads):
        assert d == q, "Classifier_Module kernel requires padding == dilation"
    pmax = max(pads)

    TH = _pick_tile(H, (8, 16, 4, 32, 2, 64))
    Wp = W + 2 * pmax

    x_pad = jnp.pad(feat_nhwc, ((0, 0), (pmax, pmax), (pmax, pmax), (0, 0)))

    # (K, C, 3, 3) -> (3, 3, C, K), zero-pad C->Cp / K->Kp, bf16, flattened to
    # 18 contiguous lane-dense (Cp, Kp) matmul taps (conv-major, kh, kw).
    w_stack = jnp.stack(
        [_pad_to(jnp.transpose(weights[i], (2, 3, 1, 0)), (3, 3, Cp, Kp))
         for i in range(2)], axis=0).reshape(18, Cp, Kp).astype(jnp.bfloat16)
    b_sum = _pad_to(biases[0] + biases[1], (Kp,)).astype(jnp.float32).reshape(1, Kp)

    kernel = functools.partial(
        _aspp_kernel, TH=TH, W=W, Cp=Cp, Kp=Kp, dils=dils, pads=pads, pmax=pmax)

    out = pl.pallas_call(
        kernel,
        out_shape=jax.ShapeDtypeStruct((B, H, W, Kp), jnp.float32),
        grid_spec=pltpu.PrefetchScalarGridSpec(
            num_scalar_prefetch=0,
            grid=(B, H // TH),
            in_specs=[
                pl.BlockSpec(memory_space=pl.ANY),              # padded frame in HBM
                pl.BlockSpec((18, Cp, Kp), lambda n, r: (0, 0, 0)),
                pl.BlockSpec((1, Kp), lambda n, r: (0, 0)),
            ],
            out_specs=pl.BlockSpec((1, TH, W, Kp), lambda n, r: (n, r, 0, 0)),
            scratch_shapes=[
                pltpu.VMEM((TH + 2 * pmax, Wp, Cp), jnp.bfloat16),
                pltpu.SemaphoreType.DMA((1,)),
            ]),
        compiler_params=pltpu.CompilerParams(
            dimension_semantics=("parallel", "parallel"),
            vmem_limit_bytes=32 * 1024 * 1024),
    )(x_pad, w_stack, b_sum)

    # drop the K padding, NHWC -> NCHW to match the PyTorch output layout
    return jnp.transpose(out[..., :K], (0, 3, 1, 2))


def cca_classifier_forward(x_nchw, att_nchw, params,
                           dilation_series, padding_series):
    feat_nhwc = cca_module_forward(x_nchw, att_nchw, params)
    return classifier_module_forward(feat_nhwc, params["cls_w"], params["cls_b"],
                                     dilation_series, padding_series)


# ---------------------------------------------------------------------------
# Pure-JAX f32 reference (eval-mode BN), reproducing the PyTorch forward.
# ---------------------------------------------------------------------------
def _reference_forward(x, att, prm, dilation_series, padding_series):
    B, C, H, W = x.shape
    C8 = C // 8

    def conv1x1(v, w, b):
        y = lax.conv_general_dilated(v, w, (1, 1), "VALID",
                                     dimension_numbers=("NCHW", "OIHW", "NCHW"))
        return y + b[None, :, None, None]

    def bn(v, g, be, mu, var):
        s = g / jnp.sqrt(var + _BN_EPS)
        return (v - mu[None, :, None, None]) * s[None, :, None, None] + \
            be[None, :, None, None]

    key = conv1x1(x, prm["key_w"], prm["key_b"])                 # (B, C8, H, W)
    proj_query = att.reshape(B, -1, H * W).transpose(0, 2, 1)    # (B, HW, Ca)
    proj_key = key.reshape(B, C8, H * W)
    energy = jnp.einsum("bip,bpa->bia", proj_key, proj_query)
    attention = jax.nn.softmax(energy, axis=-1)
    proj_value = att.reshape(B, -1, H * W)
    out = jnp.einsum("bia,bap->bip", attention, proj_value).reshape(B, C8, H, W)
    out = jax.nn.relu(bn(conv1x1(out, prm["w1"], prm["b1"]),
                         prm["bn1_gamma"], prm["bn1_beta"],
                         prm["bn1_mean"], prm["bn1_var"]))
    out = jnp.concatenate([out, x], axis=1)
    out = jax.nn.relu(bn(conv1x1(out, prm["w2"], prm["b2"]),
                         prm["bn2_gamma"], prm["bn2_beta"],
                         prm["bn2_mean"], prm["bn2_var"]))

    def dconv(v, w, b, d, q):
        y = lax.conv_general_dilated(v, w, (1, 1), ((q, q), (q, q)),
                                     rhs_dilation=(d, d),
                                     dimension_numbers=("NCHW", "OIHW", "NCHW"))
        return y + b[None, :, None, None]

    pre = dconv(out, prm["cls_w"][0], prm["cls_b"][0],
                dilation_series[0], padding_series[0])
    pre = pre + dconv(out, prm["cls_w"][1], prm["cls_b"][1],
                      dilation_series[1], padding_series[1])
    return pre


if __name__ == "__main__":
    num_classes = 5
    C = 32                       # in_dim of the head (2048 in the real model)
    C8 = C // 8
    Ca = C8                      # channels of the external attention map `att`
    B, H, W = 2, 16, 16
    dilation_series = [6, 12, 18, 24]
    padding_series = [6, 12, 18, 24]

    f32 = jnp.float32
    ks = iter(jax.random.split(jax.random.PRNGKey(0), 32))

    def nrm(k, shape, std=0.01):
        return std * jax.random.normal(k, shape, f32)

    params = {
        # CCA_Module (only the layers its forward actually uses)
        "key_w": nrm(next(ks), (C8, C, 1, 1)),
        "key_b": 0.1 * jax.random.normal(next(ks), (C8,), f32),
        "w1": nrm(next(ks), (C8, C8, 1, 1)),
        "b1": 0.1 * jax.random.normal(next(ks), (C8,), f32),
        "bn1_gamma": jnp.ones((C8,), f32), "bn1_beta": jnp.zeros((C8,), f32),
        "bn1_mean": jnp.zeros((C8,), f32), "bn1_var": jnp.ones((C8,), f32),
        "w2": nrm(next(ks), (C, C + C8, 1, 1)),
        "b2": 0.1 * jax.random.normal(next(ks), (C,), f32),
        "bn2_gamma": jnp.ones((C,), f32), "bn2_beta": jnp.zeros((C,), f32),
        "bn2_mean": jnp.zeros((C,), f32), "bn2_var": jnp.ones((C,), f32),
        # Classifier_Module: 4 dilated 3x3 convs (only the first 2 are used)
        "cls_w": [nrm(next(ks), (num_classes, C, 3, 3)) for _ in range(4)],
        "cls_b": [0.1 * jax.random.normal(next(ks), (num_classes,), f32)
                  for _ in range(4)],
    }

    x = jax.random.normal(next(ks), (B, C, H, W), f32)
    att = jax.random.normal(next(ks), (B, Ca, H, W), f32)

    fwd = jax.jit(functools.partial(cca_classifier_forward,
                                    dilation_series=dilation_series,
                                    padding_series=padding_series))
    out = jax.block_until_ready(fwd(x, att, params))
    assert out.shape == (B, num_classes, H, W)

    ref = _reference_forward(x, att, params, dilation_series, padding_series)
    err = float(jnp.max(jnp.abs(out - ref)))
    scale = float(jnp.max(jnp.abs(ref)))
    assert err <= 1e-2 * scale + 1e-2, f"mismatch vs reference: err={err}, scale={scale}"

    print("KERNEL_OK")
</pallas_src>

<mosaic_0001>
module attributes {stable_mosaic.version = 11 : i64} {
  func.func @_cca_attention_kernel(%arg0: i32, %arg1: i32, %arg2: memref<1x128x128xbf16, #tpu.memory_space<vmem>>, %arg3: memref<1x128x128xbf16, #tpu.memory_space<vmem>>, %arg4: memref<128x128xbf16, #tpu.memory_space<vmem>>, %arg5: memref<1x128xf32, #tpu.memory_space<vmem>>, %arg6: memref<1x128x128xf32, #tpu.memory_space<vmem>>, %arg7: memref<128x128xf32, #tpu.memory_space<vmem>>) attributes {dimension_semantics = [#tpu.dimension_semantics<parallel>, #tpu.dimension_semantics<arbitrary>], iteration_bounds = array<i64: 2, 2>, scalar_prefetch = 0 : i64, scratch_operands = 1 : i64, tpu.core_type = #tpu.core_type<tc>, window_params = [{transform_indices = @transform_0, window_bounds = array<i64: 1, 128, 128>}, {transform_indices = @transform_1, window_bounds = array<i64: 1, 128, 128>}, {pipeline_mode = #tpu.pipeline_mode<synchronous>, transform_indices = @transform_2, window_bounds = array<i64: 128, 128>}, {pipeline_mode = #tpu.pipeline_mode<synchronous>, transform_indices = @transform_3, window_bounds = array<i64: 1, 128>}, {transform_indices = @transform_4, window_bounds = array<i64: 1, 128, 128>}]} {
    %c0_i32 = arith.constant 0 : i32
    %0 = arith.cmpi eq, %arg1, %c0_i32 : i32
    %1 = arith.extui %0 : i1 to i32
    %c0_i32_0 = arith.constant 0 : i32
    %2 = arith.cmpi ne, %1, %c0_i32_0 : i32
    scf.if %2 {
      %cst_16 = arith.constant 0.000000e+00 : f32
      %20 = vector.broadcast %cst_16 : f32 to vector<128x128xf32>
      %c0_17 = arith.constant 0 : index
      %c0_18 = arith.constant 0 : index
      %21 = vector.load %arg7[%c0_17, %c0_18] : memref<128x128xf32, #tpu.memory_space<vmem>>, vector<128x128xf32>
      tpu.vector_store %arg7[%c0_17, %c0_18], %20 {strides = array<i32>} : memref<128x128xf32, #tpu.memory_space<vmem>>, vector<128x128xf32>,
    } else {
    }
    %c0 = arith.constant 0 : index
    %c0_1 = arith.constant 0 : index
    %c0_2 = arith.constant 0 : index
    %3 = vector.load %arg2[%c0, %c0_1, %c0_2] : memref<1x128x128xbf16, #tpu.memory_space<vmem>>, vector<1x128x128xbf16>
    %4 = vector.shape_cast %3 : vector<1x128x128xbf16> to vector<128x128xbf16>
    %c0_3 = arith.constant 0 : index
    %c0_4 = arith.constant 0 : index
    %c0_5 = arith.constant 0 : index
    %5 = vector.load %arg3[%c0_3, %c0_4, %c0_5] : memref<1x128x128xbf16, #tpu.memory_space<vmem>>, vector<1x128x128xbf16>
    %6 = vector.shape_cast %5 : vector<1x128x128xbf16> to vector<128x128xbf16>
    %c0_6 = arith.constant 0 : index
    %c0_7 = arith.constant 0 : index
    %7 = vector.load %arg4[%c0_6, %c0_7] : memref<128x128xbf16, #tpu.memory_space<vmem>>, vector<128x128xbf16>
    %cst = arith.constant dense<0.000000e+00> : vector<128x128xf32>
    %8 = tpu.matmul %4, %7, %cst {dimension_numbers = #tpu.dot_dimension_numbers<[1], [0], [0], [1], [0, 0, 1, 1], [], []>} : vector<128x128xbf16>, vector<128x128xbf16>, vector<128x128xf32> -> vector<128x128xf32>
    %c0_8 = arith.constant 0 : index
    %c0_9 = arith.constant 0 : index
    %9 = vector.load %arg5[%c0_8, %c0_9] : memref<1x128xf32, #tpu.memory_space<vmem>>, vector<1x128xf32>
    %10 = vector.broadcast %9 : vector<1x128xf32> to vector<128x128xf32>
    %11 = arith.addf %8, %10 : vector<128x128xf32>
    %c0_10 = arith.constant 0 : index
    %c0_11 = arith.constant 0 : index
    %12 = vector.load %arg7[%c0_10, %c0_11] : memref<128x128xf32, #tpu.memory_space<vmem>>, vector<128x128xf32>
    %13 = arith.truncf %11 : vector<128x128xf32> to vector<128x128xbf16>
    %cst_12 = arith.constant dense<0.000000e+00> : vector<128x128xf32>
    %14 = tpu.matmul %13, %6, %cst_12 {dimension_numbers = #tpu.dot_dimension_numbers<[0], [0], [1], [1], [0, 1, 1, 1], [], []>} : vector<128x128xbf16>, vector<128x128xbf16>, vector<128x128xf32> -> vector<128x128xf32>
    %15 = arith.addf %12, %14 : vector<128x128xf32>
    %c0_13 = arith.constant 0 : index
    %c0_14 = arith.constant 0 : index
    %16 = vector.load %arg7[%c0_13, %c0_14] : memref<128x128xf32, #tpu.memory_space<vmem>>, vector<128x128xf32>
    tpu.vector_store %arg7[%c0_13, %c0_14], %15 {strides = array<i32>} : memref<128x128xf32, #tpu.memory_space<vmem>>, vector<128x128xf32>,
    %c1_i32 = arith.constant 1 : i32
    %17 = arith.cmpi eq, %arg1, %c1_i32 : i32
    %18 = arith.extui %17 : i1 to i32
    %c0_i32_15 = arith.constant 0 : i32
    %19 = arith.cmpi ne, %18, %c0_i32_15 : i32
    scf.if %19 {
      %c0_16 = arith.constant 0 : index
      %c0_17 = arith.constant 0 : index
      %20 = vector.load %arg7[%c0_16, %c0_17] : memref<128x128xf32, #tpu.memory_space<vmem>>, vector<128x128xf32>
      %21 = tpu.iota {dimensions = array<i32: 1>} : vector<128x128xi32>
      %c4_i32 = arith.constant 4 : i32
      %22 = vector.broadcast %c4_i32 : i32 to vector<128x128xi32>
      %23 = arith.cmpi slt, %21, %22 : vector<128x128xi32>
      %cst_18 = arith.constant -1.000000e+30 : f32
      %24 = vector.broadcast %cst_18 : f32 to vector<128x128xf32>
      %25 = arith.select %23, %20, %24 : vector<128x128xi1>, vector<128x128xf32>
      %cst_19 = arith.constant dense<0xFF800000> : vector<128xf32>
      %26 = vector.multi_reduction <maximumf>, %25, %cst_19 [1] : vector<128x128xf32> to vector<128xf32>
      %27 = vector.shape_cast %26 : vector<128xf32> to vector<128x1xf32>
      %28 = vector.broadcast %27 : vector<128x1xf32> to vector<128x128xf32>
      %29 = arith.subf %25, %28 : vector<128x128xf32>
      %30 = math.exp %29 : vector<128x128xf32>
      %cst_20 = arith.constant dense<0.000000e+00> : vector<128xf32>
      %31 = vector.multi_reduction <add>, %30, %cst_20 [1] : vector<128x128xf32> to vector<128xf32>
      %32 = vector.shape_cast %31 : vector<128xf32> to vector<128x1xf32>
      %33 = vector.broadcast %32 : vector<128x1xf32> to vector<128x128xf32>
      %34 = arith.divf %30, %33 : vector<128x128xf32>
      %c0_21 = arith.constant 0 : index
      %c0_22 = arith.constant 0 : index
      %c0_23 = arith.constant 0 : index
      %35 = vector.load %arg6[%c0_21, %c0_22, %c0_23] : memref<1x128x128xf32, #tpu.memory_space<vmem>>, vector<1x128x128xf32>
      %36 = vector.shape_cast %35 : vector<1x128x128xf32> to vector<128x128xf32>
      %37 = vector.shape_cast %34 : vector<128x128xf32> to vector<1x128x128xf32>
      tpu.vector_store %arg6[%c0_21, %c0_22, %c0_23], %37 {strides = array<i32>} : memref<1x128x128xf32, #tpu.memory_space<vmem>>, vector<1x128x128xf32>,
    } else {
    }
    return
  }
  func.func @transform_0(%arg0: i32, %arg1: i32) -> (i32, i32, i32) {
    %c0_i32 = arith.constant 0 : i32
    %c0_i32_0 = arith.constant 0 : i32
    return %arg0, %arg1, %c0_i32 : i32, i32, i32
  }
  func.func @transform_1(%arg0: i32, %arg1: i32) -> (i32, i32, i32) {
    %c0_i32 = arith.constant 0 : i32
    %c0_i32_0 = arith.constant 0 : i32
    return %arg0, %arg1, %c0_i32 : i32, i32, i32
  }
  func.func @transform_2(%arg0: i32, %arg1: i32) -> (i32, i32) {
    %c0_i32 = arith.constant 0 : i32
    %c0_i32_0 = arith.constant 0 : i32
    %c0_i32_1 = arith.constant 0 : i32
    return %c0_i32, %c0_i32_0 : i32, i32
  }
  func.func @transform_3(%arg0: i32, %arg1: i32) -> (i32, i32) {
    %c0_i32 = arith.constant 0 : i32
    %c0_i32_0 = arith.constant 0 : i32
    %c0_i32_1 = arith.constant 0 : i32
    return %c0_i32, %c0_i32_0 : i32, i32
  }
  func.func @transform_4(%arg0: i32, %arg1: i32) -> (i32, i32, i32) {
    %c0_i32 = arith.constant 0 : i32
    %c0_i32_0 = arith.constant 0 : i32
    %c0_i32_1 = arith.constant 0 : i32
    return %arg0, %c0_i32, %c0_i32_0 : i32, i32, i32
  }
}

module attributes {stable_mosaic.version = 11 : i64} {
  func.func @_cca_apply_kernel(%arg0: i32, %arg1: i32, %arg2: memref<1x128x128xbf16, #tpu.memory_space<vmem>>, %arg3: memref<1x128x128xbf16, #tpu.memory_space<vmem>>, %arg4: memref<1x128x128xf32, #tpu.memory_space<vmem>>, %arg5: memref<128x128xbf16, #tpu.memory_space<vmem>>, %arg6: memref<128x128xbf16, #tpu.memory_space<vmem>>, %arg7: memref<128x128xbf16, #tpu.memory_space<vmem>>, %arg8: memref<1x128xf32, #tpu.memory_space<vmem>>, %arg9: memref<1x128xf32, #tpu.memory_space<vmem>>, %arg10: memref<1x128x128xbf16, #tpu.memory_space<vmem>>) attributes {dimension_semantics = [#tpu.dimension_semantics<parallel>, #tpu.dimension_semantics<parallel>], iteration_bounds = array<i64: 2, 2>, scalar_prefetch = 0 : i64, scratch_operands = 0 : i64, tpu.core_type = #tpu.core_type<tc>, window_params = [{transform_indices = @transform_0, window_bounds = array<i64: 1, 128, 128>}, {transform_indices = @transform_1, window_bounds = array<i64: 1, 128, 128>}, {transform_indices = @transform_2, window_bounds = array<i64: 1, 128, 128>}, {pipeline_mode = #tpu.pipeline_mode<synchronous>, transform_indices = @transform_3, window_bounds = array<i64: 128, 128>}, {pipeline_mode = #tpu.pipeline_mode<synchronous>, transform_indices = @transform_4, window_bounds = array<i64: 128, 128>}, {pipeline_mode = #tpu.pipeline_mode<synchronous>, transform_indices = @transform_5, window_bounds = array<i64: 128, 128>}, {pipeline_mode = #tpu.pipeline_mode<synchronous>, transform_indices = @transform_6, window_bounds = array<i64: 1, 128>}, {pipeline_mode = #tpu.pipeline_mode<synchronous>, transform_indices = @transform_7, window_bounds = array<i64: 1, 128>}, {transform_indices = @transform_8, window_bounds = array<i64: 1, 128, 128>}]} {
    %c0 = arith.constant 0 : index
    %c0_0 = arith.constant 0 : index
    %c0_1 = arith.constant 0 : index
    %0 = vector.load %arg2[%c0, %c0_0, %c0_1] : memref<1x128x128xbf16, #tpu.memory_space<vmem>>, vector<1x128x128xbf16>
    %1 = vector.shape_cast %0 : vector<1x128x128xbf16> to vector<128x128xbf16>
    %c0_2 = arith.constant 0 : index
    %c0_3 = arith.constant 0 : index
    %c0_4 = arith.constant 0 : index
    %2 = vector.load %arg3[%c0_2, %c0_3, %c0_4] : memref<1x128x128xbf16, #tpu.memory_space<vmem>>, vector<1x128x128xbf16>
    %3 = vector.shape_cast %2 : vector<1x128x128xbf16> to vector<128x128xbf16>
    %c0_5 = arith.constant 0 : index
    %c0_6 = arith.constant 0 : index
    %c0_7 = arith.constant 0 : index
    %4 = vector.load %arg4[%c0_5, %c0_6, %c0_7] : memref<1x128x128xf32, #tpu.memory_space<vmem>>, vector<1x128x128xf32>
    %5 = vector.shape_cast %4 : vector<1x128x128xf32> to vector<128x128xf32>
    %6 = arith.truncf %5 : vector<128x128xf32> to vector<128x128xbf16>
    %cst = arith.constant dense<0.000000e+00> : vector<128x128xf32>
    %7 = tpu.matmul %3, %6, %cst {dimension_numbers = #tpu.dot_dimension_numbers<[1], [1], [0], [0], [0, 0, 1, 0], [], []>} : vector<128x128xbf16>, vector<128x128xbf16>, vector<128x128xf32> -> vector<128x128xf32>
    %8 = arith.truncf %7 : vector<128x128xf32> to vector<128x128xbf16>
    %c0_8 = arith.constant 0 : index
    %c0_9 = arith.constant 0 : index
    %9 = vector.load %arg5[%c0_8, %c0_9] : memref<128x128xbf16, #tpu.memory_space<vmem>>, vector<128x128xbf16>
    %cst_10 = arith.constant dense<0.000000e+00> : vector<128x128xf32>
    %10 = tpu.matmul %8, %9, %cst_10 {dimension_numbers = #tpu.dot_dimension_numbers<[1], [0], [0], [1], [0, 0, 1, 1], [], []>} : vector<128x128xbf16>, vector<128x128xbf16>, vector<128x128xf32> -> vector<128x128xf32>
    %c0_11 = arith.constant 0 : index
    %c0_12 = arith.constant 0 : index
    %11 = vector.load %arg8[%c0_11, %c0_12] : memref<1x128xf32, #tpu.memory_space<vmem>>, vector<1x128xf32>
    %12 = vector.broadcast %11 : vector<1x128xf32> to vector<128x128xf32>
    %13 = arith.addf %10, %12 : vector<128x128xf32>
    %cst_13 = arith.constant 0.000000e+00 : f32
    %14 = vector.broadcast %cst_13 : f32 to vector<128x128xf32>
    %15 = arith.maximumf %13, %14 : vector<128x128xf32>
    %16 = arith.truncf %15 : vector<128x128xf32> to vector<128x128xbf16>
    %c0_14 = arith.constant 0 : index
    %c0_15 = arith.constant 0 : index
    %17 = vector.load %arg6[%c0_14, %c0_15] : memref<128x128xbf16, #tpu.memory_space<vmem>>, vector<128x128xbf16>
    %cst_16 = arith.constant dense<0.000000e+00> : vector<128x128xf32>
    %18 = tpu.matmul %16, %17, %cst_16 {dimension_numbers = #tpu.dot_dimension_numbers<[1], [0], [0], [1], [0, 0, 1, 1], [], []>} : vector<128x128xbf16>, vector<128x128xbf16>, vector<128x128xf32> -> vector<128x128xf32>
    %c0_17 = arith.constant 0 : index
    %c0_18 = arith.constant 0 : index
    %19 = vector.load %arg7[%c0_17, %c0_18] : memref<128x128xbf16, #tpu.memory_space<vmem>>, vector<128x128xbf16>
    %cst_19 = arith.constant dense<0.000000e+00> : vector<128x128xf32>
    %20 = tpu.matmul %1, %19, %cst_19 {dimension_numbers = #tpu.dot_dimension_numbers<[1], [0], [0], [1], [0, 0, 1, 1], [], []>} : vector<128x128xbf16>, vector<128x128xbf16>, vector<128x128xf32> -> vector<128x128xf32>
    %21 = arith.addf %18, %20 : vector<128x128xf32>
    %c0_20 = arith.constant 0 : index
    %c0_21 = arith.constant 0 : index
    %22 = vector.load %arg9[%c0_20, %c0_21] : memref<1x128xf32, #tpu.memory_space<vmem>>, vector<1x128xf32>
    %23 = vector.broadcast %22 : vector<1x128xf32> to vector<128x128xf32>
    %24 = arith.addf %21, %23 : vector<128x128xf32>
    %cst_22 = arith.constant 0.000000e+00 : f32
    %25 = vector.broadcast %cst_22 : f32 to vector<128x128xf32>
    %26 = arith.maximumf %24, %25 : vector<128x128xf32>
    %27 = arith.truncf %26 : vector<128x128xf32> to vector<128x128xbf16>
    %c0_23 = arith.constant 0 : index
    %c0_24 = arith.constant 0 : index
    %c0_25 = arith.constant 0 : index
    %28 = vector.load %arg10[%c0_23, %c0_24, %c0_25] : memref<1x128x128xbf16, #tpu.memory_space<vmem>>, vector<1x128x128xbf16>
    %29 = vector.shape_cast %28 : vector<1x128x128xbf16> to vector<128x128xbf16>
    %30 = vector.shape_cast %27 : vector<128x128xbf16> to vector<1x128x128xbf16>
    tpu.vector_store %arg10[%c0_23, %c0_24, %c0_25], %30 {strides = array<i32>} : memref<1x128x128xbf16, #tpu.memory_space<vmem>>, vector<1x128x128xbf16>,
    return
  }
  func.func @transform_0(%arg0: i32, %arg1: i32) -> (i32, i32, i32) {
    %c0_i32 = arith.constant 0 : i32
    %c0_i32_0 = arith.constant 0 : i32
    return %arg0, %arg1, %c0_i32 : i32, i32, i32
  }
  func.func @transform_1(%arg0: i32, %arg1: i32) -> (i32, i32, i32) {
    %c0_i32 = arith.constant 0 : i32
    %c0_i32_0 = arith.constant 0 : i32
    return %arg0, %arg1, %c0_i32 : i32, i32, i32
  }
  func.func @transform_2(%arg0: i32, %arg1: i32) -> (i32, i32, i32) {
    %c0_i32 = arith.constant 0 : i32
    %c0_i32_0 = arith.constant 0 : i32
    %c0_i32_1 = arith.constant 0 : i32
    return %arg0, %c0_i32, %c0_i32_0 : i32, i32, i32
  }
  func.func @transform_3(%arg0: i32, %arg1: i32) -> (i32, i32) {
    %c0_i32 = arith.constant 0 : i32
    %c0_i32_0 = arith.constant 0 : i32
    %c0_i32_1 = arith.constant 0 : i32
    return %c0_i32, %c0_i32_0 : i32, i32
  }
  func.func @transform_4(%arg0: i32, %arg1: i32) -> (i32, i32) {
    %c0_i32 = arith.constant 0 : i32
    %c0_i32_0 = arith.constant 0 : i32
    %c0_i32_1 = arith.constant 0 : i32
    return %c0_i32, %c0_i32_0 : i32, i32
  }
  func.func @transform_5(%arg0: i32, %arg1: i32) -> (i32, i32) {
    %c0_i32 = arith.constant 0 : i32
    %c0_i32_0 = arith.constant 0 : i32
    %c0_i32_1 = arith.constant 0 : i32
    return %c0_i32, %c0_i32_0 : i32, i32
  }
  func.func @transform_6(%arg0: i32, %arg1: i32) -> (i32, i32) {
    %c0_i32 = arith.constant 0 : i32
    %c0_i32_0 = arith.constant 0 : i32
    %c0_i32_1 = arith.constant 0 : i32
    return %c0_i32, %c0_i32_0 : i32, i32
  }
  func.func @transform_7(%arg0: i32, %arg1: i32) -> (i32, i32) {
    %c0_i32 = arith.constant 0 : i32
    %c0_i32_0 = arith.constant 0 : i32
    %c0_i32_1 = arith.constant 0 : i32
    return %c0_i32, %c0_i32_0 : i32, i32
  }
  func.func @transform_8(%arg0: i32, %arg1: i32) -> (i32, i32, i32) {
    %c0_i32 = arith.constant 0 : i32
    %c0_i32_0 = arith.constant 0 : i32
    return %arg0, %arg1, %c0_i32 : i32, i32, i32
  }
}

module attributes {stable_mosaic.version = 11 : i64} {
  func.func @_aspp_kernel(%arg0: i32, %arg1: i32, %arg2: memref<2x40x40x128xbf16, #tpu.memory_space<any>>, %arg3: memref<18x128x128xbf16, #tpu.memory_space<vmem>>, %arg4: memref<1x128xf32, #tpu.memory_space<vmem>>, %arg5: memref<1x8x16x128xf32, #tpu.memory_space<vmem>>, %arg6: memref<32x40x128xbf16, #tpu.memory_space<vmem>>, %arg7: memref<1x!tpu.dma_semaphore, #tpu.memory_space<semaphore_mem>>) attributes {dimension_semantics = [#tpu.dimension_semantics<parallel>, #tpu.dimension_semantics<parallel>], iteration_bounds = array<i64: 2, 2>, scalar_prefetch = 0 : i64, scratch_operands = 2 : i64, tpu.core_type = #tpu.core_type<tc>, window_params = [{}, {pipeline_mode = #tpu.pipeline_mode<synchronous>, transform_indices = @transform_1, window_bounds = array<i64: 18, 128, 128>}, {pipeline_mode = #tpu.pipeline_mode<synchronous>, transform_indices = @transform_2, window_bounds = array<i64: 1, 128>}, {transform_indices = @transform_3, window_bounds = array<i64: 1, 8, 16, 128>}]} {
    %c8_i32 = arith.constant 8 : i32
    %0 = arith.muli %arg1, %c8_i32 : i32
    %1 = tpu.assume_multiple %0, 8 : i32
    %c0_i32 = arith.constant 0 : i32
    %c0_i32_0 = arith.constant 0 : i32
    %c0_i32_1 = arith.constant 0 : i32
    %2 = tpu.memref_slice %arg2[%arg0, %1, %c0_i32_0, %c0_i32_1] : memref<2x40x40x128xbf16, #tpu.memory_space<any>> -> memref<1x32x40x128xbf16, #tpu.memory_space<any>>
    %3 = tpu.memref_squeeze %2 : memref<1x32x40x128xbf16, #tpu.memory_space<any>> -> memref<32x40x128xbf16, #tpu.memory_space<any>>
    %4 = tpu.memref_slice %arg7[%c0_i32] : memref<1x!tpu.dma_semaphore, #tpu.memory_space<semaphore_mem>> -> memref<1x!tpu.dma_semaphore, #tpu.memory_space<semaphore_mem>>
    %5 = tpu.memref_squeeze %4 : memref<1x!tpu.dma_semaphore, #tpu.memory_space<semaphore_mem>> -> memref<!tpu.dma_semaphore, #tpu.memory_space<semaphore_mem>>
    tpu.enqueue_dma source(%3 : memref<32x40x128xbf16, #tpu.memory_space<any>>) target(%arg6 : memref<32x40x128xbf16, #tpu.memory_space<vmem>>) target_semaphore(%5 : memref<!tpu.dma_semaphore, #tpu.memory_space<semaphore_mem>>)
    %c0_i32_2 = arith.constant 0 : i32
    %c0_i32_3 = arith.constant 0 : i32
    %c0_i32_4 = arith.constant 0 : i32
    %6 = tpu.memref_slice %arg2[%arg0, %1, %c0_i32_3, %c0_i32_4] : memref<2x40x40x128xbf16, #tpu.memory_space<any>> -> memref<1x32x40x128xbf16, #tpu.memory_space<any>>
    %7 = tpu.memref_squeeze %6 : memref<1x32x40x128xbf16, #tpu.memory_space<any>> -> memref<32x40x128xbf16, #tpu.memory_space<any>>
    %8 = tpu.memref_slice %arg7[%c0_i32_2] : memref<1x!tpu.dma_semaphore, #tpu.memory_space<semaphore_mem>> -> memref<1x!tpu.dma_semaphore, #tpu.memory_space<semaphore_mem>>
    %9 = tpu.memref_squeeze %8 : memref<1x!tpu.dma_semaphore, #tpu.memory_space<semaphore_mem>> -> memref<!tpu.dma_semaphore, #tpu.memory_space<semaphore_mem>>
    tpu.wait_dma2 semaphore(%9 : memref<!tpu.dma_semaphore, #tpu.memory_space<semaphore_mem>>) src(%7 : memref<32x40x128xbf16, #tpu.memory_space<any>>) dst(%arg6 : memref<32x40x128xbf16, #tpu.memory_space<vmem>>)
    %cst = arith.constant 0.000000e+00 : f32
    %10 = vector.broadcast %cst : f32 to vector<128x128xf32>
    %c6 = arith.constant 6 : index
    %c0 = arith.constant 0 : index
    %c0_5 = arith.constant 0 : index
    %11 = vector.load %arg6[%c6, %c0, %c0_5] : memref<32x40x128xbf16, #tpu.memory_space<vmem>>, vector<8x40x128xbf16>
    %12 = vector.extract_strided_slice %11 {offsets = [0, 6, 0], sizes = [8, 16, 128], strides = [1, 1, 1]} : vector<8x40x128xbf16> to vector<8x16x128xbf16>
    %13 = vector.shape_cast %12 : vector<8x16x128xbf16> to vector<128x128xbf16>
    %c0_6 = arith.constant 0 : index
    %c0_7 = arith.constant 0 : index
    %c0_8 = arith.constant 0 : index
    %14 = vector.load %arg3[%c0_6, %c0_7, %c0_8] : memref<18x128x128xbf16, #tpu.memory_space<vmem>>, vector<1x128x128xbf16>
    %15 = vector.shape_cast %14 : vector<1x128x128xbf16> to vector<128x128xbf16>
    %cst_9 = arith.constant dense<0.000000e+00> : vector<128x128xf32>
    %16 = tpu.matmul %13, %15, %cst_9 {dimension_numbers = #tpu.dot_dimension_numbers<[1], [0], [0], [1], [0, 0, 1, 1], [], []>} : vector<128x128xbf16>, vector<128x128xbf16>, vector<128x128xf32> -> vector<128x128xf32>
    %17 = arith.addf %10, %16 : vector<128x128xf32>
    %18 = vector.extract_strided_slice %11 {offsets = [0, 12, 0], sizes = [8, 16, 128], strides = [1, 1, 1]} : vector<8x40x128xbf16> to vector<8x16x128xbf16>
    %19 = vector.shape_cast %18 : vector<8x16x128xbf16> to vector<128x128xbf16>
    %c1 = arith.constant 1 : index
    %c0_10 = arith.constant 0 : index
    %c0_11 = arith.constant 0 : index
    %20 = vector.load %arg3[%c1, %c0_10, %c0_11] : memref<18x128x128xbf16, #tpu.memory_space<vmem>>, vector<1x128x128xbf16>
    %21 = vector.shape_cast %20 : vector<1x128x128xbf16> to vector<128x128xbf16>
    %cst_12 = arith.constant dense<0.000000e+00> : vector<128x128xf32>
    %22 = tpu.matmul %19, %21, %cst_12 {dimension_numbers = #tpu.dot_dimension_numbers<[1], [0], [0], [1], [0, 0, 1, 1], [], []>} : vector<128x128xbf16>, vector<128x128xbf16>, vector<128x128xf32> -> vector<128x128xf32>
    %23 = arith.addf %17, %22 : vector<128x128xf32>
    %24 = vector.extract_strided_slice %11 {offsets = [0, 18, 0], sizes = [8, 16, 128], strides = [1, 1, 1]} : vector<8x40x128xbf16> to vector<8x16x128xbf16>
    %25 = vector.shape_cast %24 : vector<8x16x128xbf16> to vector<128x128xbf16>
    %c2 = arith.constant 2 : index
    %c0_13 = arith.constant 0 : index
    %c0_14 = arith.constant 0 : index
    %26 = vector.load %arg3[%c2, %c0_13, %c0_14] : memref<18x128x128xbf16, #tpu.memory_space<vmem>>, vector<1x128x128xbf16>
    %27 = vector.shape_cast %26 : vector<1x128x128xbf16> to vector<128x128xbf16>
    %cst_15 = arith.constant dense<0.000000e+00> : vector<128x128xf32>
    %28 = tpu.matmul %25, %27, %cst_15 {dimension_numbers = #tpu.dot_dimension_numbers<[1], [0], [0], [1], [0, 0, 1, 1], [], []>} : vector<128x128xbf16>, vector<128x128xbf16>, vector<128x128xf32> -> vector<128x128xf32>
    %29 = arith.addf %23, %28 : vector<128x128xf32>
    %c12 = arith.constant 12 : index
    %c0_16 = arith.constant 0 : index
    %c0_17 = arith.constant 0 : index
    %30 = vector.load %arg6[%c12, %c0_16, %c0_17] : memref<32x40x128xbf16, #tpu.memory_space<vmem>>, vector<8x40x128xbf16>
    %31 = vector.extract_strided_slice %30 {offsets = [0, 6, 0], sizes = [8, 16, 128], strides = [1, 1, 1]} : vector<8x40x128xbf16> to vector<8x16x128xbf16>
    %32 = vector.shape_cast %31 : vector<8x16x128xbf16> to vector<128x128xbf16>
    %c3 = arith.constant 3 : index
    %c0_18 = arith.constant 0 : index
    %c0_19 = arith.constant 0 : index
    %33 = vector.load %arg3[%c3, %c0_18, %c0_19] : memref<18x128x128xbf16, #tpu.memory_space<vmem>>, vector<1x128x128xbf16>
    %34 = vector.shape_cast %33 : vector<1x128x128xbf16> to vector<128x128xbf16>
    %cst_20 = arith.constant dense<0.000000e+00> : vector<128x128xf32>
    %35 = tpu.matmul %32, %34, %cst_20 {dimension_numbers = #tpu.dot_dimension_numbers<[1], [0], [0], [1], [0, 0, 1, 1], [], []>} : vector<128x128xbf16>, vector<128x128xbf16>, vector<128x128xf32> -> vector<128x128xf32>
    %36 = arith.addf %29, %35 : vector<128x128xf32>
    %37 = vector.extract_strided_slice %30 {offsets = [0, 12, 0], sizes = [8, 16, 128], strides = [1, 1, 1]} : vector<8x40x128xbf16> to vector<8x16x128xbf16>
    %38 = vector.shape_cast %37 : vector<8x16x128xbf16> to vector<128x128xbf16>
    %c4 = arith.constant 4 : index
    %c0_21 = arith.constant 0 : index
    %c0_22 = arith.constant 0 : index
    %39 = vector.load %arg3[%c4, %c0_21, %c0_22] : memref<18x128x128xbf16, #tpu.memory_space<vmem>>, vector<1x128x128xbf16>
    %40 = vector.shape_cast %39 : vector<1x128x128xbf16> to vector<128x128xbf16>
    %cst_23 = arith.constant dense<0.000000e+00> : vector<128x128xf32>
    %41 = tpu.matmul %38, %40, %cst_23 {dimension_numbers = #tpu.dot_dimension_numbers<[1], [0], [0], [1], [0, 0, 1, 1], [], []>} : vector<128x128xbf16>, vector<128x128xbf16>, vector<128x128xf32> -> vector<128x128xf32>
    %42 = arith.addf %36, %41 : vector<128x128xf32>
    %43 = vector.extract_strided_slice %30 {offsets = [0, 18, 0], sizes = [8, 16, 128], strides = [1, 1, 1]} : vector<8x40x128xbf16> to vector<8x16x128xbf16>
    %44 = vector.shape_cast %43 : vector<8x16x128xbf16> to vector<128x128xbf16>
    %c5 = arith.constant 5 : index
    %c0_24 = arith.constant 0 : index
    %c0_25 = arith.constant 0 : index
    %45 = vector.load %arg3[%c5, %c0_24, %c0_25] : memref<18x128x128xbf16, #tpu.memory_space<vmem>>, vector<1x128x128xbf16>
    %46 = vector.shape_cast %45 : vector<1x128x128xbf16> to vector<128x128xbf16>
    %cst_26 = arith.constant dense<0.000000e+00> : vector<128x128xf32>
    %47 = tpu.matmul %44, %46, %cst_26 {dimension_numbers = #tpu.dot_dimension_numbers<[1], [0], [0], [1], [0, 0, 1, 1], [], []>} : vector<128x128xbf16>, vector<128x128xbf16>, vector<128x128xf32> -> vector<128x128xf32>
    %48 = arith.addf %42, %47 : vector<128x128xf32>
    %c18 = arith.constant 18 : index
    %c0_27 = arith.constant 0 : index
    %c0_28 = arith.constant 0 : index
    %49 = vector.load %arg6[%c18, %c0_27, %c0_28] : memref<32x40x128xbf16, #tpu.memory_space<vmem>>, vector<8x40x128xbf16>
    %50 = vector.extract_strided_slice %49 {offsets = [0, 6, 0], sizes = [8, 16, 128], strides = [1, 1, 1]} : vector<8x40x128xbf16> to vector<8x16x128xbf16>
    %51 = vector.shape_cast %50 : vector<8x16x128xbf16> to vector<128x128xbf16>
    %c6_29 = arith.constant 6 : index
    %c0_30 = arith.constant 0 : index
    %c0_31 = arith.constant 0 : index
    %52 = vector.load %arg3[%c6_29, %c0_30, %c0_31] : memref<18x128x128xbf16, #tpu.memory_space<vmem>>, vector<1x128x128xbf16>
    %53 = vector.shape_cast %52 : vector<1x128x128xbf16> to vector<128x128xbf16>
    %cst_32 = arith.constant dense<0.000000e+00> : vector<128x128xf32>
    %54 = tpu.matmul %51, %53, %cst_32 {dimension_numbers = #tpu.dot_dimension_numbers<[1], [0], [0], [1], [0, 0, 1, 1], [], []>} : vector<128x128xbf16>, vector<128x128xbf16>, vector<128x128xf32> -> vector<128x128xf32>
    %55 = arith.addf %48, %54 : vector<128x128xf32>
    %56 = vector.extract_strided_slice %49 {offsets = [0, 12, 0], sizes = [8, 16, 128], strides = [1, 1, 1]} : vector<8x40x128xbf16> to vector<8x16x128xbf16>
    %57 = vector.shape_cast %56 : vector<8x16x128xbf16> to vector<128x128xbf16>
    %c7 = arith.constant 7 : index
    %c0_33 = arith.constant 0 : index
    %c0_34 = arith.constant 0 : index
    %58 = vector.load %arg3[%c7, %c0_33, %c0_34] : memref<18x128x128xbf16, #tpu.memory_space<vmem>>, vector<1x128x128xbf16>
    %59 = vector.shape_cast %58 : vector<1x128x128xbf16> to vector<128x128xbf16>
    %cst_35 = arith.constant dense<0.000000e+00> : vector<128x128xf32>
    %60 = tpu.matmul %57, %59, %cst_35 {dimension_numbers = #tpu.dot_dimension_numbers<[1], [0], [0], [1], [0, 0, 1, 1], [], []>} : vector<128x128xbf16>, vector<128x128xbf16>, vector<128x128xf32> -> vector<128x128xf32>
    %61 = arith.addf %55, %60 : vector<128x128xf32>
    %62 = vector.extract_strided_slice %49 {offsets = [0, 18, 0], sizes = [8, 16, 128], strides = [1, 1, 1]} : vector<8x40x128xbf16> to vector<8x16x128xbf16>
    %63 = vector.shape_cast %62 : vector<8x16x128xbf16> to vector<128x128xbf16>
    %c8 = arith.constant 8 : index
    %c0_36 = arith.constant 0 : index
    %c0_37 = arith.constant 0 : index
    %64 = vector.load %arg3[%c8, %c0_36, %c0_37] : memref<18x128x128xbf16, #tpu.memory_space<vmem>>, vector<1x128x128xbf16>
    %65 = vector.shape_cast %64 : vector<1x128x128xbf16> to vector<128x128xbf16>
    %cst_38 = arith.constant dense<0.000000e+00> : vector<128x128xf32>
    %66 = tpu.matmul %63, %65, %cst_38 {dimension_numbers = #tpu.dot_dimension_numbers<[1], [0], [0], [1], [0, 0, 1, 1], [], []>} : vector<128x128xbf16>, vector<128x128xbf16>, vector<128x128xf32> -> vector<128x128xf32>
    %67 = arith.addf %61, %66 : vector<128x128xf32>
    %c0_39 = arith.constant 0 : index
    %c0_40 = arith.constant 0 : index
    %c0_41 = arith.constant 0 : index
    %68 = vector.load %arg6[%c0_39, %c0_40, %c0_41] : memref<32x40x128xbf16, #tpu.memory_space<vmem>>, vector<8x40x128xbf16>
    %69 = vector.extract_strided_slice %68 {offsets = [0, 0, 0], sizes = [8, 16, 128], strides = [1, 1, 1]} : vector<8x40x128xbf16> to vector<8x16x128xbf16>
    %70 = vector.shape_cast %69 : vector<8x16x128xbf16> to vector<128x128xbf16>
    %c9 = arith.constant 9 : index
    %c0_42 = arith.constant 0 : index
    %c0_43 = arith.constant 0 : index
    %71 = vector.load %arg3[%c9, %c0_42, %c0_43] : memref<18x128x128xbf16, #tpu.memory_space<vmem>>, vector<1x128x128xbf16>
    %72 = vector.shape_cast %71 : vector<1x128x128xbf16> to vector<128x128xbf16>
    %cst_44 = arith.constant dense<0.000000e+00> : vector<128x128xf32>
    %73 = tpu.matmul %70, %72, %cst_44 {dimension_numbers = #tpu.dot_dimension_numbers<[1], [0], [0], [1], [0, 0, 1, 1], [], []>} : vector<128x128xbf16>, vector<128x128xbf16>, vector<128x128xf32> -> vector<128x128xf32>
    %74 = arith.addf %67, %73 : vector<128x128xf32>
    %75 = vector.extract_strided_slice %68 {offsets = [0, 12, 0], sizes = [8, 16, 128], strides = [1, 1, 1]} : vector<8x40x128xbf16> to vector<8x16x128xbf16>
    %76 = vector.shape_cast %75 : vector<8x16x128xbf16> to vector<128x128xbf16>
    %c10 = arith.constant 10 : index
    %c0_45 = arith.constant 0 : index
    %c0_46 = arith.constant 0 : index
    %77 = vector.load %arg3[%c10, %c0_45, %c0_46] : memref<18x128x128xbf16, #tpu.memory_space<vmem>>, vector<1x128x128xbf16>
    %78 = vector.shape_cast %77 : vector<1x128x128xbf16> to vector<128x128xbf16>
    %cst_47 = arith.constant dense<0.000000e+00> : vector<128x128xf32>
    %79 = tpu.matmul %76, %78, %cst_47 {dimension_numbers = #tpu.dot_dimension_numbers<[1], [0], [0], [1], [0, 0, 1, 1], [], []>} : vector<128x128xbf16>, vector<128x128xbf16>, vector<128x128xf32> -> vector<128x128xf32>
    %80 = arith.addf %74, %79 : vector<128x128xf32>
    %81 = vector.extract_strided_slice %68 {offsets = [0, 24, 0], sizes = [8, 16, 128], strides = [1, 1, 1]} : vector<8x40x128xbf16> to vector<8x16x128xbf16>
    %82 = vector.shape_cast %81 : vector<8x16x128xbf16> to vector<128x128xbf16>
    %c11 = arith.constant 11 : index
    %c0_48 = arith.constant 0 : index
    %c0_49 = arith.constant 0 : index
    %83 = vector.load %arg3[%c11, %c0_48, %c0_49] : memref<18x128x128xbf16, #tpu.memory_space<vmem>>, vector<1x128x128xbf16>
    %84 = vector.shape_cast %83 : vector<1x128x128xbf16> to vector<128x128xbf16>
    %cst_50 = arith.constant dense<0.000000e+00> : vector<128x128xf32>
    %85 = tpu.matmul %82, %84, %cst_50 {dimension_numbers = #tpu.dot_dimension_numbers<[1], [0], [0], [1], [0, 0, 1, 1], [], []>} : vector<128x128xbf16>, vector<128x128xbf16>, vector<128x128xf32> -> vector<128x128xf32>
    %86 = arith.addf %80, %85 : vector<128x128xf32>
    %c12_51 = arith.constant 12 : index
    %c0_52 = arith.constant 0 : index
    %c0_53 = arith.constant 0 : index
    %87 = vector.load %arg6[%c12_51, %c0_52, %c0_53] : memref<32x40x128xbf16, #tpu.memory_space<vmem>>, vector<8x40x128xbf16>
    %88 = vector.extract_strided_slice %87 {offsets = [0, 0, 0], sizes = [8, 16, 128], strides = [1, 1, 1]} : vector<8x40x128xbf16> to vector<8x16x128xbf16>
    %89 = vector.shape_cast %88 : vector<8x16x128xbf16> to vector<128x128xbf16>
    %c12_54 = arith.constant 12 : index
    %c0_55 = arith.constant 0 : index
    %c0_56 = arith.constant 0 : index
    %90 = vector.load %arg3[%c12_54, %c0_55, %c0_56] : memref<18x128x128xbf16, #tpu.memory_space<vmem>>, vector<1x128x128xbf16>
    %91 = vector.shape_cast %90 : vector<1x128x128xbf16> to vector<128x128xbf16>
    %cst_57 = arith.constant dense<0.000000e+00> : vector<128x128xf32>
    %92 = tpu.matmul %89, %91, %cst_57 {dimension_numbers = #tpu.dot_dimension_numbers<[1], [0], [0], [1], [0, 0, 1, 1], [], []>} : vector<128x128xbf16>, vector<128x128xbf16>, vector<128x128xf32> -> vector<128x128xf32>
    %93 = arith.addf %86, %92 : vector<128x128xf32>
    %94 = vector.extract_strided_slice %87 {offsets = [0, 12, 0], sizes = [8, 16, 128], strides = [1, 1, 1]} : vector<8x40x128xbf16> to vector<8x16x128xbf16>
    %95 = vector.shape_cast %94 : vector<8x16x128xbf16> to vector<128x128xbf16>
    %c13 = arith.constant 13 : index
    %c0_58 = arith.constant 0 : index
    %c0_59 = arith.constant 0 : index
    %96 = vector.load %arg3[%c13, %c0_58, %c0_59] : memref<18x128x128xbf16, #tpu.memory_space<vmem>>, vector<1x128x128xbf16>
    %97 = vector.shape_cast %96 : vector<1x128x128xbf16> to vector<128x128xbf16>
    %cst_60 = arith.constant dense<0.000000e+00> : vector<128x128xf32>
    %98 = tpu.matmul %95, %97, %cst_60 {dimension_numbers = #tpu.dot_dimension_numbers<[1], [0], [0], [1], [0, 0, 1, 1], [], []>} : vector<128x128xbf16>, vector<128x128xbf16>, vector<128x128xf32> -> vector<128x128xf32>
    %99 = arith.addf %93, %98 : vector<128x128xf32>
    %100 = vector.extract_strided_slice %87 {offsets = [0, 24, 0], sizes = [8, 16, 128], strides = [1, 1, 1]} : vector<8x40x128xbf16> to vector<8x16x128xbf16>
    %101 = vector.shape_cast %100 : vector<8x16x128xbf16> to vector<128x128xbf16>
    %c14 = arith.constant 14 : index
    %c0_61 = arith.constant 0 : index
    %c0_62 = arith.constant 0 : index
    %102 = vector.load %arg3[%c14, %c0_61, %c0_62] : memref<18x128x128xbf16, #tpu.memory_space<vmem>>, vector<1x128x128xbf16>
    %103 = vector.shape_cast %102 : vector<1x128x128xbf16> to vector<128x128xbf16>
    %cst_63 = arith.constant dense<0.000000e+00> : vector<128x128xf32>
    %104 = tpu.matmul %101, %103, %cst_63 {dimension_numbers = #tpu.dot_dimension_numbers<[1], [0], [0], [1], [0, 0, 1, 1], [], []>} : vector<128x128xbf16>, vector<128x128xbf16>, vector<128x128xf32> -> vector<128x128xf32>
    %105 = arith.addf %99, %104 : vector<128x128xf32>
    %c24 = arith.constant 24 : index
    %c0_64 = arith.constant 0 : index
    %c0_65 = arith.constant 0 : index
    %106 = vector.load %arg6[%c24, %c0_64, %c0_65] : memref<32x40x128xbf16, #tpu.memory_space<vmem>>, vector<8x40x128xbf16>
    %107 = vector.extract_strided_slice %106 {offsets = [0, 0, 0], sizes = [8, 16, 128], strides = [1, 1, 1]} : vector<8x40x128xbf16> to vector<8x16x128xbf16>
    %108 = vector.shape_cast %107 : vector<8x16x128xbf16> to vector<128x128xbf16>
    %c15 = arith.constant 15 : index
    %c0_66 = arith.constant 0 : index
    %c0_67 = arith.constant 0 : index
    %109 = vector.load %arg3[%c15, %c0_66, %c0_67] : memref<18x128x128xbf16, #tpu.memory_space<vmem>>, vector<1x128x128xbf16>
    %110 = vector.shape_cast %109 : vector<1x128x128xbf16> to vector<128x128xbf16>
    %cst_68 = arith.constant dense<0.000000e+00> : vector<128x128xf32>
    %111 = tpu.matmul %108, %110, %cst_68 {dimension_numbers = #tpu.dot_dimension_numbers<[1], [0], [0], [1], [0, 0, 1, 1], [], []>} : vector<128x128xbf16>, vector<128x128xbf16>, vector<128x128xf32> -> vector<128x128xf32>
    %112 = arith.addf %105, %111 : vector<128x128xf32>
    %113 = vector.extract_strided_slice %106 {offsets = [0, 12, 0], sizes = [8, 16, 128], strides = [1, 1, 1]} : vector<8x40x128xbf16> to vector<8x16x128xbf16>
    %114 = vector.shape_cast %113 : vector<8x16x128xbf16> to vector<128x128xbf16>
    %c16 = arith.constant 16 : index
    %c0_69 = arith.constant 0 : index
    %c0_70 = arith.constant 0 : index
    %115 = vector.load %arg3[%c16, %c0_69, %c0_70] : memref<18x128x128xbf16, #tpu.memory_space<vmem>>, vector<1x128x128xbf16>
    %116 = vector.shape_cast %115 : vector<1x128x128xbf16> to vector<128x128xbf16>
    %cst_71 = arith.constant dense<0.000000e+00> : vector<128x128xf32>
    %117 = tpu.matmul %114, %116, %cst_71 {dimension_numbers = #tpu.dot_dimension_numbers<[1], [0], [0], [1], [0, 0, 1, 1], [], []>} : vector<128x128xbf16>, vector<128x128xbf16>, vector<128x128xf32> -> vector<128x128xf32>
    %118 = arith.addf %112, %117 : vector<128x128xf32>
    %119 = vector.extract_strided_slice %106 {offsets = [0, 24, 0], sizes = [8, 16, 128], strides = [1, 1, 1]} : vector<8x40x128xbf16> to vector<8x16x128xbf16>
    %120 = vector.shape_cast %119 : vector<8x16x128xbf16> to vector<128x128xbf16>
    %c17 = arith.constant 17 : index
    %c0_72 = arith.constant 0 : index
    %c0_73 = arith.constant 0 : index
    %121 = vector.load %arg3[%c17, %c0_72, %c0_73] : memref<18x128x128xbf16, #tpu.memory_space<vmem>>, vector<1x128x128xbf16>
    %122 = vector.shape_cast %121 : vector<1x128x128xbf16> to vector<128x128xbf16>
    %cst_74 = arith.constant dense<0.000000e+00> : vector<128x128xf32>
    %123 = tpu.matmul %120, %122, %cst_74 {dimension_numbers = #tpu.dot_dimension_numbers<[1], [0], [0], [1], [0, 0, 1, 1], [], []>} : vector<128x128xbf16>, vector<128x128xbf16>, vector<128x128xf32> -> vector<128x128xf32>
    %124 = arith.addf %118, %123 : vector<128x128xf32>
    %c0_75 = arith.constant 0 : index
    %c0_76 = arith.constant 0 : index
    %125 = vector.load %arg4[%c0_75, %c0_76] : memref<1x128xf32, #tpu.memory_space<vmem>>, vector<1x128xf32>
    %126 = vector.broadcast %125 : vector<1x128xf32> to vector<128x128xf32>
    %127 = arith.addf %124, %126 : vector<128x128xf32>
    %128 = vector.shape_cast %127 : vector<128x128xf32> to vector<8x16x128xf32>
    %c0_77 = arith.constant 0 : index
    %c0_78 = arith.constant 0 : index
    %c0_79 = arith.constant 0 : index
    %c0_80 = arith.constant 0 : index
    %129 = vector.load %arg5[%c0_77, %c0_78, %c0_79, %c0_80] : memref<1x8x16x128xf32, #tpu.memory_space<vmem>>, vector<1x8x16x128xf32>
    %130 = vector.shape_cast %129 : vector<1x8x16x128xf32> to vector<8x16x128xf32>
    %131 = vector.shape_cast %128 : vector<8x16x128xf32> to vector<1x8x16x128xf32>
    tpu.vector_store %arg5[%c0_77, %c0_78, %c0_79, %c0_80], %131 {strides = array<i32>} : memref<1x8x16x128xf32, #tpu.memory_space<vmem>>, vector<1x8x16x128xf32>,
    return
  }
  func.func @transform_1(%arg0: i32, %arg1: i32) -> (i32, i32, i32) {
    %c0_i32 = arith.constant 0 : i32
    %c0_i32_0 = arith.constant 0 : i32
    %c0_i32_1 = arith.constant 0 : i32
    %c0_i32_2 = arith.constant 0 : i32
    return %c0_i32, %c0_i32_0, %c0_i32_1 : i32, i32, i32
  }
  func.func @transform_2(%arg0: i32, %arg1: i32) -> (i32, i32) {
    %c0_i32 = arith.constant 0 : i32
    %c0_i32_0 = arith.constant 0 : i32
    %c0_i32_1 = arith.constant 0 : i32
    return %c0_i32, %c0_i32_0 : i32, i32
  }
  func.func @transform_3(%arg0: i32, %arg1: i32) -> (i32, i32, i32, i32) {
    %c0_i32 = arith.constant 0 : i32
    %c0_i32_0 = arith.constant 0 : i32
    %c0_i32_1 = arith.constant 0 : i32
    return %arg0, %arg1, %c0_i32, %c0_i32_0 : i32, i32, i32, i32
  }
}

</mosaic_0001>

<llo_original>
// kernel: cca_classifier_forward.3
$region0: #{cca_classifier_forward.3}
  #allocation0 [shape = 'u32[]', space=smem, size = 0x4, offset = 0x4, fixed_abs, tag = 'smem constant byte address 0x4 - core index']
  #allocation1 [shape = 'u32[144,128]{1,0:T(1,128)}', space=vmem, size = 0x12000, scoped, tag = 'internal scratch']
  #allocation2 [shape = 'f32[128,128]{1,0:T(8,128)}', space=vmem, size = 0x10000, scoped, tag = 'scratch operand']
  %s0 = inlined_call_operand.vmem [shape: bf16[2,256,128], index: 0, kind: input, shape index: {}]
  %s1 = inlined_call_operand.vmem [shape: bf16[2,256,128], index: 1, kind: input, shape index: {}]
  %s2 = inlined_call_operand.vmem [shape: bf16[128,128], index: 2, kind: input, shape index: {}]
  %s3 = inlined_call_operand.vmem [shape: f32[1,128], index: 3, kind: input, shape index: {}]
  %s4 = inlined_call_operand.vmem [shape: f32[2,128,128], index: 4, kind: output, shape index: {}]
  %s5 = sld [smem:[#allocation0]]
  $region57: #{cca_classifier_forward.3} parent=0
    _
  %s7 = ssub.s32 1, %s5
  %s8 = scalar_select 0, %s7, %s5
  loop: start=0, step=1, limit=6
  $region2: #{cca_classifier_forward.3} parent=0 // loop_pre_header
    _
  $region3: #{cca_classifier_forward.3} parent=0 // loop_header
    %s10 = sphi 0, %s14
    %p11 = scmp.ge.s32.totalorder %s10, 6
    %s17 = sphi 0, %s29
    %s18 = sphi 0, %s25
    %s19 = sphi 0, %s17
    %s20 = sphi 0, %s18
    %s21 = sphi 0, %s19
    %s22 = sphi 0, %s20
    %s34 = sphi 0, %s36
    %s37 = sphi 0, %s34
    %s38 = sphi 0, %s37
    %s54 = sphi 0, %s38
    %s62 = sphi 0, %s64
    %s65 = sphi 0, %s62
    %s66 = sphi 0, %s65
    %s82 = sphi 0, %s66
    %s86 = sphi 0, %s86
    %s88 = sphi 0, %s86
    %s89 = sphi 0, %s88
    %s103 = sphi 0, %s89
    %s107 = sphi 0, %s107
    %s109 = sphi 0, %s107
    %s110 = sphi 0, %s109
    %s124 = sphi 0, %s110
    %s130 = sphi 0, %s132
    %s133 = sphi 0, %s130
    %s134 = sphi 0, %s133
    %s150 = sphi 0, %s134
  $region4: #{cca_classifier_forward.3} parent=0 // loop_header_branch
    %13 = sbr.rel (%p11) target = $region8
  $region5: #{cca_classifier_forward.3} parent=0 // loop_body
    %s15 = ssub.s32 %s10, 1
    %s16 = ssub.s32 %s10, 2
    %s23 = sadd.s32 1, %s18
    %p24 = scmp.ge.s32.totalorder %s23, 2
    %s25 = scalar_select %p24, 0, %s23
    %s26 = sadd.s32 1, %s17
    %s27 = scalar_select %p24, %s26, %s17
    %p28 = scmp.ge.s32.totalorder %s27, 2
    %s29 = scalar_select %p28, 0, %s27
    %s30 = ssub.s32 %s17, %s29
    %s31 = ssub.s32 %s18, %s25
    %s32 = sor.u32 %s30, %s31
    %p33 = scmp.eq.s32.totalorder %s32, 0
    %s35 = sadd.s32 %s34, 1
    %s36 = scalar_select %p33, %s34, %s35
    %p39 = pneg %p33
    %p40 = scmp.eq.s32.totalorder %s10, 3
    %p41 = por %p39, %p40
    %p42 = scmp.ne.s32.totalorder %s34, %s37
    %p43 = scmp.eq.s32.totalorder %s10, 0
    %p44 = por %p42, %p43
    %p45 = scmp.ne.s32.totalorder %s34, %s37
    %p46 = scmp.eq.s32.totalorder %s15, 3
    %p47 = por %p45, %p46
    %p48 = scmp.ne.s32.totalorder %s37, %s38
    %p49 = scmp.eq.s32.totalorder %s15, 0
    %p50 = por %p48, %p49
    %p51 = scmp.ne.s32.totalorder %s37, %s38
    %p52 = scmp.eq.s32.totalorder %s16, 3
    %p53 = por %p51, %p52
    %p55 = scmp.ne.s32.totalorder %s38, %s54
    %p56 = scmp.eq.s32.totalorder %s16, 0
    %p57 = por %p55, %p56
    %s58 = ssub.s32 %s17, %s29
    %s59 = ssub.s32 %s18, %s25
    %s60 = sor.u32 %s58, %s59
    %p61 = scmp.eq.s32.totalorder %s60, 0
    %s63 = sadd.s32 %s62, 1
    %s64 = scalar_select %p61, %s62, %s63
    %p67 = pneg %p61
    %p68 = scmp.eq.s32.totalorder %s10, 3
    %p69 = por %p67, %p68
    %p70 = scmp.ne.s32.totalorder %s62, %s65
    %p71 = scmp.eq.s32.totalorder %s10, 0
    %p72 = por %p70, %p71
    %p73 = scmp.ne.s32.totalorder %s62, %s65
    %p74 = scmp.eq.s32.totalorder %s15, 3
    %p75 = por %p73, %p74
    %p76 = scmp.ne.s32.totalorder %s65, %s66
    %p77 = scmp.eq.s32.totalorder %s15, 0
    %p78 = por %p76, %p77
    %p79 = scmp.ne.s32.totalorder %s65, %s66
    %p80 = scmp.eq.s32.totalorder %s16, 3
    %p81 = por %p79, %p80
    %p83 = scmp.ne.s32.totalorder %s66, %s82
    %p84 = scmp.eq.s32.totalorder %s16, 0
    %p85 = por %p83, %p84
    %s87 = sadd.s32 %s86, 1
    %p90 = scmp.eq.s32.totalorder %s10, 3
    %p91 = scmp.ne.s32.totalorder %s86, %s88
    %p92 = scmp.eq.s32.totalorder %s10, 0
    %p93 = por %p91, %p92
    %p94 = scmp.ne.s32.totalorder %s86, %s88
    %p95 = scmp.eq.s32.totalorder %s15, 3
    %p96 = por %p94, %p95
    %p97 = scmp.ne.s32.totalorder %s88, %s89
    %p98 = scmp.eq.s32.totalorder %s15, 0
    %p99 = por %p97, %p98
    %p100 = scmp.ne.s32.totalorder %s88, %s89
    %p101 = scmp.eq.s32.totalorder %s16, 3
    %p102 = por %p100, %p101
    %p104 = scmp.ne.s32.totalorder %s89, %s103
    %p105 = scmp.eq.s32.totalorder %s16, 0
    %p106 = por %p104, %p105
    %s108 = sadd.s32 %s107, 1
    %p111 = scmp.eq.s32.totalorder %s10, 3
    %p112 = scmp.ne.s32.totalorder %s107, %s109
    %p113 = scmp.eq.s32.totalorder %s10, 0
    %p114 = por %p112, %p113
    %p115 = scmp.ne.s32.totalorder %s107, %s109
    %p116 = scmp.eq.s32.totalorder %s15, 3
    %p117 = por %p115, %p116
    %p118 = scmp.ne.s32.totalorder %s109, %s110
    %p119 = scmp.eq.s32.totalorder %s15, 0
    %p120 = por %p118, %p119
    %p121 = scmp.ne.s32.totalorder %s109, %s110
    %p122 = scmp.eq.s32.totalorder %s16, 3
    %p123 = por %p121, %p122
    %p125 = scmp.ne.s32.totalorder %s110, %s124
    %p126 = scmp.eq.s32.totalorder %s16, 0
    %p127 = por %p125, %p126
    %s128 = ssub.s32 %s17, %s29
    %p129 = scmp.eq.s32.totalorder %s128, 0
    %s131 = sadd.s32 %s130, 1
    %s132 = scalar_select %p129, %s130, %s131
    %p135 = pneg %p129
    %p136 = scmp.eq.s32.totalorder %s10, 3
    %p137 = por %p135, %p136
    %p138 = scmp.ne.s32.totalorder %s130, %s133
    %p139 = scmp.eq.s32.totalorder %s10, 0
    %p140 = por %p138, %p139
    %p141 = scmp.ne.s32.totalorder %s130, %s133
    %p142 = scmp.eq.s32.totalorder %s15, 3
    %p143 = por %p141, %p142
    %p144 = scmp.ne.s32.totalorder %s133, %s134
    %p145 = scmp.eq.s32.totalorder %s15, 0
    %p146 = por %p144, %p145
    %p147 = scmp.ne.s32.totalorder %s133, %s134
    %p148 = scmp.eq.s32.totalorder %s16, 3
    %p149 = por %p147, %p148
    %p151 = scmp.ne.s32.totalorder %s134, %s150
    %p152 = scmp.eq.s32.totalorder %s16, 0
    %p153 = por %p151, %p152
    %p154 = scmp.le.s32.totalorder 1, %s10
    %p155 = scmp.lt.s32.totalorder %s10, 5
    %p156 = pnand %p154, %p155
    %p157 = pneg %p156
    // Predicated region
    $region9: #{cca_classifier_forward.3} parent=5 // pred_check
      _
    $region10: #{cca_classifier_forward.3} parent=5 // pred_check_branch
      %159 = sbr.rel (%p156) target = $region12
    $region11: #{cca_classifier_forward.3} parent=5 // pred_region
      %s160 = ssub.s32 %s10, 1
      // Predicated region
      $region13: #{cca_classifier_forward.3} parent=11 // pred_check
        %p161 = pneg %p99
      $region14: #{cca_classifier_forward.3} parent=11 // pred_check_branch
        %163 = sbr.rel (%p161) target = $region16
      $region15: #{cca_classifier_forward.3} parent=11 // pred_region
        _
      $region16: #{cca_classifier_forward.3} parent=11 // pred_fallthru
        _
      // Predicated region
      $region17: #{cca_classifier_forward.3} parent=11 // pred_check
        %p164 = pneg %p120
      $region18: #{cca_classifier_forward.3} parent=11 // pred_check_branch
        %166 = sbr.rel (%p164) target = $region20
      $region19: #{cca_classifier_forward.3} parent=11 // pred_region
        _
      $region20: #{cca_classifier_forward.3} parent=11 // pred_fallthru
        _
    $region12: #{cca_classifier_forward.3} parent=5 // pred_fallthru
      _
    %p167 = scmp.lt.s32.totalorder %s10, 4
    // Predicated region
    $region21: #{cca_classifier_forward.3} parent=5 // pred_check
      %p168 = pneg %p167
    $region22: #{cca_classifier_forward.3} parent=5 // pred_check_branch
      %170 = sbr.rel (%p168) target = $region24
    $region23: #{cca_classifier_forward.3} parent=5 // pred_region
      // Predicated region
      $region25: #{cca_classifier_forward.3} parent=23 // pred_check
        %p171 = pneg %p44
      $region26: #{cca_classifier_forward.3} parent=23 // pred_check_branch
        %173 = sbr.rel (%p171) target = $region28
      $region27: #{cca_classifier_forward.3} parent=23 // pred_region
        %s174 = smul.u32 16, %s18
        %p175 = scmp.lt.s32.totalorder %s17, 1
        %s176 = scalar_select %p175, %s17, 1
        %p177 = scmp.lt.s32.totalorder %s174, 31
        %s178 = scalar_select %p177, %s174, 31
        %s179 = smul.addr %s176, 32
        %s180 = sadd.s32 %s178, %s179
        %s181 = smul.addr %s180, 4
        %s182 = scalar_lea.vmem %s0, %s181
        %s183 = smul.u32 16, %s18
      $region28: #{cca_classifier_forward.3} parent=23 // pred_fallthru
        _
      // Predicated region
      $region29: #{cca_classifier_forward.3} parent=23 // pred_check
        %p184 = pneg %p72
      $region30: #{cca_classifier_forward.3} parent=23 // pred_check_branch
        %186 = sbr.rel (%p184) target = $region32
      $region31: #{cca_classifier_forward.3} parent=23 // pred_region
        %s187 = smul.u32 16, %s18
        %p188 = scmp.lt.s32.totalorder %s17, 1
        %s189 = scalar_select %p188, %s17, 1
        %p190 = scmp.lt.s32.totalorder %s187, 31
        %s191 = scalar_select %p190, %s187, 31
        %s192 = smul.addr %s189, 32
        %s193 = sadd.s32 %s191, %s192
        %s194 = smul.addr %s193, 4
        %s195 = scalar_lea.vmem %s1, %s194
        %s196 = smul.u32 16, %s18
      $region32: #{cca_classifier_forward.3} parent=23 // pred_fallthru
        _
    $region24: #{cca_classifier_forward.3} parent=5 // pred_fallthru
      _
    %p197 = scmp.le.s32.totalorder 1, %s10
    %p198 = scmp.lt.s32.totalorder %s10, 5
    %p199 = pnand %p197, %p198
    %p200 = pneg %p199
    // Predicated region
    $region33: #{cca_classifier_forward.3} parent=5 // pred_check
      _
    $region34: #{cca_classifier_forward.3} parent=5 // pred_check_branch
      %202 = sbr.rel (%p199) target = $region36
    $region35: #{cca_classifier_forward.3} parent=5 // pred_region
      %s203 = ssub.s32 %s10, 1
      %s204 = smul.u32 16, %s20
      %p205 = scmp.lt.s32.totalorder %s19, 1
      %s206 = scalar_select %p205, %s19, 1
      %p207 = scmp.lt.s32.totalorder %s204, 31
      %s208 = scalar_select %p207, %s204, 31
      %s209 = smul.addr %s206, 32
      %s210 = sadd.s32 %s208, %s209
      %s211 = smul.addr %s210, 4
      %s212 = scalar_lea.vmem %s0, %s211
      %p213 = pneg %p50
      %p214 = pneg %p47
      %s215 = smul.u32 16, %s20
      %p216 = scmp.lt.s32.totalorder %s19, 1
      %s217 = scalar_select %p216, %s19, 1
      %p218 = scmp.lt.s32.totalorder %s215, 31
      %s219 = scalar_select %p218, %s215, 31
      %s220 = smul.addr %s217, 32
      %s221 = sadd.s32 %s219, %s220
      %s222 = smul.addr %s221, 4
      %s223 = scalar_lea.vmem %s1, %s222
      %p224 = pneg %p78
      %p225 = pneg %p75
      %p226 = pneg %p99
      %p227 = pneg %p96
      %p228 = pneg %p120
      %p229 = pneg %p117
      %p230 = pneg %p146
      %p231 = pneg %p143
      %p232 = scmp.lt.s32.totalorder %s19, 1
      %s233 = scalar_select %p232, %s19, 1
      %s234 = smul.addr %s233, 16
      %s235 = smul.addr %s234, 8
      %s236 = scalar_lea.vmem %s4, %s235
      %s237 = smul.u32 16, %s20
      %p238 = scmp.lt.s32.totalorder %s19, 1
      %s239 = scalar_select %p238, %s19, 1
      %p240 = scmp.lt.s32.totalorder %s237, 31
      %s241 = scalar_select %p240, %s237, 31
      %s242 = smul.addr %s239, 32
      %s243 = sadd.s32 %s241, %s242
      %s244 = smul.addr %s243, 4
      %s245 = scalar_lea.vmem %s0, %s244
      %s246 = smul.u32 16, %s20
      %s247 = smul.u32 16, %s20
      %p248 = scmp.lt.s32.totalorder %s19, 1
      %s249 = scalar_select %p248, %s19, 1
      %p250 = scmp.lt.s32.totalorder %s247, 31
      %s251 = scalar_select %p250, %s247, 31
      %s252 = smul.addr %s249, 32
      %s253 = sadd.s32 %s251, %s252
      %s254 = smul.addr %s253, 4
      %s255 = scalar_lea.vmem %s1, %s254
      %s256 = smul.u32 16, %s20
      %p257 = scmp.lt.s32.totalorder %s19, 1
      %s258 = scalar_select %p257, %s19, 1
      %s259 = smul.addr %s258, 16
      %s260 = smul.addr %s259, 8
      %s261 = scalar_lea.vmem %s4, %s260
      %p263 = scmp.eq.s32.totalorder %s20, 0
      // Predicated region
      $region37: #{cca_classifier_forward.3} parent=35 // pred_check
        %p264 = pneg %p263
      $region38: #{cca_classifier_forward.3} parent=35 // pred_check_branch
        %266 = sbr.rel (%p264) target = $region40
      $region39: #{cca_classifier_forward.3} parent=35 // pred_region
        %267 = vst [vmem:[#allocation2] sm:$0xff] 0.0
        %268 = vst [vmem:[#allocation2 + $0x8] sm:$0xff] 0.0
        %269 = vst [vmem:[#allocation2 + $0x10] sm:$0xff] 0.0
        %270 = vst [vmem:[#allocation2 + $0x18] sm:$0xff] 0.0
        %271 = vst [vmem:[#allocation2 + $0x20] sm:$0xff] 0.0
        %272 = vst [vmem:[#allocation2 + $0x28] sm:$0xff] 0.0
        %273 = vst [vmem:[#allocation2 + $0x30] sm:$0xff] 0.0
        %274 = vst [vmem:[#allocation2 + $0x38] sm:$0xff] 0.0
        %275 = vst [vmem:[#allocation2 + $0x40] sm:$0xff] 0.0
        %276 = vst [vmem:[#allocation2 + $0x48] sm:$0xff] 0.0
        %277 = vst [vmem:[#allocation2 + $0x50] sm:$0xff] 0.0
        %278 = vst [vmem:[#allocation2 + $0x58] sm:$0xff] 0.0
        %279 = vst [vmem:[#allocation2 + $0x60] sm:$0xff] 0.0
        %280 = vst [vmem:[#allocation2 + $0x68] sm:$0xff] 0.0
        %281 = vst [vmem:[#allocation2 + $0x70] sm:$0xff] 0.0
        %282 = vst [vmem:[#allocation2 + $0x78] sm:$0xff] 0.0
      $region40: #{cca_classifier_forward.3} parent=35 // pred_fallthru
        _
      %v283 = vld [vmem:[%s245] sm:$0xf]
      %v284 = vld [vmem:[%s245 + $0x4] sm:$0xf]
      %v285 = vld [vmem:[%s245 + $0x8] sm:$0xf]
      %v286 = vld [vmem:[%s245 + $0xc] sm:$0xf]
      %v287 = vld [vmem:[%s245 + $0x10] sm:$0xf]
      %v288 = vld [vmem:[%s245 + $0x14] sm:$0xf]
      %v289 = vld [vmem:[%s245 + $0x18] sm:$0xf]
      %v290 = vld [vmem:[%s245 + $0x1c] sm:$0xf]
      %v291 = vld [vmem:[%s245 + $0x20] sm:$0xf]
      %v292 = vld [vmem:[%s245 + $0x24] sm:$0xf]
      %v293 = vld [vmem:[%s245 + $0x28] sm:$0xf]
      %v294 = vld [vmem:[%s245 + $0x2c] sm:$0xf]
      %v295 = vld [vmem:[%s245 + $0x30] sm:$0xf]
      %v296 = vld [vmem:[%s245 + $0x34] sm:$0xf]
      %v297 = vld [vmem:[%s245 + $0x38] sm:$0xf]
      %v298 = vld [vmem:[%s245 + $0x3c] sm:$0xf]
      %v299 = vld [vmem:[%s255] sm:$0xf]
      %v300 = vld [vmem:[%s255 + $0x4] sm:$0xf]
      %v301 = vld [vmem:[%s255 + $0x8] sm:$0xf]
      %v302 = vld [vmem:[%s255 + $0xc] sm:$0xf]
      %v303 = vld [vmem:[%s255 + $0x10] sm:$0xf]
      %v304 = vld [vmem:[%s255 + $0x14] sm:$0xf]
      %v305 = vld [vmem:[%s255 + $0x18] sm:$0xf]
      %v306 = vld [vmem:[%s255 + $0x1c] sm:$0xf]
      %v307 = vld [vmem:[%s255 + $0x20] sm:$0xf]
      %v308 = vld [vmem:[%s255 + $0x24] sm:$0xf]
      %v309 = vld [vmem:[%s255 + $0x28] sm:$0xf]
      %v310 = vld [vmem:[%s255 + $0x2c] sm:$0xf]
      %v311 = vld [vmem:[%s255 + $0x30] sm:$0xf]
      %v312 = vld [vmem:[%s255 + $0x34] sm:$0xf]
      %v313 = vld [vmem:[%s255 + $0x38] sm:$0xf]
      %v314 = vld [vmem:[%s255 + $0x3c] sm:$0xf]
      %v315 = vld [vmem:[%s2] sm:$0xf]
      %v316 = vld [vmem:[%s2 + $0x4] sm:$0xf]
      %v317 = vld [vmem:[%s2 + $0x8] sm:$0xf]
      %v318 = vld [vmem:[%s2 + $0xc] sm:$0xf]
      %v319 = vld [vmem:[%s2 + $0x10] sm:$0xf]
      %v320 = vld [vmem:[%s2 + $0x14] sm:$0xf]
      %v321 = vld [vmem:[%s2 + $0x18] sm:$0xf]
      %v322 = vld [vmem:[%s2 + $0x1c] sm:$0xf]
      %v323 = vld [vmem:[%s2 + $0x20] sm:$0xf]
      %v324 = vld [vmem:[%s2 + $0x24] sm:$0xf]
      %v325 = vld [vmem:[%s2 + $0x28] sm:$0xf]
      %v326 = vld [vmem:[%s2 + $0x2c] sm:$0xf]
      %v327 = vld [vmem:[%s2 + $0x30] sm:$0xf]
      %v328 = vld [vmem:[%s2 + $0x34] sm:$0xf]
      %v329 = vld [vmem:[%s2 + $0x38] sm:$0xf]
      %v330 = vld [vmem:[%s2 + $0x3c] sm:$0xf]
      %v331 = vld [vmem:[%s3] sm:$0x1]
      %v333 = vlaneseq
      %v334 = vshrl.u32 %v333, 7
      %v335 = vsub.s32 0, %v334
      %v336 = vrot.slane %v331, %v335
      %v354 = vunpack.c.l.b16 %v283
      %v355 = vunpack.c.l.b16 %v284
      %v356 = vunpack.c.l.b16 %v285
      %v357 = vunpack.c.l.b16 %v286
      %v358 = vunpack.c.l.b16 %v287
      %v359 = vunpack.c.l.b16 %v288
      %v360 = vunpack.c.l.b16 %v289
      %v361 = vunpack.c.l.b16 %v290
      %v362 = vunpack.c.l.b16 %v291
      %v363 = vunpack.c.l.b16 %v292
      %v364 = vunpack.c.l.b16 %v293
      %v365 = vunpack.c.l.b16 %v294
      %v366 = vunpack.c.l.b16 %v295
      %v367 = vunpack.c.l.b16 %v296
      %v368 = vunpack.c.l.b16 %v297
      %v369 = vunpack.c.l.b16 %v298
      %v370 = vpack.c.b16 %v355, %v354
      %v371 = vpack.c.b16 %v357, %v356
      %v372 = vpack.c.b16 %v359, %v358
      %v373 = vpack.c.b16 %v361, %v360
      %v374 = vpack.c.b16 %v363, %v362
      %v375 = vpack.c.b16 %v365, %v364
      %v376 = vpack.c.b16 %v367, %v366
      %v377 = vpack.c.b16 %v369, %v368
      %v402 = vunpack.c.l.b16 %v315
      %v403 = vunpack.c.l.b16 %v316
      %v404 = vunpack.c.l.b16 %v317
      %v405 = vunpack.c.l.b16 %v318
      %v406 = vunpack.c.l.b16 %v319
      %v407 = vunpack.c.l.b16 %v320
      %v408 = vunpack.c.l.b16 %v321
      %v409 = vunpack.c.l.b16 %v322
      %v410 = vunpack.c.l.b16 %v323
      %v411 = vunpack.c.l.b16 %v324
      %v412 = vunpack.c.l.b16 %v325
      %v413 = vunpack.c.l.b16 %v326
      %v414 = vunpack.c.l.b16 %v327
      %v415 = vunpack.c.l.b16 %v328
      %v416 = vunpack.c.l.b16 %v329
      %v417 = vunpack.c.l.b16 %v330
      %v418 = vpack.c.b16 %v403, %v402
      %v419 = vpack.c.b16 %v405, %v404
      %v420 = vpack.c.b16 %v407, %v406
      %v421 = vpack.c.b16 %v409, %v408
      %v422 = vpack.c.b16 %v411, %v410
      %v423 = vpack.c.b16 %v413, %v412
      %v424 = vpack.c.b16 %v415, %v414
      %v425 = vpack.c.b16 %v417, %v416
      %434 = vmatprep.subr.bf16.mxu0 0
      %435 = vmatpush1.bf16.msra.mxu0 %v418
      %436 = vmatprep.subr.bf16.mxu0 0
      %437 = vmatpush1.bf16.msra.mxu0 %v419
      %438 = vmatprep.subr.bf16.mxu0 0
      %439 = vmatpush1.bf16.msra.mxu0 %v420
      %440 = vmatprep.subr.bf16.mxu0 0
      %441 = vmatpush1.bf16.msra.mxu0 %v421
      %442 = vmatprep.subr.bf16.mxu0 0
      %443 = vmatpush1.bf16.msra.mxu0 %v422
      %444 = vmatprep.subr.bf16.mxu0 0
      %445 = vmatpush1.bf16.msra.mxu0 %v423
      %446 = vmatprep.subr.bf16.mxu0 0
      %447 = vmatpush1.bf16.msra.mxu0 %v424
      %448 = vmatprep.subr.bf16.mxu0 0
      %449 = vmatpush1.bf16.msra.mxu0 %v425
      %450 = vmatprep.subr.bf16.mxu0 0
      %451 = vmatpush1.bf16.msra.mxu0 0
      %452 = vmatprep.subr.bf16.mxu0 0
      %453 = vmatpush1.bf16.msra.mxu0 0
      %454 = vmatprep.subr.bf16.mxu0 0
      %455 = vmatpush1.bf16.msra.mxu0 0
      %456 = vmatprep.subr.bf16.mxu0 0
      %457 = vmatpush1.bf16.msra.mxu0 0
      %458 = vmatprep.subr.bf16.mxu0 0
      %459 = vmatpush1.bf16.msra.mxu0 0
      %460 = vmatprep.subr.bf16.mxu0 0
      %461 = vmatpush1.bf16.msra.mxu0 0
      %462 = vmatprep.subr.bf16.mxu0 0
      %463 = vmatpush1.bf16.msra.mxu0 0
      %464 = vmatprep.subr.bf16.mxu0 0
      %465 = vmatpush1.bf16.msra.mxu0 0
      %466 = vmatprep.mubr.bf16.mxu0 0
      %467 = vmatmul.mubr.bf16.gmra.mrb[0].mxu0 %v370
      %v468 = vpop.f32.mrb[0].mxu0
      %v469 = vadd.f32 %v336, %v468
      %v470 = vpop.f32.mrb[0].mxu0
      %v471 = vpop.f32.mrb[0].mxu0
      %v472 = vadd.f32 %v336, %v471
      %v473 = vpop.f32.mrb[0].mxu0
      %474 = vmatprep.mubr.bf16.mxu0 0
      %475 = vmatmul.mubr.bf16.gmra.mrb[0].mxu0 %v371
      %v476 = vpop.f32.mrb[0].mxu0
      %v477 = vadd.f32 %v336, %v476
      %v478 = vpop.f32.mrb[0].mxu0
      %v479 = vpop.f32.mrb[0].mxu0
      %v480 = vadd.f32 %v336, %v479
      %v481 = vpop.f32.mrb[0].mxu0
      %482 = vmatprep.mubr.bf16.mxu0 0
      %483 = vmatmul.mubr.bf16.gmra.mrb[0].mxu0 %v372
      %v484 = vpop.f32.mrb[0].mxu0
      %v485 = vadd.f32 %v336, %v484
      %v486 = vpop.f32.mrb[0].mxu0
      %v487 = vpop.f32.mrb[0].mxu0
      %v488 = vadd.f32 %v336, %v487
      %v489 = vpop.f32.mrb[0].mxu0
      %490 = vmatprep.mubr.bf16.mxu0 0
      %491 = vmatmul.mubr.bf16.gmra.mrb[0].mxu0 %v373
      %v492 = vpop.f32.mrb[0].mxu0
      %v493 = vadd.f32 %v336, %v492
      %v494 = vpop.f32.mrb[0].mxu0
      %v495 = vpop.f32.mrb[0].mxu0
      %v496 = vadd.f32 %v336, %v495
      %v497 = vpop.f32.mrb[0].mxu0
      %498 = vmatprep.mubr.bf16.mxu0 0
      %499 = vmatmul.mubr.bf16.gmra.mrb[0].mxu0 %v374
      %v500 = vpop.f32.mrb[0].mxu0
      %v501 = vadd.f32 %v336, %v500
      %v502 = vpop.f32.mrb[0].mxu0
      %v503 = vpop.f32.mrb[0].mxu0
      %v504 = vadd.f32 %v336, %v503
      %v505 = vpop.f32.mrb[0].mxu0
      %506 = vmatprep.mubr.bf16.mxu0 0
      %507 = vmatmul.mubr.bf16.gmra.mrb[0].mxu0 %v375
      %v508 = vpop.f32.mrb[0].mxu0
      %v509 = vadd.f32 %v336, %v508
      %v510 = vpop.f32.mrb[0].mxu0
      %v511 = vpop.f32.mrb[0].mxu0
      %v512 = vadd.f32 %v336, %v511
      %v513 = vpop.f32.mrb[0].mxu0
      %514 = vmatprep.mubr.bf16.mxu0 0
      %515 = vmatmul.mubr.bf16.gmra.mrb[0].mxu0 %v376
      %v516 = vpop.f32.mrb[0].mxu0
      %v517 = vadd.f32 %v336, %v516
      %v518 = vpop.f32.mrb[0].mxu0
      %v519 = vpop.f32.mrb[0].mxu0
      %v520 = vadd.f32 %v336, %v519
      %v521 = vpop.f32.mrb[0].mxu0
      %522 = vmatprep.mubr.bf16.mxu0 0
      %523 = vmatmul.mubr.bf16.gmra.mrb[0].mxu0 %v377
      %v524 = vpop.f32.mrb[0].mxu0
      %v525 = vadd.f32 %v336, %v524
      %v526 = vpop.f32.mrb[0].mxu0
      %v527 = vpop.f32.mrb[0].mxu0
      %v528 = vadd.f32 %v336, %v527
      %v529 = vpop.f32.mrb[0].mxu0
      %530 = vdwg.mxu0
      %v531 = vld [vmem:[#allocation2] sm:$0xff]
      %v532 = vld [vmem:[#allocation2 + $0x8] sm:$0xff]
      %v533 = vld [vmem:[#allocation2 + $0x10] sm:$0xff]
      %v534 = vld [vmem:[#allocation2 + $0x18] sm:$0xff]
      %v535 = vld [vmem:[#allocation2 + $0x20] sm:$0xff]
      %v536 = vld [vmem:[#allocation2 + $0x28] sm:$0xff]
      %v537 = vld [vmem:[#allocation2 + $0x30] sm:$0xff]
      %v538 = vld [vmem:[#allocation2 + $0x38] sm:$0xff]
      %v539 = vld [vmem:[#allocation2 + $0x40] sm:$0xff]
      %v540 = vld [vmem:[#allocation2 + $0x48] sm:$0xff]
      %v541 = vld [vmem:[#allocation2 + $0x50] sm:$0xff]
      %v542 = vld [vmem:[#allocation2 + $0x58] sm:$0xff]
      %v543 = vld [vmem:[#allocation2 + $0x60] sm:$0xff]
      %v544 = vld [vmem:[#allocation2 + $0x68] sm:$0xff]
      %v545 = vld [vmem:[#allocation2 + $0x70] sm:$0xff]
      %v546 = vld [vmem:[#allocation2 + $0x78] sm:$0xff]
      %v547 = vpack.c.bf16 %v472, %v469
      %v548 = vpack.c.bf16 %v480, %v477
      %v549 = vpack.c.bf16 %v488, %v485
      %v550 = vpack.c.bf16 %v496, %v493
      %v551 = vpack.c.bf16 %v504, %v501
      %v552 = vpack.c.bf16 %v512, %v509
      %v553 = vpack.c.bf16 %v520, %v517
      %v554 = vpack.c.bf16 %v528, %v525
      %555 = vxpose.xlu0.c.b16.start [1/8] %v547, 128
      %556 = vxpose.xlu0.c.b16.cont [2/8] %v548, 128
      %557 = vxpose.xlu0.c.b16.cont [3/8] %v549, 128
      %558 = vxpose.xlu0.c.b16.cont [4/8] %v550, 128
      %559 = vxpose.xlu0.c.b16.cont [5/8] %v551, 128
      %560 = vxpose.xlu0.c.b16.cont [6/8] %v552, 128
      %561 = vxpose.xlu0.c.b16.cont [7/8] %v553, 128
      %562 = vxpose.xlu0.c.b16.end [8/8] %v554, 128
      %v563 = vpop.trf.xlu0
      %v564 = vpop.trf.xlu0
      %v565 = vpop.trf.xlu0
      %v566 = vpop.trf.xlu0
      %v567 = vpop.trf.xlu0
      %v568 = vpop.trf.xlu0
      %v569 = vpop.trf.xlu0
      %v570 = vpop.trf.xlu0
      %v587 = vunpack.c.l.b16 %v299
      %v588 = vunpack.c.l.b16 %v300
      %v589 = vunpack.c.l.b16 %v301
      %v590 = vunpack.c.l.b16 %v302
      %v591 = vunpack.c.l.b16 %v303
      %v592 = vunpack.c.l.b16 %v304
      %v593 = vunpack.c.l.b16 %v305
      %v594 = vunpack.c.l.b16 %v306
      %v595 = vunpack.c.l.b16 %v307
      %v596 = vunpack.c.l.b16 %v308
      %v597 = vunpack.c.l.b16 %v309
      %v598 = vunpack.c.l.b16 %v310
      %v599 = vunpack.c.l.b16 %v311
      %v600 = vunpack.c.l.b16 %v312
      %v601 = vunpack.c.l.b16 %v313
      %v602 = vunpack.c.l.b16 %v314
      %v603 = vpack.c.b16 %v588, %v587
      %v604 = vpack.c.b16 %v590, %v589
      %v605 = vpack.c.b16 %v592, %v591
      %v606 = vpack.c.b16 %v594, %v593
      %v607 = vpack.c.b16 %v596, %v595
      %v608 = vpack.c.b16 %v598, %v597
      %v609 = vpack.c.b16 %v600, %v599
      %v610 = vpack.c.b16 %v602, %v601
      %619 = vmatprep.subr.bf16.mxu0 0
      %620 = vmatpush1.bf16.msra.mxu0 %v603
      %621 = vmatprep.subr.bf16.mxu0 0
      %622 = vmatpush1.bf16.msra.mxu0 %v604
      %623 = vmatprep.subr.bf16.mxu0 0
      %624 = vmatpush1.bf16.msra.mxu0 %v605
      %625 = vmatprep.subr.bf16.mxu0 0
      %626 = vmatpush1.bf16.msra.mxu0 %v606
      %627 = vmatprep.subr.bf16.mxu0 0
      %628 = vmatpush1.bf16.msra.mxu0 %v607
      %629 = vmatprep.subr.bf16.mxu0 0
      %630 = vmatpush1.bf16.msra.mxu0 %v608
      %631 = vmatprep.subr.bf16.mxu0 0
      %632 = vmatpush1.bf16.msra.mxu0 %v609
      %633 = vmatprep.subr.bf16.mxu0 0
      %634 = vmatpush1.bf16.msra.mxu0 %v610
      %635 = vmatprep.subr.bf16.mxu0 0
      %636 = vmatpush1.bf16.msra.mxu0 0
      %637 = vmatprep.subr.bf16.mxu0 0
      %638 = vmatpush1.bf16.msra.mxu0 0
      %639 = vmatprep.subr.bf16.mxu0 0
      %640 = vmatpush1.bf16.msra.mxu0 0
      %641 = vmatprep.subr.bf16.mxu0 0
      %642 = vmatpush1.bf16.msra.mxu0 0
      %643 = vmatprep.subr.bf16.mxu0 0
      %644 = vmatpush1.bf16.msra.mxu0 0
      %645 = vmatprep.subr.bf16.mxu0 0
      %646 = vmatpush1.bf16.msra.mxu0 0
      %647 = vmatprep.subr.bf16.mxu0 0
      %648 = vmatpush1.bf16.msra.mxu0 0
      %649 = vmatprep.subr.bf16.mxu0 0
      %650 = vmatpush1.bf16.msra.mxu0 0
      %651 = vmatprep.mubr.bf16.mxu0 0
      %652 = vmatmul.mubr.bf16.gmra.mrb[0].mxu0 %v563
      %v653 = vpop.f32.mrb[0].mxu0
      %v654 = vadd.f32 0.0, %v653
      %v655 = vpop.f32.mrb[0].mxu0
      %v656 = vpop.f32.mrb[0].mxu0
      %v657 = vadd.f32 0.0, %v656
      %v658 = vpop.f32.mrb[0].mxu0
      %659 = vmatprep.mubr.bf16.mxu0 0
      %660 = vmatmul.mubr.bf16.gmra.mrb[0].mxu0 %v564
      %v661 = vpop.f32.mrb[0].mxu0
      %v662 = vadd.f32 0.0, %v661
      %v663 = vpop.f32.mrb[0].mxu0
      %v664 = vpop.f32.mrb[0].mxu0
      %v665 = vadd.f32 0.0, %v664
      %v666 = vpop.f32.mrb[0].mxu0
      %667 = vmatprep.mubr.bf16.mxu0 0
      %668 = vmatmul.mubr.bf16.gmra.mrb[0].mxu0 %v565
      %v669 = vpop.f32.mrb[0].mxu0
      %v670 = vadd.f32 0.0, %v669
      %v671 = vpop.f32.mrb[0].mxu0
      %v672 = vpop.f32.mrb[0].mxu0
      %v673 = vadd.f32 0.0, %v672
      %v674 = vpop.f32.mrb[0].mxu0
      %675 = vmatprep.mubr.bf16.mxu0 0
      %676 = vmatmul.mubr.bf16.gmra.mrb[0].mxu0 %v566
      %v677 = vpop.f32.mrb[0].mxu0
      %v678 = vadd.f32 0.0, %v677
      %v679 = vpop.f32.mrb[0].mxu0
      %v680 = vpop.f32.mrb[0].mxu0
      %v681 = vadd.f32 0.0, %v680
      %v682 = vpop.f32.mrb[0].mxu0
      %683 = vmatprep.mubr.bf16.mxu0 0
      %684 = vmatmul.mubr.bf16.gmra.mrb[0].mxu0 %v567
      %v685 = vpop.f32.mrb[0].mxu0
      %v686 = vadd.f32 0.0, %v685
      %v687 = vpop.f32.mrb[0].mxu0
      %v688 = vpop.f32.mrb[0].mxu0
      %v689 = vadd.f32 0.0, %v688
      %v690 = vpop.f32.mrb[0].mxu0
      %691 = vmatprep.mubr.bf16.mxu0 0
      %692 = vmatmul.mubr.bf16.gmra.mrb[0].mxu0 %v568
      %v693 = vpop.f32.mrb[0].mxu0
      %v694 = vadd.f32 0.0, %v693
      %v695 = vpop.f32.mrb[0].mxu0
      %v696 = vpop.f32.mrb[0].mxu0
      %v697 = vadd.f32 0.0, %v696
      %v698 = vpop.f32.mrb[0].mxu0
      %699 = vmatprep.mubr.bf16.mxu0 0
      %700 = vmatmul.mubr.bf16.gmra.mrb[0].mxu0 %v569
      %v701 = vpop.f32.mrb[0].mxu0
      %v702 = vadd.f32 0.0, %v701
      %v703 = vpop.f32.mrb[0].mxu0
      %v704 = vpop.f32.mrb[0].mxu0
      %v705 = vadd.f32 0.0, %v704
      %v706 = vpop.f32.mrb[0].mxu0
      %707 = vmatprep.mubr.bf16.mxu0 0
      %708 = vmatmul.mubr.bf16.gmra.mrb[0].mxu0 %v570
      %v709 = vpop.f32.mrb[0].mxu0
      %v710 = vadd.f32 0.0, %v709
      %v711 = vpop.f32.mrb[0].mxu0
      %v712 = vpop.f32.mrb[0].mxu0
      %v713 = vadd.f32 0.0, %v712
      %v714 = vpop.f32.mrb[0].mxu0
      %715 = vdwg.mxu0
      %v716 = vadd.f32 %v531, %v654
      %v717 = vadd.f32 %v532, %v657
      %v718 = vadd.f32 %v533, %v662
      %v719 = vadd.f32 %v534, %v665
      %v720 = vadd.f32 %v535, %v670
      %v721 = vadd.f32 %v536, %v673
      %v722 = vadd.f32 %v537, %v678
      %v723 = vadd.f32 %v538, %v681
      %v724 = vadd.f32 %v539, %v686
      %v725 = vadd.f32 %v540, %v689
      %v726 = vadd.f32 %v541, %v694
      %v727 = vadd.f32 %v542, %v697
      %v728 = vadd.f32 %v543, %v702
      %v729 = vadd.f32 %v544, %v705
      %v730 = vadd.f32 %v545, %v710
      %v731 = vadd.f32 %v546, %v713
      %732 = vst [vmem:[#allocation2] sm:$0xff] %v716
      %733 = vst [vmem:[#allocation2 + $0x8] sm:$0xff] %v717
      %734 = vst [vmem:[#allocation2 + $0x10] sm:$0xff] %v718
      %735 = vst [vmem:[#allocation2 + $0x18] sm:$0xff] %v719
      %736 = vst [vmem:[#allocation2 + $0x20] sm:$0xff] %v720
      %737 = vst [vmem:[#allocation2 + $0x28] sm:$0xff] %v721
      %738 = vst [vmem:[#allocation2 + $0x30] sm:$0xff] %v722
      %739 = vst [vmem:[#allocation2 + $0x38] sm:$0xff] %v723
      %740 = vst [vmem:[#allocation2 + $0x40] sm:$0xff] %v724
      %741 = vst [vmem:[#allocation2 + $0x48] sm:$0xff] %v725
      %742 = vst [vmem:[#allocation2 + $0x50] sm:$0xff] %v726
      %743 = vst [vmem:[#allocation2 + $0x58] sm:$0xff] %v727
      %744 = vst [vmem:[#allocation2 + $0x60] sm:$0xff] %v728
      %745 = vst [vmem:[#allocation2 + $0x68] sm:$0xff] %v729
      %746 = vst [vmem:[#allocation2 + $0x70] sm:$0xff] %v730
      %747 = vst [vmem:[#allocation2 + $0x78] sm:$0xff] %v731
      %p748 = scmp.eq.s32.totalorder %s20, 1
      // Predicated region
      $region41: #{cca_classifier_forward.3} parent=35 // pred_check
        %p749 = pneg %p748
      $region42: #{cca_classifier_forward.3} parent=35 // pred_check_branch
        %751 = sbr.rel (%p749) target = $region44
      $region43: #{cca_classifier_forward.3} parent=35 // pred_region
        %v752 = vld [vmem:[#allocation2] sm:$0xff]
        %v753 = vld [vmem:[#allocation2 + $0x8] sm:$0xff]
        %v754 = vld [vmem:[#allocation2 + $0x10] sm:$0xff]
        %v755 = vld [vmem:[#allocation2 + $0x18] sm:$0xff]
        %v756 = vld [vmem:[#allocation2 + $0x20] sm:$0xff]
        %v757 = vld [vmem:[#allocation2 + $0x28] sm:$0xff]
        %v758 = vld [vmem:[#allocation2 + $0x30] sm:$0xff]
        %v759 = vld [vmem:[#allocation2 + $0x38] sm:$0xff]
        %v760 = vld [vmem:[#allocation2 + $0x40] sm:$0xff]
        %v761 = vld [vmem:[#allocation2 + $0x48] sm:$0xff]
        %v762 = vld [vmem:[#allocation2 + $0x50] sm:$0xff]
        %v763 = vld [vmem:[#allocation2 + $0x58] sm:$0xff]
        %v764 = vld [vmem:[#allocation2 + $0x60] sm:$0xff]
        %v765 = vld [vmem:[#allocation2 + $0x68] sm:$0xff]
        %v766 = vld [vmem:[#allocation2 + $0x70] sm:$0xff]
        %v767 = vld [vmem:[#allocation2 + $0x78] sm:$0xff]
        %v768 = vlaneseq
        %v769 = vand.u32 %v768, 127
        %vm770 = vcmp.lt.s32.totalorder %v769, 4
        %v771 = vsel %vm770, %v752, -1e+30
        %v772 = vsel %vm770, %v753, -1e+30
        %v773 = vsel %vm770, %v754, -1e+30
        %v774 = vsel %vm770, %v755, -1e+30
        %v775 = vsel %vm770, %v756, -1e+30
        %v776 = vsel %vm770, %v757, -1e+30
        %v777 = vsel %vm770, %v758, -1e+30
        %v778 = vsel %vm770, %v759, -1e+30
        %v779 = vsel %vm770, %v760, -1e+30
        %v780 = vsel %vm770, %v761, -1e+30
        %v781 = vsel %vm770, %v762, -1e+30
        %v782 = vsel %vm770, %v763, -1e+30
        %v783 = vsel %vm770, %v764, -1e+30
        %v784 = vsel %vm770, %v765, -1e+30
        %v785 = vsel %vm770, %v766, -1e+30
        %v786 = vsel %vm770, %v767, -1e+30
        %787 = vmax.xlane.f32.xlu0 %v771
        %v788 = vpop.xlane.xlu0 %787
        %789 = vmax.xlane.f32.xlu0 %v772
        %v790 = vpop.xlane.xlu0 %789
        %791 = vmax.xlane.f32.xlu0 %v773
        %v792 = vpop.xlane.xlu0 %791
        %793 = vmax.xlane.f32.xlu0 %v774
        %v794 = vpop.xlane.xlu0 %793
        %795 = vmax.xlane.f32.xlu0 %v775
        %v796 = vpop.xlane.xlu0 %795
        %797 = vmax.xlane.f32.xlu0 %v776
        %v798 = vpop.xlane.xlu0 %797
        %799 = vmax.xlane.f32.xlu0 %v777
        %v800 = vpop.xlane.xlu0 %799
        %801 = vmax.xlane.f32.xlu0 %v778
        %v802 = vpop.xlane.xlu0 %801
        %803 = vmax.xlane.f32.xlu0 %v779
        %v804 = vpop.xlane.xlu0 %803
        %805 = vmax.xlane.f32.xlu0 %v780
        %v806 = vpop.xlane.xlu0 %805
        %807 = vmax.xlane.f32.xlu0 %v781
        %v808 = vpop.xlane.xlu0 %807
        %809 = vmax.xlane.f32.xlu0 %v782
        %v810 = vpop.xlane.xlu0 %809
        %811 = vmax.xlane.f32.xlu0 %v783
        %v812 = vpop.xlane.xlu0 %811
        %813 = vmax.xlane.f32.xlu0 %v784
        %v814 = vpop.xlane.xlu0 %813
        %815 = vmax.xlane.f32.xlu0 %v785
        %v816 = vpop.xlane.xlu0 %815
        %817 = vmax.xlane.f32.xlu0 %v786
        %v818 = vpop.xlane.xlu0 %817
        %v819 = vsub.f32 %v771, %v788
        %v820 = vsub.f32 %v772, %v790
        %v821 = vsub.f32 %v773, %v792
        %v822 = vsub.f32 %v774, %v794
        %v823 = vsub.f32 %v775, %v796
        %v824 = vsub.f32 %v776, %v798
        %v825 = vsub.f32 %v777, %v800
        %v826 = vsub.f32 %v778, %v802
        %v827 = vsub.f32 %v779, %v804
        %v828 = vsub.f32 %v780, %v806
        %v829 = vsub.f32 %v781, %v808
        %v830 = vsub.f32 %v782, %v810
        %v831 = vsub.f32 %v783, %v812
        %v832 = vsub.f32 %v784, %v814
        %v833 = vsub.f32 %v785, %v816
        %v834 = vsub.f32 %v786, %v818
        %v835 = vmul.f32 %v819, 1.442695
        %v836 = vpow.pop %v835
        %v837 = vmul.f32 %v820, 1.442695
        %v838 = vpow.pop %v837
        %v839 = vmul.f32 %v821, 1.442695
        %v840 = vpow.pop %v839
        %v841 = vmul.f32 %v822, 1.442695
        %v842 = vpow.pop %v841
        %v843 = vmul.f32 %v823, 1.442695
        %v844 = vpow.pop %v843
        %v845 = vmul.f32 %v824, 1.442695
        %v846 = vpow.pop %v845
        %v847 = vmul.f32 %v825, 1.442695
        %v848 = vpow.pop %v847
        %v849 = vmul.f32 %v826, 1.442695
        %v850 = vpow.pop %v849
        %v851 = vmul.f32 %v827, 1.442695
        %v852 = vpow.pop %v851
        %v853 = vmul.f32 %v828, 1.442695
        %v854 = vpow.pop %v853
        %v855 = vmul.f32 %v829, 1.442695
        %v856 = vpow.pop %v855
        %v857 = vmul.f32 %v830, 1.442695
        %v858 = vpow.pop %v857
        %v859 = vmul.f32 %v831, 1.442695
        %v860 = vpow.pop %v859
        %v861 = vmul.f32 %v832, 1.442695
        %v862 = vpow.pop %v861
        %v863 = vmul.f32 %v833, 1.442695
        %v864 = vpow.pop %v863
        %v865 = vmul.f32 %v834, 1.442695
        %v866 = vpow.pop %v865
        %867 = vadd.xlane.f32.xlu0 %v836
        %v868 = vpop.xlane.xlu0 %867
        %869 = vadd.xlane.f32.xlu0 %v838
        %v870 = vpop.xlane.xlu0 %869
        %871 = vadd.xlane.f32.xlu0 %v840
        %v872 = vpop.xlane.xlu0 %871
        %873 = vadd.xlane.f32.xlu0 %v842
        %v874 = vpop.xlane.xlu0 %873
        %875 = vadd.xlane.f32.xlu0 %v844
        %v876 = vpop.xlane.xlu0 %875
        %877 = vadd.xlane.f32.xlu0 %v846
        %v878 = vpop.xlane.xlu0 %877
        %879 = vadd.xlane.f32.xlu0 %v848
        %v880 = vpop.xlane.xlu0 %879
        %881 = vadd.xlane.f32.xlu0 %v850
        %v882 = vpop.xlane.xlu0 %881
        %883 = vadd.xlane.f32.xlu0 %v852
        %v884 = vpop.xlane.xlu0 %883
        %885 = vadd.xlane.f32.xlu0 %v854
        %v886 = vpop.xlane.xlu0 %885
        %887 = vadd.xlane.f32.xlu0 %v856
        %v888 = vpop.xlane.xlu0 %887
        %889 = vadd.xlane.f32.xlu0 %v858
        %v890 = vpop.xlane.xlu0 %889
        %891 = vadd.xlane.f32.xlu0 %v860
        %v892 = vpop.xlane.xlu0 %891
        %893 = vadd.xlane.f32.xlu0 %v862
        %v894 = vpop.xlane.xlu0 %893
        %895 = vadd.xlane.f32.xlu0 %v864
        %v896 = vpop.xlane.xlu0 %895
        %897 = vadd.xlane.f32.xlu0 %v866
        %v898 = vpop.xlane.xlu0 %897
        %v899 = vrcp.pop %v868
        %v900 = vmul.f32 %v836, %v899
        %v901 = vrcp.pop %v870
        %v902 = vmul.f32 %v838, %v901
        %v903 = vrcp.pop %v872
        %v904 = vmul.f32 %v840, %v903
        %v905 = vrcp.pop %v874
        %v906 = vmul.f32 %v842, %v905
        %v907 = vrcp.pop %v876
        %v908 = vmul.f32 %v844, %v907
        %v909 = vrcp.pop %v878
        %v910 = vmul.f32 %v846, %v909
        %v911 = vrcp.pop %v880
        %v912 = vmul.f32 %v848, %v911
        %v913 = vrcp.pop %v882
        %v914 = vmul.f32 %v850, %v913
        %v915 = vrcp.pop %v884
        %v916 = vmul.f32 %v852, %v915
        %v917 = vrcp.pop %v886
        %v918 = vmul.f32 %v854, %v917
        %v919 = vrcp.pop %v888
        %v920 = vmul.f32 %v856, %v919
        %v921 = vrcp.pop %v890
        %v922 = vmul.f32 %v858, %v921
        %v923 = vrcp.pop %v892
        %v924 = vmul.f32 %v860, %v923
        %v925 = vrcp.pop %v894
        %v926 = vmul.f32 %v862, %v925
        %v927 = vrcp.pop %v896
        %v928 = vmul.f32 %v864, %v927
        %v929 = vrcp.pop %v898
        %v930 = vmul.f32 %v866, %v929
        %931 = vst [vmem:[%s261] sm:$0xff] %v900
        %932 = vst [vmem:[%s261 + $0x8] sm:$0xff] %v902
        %933 = vst [vmem:[%s261 + $0x10] sm:$0xff] %v904
        %934 = vst [vmem:[%s261 + $0x18] sm:$0xff] %v906
        %935 = vst [vmem:[%s261 + $0x20] sm:$0xff] %v908
        %936 = vst [vmem:[%s261 + $0x28] sm:$0xff] %v910
        %937 = vst [vmem:[%s261 + $0x30] sm:$0xff] %v912
        %938 = vst [vmem:[%s261 + $0x38] sm:$0xff] %v914
        %939 = vst [vmem:[%s261 + $0x40] sm:$0xff] %v916
        %940 = vst [vmem:[%s261 + $0x48] sm:$0xff] %v918
        %941 = vst [vmem:[%s261 + $0x50] sm:$0xff] %v920
        %942 = vst [vmem:[%s261 + $0x58] sm:$0xff] %v922
        %943 = vst [vmem:[%s261 + $0x60] sm:$0xff] %v924
        %944 = vst [vmem:[%s261 + $0x68] sm:$0xff] %v926
        %945 = vst [vmem:[%s261 + $0x70] sm:$0xff] %v928
        %946 = vst [vmem:[%s261 + $0x78] sm:$0xff] %v930
      $region44: #{cca_classifier_forward.3} parent=35 // pred_fallthru
        _
      %p947 = scmp.lt.s32.totalorder %s19, 1
      %s948 = scalar_select %p947, %s19, 1
      %s949 = smul.addr %s948, 16
      %s950 = smul.addr %s949, 8
      %s951 = scalar_lea.vmem %s4, %s950
      // Predicated region
      $region45: #{cca_classifier_forward.3} parent=35 // pred_check
        %p952 = pneg %p143
      $region46: #{cca_classifier_forward.3} parent=35 // pred_check_branch
        %954 = sbr.rel (%p952) target = $region48
      $region47: #{cca_classifier_forward.3} parent=35 // pred_region
        _
      $region48: #{cca_classifier_forward.3} parent=35 // pred_fallthru
        _
    $region36: #{cca_classifier_forward.3} parent=5 // pred_fallthru
      _
    %p955 = scmp.le.s32.totalorder 2, %s10
    // Predicated region
    $region49: #{cca_classifier_forward.3} parent=5 // pred_check
      %p956 = pneg %p955
    $region50: #{cca_classifier_forward.3} parent=5 // pred_check_branch
      %958 = sbr.rel (%p956) target = $region52
    $region51: #{cca_classifier_forward.3} parent=5 // pred_region
      %s959 = ssub.s32 %s10, 2
      // Predicated region
      $region53: #{cca_classifier_forward.3} parent=51 // pred_check
        %p960 = pneg %p149
      $region54: #{cca_classifier_forward.3} parent=51 // pred_check_branch
        %962 = sbr.rel (%p960) target = $region56
      $region55: #{cca_classifier_forward.3} parent=51 // pred_region
        %p963 = scmp.lt.s32.totalorder %s21, 1
        %s964 = scalar_select %p963, %s21, 1
        %s965 = smul.addr %s964, 16
        %s966 = smul.addr %s965, 8
        %s967 = scalar_lea.vmem %s4, %s966
      $region56: #{cca_classifier_forward.3} parent=51 // pred_fallthru
        _
    $region52: #{cca_classifier_forward.3} parent=5 // pred_fallthru
      _
  $region6: #{cca_classifier_forward.3} parent=0 // loop_footer
    %s14 = sadd.s32 1, %s10
  $region7: #{cca_classifier_forward.3} parent=0 // loop_footer_branch
    %9 = sbr.rel target = $region3
  $region8: #{cca_classifier_forward.3} parent=0 // loop_exit
    _

// kernel: cca_classifier_forward.4
$region0: #{cca_classifier_forward.4}
  #allocation0 [shape = 'u32[]', space=smem, size = 0x4, offset = 0x4, fixed_abs, tag = 'smem constant byte address 0x4 - core index']
  #allocation1 [shape = 'u32[144,128]{1,0:T(1,128)}', space=vmem, size = 0x12000, scoped, tag = 'internal scratch']
  %s0 = inlined_call_operand.vmem [shape: bf16[2,256,128], index: 0, kind: input, shape index: {}]
  %s1 = inlined_call_operand.vmem [shape: bf16[2,256,128], index: 1, kind: input, shape index: {}]
  %s2 = inlined_call_operand.vmem [shape: f32[2,128,128], index: 2, kind: input, shape index: {}]
  %s3 = inlined_call_operand.vmem [shape: bf16[128,128], index: 3, kind: input, shape index: {}]
  %s4 = inlined_call_operand.vmem [shape: bf16[128,128], index: 4, kind: input, shape index: {}]
  %s5 = inlined_call_operand.vmem [shape: bf16[128,128], index: 5, kind: input, shape index: {}]
  %s6 = inlined_call_operand.vmem [shape: f32[1,128], index: 6, kind: input, shape index: {}]
  %s7 = inlined_call_operand.vmem [shape: f32[1,128], index: 7, kind: input, shape index: {}]
  %s8 = inlined_call_operand.vmem [shape: bf16[2,256,128], index: 8, kind: output, shape index: {}]
  %s9 = sld [smem:[#allocation0]]
  $region65: #{cca_classifier_forward.4} parent=0
    _
  %s11 = ssub.s32 1, %s9
  %s12 = scalar_select 0, %s11, %s9
  loop: start=0, step=1, limit=6
  $region2: #{cca_classifier_forward.4} parent=0 // loop_pre_header
    _
  $region3: #{cca_classifier_forward.4} parent=0 // loop_header
    %s14 = sphi 0, %s18
    %p15 = scmp.ge.s32.totalorder %s14, 6
    %s21 = sphi 0, %s33
    %s22 = sphi 0, %s29
    %s23 = sphi 0, %s21
    %s24 = sphi 0, %s22
    %s25 = sphi 0, %s23
    %s26 = sphi 0, %s24
    %s38 = sphi 0, %s40
    %s41 = sphi 0, %s38
    %s42 = sphi 0, %s41
    %s58 = sphi 0, %s42
    %s66 = sphi 0, %s68
    %s69 = sphi 0, %s66
    %s70 = sphi 0, %s69
    %s86 = sphi 0, %s70
    %s92 = sphi 0, %s94
    %s95 = sphi 0, %s92
    %s96 = sphi 0, %s95
    %s112 = sphi 0, %s96
    %s116 = sphi 0, %s116
    %s118 = sphi 0, %s116
    %s119 = sphi 0, %s118
    %s133 = sphi 0, %s119
    %s137 = sphi 0, %s137
    %s139 = sphi 0, %s137
    %s140 = sphi 0, %s139
    %s154 = sphi 0, %s140
    %s158 = sphi 0, %s158
    %s160 = sphi 0, %s158
    %s161 = sphi 0, %s160
    %s175 = sphi 0, %s161
    %s179 = sphi 0, %s179
    %s181 = sphi 0, %s179
    %s182 = sphi 0, %s181
    %s196 = sphi 0, %s182
    %s200 = sphi 0, %s200
    %s202 = sphi 0, %s200
    %s203 = sphi 0, %s202
    %s217 = sphi 0, %s203
    %s225 = sphi 0, %s227
    %s228 = sphi 0, %s225
    %s229 = sphi 0, %s228
    %s245 = sphi 0, %s229
  $region4: #{cca_classifier_forward.4} parent=0 // loop_header_branch
    %17 = sbr.rel (%p15) target = $region8
  $region5: #{cca_classifier_forward.4} parent=0 // loop_body
    %s19 = ssub.s32 %s14, 1
    %s20 = ssub.s32 %s14, 2
    %s27 = sadd.s32 1, %s22
    %p28 = scmp.ge.s32.totalorder %s27, 2
    %s29 = scalar_select %p28, 0, %s27
    %s30 = sadd.s32 1, %s21
    %s31 = scalar_select %p28, %s30, %s21
    %p32 = scmp.ge.s32.totalorder %s31, 2
    %s33 = scalar_select %p32, 0, %s31
    %s34 = ssub.s32 %s21, %s33
    %s35 = ssub.s32 %s22, %s29
    %s36 = sor.u32 %s34, %s35
    %p37 = scmp.eq.s32.totalorder %s36, 0
    %s39 = sadd.s32 %s38, 1
    %s40 = scalar_select %p37, %s38, %s39
    %p43 = pneg %p37
    %p44 = scmp.eq.s32.totalorder %s14, 3
    %p45 = por %p43, %p44
    %p46 = scmp.ne.s32.totalorder %s38, %s41
    %p47 = scmp.eq.s32.totalorder %s14, 0
    %p48 = por %p46, %p47
    %p49 = scmp.ne.s32.totalorder %s38, %s41
    %p50 = scmp.eq.s32.totalorder %s19, 3
    %p51 = por %p49, %p50
    %p52 = scmp.ne.s32.totalorder %s41, %s42
    %p53 = scmp.eq.s32.totalorder %s19, 0
    %p54 = por %p52, %p53
    %p55 = scmp.ne.s32.totalorder %s41, %s42
    %p56 = scmp.eq.s32.totalorder %s20, 3
    %p57 = por %p55, %p56
    %p59 = scmp.ne.s32.totalorder %s42, %s58
    %p60 = scmp.eq.s32.totalorder %s20, 0
    %p61 = por %p59, %p60
    %s62 = ssub.s32 %s21, %s33
    %s63 = ssub.s32 %s22, %s29
    %s64 = sor.u32 %s62, %s63
    %p65 = scmp.eq.s32.totalorder %s64, 0
    %s67 = sadd.s32 %s66, 1
    %s68 = scalar_select %p65, %s66, %s67
    %p71 = pneg %p65
    %p72 = scmp.eq.s32.totalorder %s14, 3
    %p73 = por %p71, %p72
    %p74 = scmp.ne.s32.totalorder %s66, %s69
    %p75 = scmp.eq.s32.totalorder %s14, 0
    %p76 = por %p74, %p75
    %p77 = scmp.ne.s32.totalorder %s66, %s69
    %p78 = scmp.eq.s32.totalorder %s19, 3
    %p79 = por %p77, %p78
    %p80 = scmp.ne.s32.totalorder %s69, %s70
    %p81 = scmp.eq.s32.totalorder %s19, 0
    %p82 = por %p80, %p81
    %p83 = scmp.ne.s32.totalorder %s69, %s70
    %p84 = scmp.eq.s32.totalorder %s20, 3
    %p85 = por %p83, %p84
    %p87 = scmp.ne.s32.totalorder %s70, %s86
    %p88 = scmp.eq.s32.totalorder %s20, 0
    %p89 = por %p87, %p88
    %s90 = ssub.s32 %s21, %s33
    %p91 = scmp.eq.s32.totalorder %s90, 0
    %s93 = sadd.s32 %s92, 1
    %s94 = scalar_select %p91, %s92, %s93
    %p97 = pneg %p91
    %p98 = scmp.eq.s32.totalorder %s14, 3
    %p99 = por %p97, %p98
    %p100 = scmp.ne.s32.totalorder %s92, %s95
    %p101 = scmp.eq.s32.totalorder %s14, 0
    %p102 = por %p100, %p101
    %p103 = scmp.ne.s32.totalorder %s92, %s95
    %p104 = scmp.eq.s32.totalorder %s19, 3
    %p105 = por %p103, %p104
    %p106 = scmp.ne.s32.totalorder %s95, %s96
    %p107 = scmp.eq.s32.totalorder %s19, 0
    %p108 = por %p106, %p107
    %p109 = scmp.ne.s32.totalorder %s95, %s96
    %p110 = scmp.eq.s32.totalorder %s20, 3
    %p111 = por %p109, %p110
    %p113 = scmp.ne.s32.totalorder %s96, %s112
    %p114 = scmp.eq.s32.totalorder %s20, 0
    %p115 = por %p113, %p114
    %s117 = sadd.s32 %s116, 1
    %p120 = scmp.eq.s32.totalorder %s14, 3
    %p121 = scmp.ne.s32.totalorder %s116, %s118
    %p122 = scmp.eq.s32.totalorder %s14, 0
    %p123 = por %p121, %p122
    %p124 = scmp.ne.s32.totalorder %s116, %s118
    %p125 = scmp.eq.s32.totalorder %s19, 3
    %p126 = por %p124, %p125
    %p127 = scmp.ne.s32.totalorder %s118, %s119
    %p128 = scmp.eq.s32.totalorder %s19, 0
    %p129 = por %p127, %p128
    %p130 = scmp.ne.s32.totalorder %s118, %s119
    %p131 = scmp.eq.s32.totalorder %s20, 3
    %p132 = por %p130, %p131
    %p134 = scmp.ne.s32.totalorder %s119, %s133
    %p135 = scmp.eq.s32.totalorder %s20, 0
    %p136 = por %p134, %p135
    %s138 = sadd.s32 %s137, 1
    %p141 = scmp.eq.s32.totalorder %s14, 3
    %p142 = scmp.ne.s32.totalorder %s137, %s139
    %p143 = scmp.eq.s32.totalorder %s14, 0
    %p144 = por %p142, %p143
    %p145 = scmp.ne.s32.totalorder %s137, %s139
    %p146 = scmp.eq.s32.totalorder %s19, 3
    %p147 = por %p145, %p146
    %p148 = scmp.ne.s32.totalorder %s139, %s140
    %p149 = scmp.eq.s32.totalorder %s19, 0
    %p150 = por %p148, %p149
    %p151 = scmp.ne.s32.totalorder %s139, %s140
    %p152 = scmp.eq.s32.totalorder %s20, 3
    %p153 = por %p151, %p152
    %p155 = scmp.ne.s32.totalorder %s140, %s154
    %p156 = scmp.eq.s32.totalorder %s20, 0
    %p157 = por %p155, %p156
    %s159 = sadd.s32 %s158, 1
    %p162 = scmp.eq.s32.totalorder %s14, 3
    %p163 = scmp.ne.s32.totalorder %s158, %s160
    %p164 = scmp.eq.s32.totalorder %s14, 0
    %p165 = por %p163, %p164
    %p166 = scmp.ne.s32.totalorder %s158, %s160
    %p167 = scmp.eq.s32.totalorder %s19, 3
    %p168 = por %p166, %p167
    %p169 = scmp.ne.s32.totalorder %s160, %s161
    %p170 = scmp.eq.s32.totalorder %s19, 0
    %p171 = por %p169, %p170
    %p172 = scmp.ne.s32.totalorder %s160, %s161
    %p173 = scmp.eq.s32.totalorder %s20, 3
    %p174 = por %p172, %p173
    %p176 = scmp.ne.s32.totalorder %s161, %s175
    %p177 = scmp.eq.s32.totalorder %s20, 0
    %p178 = por %p176, %p177
    %s180 = sadd.s32 %s179, 1
    %p183 = scmp.eq.s32.totalorder %s14, 3
    %p184 = scmp.ne.s32.totalorder %s179, %s181
    %p185 = scmp.eq.s32.totalorder %s14, 0
    %p186 = por %p184, %p185
    %p187 = scmp.ne.s32.totalorder %s179, %s181
    %p188 = scmp.eq.s32.totalorder %s19, 3
    %p189 = por %p187, %p188
    %p190 = scmp.ne.s32.totalorder %s181, %s182
    %p191 = scmp.eq.s32.totalorder %s19, 0
    %p192 = por %p190, %p191
    %p193 = scmp.ne.s32.totalorder %s181, %s182
    %p194 = scmp.eq.s32.totalorder %s20, 3
    %p195 = por %p193, %p194
    %p197 = scmp.ne.s32.totalorder %s182, %s196
    %p198 = scmp.eq.s32.totalorder %s20, 0
    %p199 = por %p197, %p198
    %s201 = sadd.s32 %s200, 1
    %p204 = scmp.eq.s32.totalorder %s14, 3
    %p205 = scmp.ne.s32.totalorder %s200, %s202
    %p206 = scmp.eq.s32.totalorder %s14, 0
    %p207 = por %p205, %p206
    %p208 = scmp.ne.s32.totalorder %s200, %s202
    %p209 = scmp.eq.s32.totalorder %s19, 3
    %p210 = por %p208, %p209
    %p211 = scmp.ne.s32.totalorder %s202, %s203
    %p212 = scmp.eq.s32.totalorder %s19, 0
    %p213 = por %p211, %p212
    %p214 = scmp.ne.s32.totalorder %s202, %s203
    %p215 = scmp.eq.s32.totalorder %s20, 3
    %p216 = por %p214, %p215
    %p218 = scmp.ne.s32.totalorder %s203, %s217
    %p219 = scmp.eq.s32.totalorder %s20, 0
    %p220 = por %p218, %p219
    %s221 = ssub.s32 %s21, %s33
    %s222 = ssub.s32 %s22, %s29
    %s223 = sor.u32 %s221, %s222
    %p224 = scmp.eq.s32.totalorder %s223, 0
    %s226 = sadd.s32 %s225, 1
    %s227 = scalar_select %p224, %s225, %s226
    %p230 = pneg %p224
    %p231 = scmp.eq.s32.totalorder %s14, 3
    %p232 = por %p230, %p231
    %p233 = scmp.ne.s32.totalorder %s225, %s228
    %p234 = scmp.eq.s32.totalorder %s14, 0
    %p235 = por %p233, %p234
    %p236 = scmp.ne.s32.totalorder %s225, %s228
    %p237 = scmp.eq.s32.totalorder %s19, 3
    %p238 = por %p236, %p237
    %p239 = scmp.ne.s32.totalorder %s228, %s229
    %p240 = scmp.eq.s32.totalorder %s19, 0
    %p241 = por %p239, %p240
    %p242 = scmp.ne.s32.totalorder %s228, %s229
    %p243 = scmp.eq.s32.totalorder %s20, 3
    %p244 = por %p242, %p243
    %p246 = scmp.ne.s32.totalorder %s229, %s245
    %p247 = scmp.eq.s32.totalorder %s20, 0
    %p248 = por %p246, %p247
    %p249 = scmp.le.s32.totalorder 1, %s14
    %p250 = scmp.lt.s32.totalorder %s14, 5
    %p251 = pnand %p249, %p250
    %p252 = pneg %p251
    // Predicated region
    $region9: #{cca_classifier_forward.4} parent=5 // pred_check
      _
    $region10: #{cca_classifier_forward.4} parent=5 // pred_check_branch
      %254 = sbr.rel (%p251) target = $region12
    $region11: #{cca_classifier_forward.4} parent=5 // pred_region
      %s255 = ssub.s32 %s14, 1
      // Predicated region
      $region13: #{cca_classifier_forward.4} parent=11 // pred_check
        %p256 = pneg %p129
      $region14: #{cca_classifier_forward.4} parent=11 // pred_check_branch
        %258 = sbr.rel (%p256) target = $region16
      $region15: #{cca_classifier_forward.4} parent=11 // pred_region
        _
      $region16: #{cca_classifier_forward.4} parent=11 // pred_fallthru
        _
      // Predicated region
      $region17: #{cca_classifier_forward.4} parent=11 // pred_check
        %p259 = pneg %p150
      $region18: #{cca_classifier_forward.4} parent=11 // pred_check_branch
        %261 = sbr.rel (%p259) target = $region20
      $region19: #{cca_classifier_forward.4} parent=11 // pred_region
        _
      $region20: #{cca_classifier_forward.4} parent=11 // pred_fallthru
        _
      // Predicated region
      $region21: #{cca_classifier_forward.4} parent=11 // pred_check
        %p262 = pneg %p171
      $region22: #{cca_classifier_forward.4} parent=11 // pred_check_branch
        %264 = sbr.rel (%p262) target = $region24
      $region23: #{cca_classifier_forward.4} parent=11 // pred_region
        _
      $region24: #{cca_classifier_forward.4} parent=11 // pred_fallthru
        _
      // Predicated region
      $region25: #{cca_classifier_forward.4} parent=11 // pred_check
        %p265 = pneg %p192
      $region26: #{cca_classifier_forward.4} parent=11 // pred_check_branch
        %267 = sbr.rel (%p265) target = $region28
      $region27: #{cca_classifier_forward.4} parent=11 // pred_region
        _
      $region28: #{cca_classifier_forward.4} parent=11 // pred_fallthru
        _
      // Predicated region
      $region29: #{cca_classifier_forward.4} parent=11 // pred_check
        %p268 = pneg %p213
      $region30: #{cca_classifier_forward.4} parent=11 // pred_check_branch
        %270 = sbr.rel (%p268) target = $region32
      $region31: #{cca_classifier_forward.4} parent=11 // pred_region
        _
      $region32: #{cca_classifier_forward.4} parent=11 // pred_fallthru
        _
    $region12: #{cca_classifier_forward.4} parent=5 // pred_fallthru
      _
    %p271 = scmp.lt.s32.totalorder %s14, 4
    // Predicated region
    $region33: #{cca_classifier_forward.4} parent=5 // pred_check
      %p272 = pneg %p271
    $region34: #{cca_classifier_forward.4} parent=5 // pred_check_branch
      %274 = sbr.rel (%p272) target = $region36
    $region35: #{cca_classifier_forward.4} parent=5 // pred_region
      // Predicated region
      $region37: #{cca_classifier_forward.4} parent=35 // pred_check
        %p275 = pneg %p48
      $region38: #{cca_classifier_forward.4} parent=35 // pred_check_branch
        %277 = sbr.rel (%p275) target = $region40
      $region39: #{cca_classifier_forward.4} parent=35 // pred_region
        %s278 = smul.u32 16, %s22
        %p279 = scmp.lt.s32.totalorder %s21, 1
        %s280 = scalar_select %p279, %s21, 1
        %p281 = scmp.lt.s32.totalorder %s278, 31
        %s282 = scalar_select %p281, %s278, 31
        %s283 = smul.addr %s280, 32
        %s284 = sadd.s32 %s282, %s283
        %s285 = smul.addr %s284, 4
        %s286 = scalar_lea.vmem %s0, %s285
        %s287 = smul.u32 16, %s22
      $region40: #{cca_classifier_forward.4} parent=35 // pred_fallthru
        _
      // Predicated region
      $region41: #{cca_classifier_forward.4} parent=35 // pred_check
        %p288 = pneg %p76
      $region42: #{cca_classifier_forward.4} parent=35 // pred_check_branch
        %290 = sbr.rel (%p288) target = $region44
      $region43: #{cca_classifier_forward.4} parent=35 // pred_region
        %s291 = smul.u32 16, %s22
        %p292 = scmp.lt.s32.totalorder %s21, 1
        %s293 = scalar_select %p292, %s21, 1
        %p294 = scmp.lt.s32.totalorder %s291, 31
        %s295 = scalar_select %p294, %s291, 31
        %s296 = smul.addr %s293, 32
        %s297 = sadd.s32 %s295, %s296
        %s298 = smul.addr %s297, 4
        %s299 = scalar_lea.vmem %s1, %s298
        %s300 = smul.u32 16, %s22
      $region44: #{cca_classifier_forward.4} parent=35 // pred_fallthru
        _
      // Predicated region
      $region45: #{cca_classifier_forward.4} parent=35 // pred_check
        %p301 = pneg %p102
      $region46: #{cca_classifier_forward.4} parent=35 // pred_check_branch
        %303 = sbr.rel (%p301) target = $region48
      $region47: #{cca_classifier_forward.4} parent=35 // pred_region
        %p304 = scmp.lt.s32.totalorder %s21, 1
        %s305 = scalar_select %p304, %s21, 1
        %s306 = smul.addr %s305, 16
        %s307 = smul.addr %s306, 8
        %s308 = scalar_lea.vmem %s2, %s307
      $region48: #{cca_classifier_forward.4} parent=35 // pred_fallthru
        _
    $region36: #{cca_classifier_forward.4} parent=5 // pred_fallthru
      _
    %p309 = scmp.le.s32.totalorder 1, %s14
    %p310 = scmp.lt.s32.totalorder %s14, 5
    %p311 = pnand %p309, %p310
    %p312 = pneg %p311
    // Predicated region
    $region49: #{cca_classifier_forward.4} parent=5 // pred_check
      _
    $region50: #{cca_classifier_forward.4} parent=5 // pred_check_branch
      %314 = sbr.rel (%p311) target = $region52
    $region51: #{cca_classifier_forward.4} parent=5 // pred_region
      %s315 = ssub.s32 %s14, 1
      %s316 = smul.u32 16, %s24
      %p317 = scmp.lt.s32.totalorder %s23, 1
      %s318 = scalar_select %p317, %s23, 1
      %p319 = scmp.lt.s32.totalorder %s316, 31
      %s320 = scalar_select %p319, %s316, 31
      %s321 = smul.addr %s318, 32
      %s322 = sadd.s32 %s320, %s321
      %s323 = smul.addr %s322, 4
      %s324 = scalar_lea.vmem %s0, %s323
      %p325 = pneg %p54
      %p326 = pneg %p51
      %s327 = smul.u32 16, %s24
      %p328 = scmp.lt.s32.totalorder %s23, 1
      %s329 = scalar_select %p328, %s23, 1
      %p330 = scmp.lt.s32.totalorder %s327, 31
      %s331 = scalar_select %p330, %s327, 31
      %s332 = smul.addr %s329, 32
      %s333 = sadd.s32 %s331, %s332
      %s334 = smul.addr %s333, 4
      %s335 = scalar_lea.vmem %s1, %s334
      %p336 = pneg %p82
      %p337 = pneg %p79
      %p338 = scmp.lt.s32.totalorder %s23, 1
      %s339 = scalar_select %p338, %s23, 1
      %s340 = smul.addr %s339, 16
      %s341 = smul.addr %s340, 8
      %s342 = scalar_lea.vmem %s2, %s341
      %p343 = pneg %p108
      %p344 = pneg %p105
      %p345 = pneg %p129
      %p346 = pneg %p126
      %p347 = pneg %p150
      %p348 = pneg %p147
      %p349 = pneg %p171
      %p350 = pneg %p168
      %p351 = pneg %p192
      %p352 = pneg %p189
      %p353 = pneg %p213
      %p354 = pneg %p210
      %p355 = pneg %p241
      %p356 = pneg %p238
      %s357 = smul.u32 16, %s24
      %p358 = scmp.lt.s32.totalorder %s23, 1
      %s359 = scalar_select %p358, %s23, 1
      %p360 = scmp.lt.s32.totalorder %s357, 31
      %s361 = scalar_select %p360, %s357, 31
      %s362 = smul.addr %s359, 32
      %s363 = sadd.s32 %s361, %s362
      %s364 = smul.addr %s363, 4
      %s365 = scalar_lea.vmem %s8, %s364
      %s366 = smul.u32 16, %s24
      %p367 = scmp.lt.s32.totalorder %s23, 1
      %s368 = scalar_select %p367, %s23, 1
      %p369 = scmp.lt.s32.totalorder %s366, 31
      %s370 = scalar_select %p369, %s366, 31
      %s371 = smul.addr %s368, 32
      %s372 = sadd.s32 %s370, %s371
      %s373 = smul.addr %s372, 4
      %s374 = scalar_lea.vmem %s0, %s373
      %s375 = smul.u32 16, %s24
      %s376 = smul.u32 16, %s24
      %p377 = scmp.lt.s32.totalorder %s23, 1
      %s378 = scalar_select %p377, %s23, 1
      %p379 = scmp.lt.s32.totalorder %s376, 31
      %s380 = scalar_select %p379, %s376, 31
      %s381 = smul.addr %s378, 32
      %s382 = sadd.s32 %s380, %s381
      %s383 = smul.addr %s382, 4
      %s384 = scalar_lea.vmem %s1, %s383
      %s385 = smul.u32 16, %s24
      %p386 = scmp.lt.s32.totalorder %s23, 1
      %s387 = scalar_select %p386, %s23, 1
      %s388 = smul.addr %s387, 16
      %s389 = smul.addr %s388, 8
      %s390 = scalar_lea.vmem %s2, %s389
      %s391 = smul.u32 16, %s24
      %p392 = scmp.lt.s32.totalorder %s23, 1
      %s393 = scalar_select %p392, %s23, 1
      %p394 = scmp.lt.s32.totalorder %s391, 31
      %s395 = scalar_select %p394, %s391, 31
      %s396 = smul.addr %s393, 32
      %s397 = sadd.s32 %s395, %s396
      %s398 = smul.addr %s397, 4
      %s399 = scalar_lea.vmem %s8, %s398
      %s400 = smul.u32 16, %s24
      %v402 = vld [vmem:[%s374] sm:$0xf]
      %v403 = vld [vmem:[%s374 + $0x4] sm:$0xf]
      %v404 = vld [vmem:[%s374 + $0x8] sm:$0xf]
      %v405 = vld [vmem:[%s374 + $0xc] sm:$0xf]
      %v406 = vld [vmem:[%s374 + $0x10] sm:$0xf]
      %v407 = vld [vmem:[%s374 + $0x14] sm:$0xf]
      %v408 = vld [vmem:[%s374 + $0x18] sm:$0xf]
      %v409 = vld [vmem:[%s374 + $0x1c] sm:$0xf]
      %v410 = vld [vmem:[%s374 + $0x20] sm:$0xf]
      %v411 = vld [vmem:[%s374 + $0x24] sm:$0xf]
      %v412 = vld [vmem:[%s374 + $0x28] sm:$0xf]
      %v413 = vld [vmem:[%s374 + $0x2c] sm:$0xf]
      %v414 = vld [vmem:[%s374 + $0x30] sm:$0xf]
      %v415 = vld [vmem:[%s374 + $0x34] sm:$0xf]
      %v416 = vld [vmem:[%s374 + $0x38] sm:$0xf]
      %v417 = vld [vmem:[%s374 + $0x3c] sm:$0xf]
      %v418 = vld [vmem:[%s384] sm:$0xf]
      %v419 = vld [vmem:[%s384 + $0x4] sm:$0xf]
      %v420 = vld [vmem:[%s384 + $0x8] sm:$0xf]
      %v421 = vld [vmem:[%s384 + $0xc] sm:$0xf]
      %v422 = vld [vmem:[%s384 + $0x10] sm:$0xf]
      %v423 = vld [vmem:[%s384 + $0x14] sm:$0xf]
      %v424 = vld [vmem:[%s384 + $0x18] sm:$0xf]
      %v425 = vld [vmem:[%s384 + $0x1c] sm:$0xf]
      %v426 = vld [vmem:[%s384 + $0x20] sm:$0xf]
      %v427 = vld [vmem:[%s384 + $0x24] sm:$0xf]
      %v428 = vld [vmem:[%s384 + $0x28] sm:$0xf]
      %v429 = vld [vmem:[%s384 + $0x2c] sm:$0xf]
      %v430 = vld [vmem:[%s384 + $0x30] sm:$0xf]
      %v431 = vld [vmem:[%s384 + $0x34] sm:$0xf]
      %v432 = vld [vmem:[%s384 + $0x38] sm:$0xf]
      %v433 = vld [vmem:[%s384 + $0x3c] sm:$0xf]
      %v434 = vld [vmem:[%s390] sm:$0xff]
      %v435 = vld [vmem:[%s390 + $0x8] sm:$0xff]
      %v436 = vld [vmem:[%s390 + $0x10] sm:$0xff]
      %v437 = vld [vmem:[%s390 + $0x18] sm:$0xff]
      %v438 = vld [vmem:[%s390 + $0x20] sm:$0xff]
      %v439 = vld [vmem:[%s390 + $0x28] sm:$0xff]
      %v440 = vld [vmem:[%s390 + $0x30] sm:$0xff]
      %v441 = vld [vmem:[%s390 + $0x38] sm:$0xff]
      %v442 = vld [vmem:[%s390 + $0x40] sm:$0xff]
      %v443 = vld [vmem:[%s390 + $0x48] sm:$0xff]
      %v444 = vld [vmem:[%s390 + $0x50] sm:$0xff]
      %v445 = vld [vmem:[%s390 + $0x58] sm:$0xff]
      %v446 = vld [vmem:[%s390 + $0x60] sm:$0xff]
      %v447 = vld [vmem:[%s390 + $0x68] sm:$0xff]
      %v448 = vld [vmem:[%s390 + $0x70] sm:$0xff]
      %v449 = vld [vmem:[%s390 + $0x78] sm:$0xff]
      %v450 = vpack.c.bf16 %v435, %v434
      %v451 = vpack.c.bf16 %v437, %v436
      %v452 = vpack.c.bf16 %v439, %v438
      %v453 = vpack.c.bf16 %v441, %v440
      %v454 = vpack.c.bf16 %v443, %v442
      %v455 = vpack.c.bf16 %v445, %v444
      %v456 = vpack.c.bf16 %v447, %v446
      %v457 = vpack.c.bf16 %v449, %v448
      %v474 = vunpack.c.l.b16 %v418
      %v475 = vunpack.c.l.b16 %v419
      %v476 = vunpack.c.l.b16 %v420
      %v477 = vunpack.c.l.b16 %v421
      %v478 = vunpack.c.l.b16 %v422
      %v479 = vunpack.c.l.b16 %v423
      %v480 = vunpack.c.l.b16 %v424
      %v481 = vunpack.c.l.b16 %v425
      %v482 = vunpack.c.l.b16 %v426
      %v483 = vunpack.c.l.b16 %v427
      %v484 = vunpack.c.l.b16 %v428
      %v485 = vunpack.c.l.b16 %v429
      %v486 = vunpack.c.l.b16 %v430
      %v487 = vunpack.c.l.b16 %v431
      %v488 = vunpack.c.l.b16 %v432
      %v489 = vunpack.c.l.b16 %v433
      %v490 = vpack.c.b16 %v475, %v474
      %v491 = vpack.c.b16 %v477, %v476
      %v492 = vpack.c.b16 %v479, %v478
      %v493 = vpack.c.b16 %v481, %v480
      %v494 = vpack.c.b16 %v483, %v482
      %v495 = vpack.c.b16 %v485, %v484
      %v496 = vpack.c.b16 %v487, %v486
      %v497 = vpack.c.b16 %v489, %v488
      %506 = vmatprep.subr.bf16.mxu0 0
      %507 = vmatpush1.bf16.xpose.msra.mxu0 %v450
      %508 = vmatprep.subr.bf16.mxu0 0
      %509 = vmatpush1.bf16.xpose.msra.mxu0 %v451
      %510 = vmatprep.subr.bf16.mxu0 0
      %511 = vmatpush1.bf16.xpose.msra.mxu0 %v452
      %512 = vmatprep.subr.bf16.mxu0 0
      %513 = vmatpush1.bf16.xpose.msra.mxu0 %v453
      %514 = vmatprep.subr.bf16.mxu0 0
      %515 = vmatpush1.bf16.xpose.msra.mxu0 %v454
      %516 = vmatprep.subr.bf16.mxu0 0
      %517 = vmatpush1.bf16.xpose.msra.mxu0 %v455
      %518 = vmatprep.subr.bf16.mxu0 0
      %519 = vmatpush1.bf16.xpose.msra.mxu0 %v456
      %520 = vmatprep.subr.bf16.mxu0 0
      %521 = vmatpush1.bf16.xpose.msra.mxu0 %v457
      %522 = vmatprep.subr.bf16.mxu0 0
      %523 = vmatpush1.bf16.xpose.msra.mxu0 0
      %524 = vmatprep.subr.bf16.mxu0 0
      %525 = vmatpush1.bf16.xpose.msra.mxu0 0
      %526 = vmatprep.subr.bf16.mxu0 0
      %527 = vmatpush1.bf16.xpose.msra.mxu0 0
      %528 = vmatprep.subr.bf16.mxu0 0
      %529 = vmatpush1.bf16.xpose.msra.mxu0 0
      %530 = vmatprep.subr.bf16.mxu0 0
      %531 = vmatpush1.bf16.xpose.msra.mxu0 0
      %532 = vmatprep.subr.bf16.mxu0 0
      %533 = vmatpush1.bf16.xpose.msra.mxu0 0
      %534 = vmatprep.subr.bf16.mxu0 0
      %535 = vmatpush1.bf16.xpose.msra.mxu0 0
      %536 = vmatprep.subr.bf16.mxu0 0
      %537 = vmatpush1.bf16.xpose.msra.mxu0 0
      %538 = vmatprep.mubr.bf16.mxu0 0
      %539 = vmatmul.mubr.bf16.gmra.mrb[0].mxu0 %v490
      %v540 = vpop.f32.mrb[0].mxu0
      %v541 = vadd.f32 0.0, %v540
      %v542 = vpop.f32.mrb[0].mxu0
      %v543 = vpop.f32.mrb[0].mxu0
      %v544 = vadd.f32 0.0, %v543
      %v545 = vpop.f32.mrb[0].mxu0
      %546 = vmatprep.mubr.bf16.mxu0 0
      %547 = vmatmul.mubr.bf16.gmra.mrb[0].mxu0 %v491
      %v548 = vpop.f32.mrb[0].mxu0
      %v549 = vadd.f32 0.0, %v548
      %v550 = vpop.f32.mrb[0].mxu0
      %v551 = vpop.f32.mrb[0].mxu0
      %v552 = vadd.f32 0.0, %v551
      %v553 = vpop.f32.mrb[0].mxu0
      %554 = vmatprep.mubr.bf16.mxu0 0
      %555 = vmatmul.mubr.bf16.gmra.mrb[0].mxu0 %v492
      %v556 = vpop.f32.mrb[0].mxu0
      %v557 = vadd.f32 0.0, %v556
      %v558 = vpop.f32.mrb[0].mxu0
      %v559 = vpop.f32.mrb[0].mxu0
      %v560 = vadd.f32 0.0, %v559
      %v561 = vpop.f32.mrb[0].mxu0
      %562 = vmatprep.mubr.bf16.mxu0 0
      %563 = vmatmul.mubr.bf16.gmra.mrb[0].mxu0 %v493
      %v564 = vpop.f32.mrb[0].mxu0
      %v565 = vadd.f32 0.0, %v564
      %v566 = vpop.f32.mrb[0].mxu0
      %v567 = vpop.f32.mrb[0].mxu0
      %v568 = vadd.f32 0.0, %v567
      %v569 = vpop.f32.mrb[0].mxu0
      %570 = vmatprep.mubr.bf16.mxu0 0
      %571 = vmatmul.mubr.bf16.gmra.mrb[0].mxu0 %v494
      %v572 = vpop.f32.mrb[0].mxu0
      %v573 = vadd.f32 0.0, %v572
      %v574 = vpop.f32.mrb[0].mxu0
      %v575 = vpop.f32.mrb[0].mxu0
      %v576 = vadd.f32 0.0, %v575
      %v577 = vpop.f32.mrb[0].mxu0
      %578 = vmatprep.mubr.bf16.mxu0 0
      %579 = vmatmul.mubr.bf16.gmra.mrb[0].mxu0 %v495
      %v580 = vpop.f32.mrb[0].mxu0
      %v581 = vadd.f32 0.0, %v580
      %v582 = vpop.f32.mrb[0].mxu0
      %v583 = vpop.f32.mrb[0].mxu0
      %v584 = vadd.f32 0.0, %v583
      %v585 = vpop.f32.mrb[0].mxu0
      %586 = vmatprep.mubr.bf16.mxu0 0
      %587 = vmatmul.mubr.bf16.gmra.mrb[0].mxu0 %v496
      %v588 = vpop.f32.mrb[0].mxu0
      %v589 = vadd.f32 0.0, %v588
      %v590 = vpop.f32.mrb[0].mxu0
      %v591 = vpop.f32.mrb[0].mxu0
      %v592 = vadd.f32 0.0, %v591
      %v593 = vpop.f32.mrb[0].mxu0
      %594 = vmatprep.mubr.bf16.mxu0 0
      %595 = vmatmul.mubr.bf16.gmra.mrb[0].mxu0 %v497
      %v596 = vpop.f32.mrb[0].mxu0
      %v597 = vadd.f32 0.0, %v596
      %v598 = vpop.f32.mrb[0].mxu0
      %v599 = vpop.f32.mrb[0].mxu0
      %v600 = vadd.f32 0.0, %v599
      %v601 = vpop.f32.mrb[0].mxu0
      %602 = vdwg.mxu0
      %v603 = vpack.c.bf16 %v544, %v541
      %v604 = vpack.c.bf16 %v552, %v549
      %v605 = vpack.c.bf16 %v560, %v557
      %v606 = vpack.c.bf16 %v568, %v565
      %v607 = vpack.c.bf16 %v576, %v573
      %v608 = vpack.c.bf16 %v584, %v581
      %v609 = vpack.c.bf16 %v592, %v589
      %v610 = vpack.c.bf16 %v600, %v597
      %v611 = vld [vmem:[%s3] sm:$0xf]
      %v612 = vld [vmem:[%s3 + $0x4] sm:$0xf]
      %v613 = vld [vmem:[%s3 + $0x8] sm:$0xf]
      %v614 = vld [vmem:[%s3 + $0xc] sm:$0xf]
      %v615 = vld [vmem:[%s3 + $0x10] sm:$0xf]
      %v616 = vld [vmem:[%s3 + $0x14] sm:$0xf]
      %v617 = vld [vmem:[%s3 + $0x18] sm:$0xf]
      %v618 = vld [vmem:[%s3 + $0x1c] sm:$0xf]
      %v619 = vld [vmem:[%s3 + $0x20] sm:$0xf]
      %v620 = vld [vmem:[%s3 + $0x24] sm:$0xf]
      %v621 = vld [vmem:[%s3 + $0x28] sm:$0xf]
      %v622 = vld [vmem:[%s3 + $0x2c] sm:$0xf]
      %v623 = vld [vmem:[%s3 + $0x30] sm:$0xf]
      %v624 = vld [vmem:[%s3 + $0x34] sm:$0xf]
      %v625 = vld [vmem:[%s3 + $0x38] sm:$0xf]
      %v626 = vld [vmem:[%s3 + $0x3c] sm:$0xf]
      %v627 = vld [vmem:[%s6] sm:$0x1]
      %v629 = vlaneseq
      %v630 = vshrl.u32 %v629, 7
      %v631 = vsub.s32 0, %v630
      %v632 = vrot.slane %v627, %v631
      %v650 = vunpack.c.l.b16 %v611
      %v651 = vunpack.c.l.b16 %v612
      %v652 = vunpack.c.l.b16 %v613
      %v653 = vunpack.c.l.b16 %v614
      %v654 = vunpack.c.l.b16 %v615
      %v655 = vunpack.c.l.b16 %v616
      %v656 = vunpack.c.l.b16 %v617
      %v657 = vunpack.c.l.b16 %v618
      %v658 = vunpack.c.l.b16 %v619
      %v659 = vunpack.c.l.b16 %v620
      %v660 = vunpack.c.l.b16 %v621
      %v661 = vunpack.c.l.b16 %v622
      %v662 = vunpack.c.l.b16 %v623
      %v663 = vunpack.c.l.b16 %v624
      %v664 = vunpack.c.l.b16 %v625
      %v665 = vunpack.c.l.b16 %v626
      %v666 = vpack.c.b16 %v651, %v650
      %v667 = vpack.c.b16 %v653, %v652
      %v668 = vpack.c.b16 %v655, %v654
      %v669 = vpack.c.b16 %v657, %v656
      %v670 = vpack.c.b16 %v659, %v658
      %v671 = vpack.c.b16 %v661, %v660
      %v672 = vpack.c.b16 %v663, %v662
      %v673 = vpack.c.b16 %v665, %v664
      %682 = vmatprep.subr.bf16.mxu0 0
      %683 = vmatpush1.bf16.msra.mxu0 %v666
      %684 = vmatprep.subr.bf16.mxu0 0
      %685 = vmatpush1.bf16.msra.mxu0 %v667
      %686 = vmatprep.subr.bf16.mxu0 0
      %687 = vmatpush1.bf16.msra.mxu0 %v668
      %688 = vmatprep.subr.bf16.mxu0 0
      %689 = vmatpush1.bf16.msra.mxu0 %v669
      %690 = vmatprep.subr.bf16.mxu0 0
      %691 = vmatpush1.bf16.msra.mxu0 %v670
      %692 = vmatprep.subr.bf16.mxu0 0
      %693 = vmatpush1.bf16.msra.mxu0 %v671
      %694 = vmatprep.subr.bf16.mxu0 0
      %695 = vmatpush1.bf16.msra.mxu0 %v672
      %696 = vmatprep.subr.bf16.mxu0 0
      %697 = vmatpush1.bf16.msra.mxu0 %v673
      %698 = vmatprep.subr.bf16.mxu0 0
      %699 = vmatpush1.bf16.msra.mxu0 0
      %700 = vmatprep.subr.bf16.mxu0 0
      %701 = vmatpush1.bf16.msra.mxu0 0
      %702 = vmatprep.subr.bf16.mxu0 0
      %703 = vmatpush1.bf16.msra.mxu0 0
      %704 = vmatprep.subr.bf16.mxu0 0
      %705 = vmatpush1.bf16.msra.mxu0 0
      %706 = vmatprep.subr.bf16.mxu0 0
      %707 = vmatpush1.bf16.msra.mxu0 0
      %708 = vmatprep.subr.bf16.mxu0 0
      %709 = vmatpush1.bf16.msra.mxu0 0
      %710 = vmatprep.subr.bf16.mxu0 0
      %711 = vmatpush1.bf16.msra.mxu0 0
      %712 = vmatprep.subr.bf16.mxu0 0
      %713 = vmatpush1.bf16.msra.mxu0 0
      %714 = vmatprep.mubr.bf16.mxu0 0
      %715 = vmatmul.mubr.bf16.gmra.mrb[0].mxu0 %v603
      %v716 = vpop.f32.mrb[0].mxu0
      %v717 = vadd.f32 %v632, %v716
      %v718 = vpop.f32.mrb[0].mxu0
      %v719 = vpop.f32.mrb[0].mxu0
      %v720 = vadd.f32 %v632, %v719
      %v721 = vpop.f32.mrb[0].mxu0
      %722 = vmatprep.mubr.bf16.mxu0 0
      %723 = vmatmul.mubr.bf16.gmra.mrb[0].mxu0 %v604
      %v724 = vpop.f32.mrb[0].mxu0
      %v725 = vadd.f32 %v632, %v724
      %v726 = vpop.f32.mrb[0].mxu0
      %v727 = vpop.f32.mrb[0].mxu0
      %v728 = vadd.f32 %v632, %v727
      %v729 = vpop.f32.mrb[0].mxu0
      %730 = vmatprep.mubr.bf16.mxu0 0
      %731 = vmatmul.mubr.bf16.gmra.mrb[0].mxu0 %v605
      %v732 = vpop.f32.mrb[0].mxu0
      %v733 = vadd.f32 %v632, %v732
      %v734 = vpop.f32.mrb[0].mxu0
      %v735 = vpop.f32.mrb[0].mxu0
      %v736 = vadd.f32 %v632, %v735
      %v737 = vpop.f32.mrb[0].mxu0
      %738 = vmatprep.mubr.bf16.mxu0 0
      %739 = vmatmul.mubr.bf16.gmra.mrb[0].mxu0 %v606
      %v740 = vpop.f32.mrb[0].mxu0
      %v741 = vadd.f32 %v632, %v740
      %v742 = vpop.f32.mrb[0].mxu0
      %v743 = vpop.f32.mrb[0].mxu0
      %v744 = vadd.f32 %v632, %v743
      %v745 = vpop.f32.mrb[0].mxu0
      %746 = vmatprep.mubr.bf16.mxu0 0
      %747 = vmatmul.mubr.bf16.gmra.mrb[0].mxu0 %v607
      %v748 = vpop.f32.mrb[0].mxu0
      %v749 = vadd.f32 %v632, %v748
      %v750 = vpop.f32.mrb[0].mxu0
      %v751 = vpop.f32.mrb[0].mxu0
      %v752 = vadd.f32 %v632, %v751
      %v753 = vpop.f32.mrb[0].mxu0
      %754 = vmatprep.mubr.bf16.mxu0 0
      %755 = vmatmul.mubr.bf16.gmra.mrb[0].mxu0 %v608
      %v756 = vpop.f32.mrb[0].mxu0
      %v757 = vadd.f32 %v632, %v756
      %v758 = vpop.f32.mrb[0].mxu0
      %v759 = vpop.f32.mrb[0].mxu0
      %v760 = vadd.f32 %v632, %v759
      %v761 = vpop.f32.mrb[0].mxu0
      %762 = vmatprep.mubr.bf16.mxu0 0
      %763 = vmatmul.mubr.bf16.gmra.mrb[0].mxu0 %v609
      %v764 = vpop.f32.mrb[0].mxu0
      %v765 = vadd.f32 %v632, %v764
      %v766 = vpop.f32.mrb[0].mxu0
      %v767 = vpop.f32.mrb[0].mxu0
      %v768 = vadd.f32 %v632, %v767
      %v769 = vpop.f32.mrb[0].mxu0
      %770 = vmatprep.mubr.bf16.mxu0 0
      %771 = vmatmul.mubr.bf16.gmra.mrb[0].mxu0 %v610
      %v772 = vpop.f32.mrb[0].mxu0
      %v773 = vadd.f32 %v632, %v772
      %v774 = vpop.f32.mrb[0].mxu0
      %v775 = vpop.f32.mrb[0].mxu0
      %v776 = vadd.f32 %v632, %v775
      %v777 = vpop.f32.mrb[0].mxu0
      %778 = vdwg.mxu0
      %v779 = vmax.f32 %v717, 0.0
      %v780 = vmax.f32 %v720, 0.0
      %v781 = vmax.f32 %v725, 0.0
      %v782 = vmax.f32 %v728, 0.0
      %v783 = vmax.f32 %v733, 0.0
      %v784 = vmax.f32 %v736, 0.0
      %v785 = vmax.f32 %v741, 0.0
      %v786 = vmax.f32 %v744, 0.0
      %v787 = vmax.f32 %v749, 0.0
      %v788 = vmax.f32 %v752, 0.0
      %v789 = vmax.f32 %v757, 0.0
      %v790 = vmax.f32 %v760, 0.0
      %v791 = vmax.f32 %v765, 0.0
      %v792 = vmax.f32 %v768, 0.0
      %v793 = vmax.f32 %v773, 0.0
      %v794 = vmax.f32 %v776, 0.0
      %v795 = vpack.c.bf16 %v780, %v779
      %v796 = vpack.c.bf16 %v782, %v781
      %v797 = vpack.c.bf16 %v784, %v783
      %v798 = vpack.c.bf16 %v786, %v785
      %v799 = vpack.c.bf16 %v788, %v787
      %v800 = vpack.c.bf16 %v790, %v789
      %v801 = vpack.c.bf16 %v792, %v791
      %v802 = vpack.c.bf16 %v794, %v793
      %v803 = vld [vmem:[%s4] sm:$0xf]
      %v804 = vld [vmem:[%s4 + $0x4] sm:$0xf]
      %v805 = vld [vmem:[%s4 + $0x8] sm:$0xf]
      %v806 = vld [vmem:[%s4 + $0xc] sm:$0xf]
      %v807 = vld [vmem:[%s4 + $0x10] sm:$0xf]
      %v808 = vld [vmem:[%s4 + $0x14] sm:$0xf]
      %v809 = vld [vmem:[%s4 + $0x18] sm:$0xf]
      %v810 = vld [vmem:[%s4 + $0x1c] sm:$0xf]
      %v811 = vld [vmem:[%s4 + $0x20] sm:$0xf]
      %v812 = vld [vmem:[%s4 + $0x24] sm:$0xf]
      %v813 = vld [vmem:[%s4 + $0x28] sm:$0xf]
      %v814 = vld [vmem:[%s4 + $0x2c] sm:$0xf]
      %v815 = vld [vmem:[%s4 + $0x30] sm:$0xf]
      %v816 = vld [vmem:[%s4 + $0x34] sm:$0xf]
      %v817 = vld [vmem:[%s4 + $0x38] sm:$0xf]
      %v818 = vld [vmem:[%s4 + $0x3c] sm:$0xf]
      %v819 = vld [vmem:[%s5] sm:$0xf]
      %v820 = vld [vmem:[%s5 + $0x4] sm:$0xf]
      %v821 = vld [vmem:[%s5 + $0x8] sm:$0xf]
      %v822 = vld [vmem:[%s5 + $0xc] sm:$0xf]
      %v823 = vld [vmem:[%s5 + $0x10] sm:$0xf]
      %v824 = vld [vmem:[%s5 + $0x14] sm:$0xf]
      %v825 = vld [vmem:[%s5 + $0x18] sm:$0xf]
      %v826 = vld [vmem:[%s5 + $0x1c] sm:$0xf]
      %v827 = vld [vmem:[%s5 + $0x20] sm:$0xf]
      %v828 = vld [vmem:[%s5 + $0x24] sm:$0xf]
      %v829 = vld [vmem:[%s5 + $0x28] sm:$0xf]
      %v830 = vld [vmem:[%s5 + $0x2c] sm:$0xf]
      %v831 = vld [vmem:[%s5 + $0x30] sm:$0xf]
      %v832 = vld [vmem:[%s5 + $0x34] sm:$0xf]
      %v833 = vld [vmem:[%s5 + $0x38] sm:$0xf]
      %v834 = vld [vmem:[%s5 + $0x3c] sm:$0xf]
      %v851 = vunpack.c.l.b16 %v402
      %v852 = vunpack.c.l.b16 %v403
      %v853 = vunpack.c.l.b16 %v404
      %v854 = vunpack.c.l.b16 %v405
      %v855 = vunpack.c.l.b16 %v406
      %v856 = vunpack.c.l.b16 %v407
      %v857 = vunpack.c.l.b16 %v408
      %v858 = vunpack.c.l.b16 %v409
      %v859 = vunpack.c.l.b16 %v410
      %v860 = vunpack.c.l.b16 %v411
      %v861 = vunpack.c.l.b16 %v412
      %v862 = vunpack.c.l.b16 %v413
      %v863 = vunpack.c.l.b16 %v414
      %v864 = vunpack.c.l.b16 %v415
      %v865 = vunpack.c.l.b16 %v416
      %v866 = vunpack.c.l.b16 %v417
      %v867 = vpack.c.b16 %v852, %v851
      %v868 = vpack.c.b16 %v854, %v853
      %v869 = vpack.c.b16 %v856, %v855
      %v870 = vpack.c.b16 %v858, %v857
      %v871 = vpack.c.b16 %v860, %v859
      %v872 = vpack.c.b16 %v862, %v861
      %v873 = vpack.c.b16 %v864, %v863
      %v874 = vpack.c.b16 %v866, %v865
      %v899 = vunpack.c.l.b16 %v819
      %v900 = vunpack.c.l.b16 %v820
      %v901 = vunpack.c.l.b16 %v821
      %v902 = vunpack.c.l.b16 %v822
      %v903 = vunpack.c.l.b16 %v823
      %v904 = vunpack.c.l.b16 %v824
      %v905 = vunpack.c.l.b16 %v825
      %v906 = vunpack.c.l.b16 %v826
      %v907 = vunpack.c.l.b16 %v827
      %v908 = vunpack.c.l.b16 %v828
      %v909 = vunpack.c.l.b16 %v829
      %v910 = vunpack.c.l.b16 %v830
      %v911 = vunpack.c.l.b16 %v831
      %v912 = vunpack.c.l.b16 %v832
      %v913 = vunpack.c.l.b16 %v833
      %v914 = vunpack.c.l.b16 %v834
      %v915 = vpack.c.b16 %v900, %v899
      %v916 = vpack.c.b16 %v902, %v901
      %v917 = vpack.c.b16 %v904, %v903
      %v918 = vpack.c.b16 %v906, %v905
      %v919 = vpack.c.b16 %v908, %v907
      %v920 = vpack.c.b16 %v910, %v909
      %v921 = vpack.c.b16 %v912, %v911
      %v922 = vpack.c.b16 %v914, %v913
      %931 = vmatprep.subr.bf16.mxu0 0
      %932 = vmatpush1.bf16.msra.mxu0 %v915
      %933 = vmatprep.subr.bf16.mxu0 0
      %934 = vmatpush1.bf16.msra.mxu0 %v916
      %935 = vmatprep.subr.bf16.mxu0 0
      %936 = vmatpush1.bf16.msra.mxu0 %v917
      %937 = vmatprep.subr.bf16.mxu0 0
      %938 = vmatpush1.bf16.msra.mxu0 %v918
      %939 = vmatprep.subr.bf16.mxu0 0
      %940 = vmatpush1.bf16.msra.mxu0 %v919
      %941 = vmatprep.subr.bf16.mxu0 0
      %942 = vmatpush1.bf16.msra.mxu0 %v920
      %943 = vmatprep.subr.bf16.mxu0 0
      %944 = vmatpush1.bf16.msra.mxu0 %v921
      %945 = vmatprep.subr.bf16.mxu0 0
      %946 = vmatpush1.bf16.msra.mxu0 %v922
      %947 = vmatprep.subr.bf16.mxu0 0
      %948 = vmatpush1.bf16.msra.mxu0 0
      %949 = vmatprep.subr.bf16.mxu0 0
      %950 = vmatpush1.bf16.msra.mxu0 0
      %951 = vmatprep.subr.bf16.mxu0 0
      %952 = vmatpush1.bf16.msra.mxu0 0
      %953 = vmatprep.subr.bf16.mxu0 0
      %954 = vmatpush1.bf16.msra.mxu0 0
      %955 = vmatprep.subr.bf16.mxu0 0
      %956 = vmatpush1.bf16.msra.mxu0 0
      %957 = vmatprep.subr.bf16.mxu0 0
      %958 = vmatpush1.bf16.msra.mxu0 0
      %959 = vmatprep.subr.bf16.mxu0 0
      %960 = vmatpush1.bf16.msra.mxu0 0
      %961 = vmatprep.subr.bf16.mxu0 0
      %962 = vmatpush1.bf16.msra.mxu0 0
      %963 = vmatprep.mubr.bf16.mxu0 0
      %964 = vmatmul.mubr.bf16.gmra.mrb[0].mxu0 %v867
      %v965 = vpop.f32.mrb[0].mxu0
      %v966 = vadd.f32 0.0, %v965
      %v967 = vpop.f32.mrb[0].mxu0
      %v968 = vpop.f32.mrb[0].mxu0
      %v969 = vadd.f32 0.0, %v968
      %v970 = vpop.f32.mrb[0].mxu0
      %971 = vmatprep.mubr.bf16.mxu0 0
      %972 = vmatmul.mubr.bf16.gmra.mrb[0].mxu0 %v868
      %v973 = vpop.f32.mrb[0].mxu0
      %v974 = vadd.f32 0.0, %v973
      %v975 = vpop.f32.mrb[0].mxu0
      %v976 = vpop.f32.mrb[0].mxu0
      %v977 = vadd.f32 0.0, %v976
      %v978 = vpop.f32.mrb[0].mxu0
      %979 = vmatprep.mubr.bf16.mxu0 0
      %980 = vmatmul.mubr.bf16.gmra.mrb[0].mxu0 %v869
      %v981 = vpop.f32.mrb[0].mxu0
      %v982 = vadd.f32 0.0, %v981
      %v983 = vpop.f32.mrb[0].mxu0
      %v984 = vpop.f32.mrb[0].mxu0
      %v985 = vadd.f32 0.0, %v984
      %v986 = vpop.f32.mrb[0].mxu0
      %987 = vmatprep.mubr.bf16.mxu0 0
      %988 = vmatmul.mubr.bf16.gmra.mrb[0].mxu0 %v870
      %v989 = vpop.f32.mrb[0].mxu0
      %v990 = vadd.f32 0.0, %v989
      %v991 = vpop.f32.mrb[0].mxu0
      %v992 = vpop.f32.mrb[0].mxu0
      %v993 = vadd.f32 0.0, %v992
      %v994 = vpop.f32.mrb[0].mxu0
      %995 = vmatprep.mubr.bf16.mxu0 0
      %996 = vmatmul.mubr.bf16.gmra.mrb[0].mxu0 %v871
      %v997 = vpop.f32.mrb[0].mxu0
      %v998 = vadd.f32 0.0, %v997
      %v999 = vpop.f32.mrb[0].mxu0
      %v1000 = vpop.f32.mrb[0].mxu0
      %v1001 = vadd.f32 0.0, %v1000
      %v1002 = vpop.f32.mrb[0].mxu0
      %1003 = vmatprep.mubr.bf16.mxu0 0
      %1004 = vmatmul.mubr.bf16.gmra.mrb[0].mxu0 %v872
      %v1005 = vpop.f32.mrb[0].mxu0
      %v1006 = vadd.f32 0.0, %v1005
      %v1007 = vpop.f32.mrb[0].mxu0
      %v1008 = vpop.f32.mrb[0].mxu0
      %v1009 = vadd.f32 0.0, %v1008
      %v1010 = vpop.f32.mrb[0].mxu0
      %1011 = vmatprep.mubr.bf16.mxu0 0
      %1012 = vmatmul.mubr.bf16.gmra.mrb[0].mxu0 %v873
      %v1013 = vpop.f32.mrb[0].mxu0
      %v1014 = vadd.f32 0.0, %v1013
      %v1015 = vpop.f32.mrb[0].mxu0
      %v1016 = vpop.f32.mrb[0].mxu0
      %v1017 = vadd.f32 0.0, %v1016
      %v1018 = vpop.f32.mrb[0].mxu0
      %1019 = vmatprep.mubr.bf16.mxu0 0
      %1020 = vmatmul.mubr.bf16.gmra.mrb[0].mxu0 %v874
      %v1021 = vpop.f32.mrb[0].mxu0
      %v1022 = vadd.f32 0.0, %v1021
      %v1023 = vpop.f32.mrb[0].mxu0
      %v1024 = vpop.f32.mrb[0].mxu0
      %v1025 = vadd.f32 0.0, %v1024
      %v1026 = vpop.f32.mrb[0].mxu0
      %1027 = vdwg.mxu0
      %v1044 = vunpack.c.l.b16 %v803
      %v1045 = vunpack.c.l.b16 %v804
      %v1046 = vunpack.c.l.b16 %v805
      %v1047 = vunpack.c.l.b16 %v806
      %v1048 = vunpack.c.l.b16 %v807
      %v1049 = vunpack.c.l.b16 %v808
      %v1050 = vunpack.c.l.b16 %v809
      %v1051 = vunpack.c.l.b16 %v810
      %v1052 = vunpack.c.l.b16 %v811
      %v1053 = vunpack.c.l.b16 %v812
      %v1054 = vunpack.c.l.b16 %v813
      %v1055 = vunpack.c.l.b16 %v814
      %v1056 = vunpack.c.l.b16 %v815
      %v1057 = vunpack.c.l.b16 %v816
      %v1058 = vunpack.c.l.b16 %v817
      %v1059 = vunpack.c.l.b16 %v818
      %v1060 = vpack.c.b16 %v1045, %v1044
      %v1061 = vpack.c.b16 %v1047, %v1046
      %v1062 = vpack.c.b16 %v1049, %v1048
      %v1063 = vpack.c.b16 %v1051, %v1050
      %v1064 = vpack.c.b16 %v1053, %v1052
      %v1065 = vpack.c.b16 %v1055, %v1054
      %v1066 = vpack.c.b16 %v1057, %v1056
      %v1067 = vpack.c.b16 %v1059, %v1058
      %1076 = vmatprep.subr.bf16.mxu0 0
      %1077 = vmatpush1.bf16.msra.mxu0 %v1060
      %1078 = vmatprep.subr.bf16.mxu0 0
      %1079 = vmatpush1.bf16.msra.mxu0 %v1061
      %1080 = vmatprep.subr.bf16.mxu0 0
      %1081 = vmatpush1.bf16.msra.mxu0 %v1062
      %1082 = vmatprep.subr.bf16.mxu0 0
      %1083 = vmatpush1.bf16.msra.mxu0 %v1063
      %1084 = vmatprep.subr.bf16.mxu0 0
      %1085 = vmatpush1.bf16.msra.mxu0 %v1064
      %1086 = vmatprep.subr.bf16.mxu0 0
      %1087 = vmatpush1.bf16.msra.mxu0 %v1065
      %1088 = vmatprep.subr.bf16.mxu0 0
      %1089 = vmatpush1.bf16.msra.mxu0 %v1066
      %1090 = vmatprep.subr.bf16.mxu0 0
      %1091 = vmatpush1.bf16.msra.mxu0 %v1067
      %1092 = vmatprep.subr.bf16.mxu0 0
      %1093 = vmatpush1.bf16.msra.mxu0 0
      %1094 = vmatprep.subr.bf16.mxu0 0
      %1095 = vmatpush1.bf16.msra.mxu0 0
      %1096 = vmatprep.subr.bf16.mxu0 0
      %1097 = vmatpush1.bf16.msra.mxu0 0
      %1098 = vmatprep.subr.bf16.mxu0 0
      %1099 = vmatpush1.bf16.msra.mxu0 0
      %1100 = vmatprep.subr.bf16.mxu0 0
      %1101 = vmatpush1.bf16.msra.mxu0 0
      %1102 = vmatprep.subr.bf16.mxu0 0
      %1103 = vmatpush1.bf16.msra.mxu0 0
      %1104 = vmatprep.subr.bf16.mxu0 0
      %1105 = vmatpush1.bf16.msra.mxu0 0
      %1106 = vmatprep.subr.bf16.mxu0 0
      %1107 = vmatpush1.bf16.msra.mxu0 0
      %1108 = vmatprep.mubr.bf16.mxu0 0
      %1109 = vmatmul.mubr.bf16.gmra.mrb[0].mxu0 %v795
      %v1110 = vpop.f32.mrb[0].mxu0
      %v1111 = vadd.f32 %v966, %v1110
      %v1112 = vpop.f32.mrb[0].mxu0
      %v1113 = vpop.f32.mrb[0].mxu0
      %v1114 = vadd.f32 %v969, %v1113
      %v1115 = vpop.f32.mrb[0].mxu0
      %1116 = vmatprep.mubr.bf16.mxu0 0
      %1117 = vmatmul.mubr.bf16.gmra.mrb[0].mxu0 %v796
      %v1118 = vpop.f32.mrb[0].mxu0
      %v1119 = vadd.f32 %v974, %v1118
      %v1120 = vpop.f32.mrb[0].mxu0
      %v1121 = vpop.f32.mrb[0].mxu0
      %v1122 = vadd.f32 %v977, %v1121
      %v1123 = vpop.f32.mrb[0].mxu0
      %1124 = vmatprep.mubr.bf16.mxu0 0
      %1125 = vmatmul.mubr.bf16.gmra.mrb[0].mxu0 %v797
      %v1126 = vpop.f32.mrb[0].mxu0
      %v1127 = vadd.f32 %v982, %v1126
      %v1128 = vpop.f32.mrb[0].mxu0
      %v1129 = vpop.f32.mrb[0].mxu0
      %v1130 = vadd.f32 %v985, %v1129
      %v1131 = vpop.f32.mrb[0].mxu0
      %1132 = vmatprep.mubr.bf16.mxu0 0
      %1133 = vmatmul.mubr.bf16.gmra.mrb[0].mxu0 %v798
      %v1134 = vpop.f32.mrb[0].mxu0
      %v1135 = vadd.f32 %v990, %v1134
      %v1136 = vpop.f32.mrb[0].mxu0
      %v1137 = vpop.f32.mrb[0].mxu0
      %v1138 = vadd.f32 %v993, %v1137
      %v1139 = vpop.f32.mrb[0].mxu0
      %1140 = vmatprep.mubr.bf16.mxu0 0
      %1141 = vmatmul.mubr.bf16.gmra.mrb[0].mxu0 %v799
      %v1142 = vpop.f32.mrb[0].mxu0
      %v1143 = vadd.f32 %v998, %v1142
      %v1144 = vpop.f32.mrb[0].mxu0
      %v1145 = vpop.f32.mrb[0].mxu0
      %v1146 = vadd.f32 %v1001, %v1145
      %v1147 = vpop.f32.mrb[0].mxu0
      %1148 = vmatprep.mubr.bf16.mxu0 0
      %1149 = vmatmul.mubr.bf16.gmra.mrb[0].mxu0 %v800
      %v1150 = vpop.f32.mrb[0].mxu0
      %v1151 = vadd.f32 %v1006, %v1150
      %v1152 = vpop.f32.mrb[0].mxu0
      %v1153 = vpop.f32.mrb[0].mxu0
      %v1154 = vadd.f32 %v1009, %v1153
      %v1155 = vpop.f32.mrb[0].mxu0
      %1156 = vmatprep.mubr.bf16.mxu0 0
      %1157 = vmatmul.mubr.bf16.gmra.mrb[0].mxu0 %v801
      %v1158 = vpop.f32.mrb[0].mxu0
      %v1159 = vadd.f32 %v1014, %v1158
      %v1160 = vpop.f32.mrb[0].mxu0
      %v1161 = vpop.f32.mrb[0].mxu0
      %v1162 = vadd.f32 %v1017, %v1161
      %v1163 = vpop.f32.mrb[0].mxu0
      %1164 = vmatprep.mubr.bf16.mxu0 0
      %1165 = vmatmul.mubr.bf16.gmra.mrb[0].mxu0 %v802
      %v1166 = vpop.f32.mrb[0].mxu0
      %v1167 = vadd.f32 %v1022, %v1166
      %v1168 = vpop.f32.mrb[0].mxu0
      %v1169 = vpop.f32.mrb[0].mxu0
      %v1170 = vadd.f32 %v1025, %v1169
      %v1171 = vpop.f32.mrb[0].mxu0
      %1172 = vdwg.mxu0
      %v1173 = vld [vmem:[%s7] sm:$0x1]
      %v1175 = vlaneseq
      %v1176 = vshrl.u32 %v1175, 7
      %v1177 = vsub.s32 0, %v1176
      %v1178 = vrot.slane %v1173, %v1177
      %v1180 = vadd.f32 %v1111, %v1178
      %v1181 = vadd.f32 %v1114, %v1178
      %v1182 = vadd.f32 %v1119, %v1178
      %v1183 = vadd.f32 %v1122, %v1178
      %v1184 = vadd.f32 %v1127, %v1178
      %v1185 = vadd.f32 %v1130, %v1178
      %v1186 = vadd.f32 %v1135, %v1178
      %v1187 = vadd.f32 %v1138, %v1178
      %v1188 = vadd.f32 %v1143, %v1178
      %v1189 = vadd.f32 %v1146, %v1178
      %v1190 = vadd.f32 %v1151, %v1178
      %v1191 = vadd.f32 %v1154, %v1178
      %v1192 = vadd.f32 %v1159, %v1178
      %v1193 = vadd.f32 %v1162, %v1178
      %v1194 = vadd.f32 %v1167, %v1178
      %v1195 = vadd.f32 %v1170, %v1178
      %v1196 = vmax.f32 %v1180, 0.0
      %v1197 = vmax.f32 %v1181, 0.0
      %v1198 = vmax.f32 %v1182, 0.0
      %v1199 = vmax.f32 %v1183, 0.0
      %v1200 = vmax.f32 %v1184, 0.0
      %v1201 = vmax.f32 %v1185, 0.0
      %v1202 = vmax.f32 %v1186, 0.0
      %v1203 = vmax.f32 %v1187, 0.0
      %v1204 = vmax.f32 %v1188, 0.0
      %v1205 = vmax.f32 %v1189, 0.0
      %v1206 = vmax.f32 %v1190, 0.0
      %v1207 = vmax.f32 %v1191, 0.0
      %v1208 = vmax.f32 %v1192, 0.0
      %v1209 = vmax.f32 %v1193, 0.0
      %v1210 = vmax.f32 %v1194, 0.0
      %v1211 = vmax.f32 %v1195, 0.0
      %v1212 = vpack.c.bf16 %v1197, %v1196
      %v1213 = vpack.c.bf16 %v1199, %v1198
      %v1214 = vpack.c.bf16 %v1201, %v1200
      %v1215 = vpack.c.bf16 %v1203, %v1202
      %v1216 = vpack.c.bf16 %v1205, %v1204
      %v1217 = vpack.c.bf16 %v1207, %v1206
      %v1218 = vpack.c.bf16 %v1209, %v1208
      %v1219 = vpack.c.bf16 %v1211, %v1210
      %v1228 = vunpack.c.l.b16 %v1212
      %v1229 = vunpack.c.h.b16 %v1212
      %v1230 = vunpack.c.l.b16 %v1213
      %v1231 = vunpack.c.h.b16 %v1213
      %v1232 = vunpack.c.l.b16 %v1214
      %v1233 = vunpack.c.h.b16 %v1214
      %v1234 = vunpack.c.l.b16 %v1215
      %v1235 = vunpack.c.h.b16 %v1215
      %v1236 = vunpack.c.l.b16 %v1216
      %v1237 = vunpack.c.h.b16 %v1216
      %v1238 = vunpack.c.l.b16 %v1217
      %v1239 = vunpack.c.h.b16 %v1217
      %v1240 = vunpack.c.l.b16 %v1218
      %v1241 = vunpack.c.h.b16 %v1218
      %v1242 = vunpack.c.l.b16 %v1219
      %v1243 = vunpack.c.h.b16 %v1219
      %v1244 = vpack.c.b16 %v1228, %v1228
      %v1245 = vpack.c.b16 %v1229, %v1229
      %v1246 = vpack.c.b16 %v1230, %v1230
      %v1247 = vpack.c.b16 %v1231, %v1231
      %v1248 = vpack.c.b16 %v1232, %v1232
      %v1249 = vpack.c.b16 %v1233, %v1233
      %v1250 = vpack.c.b16 %v1234, %v1234
      %v1251 = vpack.c.b16 %v1235, %v1235
      %v1252 = vpack.c.b16 %v1236, %v1236
      %v1253 = vpack.c.b16 %v1237, %v1237
      %v1254 = vpack.c.b16 %v1238, %v1238
      %v1255 = vpack.c.b16 %v1239, %v1239
      %v1256 = vpack.c.b16 %v1240, %v1240
      %v1257 = vpack.c.b16 %v1241, %v1241
      %v1258 = vpack.c.b16 %v1242, %v1242
      %v1259 = vpack.c.b16 %v1243, %v1243
      %1276 = vst [vmem:[%s399] sm:$0xf] %v1244
      %1277 = vst [vmem:[%s399 + $0x4] sm:$0xf] %v1245
      %1278 = vst [vmem:[%s399 + $0x8] sm:$0xf] %v1246
      %1279 = vst [vmem:[%s399 + $0xc] sm:$0xf] %v1247
      %1280 = vst [vmem:[%s399 + $0x10] sm:$0xf] %v1248
      %1281 = vst [vmem:[%s399 + $0x14] sm:$0xf] %v1249
      %1282 = vst [vmem:[%s399 + $0x18] sm:$0xf] %v1250
      %1283 = vst [vmem:[%s399 + $0x1c] sm:$0xf] %v1251
      %1284 = vst [vmem:[%s399 + $0x20] sm:$0xf] %v1252
      %1285 = vst [vmem:[%s399 + $0x24] sm:$0xf] %v1253
      %1286 = vst [vmem:[%s399 + $0x28] sm:$0xf] %v1254
      %1287 = vst [vmem:[%s399 + $0x2c] sm:$0xf] %v1255
      %1288 = vst [vmem:[%s399 + $0x30] sm:$0xf] %v1256
      %1289 = vst [vmem:[%s399 + $0x34] sm:$0xf] %v1257
      %1290 = vst [vmem:[%s399 + $0x38] sm:$0xf] %v1258
      %1291 = vst [vmem:[%s399 + $0x3c] sm:$0xf] %v1259
      %s1292 = smul.u32 16, %s24
      %p1293 = scmp.lt.s32.totalorder %s23, 1
      %s1294 = scalar_select %p1293, %s23, 1
      %p1295 = scmp.lt.s32.totalorder %s1292, 31
      %s1296 = scalar_select %p1295, %s1292, 31
      %s1297 = smul.addr %s1294, 32
      %s1298 = sadd.s32 %s1296, %s1297
      %s1299 = smul.addr %s1298, 4
      %s1300 = scalar_lea.vmem %s8, %s1299
      // Predicated region
      $region53: #{cca_classifier_forward.4} parent=51 // pred_check
        %p1301 = pneg %p238
      $region54: #{cca_classifier_forward.4} parent=51 // pred_check_branch
        %1303 = sbr.rel (%p1301) target = $region56
      $region55: #{cca_classifier_forward.4} parent=51 // pred_region
        %s1304 = smul.u32 16, %s24
      $region56: #{cca_classifier_forward.4} parent=51 // pred_fallthru
        _
    $region52: #{cca_classifier_forward.4} parent=5 // pred_fallthru
      _
    %p1305 = scmp.le.s32.totalorder 2, %s14
    // Predicated region
    $region57: #{cca_classifier_forward.4} parent=5 // pred_check
      %p1306 = pneg %p1305
    $region58: #{cca_classifier_forward.4} parent=5 // pred_check_branch
      %1308 = sbr.rel (%p1306) target = $region60
    $region59: #{cca_classifier_forward.4} parent=5 // pred_region
      %s1309 = ssub.s32 %s14, 2
      // Predicated region
      $region61: #{cca_classifier_forward.4} parent=59 // pred_check
        %p1310 = pneg %p244
      $region62: #{cca_classifier_forward.4} parent=59 // pred_check_branch
        %1312 = sbr.rel (%p1310) target = $region64
      $region63: #{cca_classifier_forward.4} parent=59 // pred_region
        %s1313 = smul.u32 16, %s26
        %p1314 = scmp.lt.s32.totalorder %s25, 1
        %s1315 = scalar_select %p1314, %s25, 1
        %p1316 = scmp.lt.s32.totalorder %s1313, 31
        %s1317 = scalar_select %p1316, %s1313, 31
        %s1318 = smul.addr %s1315, 32
        %s1319 = sadd.s32 %s1317, %s1318
        %s1320 = smul.addr %s1319, 4
        %s1321 = scalar_lea.vmem %s8, %s1320
      $region64: #{cca_classifier_forward.4} parent=59 // pred_fallthru
        _
    $region60: #{cca_classifier_forward.4} parent=5 // pred_fallthru
      _
  $region6: #{cca_classifier_forward.4} parent=0 // loop_footer
    %s18 = sadd.s32 1, %s14
  $region7: #{cca_classifier_forward.4} parent=0 // loop_footer_branch
    %13 = sbr.rel target = $region3
  $region8: #{cca_classifier_forward.4} parent=0 // loop_exit
    _

// kernel: cca_classifier_forward.5
$region0: #{cca_classifier_forward.5}
  #allocation0 [shape = 'u32[]', space=smem, size = 0x4, offset = 0x4, fixed_abs, tag = 'smem constant byte address 0x4 - core index']
  #allocation1 [shape = 'u32[144,128]{1,0:T(1,128)}', space=vmem, size = 0x12000, scoped, tag = 'internal scratch']
  #allocation2 [shape = 'bf16[32,40,128]{2,1,0:T(8,128)(2,1)}', space=vmem, size = 0x50000, scoped, tag = 'scratch operand']
  #allocation3 [shape = 's32[1]{0}', space=sflag, size = 0x4, scoped, tag = 'scratch operand']
  #allocation4 [shape = 's32[]', space=sflag, size = 0x4, offset = 0, fixed_abs, tag = 'sflag constant byte address 0x0 - dummy sync flag']
  %s0 = inlined_call_operand.vmem [shape: bf16[2,40,40,128], index: 0, kind: input, shape index: {}]
  %s1 = inlined_call_operand.vmem [shape: bf16[18,128,128], index: 1, kind: input, shape index: {}]
  %s2 = inlined_call_operand.vmem [shape: f32[1,128], index: 2, kind: input, shape index: {}]
  %s3 = inlined_call_operand.vmem [shape: f32[2,16,16,128], index: 3, kind: output, shape index: {}]
  %s4 = sld [smem:[#allocation0]]
  $region75: #{cca_classifier_forward.5} parent=0
    _
  %s6 = ssub.s32 1, %s4
  %s7 = scalar_select 0, %s6, %s4
  loop: start=0, step=1, limit=6
  $region2: #{cca_classifier_forward.5} parent=0 // loop_pre_header
    _
  $region3: #{cca_classifier_forward.5} parent=0 // loop_header
    %s9 = sphi 0, %s13
    %p10 = scmp.ge.s32.totalorder %s9, 6
    %s16 = sphi 0, %s28
    %s17 = sphi 0, %s24
    %s18 = sphi 0, %s16
    %s19 = sphi 0, %s17
    %s20 = sphi 0, %s18
    %s21 = sphi 0, %s19
    %s29 = sphi 0, %s29
    %s31 = sphi 0, %s29
    %s32 = sphi 0, %s31
    %s46 = sphi 0, %s32
    %s50 = sphi 0, %s50
    %s52 = sphi 0, %s50
    %s53 = sphi 0, %s52
    %s67 = sphi 0, %s53
    %s75 = sphi 0, %s77
    %s78 = sphi 0, %s75
    %s79 = sphi 0, %s78
    %s95 = sphi 0, %s79
  $region4: #{cca_classifier_forward.5} parent=0 // loop_header_branch
    %12 = sbr.rel (%p10) target = $region8
  $region5: #{cca_classifier_forward.5} parent=0 // loop_body
    %s14 = ssub.s32 %s9, 1
    %s15 = ssub.s32 %s9, 2
    %s22 = sadd.s32 1, %s17
    %p23 = scmp.ge.s32.totalorder %s22, 2
    %s24 = scalar_select %p23, 0, %s22
    %s25 = sadd.s32 1, %s16
    %s26 = scalar_select %p23, %s25, %s16
    %p27 = scmp.ge.s32.totalorder %s26, 2
    %s28 = scalar_select %p27, 0, %s26
    %s30 = sadd.s32 %s29, 1
    %p33 = scmp.eq.s32.totalorder %s9, 3
    %p34 = scmp.ne.s32.totalorder %s29, %s31
    %p35 = scmp.eq.s32.totalorder %s9, 0
    %p36 = por %p34, %p35
    %p37 = scmp.ne.s32.totalorder %s29, %s31
    %p38 = scmp.eq.s32.totalorder %s14, 3
    %p39 = por %p37, %p38
    %p40 = scmp.ne.s32.totalorder %s31, %s32
    %p41 = scmp.eq.s32.totalorder %s14, 0
    %p42 = por %p40, %p41
    %p43 = scmp.ne.s32.totalorder %s31, %s32
    %p44 = scmp.eq.s32.totalorder %s15, 3
    %p45 = por %p43, %p44
    %p47 = scmp.ne.s32.totalorder %s32, %s46
    %p48 = scmp.eq.s32.totalorder %s15, 0
    %p49 = por %p47, %p48
    %s51 = sadd.s32 %s50, 1
    %p54 = scmp.eq.s32.totalorder %s9, 3
    %p55 = scmp.ne.s32.totalorder %s50, %s52
    %p56 = scmp.eq.s32.totalorder %s9, 0
    %p57 = por %p55, %p56
    %p58 = scmp.ne.s32.totalorder %s50, %s52
    %p59 = scmp.eq.s32.totalorder %s14, 3
    %p60 = por %p58, %p59
    %p61 = scmp.ne.s32.totalorder %s52, %s53
    %p62 = scmp.eq.s32.totalorder %s14, 0
    %p63 = por %p61, %p62
    %p64 = scmp.ne.s32.totalorder %s52, %s53
    %p65 = scmp.eq.s32.totalorder %s15, 3
    %p66 = por %p64, %p65
    %p68 = scmp.ne.s32.totalorder %s53, %s67
    %p69 = scmp.eq.s32.totalorder %s15, 0
    %p70 = por %p68, %p69
    %s71 = ssub.s32 %s16, %s28
    %s72 = ssub.s32 %s17, %s24
    %s73 = sor.u32 %s71, %s72
    %p74 = scmp.eq.s32.totalorder %s73, 0
    %s76 = sadd.s32 %s75, 1
    %s77 = scalar_select %p74, %s75, %s76
    %p80 = pneg %p74
    %p81 = scmp.eq.s32.totalorder %s9, 3
    %p82 = por %p80, %p81
    %p83 = scmp.ne.s32.totalorder %s75, %s78
    %p84 = scmp.eq.s32.totalorder %s9, 0
    %p85 = por %p83, %p84
    %p86 = scmp.ne.s32.totalorder %s75, %s78
    %p87 = scmp.eq.s32.totalorder %s14, 3
    %p88 = por %p86, %p87
    %p89 = scmp.ne.s32.totalorder %s78, %s79
    %p90 = scmp.eq.s32.totalorder %s14, 0
    %p91 = por %p89, %p90
    %p92 = scmp.ne.s32.totalorder %s78, %s79
    %p93 = scmp.eq.s32.totalorder %s15, 3
    %p94 = por %p92, %p93
    %p96 = scmp.ne.s32.totalorder %s79, %s95
    %p97 = scmp.eq.s32.totalorder %s15, 0
    %p98 = por %p96, %p97
    %p99 = scmp.le.s32.totalorder 1, %s9
    %p100 = scmp.lt.s32.totalorder %s9, 5
    %p101 = pnand %p99, %p100
    %p102 = pneg %p101
    // Predicated region
    $region9: #{cca_classifier_forward.5} parent=5 // pred_check
      _
    $region10: #{cca_classifier_forward.5} parent=5 // pred_check_branch
      %104 = sbr.rel (%p101) target = $region12
    $region11: #{cca_classifier_forward.5} parent=5 // pred_region
      %s105 = ssub.s32 %s9, 1
      // Predicated region
      $region13: #{cca_classifier_forward.5} parent=11 // pred_check
        %p106 = pneg %p42
      $region14: #{cca_classifier_forward.5} parent=11 // pred_check_branch
        %108 = sbr.rel (%p106) target = $region16
      $region15: #{cca_classifier_forward.5} parent=11 // pred_region
        _
      $region16: #{cca_classifier_forward.5} parent=11 // pred_fallthru
        _
      // Predicated region
      $region17: #{cca_classifier_forward.5} parent=11 // pred_check
        %p109 = pneg %p63
      $region18: #{cca_classifier_forward.5} parent=11 // pred_check_branch
        %111 = sbr.rel (%p109) target = $region20
      $region19: #{cca_classifier_forward.5} parent=11 // pred_region
        _
      $region20: #{cca_classifier_forward.5} parent=11 // pred_fallthru
        _
    $region12: #{cca_classifier_forward.5} parent=5 // pred_fallthru
      _
    %p112 = scmp.lt.s32.totalorder %s9, 4
    // Predicated region
    $region21: #{cca_classifier_forward.5} parent=5 // pred_check
      %p113 = pneg %p112
    $region22: #{cca_classifier_forward.5} parent=5 // pred_check_branch
      %115 = sbr.rel (%p113) target = $region24
    $region23: #{cca_classifier_forward.5} parent=5 // pred_region
      _
    $region24: #{cca_classifier_forward.5} parent=5 // pred_fallthru
      _
    %p116 = scmp.le.s32.totalorder 1, %s9
    %p117 = scmp.lt.s32.totalorder %s9, 5
    %p118 = pnand %p116, %p117
    %p119 = pneg %p118
    // Predicated region
    $region25: #{cca_classifier_forward.5} parent=5 // pred_check
      _
    $region26: #{cca_classifier_forward.5} parent=5 // pred_check_branch
      %121 = sbr.rel (%p118) target = $region28
    $region27: #{cca_classifier_forward.5} parent=5 // pred_region
      %s122 = ssub.s32 %s9, 1
      %p123 = pneg %p42
      %p124 = pneg %p39
      %p125 = pneg %p63
      %p126 = pneg %p60
      %p127 = pneg %p91
      %p128 = pneg %p88
      %s129 = smul.u32 8, %s19
      %p130 = scmp.lt.s32.totalorder %s18, 1
      %s131 = scalar_select %p130, %s18, 1
      %p132 = scmp.lt.s32.totalorder %s129, 15
      %s133 = scalar_select %p132, %s129, 15
      %s134 = smul.addr %s133, 2
      %s135 = smul.addr %s131, 32
      %s136 = sadd.s32 %s134, %s135
      %s137 = smul.addr %s136, 8
      %s138 = scalar_lea.vmem %s3, %s137
      %s139 = smul.u32 8, %s19
      %p140 = scmp.lt.s32.totalorder %s18, 1
      %s141 = scalar_select %p140, %s18, 1
      %p142 = scmp.lt.s32.totalorder %s139, 15
      %s143 = scalar_select %p142, %s139, 15
      %s144 = smul.addr %s143, 2
      %s145 = smul.addr %s141, 32
      %s146 = sadd.s32 %s144, %s145
      %s147 = smul.addr %s146, 8
      %s148 = scalar_lea.vmem %s3, %s147
      %s149 = smul.u32 8, %s19
      %s151 = smul.u32 %s19, 8
      %s152 = smul.u32 %s151, 5
      %s153 = smul.u32 %s18, 200
      %s154 = sadd.s32 %s152, %s153
      %s155 = smul.addr %s154, 4
      %s156 = scalar_lea.vmem %s0, %s155
      %p158 = scmp.lt.u32.totalorder 640, 8
      %p159 = pneg %p158
      // Predicated region
      $region29: #{cca_classifier_forward.5} parent=27 // pred_check
        _
      $region30: #{cca_classifier_forward.5} parent=27 // pred_check_branch
        %161 = sbr.rel (%p158) target = $region32
      $region31: #{cca_classifier_forward.5} parent=27 // pred_region
        %s176 = sand.u32 640, 7
        %p177 = scmp.eq.s32.totalorder %s176, 0
        // Predicated region
        $region44: #{cca_classifier_forward.5} parent=31 // pred_check
          %p178 = pneg %p177
        $region45: #{cca_classifier_forward.5} parent=31 // pred_check_branch
          %180 = sbr.rel (%p178) target = $region47
        $region46: #{cca_classifier_forward.5} parent=31 // pred_region
          loop: start=0, step=1, limit=1
          $region48: #{cca_classifier_forward.5} parent=46 // loop_pre_header
            _
          $region49: #{cca_classifier_forward.5} parent=46 // loop_header
            %s182 = sphi 0, %s186
            %p183 = scmp.ge.s32.totalorder %s182, 1
            %s187 = sphi %s156, %s156
            %s188 = sphi [#allocation2], [#allocation2]
          $region50: #{cca_classifier_forward.5} parent=46 // loop_header_branch
            %185 = sbr.rel (%p183) target = $region54
          $region51: #{cca_classifier_forward.5} parent=46 // loop_body
            %v189 = vld [vmem:[%s187] sm:$0xff]
            %190 = vst [vmem:[%s188] sm:$0xff] %v189
            %v191 = vld [vmem:[%s187 + $0x8] sm:$0xff]
            %192 = vst [vmem:[%s188 + $0x8] sm:$0xff] %v191
            %v193 = vld [vmem:[%s187 + $0x10] sm:$0xff]
            %194 = vst [vmem:[%s188 + $0x10] sm:$0xff] %v193
            %v195 = vld [vmem:[%s187 + $0x18] sm:$0xff]
            %196 = vst [vmem:[%s188 + $0x18] sm:$0xff] %v195
            %v197 = vld [vmem:[%s187 + $0x20] sm:$0xff]
            %198 = vst [vmem:[%s188 + $0x20] sm:$0xff] %v197
            %v199 = vld [vmem:[%s187 + $0x28] sm:$0xff]
            %200 = vst [vmem:[%s188 + $0x28] sm:$0xff] %v199
            %v201 = vld [vmem:[%s187 + $0x30] sm:$0xff]
            %202 = vst [vmem:[%s188 + $0x30] sm:$0xff] %v201
            %v203 = vld [vmem:[%s187 + $0x38] sm:$0xff]
            %204 = vst [vmem:[%s188 + $0x38] sm:$0xff] %v203
            %v205 = vld [vmem:[%s187 + $0x40] sm:$0xff]
            %206 = vst [vmem:[%s188 + $0x40] sm:$0xff] %v205
            %v207 = vld [vmem:[%s187 + $0x48] sm:$0xff]
            %208 = vst [vmem:[%s188 + $0x48] sm:$0xff] %v207
            %v209 = vld [vmem:[%s187 + $0x50] sm:$0xff]
            %210 = vst [vmem:[%s188 + $0x50] sm:$0xff] %v209
            %v211 = vld [vmem:[%s187 + $0x58] sm:$0xff]
            %212 = vst [vmem:[%s188 + $0x58] sm:$0xff] %v211
            %v213 = vld [vmem:[%s187 + $0x60] sm:$0xff]
            %214 = vst [vmem:[%s188 + $0x60] sm:$0xff] %v213
            %v215 = vld [vmem:[%s187 + $0x68] sm:$0xff]
            %216 = vst [vmem:[%s188 + $0x68] sm:$0xff] %v215
            %v217 = vld [vmem:[%s187 + $0x70] sm:$0xff]
            %218 = vst [vmem:[%s188 + $0x70] sm:$0xff] %v217
            %v219 = vld [vmem:[%s187 + $0x78] sm:$0xff]
            %220 = vst [vmem:[%s188 + $0x78] sm:$0xff] %v219
            %v221 = vld [vmem:[%s187 + $0x80] sm:$0xff]
            %222 = vst [vmem:[%s188 + $0x80] sm:$0xff] %v221
            %v223 = vld [vmem:[%s187 + $0x88] sm:$0xff]
            %224 = vst [vmem:[%s188 + $0x88] sm:$0xff] %v223
            %v225 = vld [vmem:[%s187 + $0x90] sm:$0xff]
            %226 = vst [vmem:[%s188 + $0x90] sm:$0xff] %v225
            %v227 = vld [vmem:[%s187 + $0x98] sm:$0xff]
            %228 = vst [vmem:[%s188 + $0x98] sm:$0xff] %v227
            %v229 = vld [vmem:[%s187 + $0xa0] sm:$0xff]
            %230 = vst [vmem:[%s188 + $0xa0] sm:$0xff] %v229
            %v231 = vld [vmem:[%s187 + $0xa8] sm:$0xff]
            %232 = vst [vmem:[%s188 + $0xa8] sm:$0xff] %v231
            %v233 = vld [vmem:[%s187 + $0xb0] sm:$0xff]
            %234 = vst [vmem:[%s188 + $0xb0] sm:$0xff] %v233
            %v235 = vld [vmem:[%s187 + $0xb8] sm:$0xff]
            %236 = vst [vmem:[%s188 + $0xb8] sm:$0xff] %v235
            %v237 = vld [vmem:[%s187 + $0xc0] sm:$0xff]
            %238 = vst [vmem:[%s188 + $0xc0] sm:$0xff] %v237
            %v239 = vld [vmem:[%s187 + $0xc8] sm:$0xff]
            %240 = vst [vmem:[%s188 + $0xc8] sm:$0xff] %v239
            %v241 = vld [vmem:[%s187 + $0xd0] sm:$0xff]
            %242 = vst [vmem:[%s188 + $0xd0] sm:$0xff] %v241
            %v243 = vld [vmem:[%s187 + $0xd8] sm:$0xff]
            %244 = vst [vmem:[%s188 + $0xd8] sm:$0xff] %v243
            %v245 = vld [vmem:[%s187 + $0xe0] sm:$0xff]
            %246 = vst [vmem:[%s188 + $0xe0] sm:$0xff] %v245
            %v247 = vld [vmem:[%s187 + $0xe8] sm:$0xff]
            %248 = vst [vmem:[%s188 + $0xe8] sm:$0xff] %v247
            %v249 = vld [vmem:[%s187 + $0xf0] sm:$0xff]
            %250 = vst [vmem:[%s188 + $0xf0] sm:$0xff] %v249
            %v251 = vld [vmem:[%s187 + $0xf8] sm:$0xff]
            %252 = vst [vmem:[%s188 + $0xf8] sm:$0xff] %v251
            %v253 = vld [vmem:[%s187 + $0x100] sm:$0xff]
            %254 = vst [vmem:[%s188 + $0x100] sm:$0xff] %v253
            %v255 = vld [vmem:[%s187 + $0x108] sm:$0xff]
            %256 = vst [vmem:[%s188 + $0x108] sm:$0xff] %v255
            %v257 = vld [vmem:[%s187 + $0x110] sm:$0xff]
            %258 = vst [vmem:[%s188 + $0x110] sm:$0xff] %v257
            %v259 = vld [vmem:[%s187 + $0x118] sm:$0xff]
            %260 = vst [vmem:[%s188 + $0x118] sm:$0xff] %v259
            %v261 = vld [vmem:[%s187 + $0x120] sm:$0xff]
            %262 = vst [vmem:[%s188 + $0x120] sm:$0xff] %v261
            %v263 = vld [vmem:[%s187 + $0x128] sm:$0xff]
            %264 = vst [vmem:[%s188 + $0x128] sm:$0xff] %v263
            %v265 = vld [vmem:[%s187 + $0x130] sm:$0xff]
            %266 = vst [vmem:[%s188 + $0x130] sm:$0xff] %v265
            %v267 = vld [vmem:[%s187 + $0x138] sm:$0xff]
            %268 = vst [vmem:[%s188 + $0x138] sm:$0xff] %v267
            %v269 = vld [vmem:[%s187 + $0x140] sm:$0xff]
            %270 = vst [vmem:[%s188 + $0x140] sm:$0xff] %v269
            %v271 = vld [vmem:[%s187 + $0x148] sm:$0xff]
            %272 = vst [vmem:[%s188 + $0x148] sm:$0xff] %v271
            %v273 = vld [vmem:[%s187 + $0x150] sm:$0xff]
            %274 = vst [vmem:[%s188 + $0x150] sm:$0xff] %v273
            %v275 = vld [vmem:[%s187 + $0x158] sm:$0xff]
            %276 = vst [vmem:[%s188 + $0x158] sm:$0xff] %v275
            %v277 = vld [vmem:[%s187 + $0x160] sm:$0xff]
            %278 = vst [vmem:[%s188 + $0x160] sm:$0xff] %v277
            %v279 = vld [vmem:[%s187 + $0x168] sm:$0xff]
            %280 = vst [vmem:[%s188 + $0x168] sm:$0xff] %v279
            %v281 = vld [vmem:[%s187 + $0x170] sm:$0xff]
            %282 = vst [vmem:[%s188 + $0x170] sm:$0xff] %v281
            %v283 = vld [vmem:[%s187 + $0x178] sm:$0xff]
            %284 = vst [vmem:[%s188 + $0x178] sm:$0xff] %v283
            %v285 = vld [vmem:[%s187 + $0x180] sm:$0xff]
            %286 = vst [vmem:[%s188 + $0x180] sm:$0xff] %v285
            %v287 = vld [vmem:[%s187 + $0x188] sm:$0xff]
            %288 = vst [vmem:[%s188 + $0x188] sm:$0xff] %v287
            %v289 = vld [vmem:[%s187 + $0x190] sm:$0xff]
            %290 = vst [vmem:[%s188 + $0x190] sm:$0xff] %v289
            %v291 = vld [vmem:[%s187 + $0x198] sm:$0xff]
            %292 = vst [vmem:[%s188 + $0x198] sm:$0xff] %v291
            %v293 = vld [vmem:[%s187 + $0x1a0] sm:$0xff]
            %294 = vst [vmem:[%s188 + $0x1a0] sm:$0xff] %v293
            %v295 = vld [vmem:[%s187 + $0x1a8] sm:$0xff]
            %296 = vst [vmem:[%s188 + $0x1a8] sm:$0xff] %v295
            %v297 = vld [vmem:[%s187 + $0x1b0] sm:$0xff]
            %298 = vst [vmem:[%s188 + $0x1b0] sm:$0xff] %v297
            %v299 = vld [vmem:[%s187 + $0x1b8] sm:$0xff]
            %300 = vst [vmem:[%s188 + $0x1b8] sm:$0xff] %v299
            %v301 = vld [vmem:[%s187 + $0x1c0] sm:$0xff]
            %302 = vst [vmem:[%s188 + $0x1c0] sm:$0xff] %v301
            %v303 = vld [vmem:[%s187 + $0x1c8] sm:$0xff]
            %304 = vst [vmem:[%s188 + $0x1c8] sm:$0xff] %v303
            %v305 = vld [vmem:[%s187 + $0x1d0] sm:$0xff]
            %306 = vst [vmem:[%s188 + $0x1d0] sm:$0xff] %v305
            %v307 = vld [vmem:[%s187 + $0x1d8] sm:$0xff]
            %308 = vst [vmem:[%s188 + $0x1d8] sm:$0xff] %v307
            %v309 = vld [vmem:[%s187 + $0x1e0] sm:$0xff]
            %310 = vst [vmem:[%s188 + $0x1e0] sm:$0xff] %v309
            %v311 = vld [vmem:[%s187 + $0x1e8] sm:$0xff]
            %312 = vst [vmem:[%s188 + $0x1e8] sm:$0xff] %v311
            %v313 = vld [vmem:[%s187 + $0x1f0] sm:$0xff]
            %314 = vst [vmem:[%s188 + $0x1f0] sm:$0xff] %v313
            %v315 = vld [vmem:[%s187 + $0x1f8] sm:$0xff]
            %316 = vst [vmem:[%s188 + $0x1f8] sm:$0xff] %v315
            %v317 = vld [vmem:[%s187 + $0x200] sm:$0xff]
            %318 = vst [vmem:[%s188 + $0x200] sm:$0xff] %v317
            %v319 = vld [vmem:[%s187 + $0x208] sm:$0xff]
            %320 = vst [vmem:[%s188 + $0x208] sm:$0xff] %v319
            %v321 = vld [vmem:[%s187 + $0x210] sm:$0xff]
            %322 = vst [vmem:[%s188 + $0x210] sm:$0xff] %v321
            %v323 = vld [vmem:[%s187 + $0x218] sm:$0xff]
            %324 = vst [vmem:[%s188 + $0x218] sm:$0xff] %v323
            %v325 = vld [vmem:[%s187 + $0x220] sm:$0xff]
            %326 = vst [vmem:[%s188 + $0x220] sm:$0xff] %v325
            %v327 = vld [vmem:[%s187 + $0x228] sm:$0xff]
            %328 = vst [vmem:[%s188 + $0x228] sm:$0xff] %v327
            %v329 = vld [vmem:[%s187 + $0x230] sm:$0xff]
            %330 = vst [vmem:[%s188 + $0x230] sm:$0xff] %v329
            %v331 = vld [vmem:[%s187 + $0x238] sm:$0xff]
            %332 = vst [vmem:[%s188 + $0x238] sm:$0xff] %v331
            %v333 = vld [vmem:[%s187 + $0x240] sm:$0xff]
            %334 = vst [vmem:[%s188 + $0x240] sm:$0xff] %v333
            %v335 = vld [vmem:[%s187 + $0x248] sm:$0xff]
            %336 = vst [vmem:[%s188 + $0x248] sm:$0xff] %v335
            %v337 = vld [vmem:[%s187 + $0x250] sm:$0xff]
            %338 = vst [vmem:[%s188 + $0x250] sm:$0xff] %v337
            %v339 = vld [vmem:[%s187 + $0x258] sm:$0xff]
            %340 = vst [vmem:[%s188 + $0x258] sm:$0xff] %v339
            %v341 = vld [vmem:[%s187 + $0x260] sm:$0xff]
            %342 = vst [vmem:[%s188 + $0x260] sm:$0xff] %v341
            %v343 = vld [vmem:[%s187 + $0x268] sm:$0xff]
            %344 = vst [vmem:[%s188 + $0x268] sm:$0xff] %v343
            %v345 = vld [vmem:[%s187 + $0x270] sm:$0xff]
            %346 = vst [vmem:[%s188 + $0x270] sm:$0xff] %v345
            %v347 = vld [vmem:[%s187 + $0x278] sm:$0xff]
            %348 = vst [vmem:[%s188 + $0x278] sm:$0xff] %v347
          $region52: #{cca_classifier_forward.5} parent=46 // loop_footer
            %s186 = sadd.s32 1, %s182
          $region53: #{cca_classifier_forward.5} parent=46 // loop_footer_branch
            %181 = sbr.rel target = $region49
          $region54: #{cca_classifier_forward.5} parent=46 // loop_exit
            _
        $region47: #{cca_classifier_forward.5} parent=31 // pred_fallthru
          _
        %p349 = pneg %p177
        // Predicated region
        $region55: #{cca_classifier_forward.5} parent=31 // pred_check
          _
        $region56: #{cca_classifier_forward.5} parent=31 // pred_check_branch
          %351 = sbr.rel (%p177) target = $region58
        $region57: #{cca_classifier_forward.5} parent=31 // pred_region
          %s352 = sand.u32 640, 7
        $region58: #{cca_classifier_forward.5} parent=31 // pred_fallthru
          _
      $region32: #{cca_classifier_forward.5} parent=27 // pred_fallthru
        _
      // Predicated region
      $region33: #{cca_classifier_forward.5} parent=27 // pred_check
        %p162 = pneg %p158
      $region34: #{cca_classifier_forward.5} parent=27 // pred_check_branch
        %164 = sbr.rel (%p162) target = $region36
      $region35: #{cca_classifier_forward.5} parent=27 // pred_region
        %s165 = sshllo.u32 0, 640
        loop: start=0, step=1, limit=1
        $region37: #{cca_classifier_forward.5} parent=35 // loop_pre_header
          _
        $region38: #{cca_classifier_forward.5} parent=35 // loop_header
          %s167 = sphi 0, %s171
          %p168 = scmp.ge.s32.totalorder %s167, 1
          %s172 = sphi %s156, %s156
          %s173 = sphi [#allocation2], [#allocation2]
        $region39: #{cca_classifier_forward.5} parent=35 // loop_header_branch
          %170 = sbr.rel (%p168) target = $region43
        $region40: #{cca_classifier_forward.5} parent=35 // loop_body
          %v174 = vld [vmem:[%s172] sm:%s165]
          %175 = vst [vmem:[%s173] sm:%s165] %v174
        $region41: #{cca_classifier_forward.5} parent=35 // loop_footer
          %s171 = sadd.s32 1, %s167
        $region42: #{cca_classifier_forward.5} parent=35 // loop_footer_branch
          %166 = sbr.rel target = $region38
        $region43: #{cca_classifier_forward.5} parent=35 // loop_exit
          _
      $region36: #{cca_classifier_forward.5} parent=27 // pred_fallthru
        _
      // Predicated region
      $region59: #{cca_classifier_forward.5} parent=27 // pred_check
        _
      $region60: #{cca_classifier_forward.5} parent=27 // pred_check_branch
        %355 = sbr.rel (0) target = $region62
      $region61: #{cca_classifier_forward.5} parent=27 // pred_region
        %356 = vsyncadd [#allocation3], 10240
      $region62: #{cca_classifier_forward.5} parent=27 // pred_fallthru
        _
      %s357 = smul.u32 4, 32
      %s358 = smul.u32 %s357, 5
      %s359 = smul.u32 %s358, 1
      %s360 = sshll.u32 %s359, 4
      %361 = dma.done [#allocation3], %s360
      %s362 = scalar_lea.vmem [#allocation2], 120
      %v363 = vld [vmem:[%s362] sm:$0xf]
      %v364 = vld [vmem:[%s362 + $0x4] sm:$0xf]
      %v365 = vld [vmem:[%s362 + $0x8] sm:$0xf]
      %v366 = vld [vmem:[%s362 + $0xc] sm:$0xf]
      %v367 = vld [vmem:[%s362 + $0x10] sm:$0xf]
      %v368 = vld [vmem:[%s362 + $0x14] sm:$0xf]
      %v369 = vld [vmem:[%s362 + $0x18] sm:$0xf]
      %v370 = vld [vmem:[%s362 + $0x1c] sm:$0xf]
      %v371 = vld [vmem:[%s362 + $0x20] sm:$0xf]
      %v372 = vld [vmem:[%s362 + $0x24] sm:$0xf]
      %v373 = vld [vmem:[%s362 + $0x28] sm:$0xf]
      %v374 = vld [vmem:[%s362 + $0x2c] sm:$0xf]
      %v375 = vld [vmem:[%s362 + $0x30] sm:$0xf]
      %v376 = vld [vmem:[%s362 + $0x34] sm:$0xf]
      %v377 = vld [vmem:[%s362 + $0x38] sm:$0xf]
      %v378 = vld [vmem:[%s362 + $0x3c] sm:$0xf]
      %v379 = vld [vmem:[%s362 + $0x40] sm:$0xf]
      %v380 = vld [vmem:[%s362 + $0x44] sm:$0xf]
      %v381 = vld [vmem:[%s362 + $0x48] sm:$0xf]
      %v382 = vld [vmem:[%s362 + $0x4c] sm:$0xf]
      %v383 = vld [vmem:[%s362 + $0x50] sm:$0xf]
      %v384 = vld [vmem:[%s362 + $0x54] sm:$0xf]
      %v385 = vld [vmem:[%s362 + $0x58] sm:$0xf]
      %v386 = vld [vmem:[%s362 + $0x5c] sm:$0xf]
      %v387 = vld [vmem:[%s362 + $0x60] sm:$0xf]
      %v388 = vld [vmem:[%s362 + $0x64] sm:$0xf]
      %v389 = vld [vmem:[%s362 + $0x68] sm:$0xf]
      %v390 = vld [vmem:[%s362 + $0x6c] sm:$0xf]
      %v391 = vld [vmem:[%s362 + $0x70] sm:$0xf]
      %v392 = vld [vmem:[%s362 + $0x74] sm:$0xf]
      %v393 = vld [vmem:[%s362 + $0x78] sm:$0xf]
      %v394 = vld [vmem:[%s362 + $0x7c] sm:$0xf]
      %v395 = vld [vmem:[%s362 + $0x80] sm:$0xf]
      %v396 = vld [vmem:[%s362 + $0x84] sm:$0xf]
      %v397 = vld [vmem:[%s362 + $0x88] sm:$0xf]
      %v398 = vld [vmem:[%s362 + $0x8c] sm:$0xf]
      %v399 = vld [vmem:[%s362 + $0x90] sm:$0xf]
      %v400 = vld [vmem:[%s362 + $0x94] sm:$0xf]
      %v401 = vld [vmem:[%s362 + $0x98] sm:$0xf]
      %v402 = vld [vmem:[%s362 + $0x9c] sm:$0xf]
      %vm427 = vcmask 1040384
      %vm428 = vcmask 1044484
      %vm429 = vmor %vm427, %vm428
      %v430 = vrot.slane %v363, 7
      %v431 = vrot.slane %v430, 4
      %v432 = vrot.slane %v364, 7
      %v433 = vsel %vm429, %v431, %v432
      %v434 = vrot.slane %v432, 4
      %v435 = vrot.slane %v365, 7
      %v436 = vsel %vm429, %v434, %v435
      %v437 = vrot.slane %v368, 7
      %v438 = vrot.slane %v437, 4
      %v439 = vrot.slane %v369, 7
      %v440 = vsel %vm429, %v438, %v439
      %v441 = vrot.slane %v439, 4
      %v442 = vrot.slane %v370, 7
      %v443 = vsel %vm429, %v441, %v442
      %v444 = vrot.slane %v373, 7
      %v445 = vrot.slane %v444, 4
      %v446 = vrot.slane %v374, 7
      %v447 = vsel %vm429, %v445, %v446
      %v448 = vrot.slane %v446, 4
      %v449 = vrot.slane %v375, 7
      %v450 = vsel %vm429, %v448, %v449
      %v451 = vrot.slane %v378, 7
      %v452 = vrot.slane %v451, 4
      %v453 = vrot.slane %v379, 7
      %v454 = vsel %vm429, %v452, %v453
      %v455 = vrot.slane %v453, 4
      %v456 = vrot.slane %v380, 7
      %v457 = vsel %vm429, %v455, %v456
      %v458 = vrot.slane %v383, 7
      %v459 = vrot.slane %v458, 4
      %v460 = vrot.slane %v384, 7
      %v461 = vsel %vm429, %v459, %v460
      %v462 = vrot.slane %v460, 4
      %v463 = vrot.slane %v385, 7
      %v464 = vsel %vm429, %v462, %v463
      %v465 = vrot.slane %v388, 7
      %v466 = vrot.slane %v465, 4
      %v467 = vrot.slane %v389, 7
      %v468 = vsel %vm429, %v466, %v467
      %v469 = vrot.slane %v467, 4
      %v470 = vrot.slane %v390, 7
      %v471 = vsel %vm429, %v469, %v470
      %v472 = vrot.slane %v393, 7
      %v473 = vrot.slane %v472, 4
      %v474 = vrot.slane %v394, 7
      %v475 = vsel %vm429, %v473, %v474
      %v476 = vrot.slane %v474, 4
      %v477 = vrot.slane %v395, 7
      %v478 = vsel %vm429, %v476, %v477
      %v479 = vrot.slane %v398, 7
      %v480 = vrot.slane %v479, 4
      %v481 = vrot.slane %v399, 7
      %v482 = vsel %vm429, %v480, %v481
      %v483 = vrot.slane %v481, 4
      %v484 = vrot.slane %v400, 7
      %v485 = vsel %vm429, %v483, %v484
      %v486 = vld [vmem:[%s1] sm:$0xf]
      %v487 = vld [vmem:[%s1 + $0x4] sm:$0xf]
      %v488 = vld [vmem:[%s1 + $0x8] sm:$0xf]
      %v489 = vld [vmem:[%s1 + $0xc] sm:$0xf]
      %v490 = vld [vmem:[%s1 + $0x10] sm:$0xf]
      %v491 = vld [vmem:[%s1 + $0x14] sm:$0xf]
      %v492 = vld [vmem:[%s1 + $0x18] sm:$0xf]
      %v493 = vld [vmem:[%s1 + $0x1c] sm:$0xf]
      %v494 = vld [vmem:[%s1 + $0x20] sm:$0xf]
      %v495 = vld [vmem:[%s1 + $0x24] sm:$0xf]
      %v496 = vld [vmem:[%s1 + $0x28] sm:$0xf]
      %v497 = vld [vmem:[%s1 + $0x2c] sm:$0xf]
      %v498 = vld [vmem:[%s1 + $0x30] sm:$0xf]
      %v499 = vld [vmem:[%s1 + $0x34] sm:$0xf]
      %v500 = vld [vmem:[%s1 + $0x38] sm:$0xf]
      %v501 = vld [vmem:[%s1 + $0x3c] sm:$0xf]
      %vm510 = vcmask 1041408
      %vm511 = vcmask 1045508
      %vm512 = vmor %vm510, %vm511
      %v513 = vrot.slane %v364, 6
      %v514 = vrot.slane %v513, 4
      %v515 = vrot.slane %v365, 6
      %v516 = vsel %vm512, %v514, %v515
      %v517 = vrot.slane %v515, 4
      %v518 = vrot.slane %v366, 6
      %v519 = vsel %vm512, %v517, %v518
      %v520 = vrot.slane %v369, 6
      %v521 = vrot.slane %v520, 4
      %v522 = vrot.slane %v370, 6
      %v523 = vsel %vm512, %v521, %v522
      %v524 = vrot.slane %v522, 4
      %v525 = vrot.slane %v371, 6
      %v526 = vsel %vm512, %v524, %v525
      %v527 = vrot.slane %v374, 6
      %v528 = vrot.slane %v527, 4
      %v529 = vrot.slane %v375, 6
      %v530 = vsel %vm512, %v528, %v529
      %v531 = vrot.slane %v529, 4
      %v532 = vrot.slane %v376, 6
      %v533 = vsel %vm512, %v531, %v532
      %v534 = vrot.slane %v379, 6
      %v535 = vrot.slane %v534, 4
      %v536 = vrot.slane %v380, 6
      %v537 = vsel %vm512, %v535, %v536
      %v538 = vrot.slane %v536, 4
      %v539 = vrot.slane %v381, 6
      %v540 = vsel %vm512, %v538, %v539
      %v541 = vrot.slane %v384, 6
      %v542 = vrot.slane %v541, 4
      %v543 = vrot.slane %v385, 6
      %v544 = vsel %vm512, %v542, %v543
      %v545 = vrot.slane %v543, 4
      %v546 = vrot.slane %v386, 6
      %v547 = vsel %vm512, %v545, %v546
      %v548 = vrot.slane %v389, 6
      %v549 = vrot.slane %v548, 4
      %v550 = vrot.slane %v390, 6
      %v551 = vsel %vm512, %v549, %v550
      %v552 = vrot.slane %v550, 4
      %v553 = vrot.slane %v391, 6
      %v554 = vsel %vm512, %v552, %v553
      %v555 = vrot.slane %v394, 6
      %v556 = vrot.slane %v555, 4
      %v557 = vrot.slane %v395, 6
      %v558 = vsel %vm512, %v556, %v557
      %v559 = vrot.slane %v557, 4
      %v560 = vrot.slane %v396, 6
      %v561 = vsel %vm512, %v559, %v560
      %v562 = vrot.slane %v399, 6
      %v563 = vrot.slane %v562, 4
      %v564 = vrot.slane %v400, 6
      %v565 = vsel %vm512, %v563, %v564
      %v566 = vrot.slane %v564, 4
      %v567 = vrot.slane %v401, 6
      %v568 = vsel %vm512, %v566, %v567
      %s569 = scalar_lea.vmem %s1, 64
      %v570 = vld [vmem:[%s569] sm:$0xf]
      %v571 = vld [vmem:[%s569 + $0x4] sm:$0xf]
      %v572 = vld [vmem:[%s569 + $0x8] sm:$0xf]
      %v573 = vld [vmem:[%s569 + $0xc] sm:$0xf]
      %v574 = vld [vmem:[%s569 + $0x10] sm:$0xf]
      %v575 = vld [vmem:[%s569 + $0x14] sm:$0xf]
      %v576 = vld [vmem:[%s569 + $0x18] sm:$0xf]
      %v577 = vld [vmem:[%s569 + $0x1c] sm:$0xf]
      %v578 = vld [vmem:[%s569 + $0x20] sm:$0xf]
      %v579 = vld [vmem:[%s569 + $0x24] sm:$0xf]
      %v580 = vld [vmem:[%s569 + $0x28] sm:$0xf]
      %v581 = vld [vmem:[%s569 + $0x2c] sm:$0xf]
      %v582 = vld [vmem:[%s569 + $0x30] sm:$0xf]
      %v583 = vld [vmem:[%s569 + $0x34] sm:$0xf]
      %v584 = vld [vmem:[%s569 + $0x38] sm:$0xf]
      %v585 = vld [vmem:[%s569 + $0x3c] sm:$0xf]
      %v586 = vunpack.c.l.b16 %v516
      %v587 = vunpack.c.l.b16 %v519
      %v588 = vunpack.c.l.b16 %v523
      %v589 = vunpack.c.l.b16 %v526
      %v590 = vunpack.c.l.b16 %v530
      %v591 = vunpack.c.l.b16 %v533
      %v592 = vunpack.c.l.b16 %v537
      %v593 = vunpack.c.l.b16 %v540
      %v594 = vunpack.c.l.b16 %v544
      %v595 = vunpack.c.l.b16 %v547
      %v596 = vunpack.c.l.b16 %v551
      %v597 = vunpack.c.l.b16 %v554
      %v598 = vunpack.c.l.b16 %v558
      %v599 = vunpack.c.l.b16 %v561
      %v600 = vunpack.c.l.b16 %v565
      %v601 = vunpack.c.l.b16 %v568
      %v602 = vpack.c.b16 %v587, %v586
      %v603 = vpack.c.b16 %v589, %v588
      %v604 = vpack.c.b16 %v591, %v590
      %v605 = vpack.c.b16 %v593, %v592
      %v606 = vpack.c.b16 %v595, %v594
      %v607 = vpack.c.b16 %v597, %v596
      %v608 = vpack.c.b16 %v599, %v598
      %v609 = vpack.c.b16 %v601, %v600
      %v634 = vunpack.c.l.b16 %v570
      %v635 = vunpack.c.l.b16 %v571
      %v636 = vunpack.c.l.b16 %v572
      %v637 = vunpack.c.l.b16 %v573
      %v638 = vunpack.c.l.b16 %v574
      %v639 = vunpack.c.l.b16 %v575
      %v640 = vunpack.c.l.b16 %v576
      %v641 = vunpack.c.l.b16 %v577
      %v642 = vunpack.c.l.b16 %v578
      %v643 = vunpack.c.l.b16 %v579
      %v644 = vunpack.c.l.b16 %v580
      %v645 = vunpack.c.l.b16 %v581
      %v646 = vunpack.c.l.b16 %v582
      %v647 = vunpack.c.l.b16 %v583
      %v648 = vunpack.c.l.b16 %v584
      %v649 = vunpack.c.l.b16 %v585
      %v650 = vpack.c.b16 %v635, %v634
      %v651 = vpack.c.b16 %v637, %v636
      %v652 = vpack.c.b16 %v639, %v638
      %v653 = vpack.c.b16 %v641, %v640
      %v654 = vpack.c.b16 %v643, %v642
      %v655 = vpack.c.b16 %v645, %v644
      %v656 = vpack.c.b16 %v647, %v646
      %v657 = vpack.c.b16 %v649, %v648
      %666 = vmatprep.subr.bf16.mxu0 0
      %667 = vmatpush1.bf16.msra.mxu0 %v650
      %668 = vmatprep.subr.bf16.mxu0 0
      %669 = vmatpush1.bf16.msra.mxu0 %v651
      %670 = vmatprep.subr.bf16.mxu0 0
      %671 = vmatpush1.bf16.msra.mxu0 %v652
      %672 = vmatprep.subr.bf16.mxu0 0
      %673 = vmatpush1.bf16.msra.mxu0 %v653
      %674 = vmatprep.subr.bf16.mxu0 0
      %675 = vmatpush1.bf16.msra.mxu0 %v654
      %676 = vmatprep.subr.bf16.mxu0 0
      %677 = vmatpush1.bf16.msra.mxu0 %v655
      %678 = vmatprep.subr.bf16.mxu0 0
      %679 = vmatpush1.bf16.msra.mxu0 %v656
      %680 = vmatprep.subr.bf16.mxu0 0
      %681 = vmatpush1.bf16.msra.mxu0 %v657
      %682 = vmatprep.subr.bf16.mxu0 0
      %683 = vmatpush1.bf16.msra.mxu0 0
      %684 = vmatprep.subr.bf16.mxu0 0
      %685 = vmatpush1.bf16.msra.mxu0 0
      %686 = vmatprep.subr.bf16.mxu0 0
      %687 = vmatpush1.bf16.msra.mxu0 0
      %688 = vmatprep.subr.bf16.mxu0 0
      %689 = vmatpush1.bf16.msra.mxu0 0
      %690 = vmatprep.subr.bf16.mxu0 0
      %691 = vmatpush1.bf16.msra.mxu0 0
      %692 = vmatprep.subr.bf16.mxu0 0
      %693 = vmatpush1.bf16.msra.mxu0 0
      %694 = vmatprep.subr.bf16.mxu0 0
      %695 = vmatpush1.bf16.msra.mxu0 0
      %696 = vmatprep.subr.bf16.mxu0 0
      %697 = vmatpush1.bf16.msra.mxu0 0
      %698 = vmatprep.mubr.bf16.mxu0 0
      %699 = vmatmul.mubr.bf16.gmra.mrb[0].mxu0 %v602
      %v700 = vpop.f32.mrb[0].mxu0
      %v701 = vadd.f32 0.0, %v700
      %v702 = vpop.f32.mrb[0].mxu0
      %v703 = vpop.f32.mrb[0].mxu0
      %v704 = vadd.f32 0.0, %v703
      %v705 = vpop.f32.mrb[0].mxu0
      %706 = vmatprep.mubr.bf16.mxu0 0
      %707 = vmatmul.mubr.bf16.gmra.mrb[0].mxu0 %v603
      %v708 = vpop.f32.mrb[0].mxu0
      %v709 = vadd.f32 0.0, %v708
      %v710 = vpop.f32.mrb[0].mxu0
      %v711 = vpop.f32.mrb[0].mxu0
      %v712 = vadd.f32 0.0, %v711
      %v713 = vpop.f32.mrb[0].mxu0
      %714 = vmatprep.mubr.bf16.mxu0 0
      %715 = vmatmul.mubr.bf16.gmra.mrb[0].mxu0 %v604
      %v716 = vpop.f32.mrb[0].mxu0
      %v717 = vadd.f32 0.0, %v716
      %v718 = vpop.f32.mrb[0].mxu0
      %v719 = vpop.f32.mrb[0].mxu0
      %v720 = vadd.f32 0.0, %v719
      %v721 = vpop.f32.mrb[0].mxu0
      %722 = vmatprep.mubr.bf16.mxu0 0
      %723 = vmatmul.mubr.bf16.gmra.mrb[0].mxu0 %v605
      %v724 = vpop.f32.mrb[0].mxu0
      %v725 = vadd.f32 0.0, %v724
      %v726 = vpop.f32.mrb[0].mxu0
      %v727 = vpop.f32.mrb[0].mxu0
      %v728 = vadd.f32 0.0, %v727
      %v729 = vpop.f32.mrb[0].mxu0
      %730 = vmatprep.mubr.bf16.mxu0 0
      %731 = vmatmul.mubr.bf16.gmra.mrb[0].mxu0 %v606
      %v732 = vpop.f32.mrb[0].mxu0
      %v733 = vadd.f32 0.0, %v732
      %v734 = vpop.f32.mrb[0].mxu0
      %v735 = vpop.f32.mrb[0].mxu0
      %v736 = vadd.f32 0.0, %v735
      %v737 = vpop.f32.mrb[0].mxu0
      %738 = vmatprep.mubr.bf16.mxu0 0
      %739 = vmatmul.mubr.bf16.gmra.mrb[0].mxu0 %v607
      %v740 = vpop.f32.mrb[0].mxu0
      %v741 = vadd.f32 0.0, %v740
      %v742 = vpop.f32.mrb[0].mxu0
      %v743 = vpop.f32.mrb[0].mxu0
      %v744 = vadd.f32 0.0, %v743
      %v745 = vpop.f32.mrb[0].mxu0
      %746 = vmatprep.mubr.bf16.mxu0 0
      %747 = vmatmul.mubr.bf16.gmra.mrb[0].mxu0 %v608
      %v748 = vpop.f32.mrb[0].mxu0
      %v749 = vadd.f32 0.0, %v748
      %v750 = vpop.f32.mrb[0].mxu0
      %v751 = vpop.f32.mrb[0].mxu0
      %v752 = vadd.f32 0.0, %v751
      %v753 = vpop.f32.mrb[0].mxu0
      %754 = vmatprep.mubr.bf16.mxu0 0
      %755 = vmatmul.mubr.bf16.gmra.mrb[0].mxu0 %v609
      %v756 = vpop.f32.mrb[0].mxu0
      %v757 = vadd.f32 0.0, %v756
      %v758 = vpop.f32.mrb[0].mxu0
      %v759 = vpop.f32.mrb[0].mxu0
      %v760 = vadd.f32 0.0, %v759
      %v761 = vpop.f32.mrb[0].mxu0
      %762 = vdwg.mxu0
      %v763 = vunpack.c.l.b16 %v433
      %v764 = vunpack.c.l.b16 %v436
      %v765 = vunpack.c.l.b16 %v440
      %v766 = vunpack.c.l.b16 %v443
      %v767 = vunpack.c.l.b16 %v447
      %v768 = vunpack.c.l.b16 %v450
      %v769 = vunpack.c.l.b16 %v454
      %v770 = vunpack.c.l.b16 %v457
      %v771 = vunpack.c.l.b16 %v461
      %v772 = vunpack.c.l.b16 %v464
      %v773 = vunpack.c.l.b16 %v468
      %v774 = vunpack.c.l.b16 %v471
      %v775 = vunpack.c.l.b16 %v475
      %v776 = vunpack.c.l.b16 %v478
      %v777 = vunpack.c.l.b16 %v482
      %v778 = vunpack.c.l.b16 %v485
      %v779 = vpack.c.b16 %v764, %v763
      %v780 = vpack.c.b16 %v766, %v765
      %v781 = vpack.c.b16 %v768, %v767
      %v782 = vpack.c.b16 %v770, %v769
      %v783 = vpack.c.b16 %v772, %v771
      %v784 = vpack.c.b16 %v774, %v773
      %v785 = vpack.c.b16 %v776, %v775
      %v786 = vpack.c.b16 %v778, %v777
      %v811 = vunpack.c.l.b16 %v486
      %v812 = vunpack.c.l.b16 %v487
      %v813 = vunpack.c.l.b16 %v488
      %v814 = vunpack.c.l.b16 %v489
      %v815 = vunpack.c.l.b16 %v490
      %v816 = vunpack.c.l.b16 %v491
      %v817 = vunpack.c.l.b16 %v492
      %v818 = vunpack.c.l.b16 %v493
      %v819 = vunpack.c.l.b16 %v494
      %v820 = vunpack.c.l.b16 %v495
      %v821 = vunpack.c.l.b16 %v496
      %v822 = vunpack.c.l.b16 %v497
      %v823 = vunpack.c.l.b16 %v498
      %v824 = vunpack.c.l.b16 %v499
      %v825 = vunpack.c.l.b16 %v500
      %v826 = vunpack.c.l.b16 %v501
      %v827 = vpack.c.b16 %v812, %v811
      %v828 = vpack.c.b16 %v814, %v813
      %v829 = vpack.c.b16 %v816, %v815
      %v830 = vpack.c.b16 %v818, %v817
      %v831 = vpack.c.b16 %v820, %v819
      %v832 = vpack.c.b16 %v822, %v821
      %v833 = vpack.c.b16 %v824, %v823
      %v834 = vpack.c.b16 %v826, %v825
      %843 = vmatprep.subr.bf16.mxu0 0
      %844 = vmatpush1.bf16.msra.mxu0 %v827
      %845 = vmatprep.subr.bf16.mxu0 0
      %846 = vmatpush1.bf16.msra.mxu0 %v828
      %847 = vmatprep.subr.bf16.mxu0 0
      %848 = vmatpush1.bf16.msra.mxu0 %v829
      %849 = vmatprep.subr.bf16.mxu0 0
      %850 = vmatpush1.bf16.msra.mxu0 %v830
      %851 = vmatprep.subr.bf16.mxu0 0
      %852 = vmatpush1.bf16.msra.mxu0 %v831
      %853 = vmatprep.subr.bf16.mxu0 0
      %854 = vmatpush1.bf16.msra.mxu0 %v832
      %855 = vmatprep.subr.bf16.mxu0 0
      %856 = vmatpush1.bf16.msra.mxu0 %v833
      %857 = vmatprep.subr.bf16.mxu0 0
      %858 = vmatpush1.bf16.msra.mxu0 %v834
      %859 = vmatprep.subr.bf16.mxu0 0
      %860 = vmatpush1.bf16.msra.mxu0 0
      %861 = vmatprep.subr.bf16.mxu0 0
      %862 = vmatpush1.bf16.msra.mxu0 0
      %863 = vmatprep.subr.bf16.mxu0 0
      %864 = vmatpush1.bf16.msra.mxu0 0
      %865 = vmatprep.subr.bf16.mxu0 0
      %866 = vmatpush1.bf16.msra.mxu0 0
      %867 = vmatprep.subr.bf16.mxu0 0
      %868 = vmatpush1.bf16.msra.mxu0 0
      %869 = vmatprep.subr.bf16.mxu0 0
      %870 = vmatpush1.bf16.msra.mxu0 0
      %871 = vmatprep.subr.bf16.mxu0 0
      %872 = vmatpush1.bf16.msra.mxu0 0
      %873 = vmatprep.subr.bf16.mxu0 0
      %874 = vmatpush1.bf16.msra.mxu0 0
      %875 = vmatprep.mubr.bf16.mxu0 0
      %876 = vmatmul.mubr.bf16.gmra.mrb[0].mxu0 %v779
      %v877 = vpop.f32.mrb[0].mxu0
      %v878 = vadd.f32 %v701, %v877
      %v879 = vpop.f32.mrb[0].mxu0
      %v880 = vpop.f32.mrb[0].mxu0
      %v881 = vadd.f32 %v704, %v880
      %v882 = vpop.f32.mrb[0].mxu0
      %883 = vmatprep.mubr.bf16.mxu0 0
      %884 = vmatmul.mubr.bf16.gmra.mrb[0].mxu0 %v780
      %v885 = vpop.f32.mrb[0].mxu0
      %v886 = vadd.f32 %v709, %v885
      %v887 = vpop.f32.mrb[0].mxu0
      %v888 = vpop.f32.mrb[0].mxu0
      %v889 = vadd.f32 %v712, %v888
      %v890 = vpop.f32.mrb[0].mxu0
      %891 = vmatprep.mubr.bf16.mxu0 0
      %892 = vmatmul.mubr.bf16.gmra.mrb[0].mxu0 %v781
      %v893 = vpop.f32.mrb[0].mxu0
      %v894 = vadd.f32 %v717, %v893
      %v895 = vpop.f32.mrb[0].mxu0
      %v896 = vpop.f32.mrb[0].mxu0
      %v897 = vadd.f32 %v720, %v896
      %v898 = vpop.f32.mrb[0].mxu0
      %899 = vmatprep.mubr.bf16.mxu0 0
      %900 = vmatmul.mubr.bf16.gmra.mrb[0].mxu0 %v782
      %v901 = vpop.f32.mrb[0].mxu0
      %v902 = vadd.f32 %v725, %v901
      %v903 = vpop.f32.mrb[0].mxu0
      %v904 = vpop.f32.mrb[0].mxu0
      %v905 = vadd.f32 %v728, %v904
      %v906 = vpop.f32.mrb[0].mxu0
      %907 = vmatprep.mubr.bf16.mxu0 0
      %908 = vmatmul.mubr.bf16.gmra.mrb[0].mxu0 %v783
      %v909 = vpop.f32.mrb[0].mxu0
      %v910 = vadd.f32 %v733, %v909
      %v911 = vpop.f32.mrb[0].mxu0
      %v912 = vpop.f32.mrb[0].mxu0
      %v913 = vadd.f32 %v736, %v912
      %v914 = vpop.f32.mrb[0].mxu0
      %915 = vmatprep.mubr.bf16.mxu0 0
      %916 = vmatmul.mubr.bf16.gmra.mrb[0].mxu0 %v784
      %v917 = vpop.f32.mrb[0].mxu0
      %v918 = vadd.f32 %v741, %v917
      %v919 = vpop.f32.mrb[0].mxu0
      %v920 = vpop.f32.mrb[0].mxu0
      %v921 = vadd.f32 %v744, %v920
      %v922 = vpop.f32.mrb[0].mxu0
      %923 = vmatprep.mubr.bf16.mxu0 0
      %924 = vmatmul.mubr.bf16.gmra.mrb[0].mxu0 %v785
      %v925 = vpop.f32.mrb[0].mxu0
      %v926 = vadd.f32 %v749, %v925
      %v927 = vpop.f32.mrb[0].mxu0
      %v928 = vpop.f32.mrb[0].mxu0
      %v929 = vadd.f32 %v752, %v928
      %v930 = vpop.f32.mrb[0].mxu0
      %931 = vmatprep.mubr.bf16.mxu0 0
      %932 = vmatmul.mubr.bf16.gmra.mrb[0].mxu0 %v786
      %v933 = vpop.f32.mrb[0].mxu0
      %v934 = vadd.f32 %v757, %v933
      %v935 = vpop.f32.mrb[0].mxu0
      %v936 = vpop.f32.mrb[0].mxu0
      %v937 = vadd.f32 %v760, %v936
      %v938 = vpop.f32.mrb[0].mxu0
      %939 = vdwg.mxu0
      %vm948 = vcmask 1042432
      %vm949 = vcmask 1046532
      %vm950 = vmor %vm948, %vm949
      %v951 = vrot.slane %v365, 5
      %v952 = vrot.slane %v951, 4
      %v953 = vrot.slane %v366, 5
      %v954 = vsel %vm950, %v952, %v953
      %v955 = vrot.slane %v953, 4
      %v956 = vrot.slane %v367, 5
      %v957 = vsel %vm950, %v955, %v956
      %v958 = vrot.slane %v370, 5
      %v959 = vrot.slane %v958, 4
      %v960 = vrot.slane %v371, 5
      %v961 = vsel %vm950, %v959, %v960
      %v962 = vrot.slane %v960, 4
      %v963 = vrot.slane %v372, 5
      %v964 = vsel %vm950, %v962, %v963
      %v965 = vrot.slane %v375, 5
      %v966 = vrot.slane %v965, 4
      %v967 = vrot.slane %v376, 5
      %v968 = vsel %vm950, %v966, %v967
      %v969 = vrot.slane %v967, 4
      %v970 = vrot.slane %v377, 5
      %v971 = vsel %vm950, %v969, %v970
      %v972 = vrot.slane %v380, 5
      %v973 = vrot.slane %v972, 4
      %v974 = vrot.slane %v381, 5
      %v975 = vsel %vm950, %v973, %v974
      %v976 = vrot.slane %v974, 4
      %v977 = vrot.slane %v382, 5
      %v978 = vsel %vm950, %v976, %v977
      %v979 = vrot.slane %v385, 5
      %v980 = vrot.slane %v979, 4
      %v981 = vrot.slane %v386, 5
      %v982 = vsel %vm950, %v980, %v981
      %v983 = vrot.slane %v981, 4
      %v984 = vrot.slane %v387, 5
      %v985 = vsel %vm950, %v983, %v984
      %v986 = vrot.slane %v390, 5
      %v987 = vrot.slane %v986, 4
      %v988 = vrot.slane %v391, 5
      %v989 = vsel %vm950, %v987, %v988
      %v990 = vrot.slane %v988, 4
      %v991 = vrot.slane %v392, 5
      %v992 = vsel %vm950, %v990, %v991
      %v993 = vrot.slane %v395, 5
      %v994 = vrot.slane %v993, 4
      %v995 = vrot.slane %v396, 5
      %v996 = vsel %vm950, %v994, %v995
      %v997 = vrot.slane %v995, 4
      %v998 = vrot.slane %v397, 5
      %v999 = vsel %vm950, %v997, %v998
      %v1000 = vrot.slane %v400, 5
      %v1001 = vrot.slane %v1000, 4
      %v1002 = vrot.slane %v401, 5
      %v1003 = vsel %vm950, %v1001, %v1002
      %v1004 = vrot.slane %v1002, 4
      %v1005 = vrot.slane %v402, 5
      %v1006 = vsel %vm950, %v1004, %v1005
      %s1007 = scalar_lea.vmem %s1, 128
      %v1008 = vld [vmem:[%s1007] sm:$0xf]
      %v1009 = vld [vmem:[%s1007 + $0x4] sm:$0xf]
      %v1010 = vld [vmem:[%s1007 + $0x8] sm:$0xf]
      %v1011 = vld [vmem:[%s1007 + $0xc] sm:$0xf]
      %v1012 = vld [vmem:[%s1007 + $0x10] sm:$0xf]
      %v1013 = vld [vmem:[%s1007 + $0x14] sm:$0xf]
      %v1014 = vld [vmem:[%s1007 + $0x18] sm:$0xf]
      %v1015 = vld [vmem:[%s1007 + $0x1c] sm:$0xf]
      %v1016 = vld [vmem:[%s1007 + $0x20] sm:$0xf]
      %v1017 = vld [vmem:[%s1007 + $0x24] sm:$0xf]
      %v1018 = vld [vmem:[%s1007 + $0x28] sm:$0xf]
      %v1019 = vld [vmem:[%s1007 + $0x2c] sm:$0xf]
      %v1020 = vld [vmem:[%s1007 + $0x30] sm:$0xf]
      %v1021 = vld [vmem:[%s1007 + $0x34] sm:$0xf]
      %v1022 = vld [vmem:[%s1007 + $0x38] sm:$0xf]
      %v1023 = vld [vmem:[%s1007 + $0x3c] sm:$0xf]
      %v1024 = vunpack.c.l.b16 %v954
      %v1025 = vunpack.c.l.b16 %v957
      %v1026 = vunpack.c.l.b16 %v961
      %v1027 = vunpack.c.l.b16 %v964
      %v1028 = vunpack.c.l.b16 %v968
      %v1029 = vunpack.c.l.b16 %v971
      %v1030 = vunpack.c.l.b16 %v975
      %v1031 = vunpack.c.l.b16 %v978
      %v1032 = vunpack.c.l.b16 %v982
      %v1033 = vunpack.c.l.b16 %v985
      %v1034 = vunpack.c.l.b16 %v989
      %v1035 = vunpack.c.l.b16 %v992
      %v1036 = vunpack.c.l.b16 %v996
      %v1037 = vunpack.c.l.b16 %v999
      %v1038 = vunpack.c.l.b16 %v1003
      %v1039 = vunpack.c.l.b16 %v1006
      %v1040 = vpack.c.b16 %v1025, %v1024
      %v1041 = vpack.c.b16 %v1027, %v1026
      %v1042 = vpack.c.b16 %v1029, %v1028
      %v1043 = vpack.c.b16 %v1031, %v1030
      %v1044 = vpack.c.b16 %v1033, %v1032
      %v1045 = vpack.c.b16 %v1035, %v1034
      %v1046 = vpack.c.b16 %v1037, %v1036
      %v1047 = vpack.c.b16 %v1039, %v1038
      %v1072 = vunpack.c.l.b16 %v1008
      %v1073 = vunpack.c.l.b16 %v1009
      %v1074 = vunpack.c.l.b16 %v1010
      %v1075 = vunpack.c.l.b16 %v1011
      %v1076 = vunpack.c.l.b16 %v1012
      %v1077 = vunpack.c.l.b16 %v1013
      %v1078 = vunpack.c.l.b16 %v1014
      %v1079 = vunpack.c.l.b16 %v1015
      %v1080 = vunpack.c.l.b16 %v1016
      %v1081 = vunpack.c.l.b16 %v1017
      %v1082 = vunpack.c.l.b16 %v1018
      %v1083 = vunpack.c.l.b16 %v1019
      %v1084 = vunpack.c.l.b16 %v1020
      %v1085 = vunpack.c.l.b16 %v1021
      %v1086 = vunpack.c.l.b16 %v1022
      %v1087 = vunpack.c.l.b16 %v1023
      %v1088 = vpack.c.b16 %v1073, %v1072
      %v1089 = vpack.c.b16 %v1075, %v1074
      %v1090 = vpack.c.b16 %v1077, %v1076
      %v1091 = vpack.c.b16 %v1079, %v1078
      %v1092 = vpack.c.b16 %v1081, %v1080
      %v1093 = vpack.c.b16 %v1083, %v1082
      %v1094 = vpack.c.b16 %v1085, %v1084
      %v1095 = vpack.c.b16 %v1087, %v1086
      %1104 = vmatprep.subr.bf16.mxu0 0
      %1105 = vmatpush1.bf16.msra.mxu0 %v1088
      %1106 = vmatprep.subr.bf16.mxu0 0
      %1107 = vmatpush1.bf16.msra.mxu0 %v1089
      %1108 = vmatprep.subr.bf16.mxu0 0
      %1109 = vmatpush1.bf16.msra.mxu0 %v1090
      %1110 = vmatprep.subr.bf16.mxu0 0
      %1111 = vmatpush1.bf16.msra.mxu0 %v1091
      %1112 = vmatprep.subr.bf16.mxu0 0
      %1113 = vmatpush1.bf16.msra.mxu0 %v1092
      %1114 = vmatprep.subr.bf16.mxu0 0
      %1115 = vmatpush1.bf16.msra.mxu0 %v1093
      %1116 = vmatprep.subr.bf16.mxu0 0
      %1117 = vmatpush1.bf16.msra.mxu0 %v1094
      %1118 = vmatprep.subr.bf16.mxu0 0
      %1119 = vmatpush1.bf16.msra.mxu0 %v1095
      %1120 = vmatprep.subr.bf16.mxu0 0
      %1121 = vmatpush1.bf16.msra.mxu0 0
      %1122 = vmatprep.subr.bf16.mxu0 0
      %1123 = vmatpush1.bf16.msra.mxu0 0
      %1124 = vmatprep.subr.bf16.mxu0 0
      %1125 = vmatpush1.bf16.msra.mxu0 0
      %1126 = vmatprep.subr.bf16.mxu0 0
      %1127 = vmatpush1.bf16.msra.mxu0 0
      %1128 = vmatprep.subr.bf16.mxu0 0
      %1129 = vmatpush1.bf16.msra.mxu0 0
      %1130 = vmatprep.subr.bf16.mxu0 0
      %1131 = vmatpush1.bf16.msra.mxu0 0
      %1132 = vmatprep.subr.bf16.mxu0 0
      %1133 = vmatpush1.bf16.msra.mxu0 0
      %1134 = vmatprep.subr.bf16.mxu0 0
      %1135 = vmatpush1.bf16.msra.mxu0 0
      %1136 = vmatprep.mubr.bf16.mxu0 0
      %1137 = vmatmul.mubr.bf16.gmra.mrb[0].mxu0 %v1040
      %v1138 = vpop.f32.mrb[0].mxu0
      %v1139 = vadd.f32 0.0, %v1138
      %v1140 = vpop.f32.mrb[0].mxu0
      %v1141 = vpop.f32.mrb[0].mxu0
      %v1142 = vadd.f32 0.0, %v1141
      %v1143 = vpop.f32.mrb[0].mxu0
      %1144 = vmatprep.mubr.bf16.mxu0 0
      %1145 = vmatmul.mubr.bf16.gmra.mrb[0].mxu0 %v1041
      %v1146 = vpop.f32.mrb[0].mxu0
      %v1147 = vadd.f32 0.0, %v1146
      %v1148 = vpop.f32.mrb[0].mxu0
      %v1149 = vpop.f32.mrb[0].mxu0
      %v1150 = vadd.f32 0.0, %v1149
      %v1151 = vpop.f32.mrb[0].mxu0
      %1152 = vmatprep.mubr.bf16.mxu0 0
      %1153 = vmatmul.mubr.bf16.gmra.mrb[0].mxu0 %v1042
      %v1154 = vpop.f32.mrb[0].mxu0
      %v1155 = vadd.f32 0.0, %v1154
      %v1156 = vpop.f32.mrb[0].mxu0
      %v1157 = vpop.f32.mrb[0].mxu0
      %v1158 = vadd.f32 0.0, %v1157
      %v1159 = vpop.f32.mrb[0].mxu0
      %1160 = vmatprep.mubr.bf16.mxu0 0
      %1161 = vmatmul.mubr.bf16.gmra.mrb[0].mxu0 %v1043
      %v1162 = vpop.f32.mrb[0].mxu0
      %v1163 = vadd.f32 0.0, %v1162
      %v1164 = vpop.f32.mrb[0].mxu0
      %v1165 = vpop.f32.mrb[0].mxu0
      %v1166 = vadd.f32 0.0, %v1165
      %v1167 = vpop.f32.mrb[0].mxu0
      %1168 = vmatprep.mubr.bf16.mxu0 0
      %1169 = vmatmul.mubr.bf16.gmra.mrb[0].mxu0 %v1044
      %v1170 = vpop.f32.mrb[0].mxu0
      %v1171 = vadd.f32 0.0, %v1170
      %v1172 = vpop.f32.mrb[0].mxu0
      %v1173 = vpop.f32.mrb[0].mxu0
      %v1174 = vadd.f32 0.0, %v1173
      %v1175 = vpop.f32.mrb[0].mxu0
      %1176 = vmatprep.mubr.bf16.mxu0 0
      %1177 = vmatmul.mubr.bf16.gmra.mrb[0].mxu0 %v1045
      %v1178 = vpop.f32.mrb[0].mxu0
      %v1179 = vadd.f32 0.0, %v1178
      %v1180 = vpop.f32.mrb[0].mxu0
      %v1181 = vpop.f32.mrb[0].mxu0
      %v1182 = vadd.f32 0.0, %v1181
      %v1183 = vpop.f32.mrb[0].mxu0
      %1184 = vmatprep.mubr.bf16.mxu0 0
      %1185 = vmatmul.mubr.bf16.gmra.mrb[0].mxu0 %v1046
      %v1186 = vpop.f32.mrb[0].mxu0
      %v1187 = vadd.f32 0.0, %v1186
      %v1188 = vpop.f32.mrb[0].mxu0
      %v1189 = vpop.f32.mrb[0].mxu0
      %v1190 = vadd.f32 0.0, %v1189
      %v1191 = vpop.f32.mrb[0].mxu0
      %1192 = vmatprep.mubr.bf16.mxu0 0
      %1193 = vmatmul.mubr.bf16.gmra.mrb[0].mxu0 %v1047
      %v1194 = vpop.f32.mrb[0].mxu0
      %v1195 = vadd.f32 0.0, %v1194
      %v1196 = vpop.f32.mrb[0].mxu0
      %v1197 = vpop.f32.mrb[0].mxu0
      %v1198 = vadd.f32 0.0, %v1197
      %v1199 = vpop.f32.mrb[0].mxu0
      %1200 = vdwg.mxu0
      %v1201 = vadd.f32 %v878, %v1139
      %v1202 = vadd.f32 %v881, %v1142
      %v1203 = vadd.f32 %v886, %v1147
      %v1204 = vadd.f32 %v889, %v1150
      %v1205 = vadd.f32 %v894, %v1155
      %v1206 = vadd.f32 %v897, %v1158
      %v1207 = vadd.f32 %v902, %v1163
      %v1208 = vadd.f32 %v905, %v1166
      %v1209 = vadd.f32 %v910, %v1171
      %v1210 = vadd.f32 %v913, %v1174
      %v1211 = vadd.f32 %v918, %v1179
      %v1212 = vadd.f32 %v921, %v1182
      %v1213 = vadd.f32 %v926, %v1187
      %v1214 = vadd.f32 %v929, %v1190
      %v1215 = vadd.f32 %v934, %v1195
      %v1216 = vadd.f32 %v937, %v1198
      %s1217 = scalar_lea.vmem [#allocation2], 240
      %v1218 = vld [vmem:[%s1217] sm:$0xf]
      %v1219 = vld [vmem:[%s1217 + $0x4] sm:$0xf]
      %v1220 = vld [vmem:[%s1217 + $0x8] sm:$0xf]
      %v1221 = vld [vmem:[%s1217 + $0xc] sm:$0xf]
      %v1222 = vld [vmem:[%s1217 + $0x10] sm:$0xf]
      %v1223 = vld [vmem:[%s1217 + $0x14] sm:$0xf]
      %v1224 = vld [vmem:[%s1217 + $0x18] sm:$0xf]
      %v1225 = vld [vmem:[%s1217 + $0x1c] sm:$0xf]
      %v1226 = vld [vmem:[%s1217 + $0x20] sm:$0xf]
      %v1227 = vld [vmem:[%s1217 + $0x24] sm:$0xf]
      %v1228 = vld [vmem:[%s1217 + $0x28] sm:$0xf]
      %v1229 = vld [vmem:[%s1217 + $0x2c] sm:$0xf]
      %v1230 = vld [vmem:[%s1217 + $0x30] sm:$0xf]
      %v1231 = vld [vmem:[%s1217 + $0x34] sm:$0xf]
      %v1232 = vld [vmem:[%s1217 + $0x38] sm:$0xf]
      %v1233 = vld [vmem:[%s1217 + $0x3c] sm:$0xf]
      %v1234 = vld [vmem:[%s1217 + $0x40] sm:$0xf]
      %v1235 = vld [vmem:[%s1217 + $0x44] sm:$0xf]
      %v1236 = vld [vmem:[%s1217 + $0x48] sm:$0xf]
      %v1237 = vld [vmem:[%s1217 + $0x4c] sm:$0xf]
      %v1238 = vld [vmem:[%s1217 + $0x50] sm:$0xf]
      %v1239 = vld [vmem:[%s1217 + $0x54] sm:$0xf]
      %v1240 = vld [vmem:[%s1217 + $0x58] sm:$0xf]
      %v1241 = vld [vmem:[%s1217 + $0x5c] sm:$0xf]
      %v1242 = vld [vmem:[%s1217 + $0x60] sm:$0xf]
      %v1243 = vld [vmem:[%s1217 + $0x64] sm:$0xf]
      %v1244 = vld [vmem:[%s1217 + $0x68] sm:$0xf]
      %v1245 = vld [vmem:[%s1217 + $0x6c] sm:$0xf]
      %v1246 = vld [vmem:[%s1217 + $0x70] sm:$0xf]
      %v1247 = vld [vmem:[%s1217 + $0x74] sm:$0xf]
      %v1248 = vld [vmem:[%s1217 + $0x78] sm:$0xf]
      %v1249 = vld [vmem:[%s1217 + $0x7c] sm:$0xf]
      %v1250 = vld [vmem:[%s1217 + $0x80] sm:$0xf]
      %v1251 = vld [vmem:[%s1217 + $0x84] sm:$0xf]
      %v1252 = vld [vmem:[%s1217 + $0x88] sm:$0xf]
      %v1253 = vld [vmem:[%s1217 + $0x8c] sm:$0xf]
      %v1254 = vld [vmem:[%s1217 + $0x90] sm:$0xf]
      %v1255 = vld [vmem:[%s1217 + $0x94] sm:$0xf]
      %v1256 = vld [vmem:[%s1217 + $0x98] sm:$0xf]
      %v1257 = vld [vmem:[%s1217 + $0x9c] sm:$0xf]
      %v1282 = vrot.slane %v1218, 7
      %v1283 = vrot.slane %v1282, 4
      %v1284 = vrot.slane %v1219, 7
      %v1285 = vsel %vm429, %v1283, %v1284
      %v1286 = vrot.slane %v1284, 4
      %v1287 = vrot.slane %v1220, 7
      %v1288 = vsel %vm429, %v1286, %v1287
      %v1289 = vrot.slane %v1223, 7
      %v1290 = vrot.slane %v1289, 4
      %v1291 = vrot.slane %v1224, 7
      %v1292 = vsel %vm429, %v1290, %v1291
      %v1293 = vrot.slane %v1291, 4
      %v1294 = vrot.slane %v1225, 7
      %v1295 = vsel %vm429, %v1293, %v1294
      %v1296 = vrot.slane %v1228, 7
      %v1297 = vrot.slane %v1296, 4
      %v1298 = vrot.slane %v1229, 7
      %v1299 = vsel %vm429, %v1297, %v1298
      %v1300 = vrot.slane %v1298, 4
      %v1301 = vrot.slane %v1230, 7
      %v1302 = vsel %vm429, %v1300, %v1301
      %v1303 = vrot.slane %v1233, 7
      %v1304 = vrot.slane %v1303, 4
      %v1305 = vrot.slane %v1234, 7
      %v1306 = vsel %vm429, %v1304, %v1305
      %v1307 = vrot.slane %v1305, 4
      %v1308 = vrot.slane %v1235, 7
      %v1309 = vsel %vm429, %v1307, %v1308
      %v1310 = vrot.slane %v1238, 7
      %v1311 = vrot.slane %v1310, 4
      %v1312 = vrot.slane %v1239, 7
      %v1313 = vsel %vm429, %v1311, %v1312
      %v1314 = vrot.slane %v1312, 4
      %v1315 = vrot.slane %v1240, 7
      %v1316 = vsel %vm429, %v1314, %v1315
      %v1317 = vrot.slane %v1243, 7
      %v1318 = vrot.slane %v1317, 4
      %v1319 = vrot.slane %v1244, 7
      %v1320 = vsel %vm429, %v1318, %v1319
      %v1321 = vrot.slane %v1319, 4
      %v1322 = vrot.slane %v1245, 7
      %v1323 = vsel %vm429, %v1321, %v1322
      %v1324 = vrot.slane %v1248, 7
      %v1325 = vrot.slane %v1324, 4
      %v1326 = vrot.slane %v1249, 7
      %v1327 = vsel %vm429, %v1325, %v1326
      %v1328 = vrot.slane %v1326, 4
      %v1329 = vrot.slane %v1250, 7
      %v1330 = vsel %vm429, %v1328, %v1329
      %v1331 = vrot.slane %v1253, 7
      %v1332 = vrot.slane %v1331, 4
      %v1333 = vrot.slane %v1254, 7
      %v1334 = vsel %vm429, %v1332, %v1333
      %v1335 = vrot.slane %v1333, 4
      %v1336 = vrot.slane %v1255, 7
      %v1337 = vsel %vm429, %v1335, %v1336
      %s1338 = scalar_lea.vmem %s1, 192
      %v1339 = vld [vmem:[%s1338] sm:$0xf]
      %v1340 = vld [vmem:[%s1338 + $0x4] sm:$0xf]
      %v1341 = vld [vmem:[%s1338 + $0x8] sm:$0xf]
      %v1342 = vld [vmem:[%s1338 + $0xc] sm:$0xf]
      %v1343 = vld [vmem:[%s1338 + $0x10] sm:$0xf]
      %v1344 = vld [vmem:[%s1338 + $0x14] sm:$0xf]
      %v1345 = vld [vmem:[%s1338 + $0x18] sm:$0xf]
      %v1346 = vld [vmem:[%s1338 + $0x1c] sm:$0xf]
      %v1347 = vld [vmem:[%s1338 + $0x20] sm:$0xf]
      %v1348 = vld [vmem:[%s1338 + $0x24] sm:$0xf]
      %v1349 = vld [vmem:[%s1338 + $0x28] sm:$0xf]
      %v1350 = vld [vmem:[%s1338 + $0x2c] sm:$0xf]
      %v1351 = vld [vmem:[%s1338 + $0x30] sm:$0xf]
      %v1352 = vld [vmem:[%s1338 + $0x34] sm:$0xf]
      %v1353 = vld [vmem:[%s1338 + $0x38] sm:$0xf]
      %v1354 = vld [vmem:[%s1338 + $0x3c] sm:$0xf]
      %v1355 = vunpack.c.l.b16 %v1285
      %v1356 = vunpack.c.l.b16 %v1288
      %v1357 = vunpack.c.l.b16 %v1292
      %v1358 = vunpack.c.l.b16 %v1295
      %v1359 = vunpack.c.l.b16 %v1299
      %v1360 = vunpack.c.l.b16 %v1302
      %v1361 = vunpack.c.l.b16 %v1306
      %v1362 = vunpack.c.l.b16 %v1309
      %v1363 = vunpack.c.l.b16 %v1313
      %v1364 = vunpack.c.l.b16 %v1316
      %v1365 = vunpack.c.l.b16 %v1320
      %v1366 = vunpack.c.l.b16 %v1323
      %v1367 = vunpack.c.l.b16 %v1327
      %v1368 = vunpack.c.l.b16 %v1330
      %v1369 = vunpack.c.l.b16 %v1334
      %v1370 = vunpack.c.l.b16 %v1337
      %v1371 = vpack.c.b16 %v1356, %v1355
      %v1372 = vpack.c.b16 %v1358, %v1357
      %v1373 = vpack.c.b16 %v1360, %v1359
      %v1374 = vpack.c.b16 %v1362, %v1361
      %v1375 = vpack.c.b16 %v1364, %v1363
      %v1376 = vpack.c.b16 %v1366, %v1365
      %v1377 = vpack.c.b16 %v1368, %v1367
      %v1378 = vpack.c.b16 %v1370, %v1369
      %v1403 = vunpack.c.l.b16 %v1339
      %v1404 = vunpack.c.l.b16 %v1340
      %v1405 = vunpack.c.l.b16 %v1341
      %v1406 = vunpack.c.l.b16 %v1342
      %v1407 = vunpack.c.l.b16 %v1343
      %v1408 = vunpack.c.l.b16 %v1344
      %v1409 = vunpack.c.l.b16 %v1345
      %v1410 = vunpack.c.l.b16 %v1346
      %v1411 = vunpack.c.l.b16 %v1347
      %v1412 = vunpack.c.l.b16 %v1348
      %v1413 = vunpack.c.l.b16 %v1349
      %v1414 = vunpack.c.l.b16 %v1350
      %v1415 = vunpack.c.l.b16 %v1351
      %v1416 = vunpack.c.l.b16 %v1352
      %v1417 = vunpack.c.l.b16 %v1353
      %v1418 = vunpack.c.l.b16 %v1354
      %v1419 = vpack.c.b16 %v1404, %v1403
      %v1420 = vpack.c.b16 %v1406, %v1405
      %v1421 = vpack.c.b16 %v1408, %v1407
      %v1422 = vpack.c.b16 %v1410, %v1409
      %v1423 = vpack.c.b16 %v1412, %v1411
      %v1424 = vpack.c.b16 %v1414, %v1413
      %v1425 = vpack.c.b16 %v1416, %v1415
      %v1426 = vpack.c.b16 %v1418, %v1417
      %1435 = vmatprep.subr.bf16.mxu0 0
      %1436 = vmatpush1.bf16.msra.mxu0 %v1419
      %1437 = vmatprep.subr.bf16.mxu0 0
      %1438 = vmatpush1.bf16.msra.mxu0 %v1420
      %1439 = vmatprep.subr.bf16.mxu0 0
      %1440 = vmatpush1.bf16.msra.mxu0 %v1421
      %1441 = vmatprep.subr.bf16.mxu0 0
      %1442 = vmatpush1.bf16.msra.mxu0 %v1422
      %1443 = vmatprep.subr.bf16.mxu0 0
      %1444 = vmatpush1.bf16.msra.mxu0 %v1423
      %1445 = vmatprep.subr.bf16.mxu0 0
      %1446 = vmatpush1.bf16.msra.mxu0 %v1424
      %1447 = vmatprep.subr.bf16.mxu0 0
      %1448 = vmatpush1.bf16.msra.mxu0 %v1425
      %1449 = vmatprep.subr.bf16.mxu0 0
      %1450 = vmatpush1.bf16.msra.mxu0 %v1426
      %1451 = vmatprep.subr.bf16.mxu0 0
      %1452 = vmatpush1.bf16.msra.mxu0 0
      %1453 = vmatprep.subr.bf16.mxu0 0
      %1454 = vmatpush1.bf16.msra.mxu0 0
      %1455 = vmatprep.subr.bf16.mxu0 0
      %1456 = vmatpush1.bf16.msra.mxu0 0
      %1457 = vmatprep.subr.bf16.mxu0 0
      %1458 = vmatpush1.bf16.msra.mxu0 0
      %1459 = vmatprep.subr.bf16.mxu0 0
      %1460 = vmatpush1.bf16.msra.mxu0 0
      %1461 = vmatprep.subr.bf16.mxu0 0
      %1462 = vmatpush1.bf16.msra.mxu0 0
      %1463 = vmatprep.subr.bf16.mxu0 0
      %1464 = vmatpush1.bf16.msra.mxu0 0
      %1465 = vmatprep.subr.bf16.mxu0 0
      %1466 = vmatpush1.bf16.msra.mxu0 0
      %1467 = vmatprep.mubr.bf16.mxu0 0
      %1468 = vmatmul.mubr.bf16.gmra.mrb[0].mxu0 %v1371
      %v1469 = vpop.f32.mrb[0].mxu0
      %v1470 = vadd.f32 0.0, %v1469
      %v1471 = vpop.f32.mrb[0].mxu0
      %v1472 = vpop.f32.mrb[0].mxu0
      %v1473 = vadd.f32 0.0, %v1472
      %v1474 = vpop.f32.mrb[0].mxu0
      %1475 = vmatprep.mubr.bf16.mxu0 0
      %1476 = vmatmul.mubr.bf16.gmra.mrb[0].mxu0 %v1372
      %v1477 = vpop.f32.mrb[0].mxu0
      %v1478 = vadd.f32 0.0, %v1477
      %v1479 = vpop.f32.mrb[0].mxu0
      %v1480 = vpop.f32.mrb[0].mxu0
      %v1481 = vadd.f32 0.0, %v1480
      %v1482 = vpop.f32.mrb[0].mxu0
      %1483 = vmatprep.mubr.bf16.mxu0 0
      %1484 = vmatmul.mubr.bf16.gmra.mrb[0].mxu0 %v1373
      %v1485 = vpop.f32.mrb[0].mxu0
      %v1486 = vadd.f32 0.0, %v1485
      %v1487 = vpop.f32.mrb[0].mxu0
      %v1488 = vpop.f32.mrb[0].mxu0
      %v1489 = vadd.f32 0.0, %v1488
      %v1490 = vpop.f32.mrb[0].mxu0
      %1491 = vmatprep.mubr.bf16.mxu0 0
      %1492 = vmatmul.mubr.bf16.gmra.mrb[0].mxu0 %v1374
      %v1493 = vpop.f32.mrb[0].mxu0
      %v1494 = vadd.f32 0.0, %v1493
      %v1495 = vpop.f32.mrb[0].mxu0
      %v1496 = vpop.f32.mrb[0].mxu0
      %v1497 = vadd.f32 0.0, %v1496
      %v1498 = vpop.f32.mrb[0].mxu0
      %1499 = vmatprep.mubr.bf16.mxu0 0
      %1500 = vmatmul.mubr.bf16.gmra.mrb[0].mxu0 %v1375
      %v1501 = vpop.f32.mrb[0].mxu0
      %v1502 = vadd.f32 0.0, %v1501
      %v1503 = vpop.f32.mrb[0].mxu0
      %v1504 = vpop.f32.mrb[0].mxu0
      %v1505 = vadd.f32 0.0, %v1504
      %v1506 = vpop.f32.mrb[0].mxu0
      %1507 = vmatprep.mubr.bf16.mxu0 0
      %1508 = vmatmul.mubr.bf16.gmra.mrb[0].mxu0 %v1376
      %v1509 = vpop.f32.mrb[0].mxu0
      %v1510 = vadd.f32 0.0, %v1509
      %v1511 = vpop.f32.mrb[0].mxu0
      %v1512 = vpop.f32.mrb[0].mxu0
      %v1513 = vadd.f32 0.0, %v1512
      %v1514 = vpop.f32.mrb[0].mxu0
      %1515 = vmatprep.mubr.bf16.mxu0 0
      %1516 = vmatmul.mubr.bf16.gmra.mrb[0].mxu0 %v1377
      %v1517 = vpop.f32.mrb[0].mxu0
      %v1518 = vadd.f32 0.0, %v1517
      %v1519 = vpop.f32.mrb[0].mxu0
      %v1520 = vpop.f32.mrb[0].mxu0
      %v1521 = vadd.f32 0.0, %v1520
      %v1522 = vpop.f32.mrb[0].mxu0
      %1523 = vmatprep.mubr.bf16.mxu0 0
      %1524 = vmatmul.mubr.bf16.gmra.mrb[0].mxu0 %v1378
      %v1525 = vpop.f32.mrb[0].mxu0
      %v1526 = vadd.f32 0.0, %v1525
      %v1527 = vpop.f32.mrb[0].mxu0
      %v1528 = vpop.f32.mrb[0].mxu0
      %v1529 = vadd.f32 0.0, %v1528
      %v1530 = vpop.f32.mrb[0].mxu0
      %1531 = vdwg.mxu0
      %v1532 = vadd.f32 %v1201, %v1470
      %v1533 = vadd.f32 %v1202, %v1473
      %v1534 = vadd.f32 %v1203, %v1478
      %v1535 = vadd.f32 %v1204, %v1481
      %v1536 = vadd.f32 %v1205, %v1486
      %v1537 = vadd.f32 %v1206, %v1489
      %v1538 = vadd.f32 %v1207, %v1494
      %v1539 = vadd.f32 %v1208, %v1497
      %v1540 = vadd.f32 %v1209, %v1502
      %v1541 = vadd.f32 %v1210, %v1505
      %v1542 = vadd.f32 %v1211, %v1510
      %v1543 = vadd.f32 %v1212, %v1513
      %v1544 = vadd.f32 %v1213, %v1518
      %v1545 = vadd.f32 %v1214, %v1521
      %v1546 = vadd.f32 %v1215, %v1526
      %v1547 = vadd.f32 %v1216, %v1529
      %v1556 = vrot.slane %v1219, 6
      %v1557 = vrot.slane %v1556, 4
      %v1558 = vrot.slane %v1220, 6
      %v1559 = vsel %vm512, %v1557, %v1558
      %v1560 = vrot.slane %v1558, 4
      %v1561 = vrot.slane %v1221, 6
      %v1562 = vsel %vm512, %v1560, %v1561
      %v1563 = vrot.slane %v1224, 6
      %v1564 = vrot.slane %v1563, 4
      %v1565 = vrot.slane %v1225, 6
      %v1566 = vsel %vm512, %v1564, %v1565
      %v1567 = vrot.slane %v1565, 4
      %v1568 = vrot.slane %v1226, 6
      %v1569 = vsel %vm512, %v1567, %v1568
      %v1570 = vrot.slane %v1229, 6
      %v1571 = vrot.slane %v1570, 4
      %v1572 = vrot.slane %v1230, 6
      %v1573 = vsel %vm512, %v1571, %v1572
      %v1574 = vrot.slane %v1572, 4
      %v1575 = vrot.slane %v1231, 6
      %v1576 = vsel %vm512, %v1574, %v1575
      %v1577 = vrot.slane %v1234, 6
      %v1578 = vrot.slane %v1577, 4
      %v1579 = vrot.slane %v1235, 6
      %v1580 = vsel %vm512, %v1578, %v1579
      %v1581 = vrot.slane %v1579, 4
      %v1582 = vrot.slane %v1236, 6
      %v1583 = vsel %vm512, %v1581, %v1582
      %v1584 = vrot.slane %v1239, 6
      %v1585 = vrot.slane %v1584, 4
      %v1586 = vrot.slane %v1240, 6
      %v1587 = vsel %vm512, %v1585, %v1586
      %v1588 = vrot.slane %v1586, 4
      %v1589 = vrot.slane %v1241, 6
      %v1590 = vsel %vm512, %v1588, %v1589
      %v1591 = vrot.slane %v1244, 6
      %v1592 = vrot.slane %v1591, 4
      %v1593 = vrot.slane %v1245, 6
      %v1594 = vsel %vm512, %v1592, %v1593
      %v1595 = vrot.slane %v1593, 4
      %v1596 = vrot.slane %v1246, 6
      %v1597 = vsel %vm512, %v1595, %v1596
      %v1598 = vrot.slane %v1249, 6
      %v1599 = vrot.slane %v1598, 4
      %v1600 = vrot.slane %v1250, 6
      %v1601 = vsel %vm512, %v1599, %v1600
      %v1602 = vrot.slane %v1600, 4
      %v1603 = vrot.slane %v1251, 6
      %v1604 = vsel %vm512, %v1602, %v1603
      %v1605 = vrot.slane %v1254, 6
      %v1606 = vrot.slane %v1605, 4
      %v1607 = vrot.slane %v1255, 6
      %v1608 = vsel %vm512, %v1606, %v1607
      %v1609 = vrot.slane %v1607, 4
      %v1610 = vrot.slane %v1256, 6
      %v1611 = vsel %vm512, %v1609, %v1610
      %s1612 = scalar_lea.vmem %s1, 256
      %v1613 = vld [vmem:[%s1612] sm:$0xf]
      %v1614 = vld [vmem:[%s1612 + $0x4] sm:$0xf]
      %v1615 = vld [vmem:[%s1612 + $0x8] sm:$0xf]
      %v1616 = vld [vmem:[%s1612 + $0xc] sm:$0xf]
      %v1617 = vld [vmem:[%s1612 + $0x10] sm:$0xf]
      %v1618 = vld [vmem:[%s1612 + $0x14] sm:$0xf]
      %v1619 = vld [vmem:[%s1612 + $0x18] sm:$0xf]
      %v1620 = vld [vmem:[%s1612 + $0x1c] sm:$0xf]
      %v1621 = vld [vmem:[%s1612 + $0x20] sm:$0xf]
      %v1622 = vld [vmem:[%s1612 + $0x24] sm:$0xf]
      %v1623 = vld [vmem:[%s1612 + $0x28] sm:$0xf]
      %v1624 = vld [vmem:[%s1612 + $0x2c] sm:$0xf]
      %v1625 = vld [vmem:[%s1612 + $0x30] sm:$0xf]
      %v1626 = vld [vmem:[%s1612 + $0x34] sm:$0xf]
      %v1627 = vld [vmem:[%s1612 + $0x38] sm:$0xf]
      %v1628 = vld [vmem:[%s1612 + $0x3c] sm:$0xf]
      %v1629 = vunpack.c.l.b16 %v1559
      %v1630 = vunpack.c.l.b16 %v1562
      %v1631 = vunpack.c.l.b16 %v1566
      %v1632 = vunpack.c.l.b16 %v1569
      %v1633 = vunpack.c.l.b16 %v1573
      %v1634 = vunpack.c.l.b16 %v1576
      %v1635 = vunpack.c.l.b16 %v1580
      %v1636 = vunpack.c.l.b16 %v1583
      %v1637 = vunpack.c.l.b16 %v1587
      %v1638 = vunpack.c.l.b16 %v1590
      %v1639 = vunpack.c.l.b16 %v1594
      %v1640 = vunpack.c.l.b16 %v1597
      %v1641 = vunpack.c.l.b16 %v1601
      %v1642 = vunpack.c.l.b16 %v1604
      %v1643 = vunpack.c.l.b16 %v1608
      %v1644 = vunpack.c.l.b16 %v1611
      %v1645 = vpack.c.b16 %v1630, %v1629
      %v1646 = vpack.c.b16 %v1632, %v1631
      %v1647 = vpack.c.b16 %v1634, %v1633
      %v1648 = vpack.c.b16 %v1636, %v1635
      %v1649 = vpack.c.b16 %v1638, %v1637
      %v1650 = vpack.c.b16 %v1640, %v1639
      %v1651 = vpack.c.b16 %v1642, %v1641
      %v1652 = vpack.c.b16 %v1644, %v1643
      %v1677 = vunpack.c.l.b16 %v1613
      %v1678 = vunpack.c.l.b16 %v1614
      %v1679 = vunpack.c.l.b16 %v1615
      %v1680 = vunpack.c.l.b16 %v1616
      %v1681 = vunpack.c.l.b16 %v1617
      %v1682 = vunpack.c.l.b16 %v1618
      %v1683 = vunpack.c.l.b16 %v1619
      %v1684 = vunpack.c.l.b16 %v1620
      %v1685 = vunpack.c.l.b16 %v1621
      %v1686 = vunpack.c.l.b16 %v1622
      %v1687 = vunpack.c.l.b16 %v1623
      %v1688 = vunpack.c.l.b16 %v1624
      %v1689 = vunpack.c.l.b16 %v1625
      %v1690 = vunpack.c.l.b16 %v1626
      %v1691 = vunpack.c.l.b16 %v1627
      %v1692 = vunpack.c.l.b16 %v1628
      %v1693 = vpack.c.b16 %v1678, %v1677
      %v1694 = vpack.c.b16 %v1680, %v1679
      %v1695 = vpack.c.b16 %v1682, %v1681
      %v1696 = vpack.c.b16 %v1684, %v1683
      %v1697 = vpack.c.b16 %v1686, %v1685
      %v1698 = vpack.c.b16 %v1688, %v1687
      %v1699 = vpack.c.b16 %v1690, %v1689
      %v1700 = vpack.c.b16 %v1692, %v1691
      %1709 = vmatprep.subr.bf16.mxu0 0
      %1710 = vmatpush1.bf16.msra.mxu0 %v1693
      %1711 = vmatprep.subr.bf16.mxu0 0
      %1712 = vmatpush1.bf16.msra.mxu0 %v1694
      %1713 = vmatprep.subr.bf16.mxu0 0
      %1714 = vmatpush1.bf16.msra.mxu0 %v1695
      %1715 = vmatprep.subr.bf16.mxu0 0
      %1716 = vmatpush1.bf16.msra.mxu0 %v1696
      %1717 = vmatprep.subr.bf16.mxu0 0
      %1718 = vmatpush1.bf16.msra.mxu0 %v1697
      %1719 = vmatprep.subr.bf16.mxu0 0
      %1720 = vmatpush1.bf16.msra.mxu0 %v1698
      %1721 = vmatprep.subr.bf16.mxu0 0
      %1722 = vmatpush1.bf16.msra.mxu0 %v1699
      %1723 = vmatprep.subr.bf16.mxu0 0
      %1724 = vmatpush1.bf16.msra.mxu0 %v1700
      %1725 = vmatprep.subr.bf16.mxu0 0
      %1726 = vmatpush1.bf16.msra.mxu0 0
      %1727 = vmatprep.subr.bf16.mxu0 0
      %1728 = vmatpush1.bf16.msra.mxu0 0
      %1729 = vmatprep.subr.bf16.mxu0 0
      %1730 = vmatpush1.bf16.msra.mxu0 0
      %1731 = vmatprep.subr.bf16.mxu0 0
      %1732 = vmatpush1.bf16.msra.mxu0 0
      %1733 = vmatprep.subr.bf16.mxu0 0
      %1734 = vmatpush1.bf16.msra.mxu0 0
      %1735 = vmatprep.subr.bf16.mxu0 0
      %1736 = vmatpush1.bf16.msra.mxu0 0
      %1737 = vmatprep.subr.bf16.mxu0 0
      %1738 = vmatpush1.bf16.msra.mxu0 0
      %1739 = vmatprep.subr.bf16.mxu0 0
      %1740 = vmatpush1.bf16.msra.mxu0 0
      %1741 = vmatprep.mubr.bf16.mxu0 0
      %1742 = vmatmul.mubr.bf16.gmra.mrb[0].mxu0 %v1645
      %v1743 = vpop.f32.mrb[0].mxu0
      %v1744 = vadd.f32 0.0, %v1743
      %v1745 = vpop.f32.mrb[0].mxu0
      %v1746 = vpop.f32.mrb[0].mxu0
      %v1747 = vadd.f32 0.0, %v1746
      %v1748 = vpop.f32.mrb[0].mxu0
      %1749 = vmatprep.mubr.bf16.mxu0 0
      %1750 = vmatmul.mubr.bf16.gmra.mrb[0].mxu0 %v1646
      %v1751 = vpop.f32.mrb[0].mxu0
      %v1752 = vadd.f32 0.0, %v1751
      %v1753 = vpop.f32.mrb[0].mxu0
      %v1754 = vpop.f32.mrb[0].mxu0
      %v1755 = vadd.f32 0.0, %v1754
      %v1756 = vpop.f32.mrb[0].mxu0
      %1757 = vmatprep.mubr.bf16.mxu0 0
      %1758 = vmatmul.mubr.bf16.gmra.mrb[0].mxu0 %v1647
      %v1759 = vpop.f32.mrb[0].mxu0
      %v1760 = vadd.f32 0.0, %v1759
      %v1761 = vpop.f32.mrb[0].mxu0
      %v1762 = vpop.f32.mrb[0].mxu0
      %v1763 = vadd.f32 0.0, %v1762
      %v1764 = vpop.f32.mrb[0].mxu0
      %1765 = vmatprep.mubr.bf16.mxu0 0
      %1766 = vmatmul.mubr.bf16.gmra.mrb[0].mxu0 %v1648
      %v1767 = vpop.f32.mrb[0].mxu0
      %v1768 = vadd.f32 0.0, %v1767
      %v1769 = vpop.f32.mrb[0].mxu0
      %v1770 = vpop.f32.mrb[0].mxu0
      %v1771 = vadd.f32 0.0, %v1770
      %v1772 = vpop.f32.mrb[0].mxu0
      %1773 = vmatprep.mubr.bf16.mxu0 0
      %1774 = vmatmul.mubr.bf16.gmra.mrb[0].mxu0 %v1649
      %v1775 = vpop.f32.mrb[0].mxu0
      %v1776 = vadd.f32 0.0, %v1775
      %v1777 = vpop.f32.mrb[0].mxu0
      %v1778 = vpop.f32.mrb[0].mxu0
      %v1779 = vadd.f32 0.0, %v1778
      %v1780 = vpop.f32.mrb[0].mxu0
      %1781 = vmatprep.mubr.bf16.mxu0 0
      %1782 = vmatmul.mubr.bf16.gmra.mrb[0].mxu0 %v1650
      %v1783 = vpop.f32.mrb[0].mxu0
      %v1784 = vadd.f32 0.0, %v1783
      %v1785 = vpop.f32.mrb[0].mxu0
      %v1786 = vpop.f32.mrb[0].mxu0
      %v1787 = vadd.f32 0.0, %v1786
      %v1788 = vpop.f32.mrb[0].mxu0
      %1789 = vmatprep.mubr.bf16.mxu0 0
      %1790 = vmatmul.mubr.bf16.gmra.mrb[0].mxu0 %v1651
      %v1791 = vpop.f32.mrb[0].mxu0
      %v1792 = vadd.f32 0.0, %v1791
      %v1793 = vpop.f32.mrb[0].mxu0
      %v1794 = vpop.f32.mrb[0].mxu0
      %v1795 = vadd.f32 0.0, %v1794
      %v1796 = vpop.f32.mrb[0].mxu0
      %1797 = vmatprep.mubr.bf16.mxu0 0
      %1798 = vmatmul.mubr.bf16.gmra.mrb[0].mxu0 %v1652
      %v1799 = vpop.f32.mrb[0].mxu0
      %v1800 = vadd.f32 0.0, %v1799
      %v1801 = vpop.f32.mrb[0].mxu0
      %v1802 = vpop.f32.mrb[0].mxu0
      %v1803 = vadd.f32 0.0, %v1802
      %v1804 = vpop.f32.mrb[0].mxu0
      %1805 = vdwg.mxu0
      %v1806 = vadd.f32 %v1532, %v1744
      %v1807 = vadd.f32 %v1533, %v1747
      %v1808 = vadd.f32 %v1534, %v1752
      %v1809 = vadd.f32 %v1535, %v1755
      %v1810 = vadd.f32 %v1536, %v1760
      %v1811 = vadd.f32 %v1537, %v1763
      %v1812 = vadd.f32 %v1538, %v1768
      %v1813 = vadd.f32 %v1539, %v1771
      %v1814 = vadd.f32 %v1540, %v1776
      %v1815 = vadd.f32 %v1541, %v1779
      %v1816 = vadd.f32 %v1542, %v1784
      %v1817 = vadd.f32 %v1543, %v1787
      %v1818 = vadd.f32 %v1544, %v1792
      %v1819 = vadd.f32 %v1545, %v1795
      %v1820 = vadd.f32 %v1546, %v1800
      %v1821 = vadd.f32 %v1547, %v1803
      %v1830 = vrot.slane %v1220, 5
      %v1831 = vrot.slane %v1830, 4
      %v1832 = vrot.slane %v1221, 5
      %v1833 = vsel %vm950, %v1831, %v1832
      %v1834 = vrot.slane %v1832, 4
      %v1835 = vrot.slane %v1222, 5
      %v1836 = vsel %vm950, %v1834, %v1835
      %v1837 = vrot.slane %v1225, 5
      %v1838 = vrot.slane %v1837, 4
      %v1839 = vrot.slane %v1226, 5
      %v1840 = vsel %vm950, %v1838, %v1839
      %v1841 = vrot.slane %v1839, 4
      %v1842 = vrot.slane %v1227, 5
      %v1843 = vsel %vm950, %v1841, %v1842
      %v1844 = vrot.slane %v1230, 5
      %v1845 = vrot.slane %v1844, 4
      %v1846 = vrot.slane %v1231, 5
      %v1847 = vsel %vm950, %v1845, %v1846
      %v1848 = vrot.slane %v1846, 4
      %v1849 = vrot.slane %v1232, 5
      %v1850 = vsel %vm950, %v1848, %v1849
      %v1851 = vrot.slane %v1235, 5
      %v1852 = vrot.slane %v1851, 4
      %v1853 = vrot.slane %v1236, 5
      %v1854 = vsel %vm950, %v1852, %v1853
      %v1855 = vrot.slane %v1853, 4
      %v1856 = vrot.slane %v1237, 5
      %v1857 = vsel %vm950, %v1855, %v1856
      %v1858 = vrot.slane %v1240, 5
      %v1859 = vrot.slane %v1858, 4
      %v1860 = vrot.slane %v1241, 5
      %v1861 = vsel %vm950, %v1859, %v1860
      %v1862 = vrot.slane %v1860, 4
      %v1863 = vrot.slane %v1242, 5
      %v1864 = vsel %vm950, %v1862, %v1863
      %v1865 = vrot.slane %v1245, 5
      %v1866 = vrot.slane %v1865, 4
      %v1867 = vrot.slane %v1246, 5
      %v1868 = vsel %vm950, %v1866, %v1867
      %v1869 = vrot.slane %v1867, 4
      %v1870 = vrot.slane %v1247, 5
      %v1871 = vsel %vm950, %v1869, %v1870
      %v1872 = vrot.slane %v1250, 5
      %v1873 = vrot.slane %v1872, 4
      %v1874 = vrot.slane %v1251, 5
      %v1875 = vsel %vm950, %v1873, %v1874
      %v1876 = vrot.slane %v1874, 4
      %v1877 = vrot.slane %v1252, 5
      %v1878 = vsel %vm950, %v1876, %v1877
      %v1879 = vrot.slane %v1255, 5
      %v1880 = vrot.slane %v1879, 4
      %v1881 = vrot.slane %v1256, 5
      %v1882 = vsel %vm950, %v1880, %v1881
      %v1883 = vrot.slane %v1881, 4
      %v1884 = vrot.slane %v1257, 5
      %v1885 = vsel %vm950, %v1883, %v1884
      %s1886 = scalar_lea.vmem %s1, 320
      %v1887 = vld [vmem:[%s1886] sm:$0xf]
      %v1888 = vld [vmem:[%s1886 + $0x4] sm:$0xf]
      %v1889 = vld [vmem:[%s1886 + $0x8] sm:$0xf]
      %v1890 = vld [vmem:[%s1886 + $0xc] sm:$0xf]
      %v1891 = vld [vmem:[%s1886 + $0x10] sm:$0xf]
      %v1892 = vld [vmem:[%s1886 + $0x14] sm:$0xf]
      %v1893 = vld [vmem:[%s1886 + $0x18] sm:$0xf]
      %v1894 = vld [vmem:[%s1886 + $0x1c] sm:$0xf]
      %v1895 = vld [vmem:[%s1886 + $0x20] sm:$0xf]
      %v1896 = vld [vmem:[%s1886 + $0x24] sm:$0xf]
      %v1897 = vld [vmem:[%s1886 + $0x28] sm:$0xf]
      %v1898 = vld [vmem:[%s1886 + $0x2c] sm:$0xf]
      %v1899 = vld [vmem:[%s1886 + $0x30] sm:$0xf]
      %v1900 = vld [vmem:[%s1886 + $0x34] sm:$0xf]
      %v1901 = vld [vmem:[%s1886 + $0x38] sm:$0xf]
      %v1902 = vld [vmem:[%s1886 + $0x3c] sm:$0xf]
      %v1903 = vunpack.c.l.b16 %v1833
      %v1904 = vunpack.c.l.b16 %v1836
      %v1905 = vunpack.c.l.b16 %v1840
      %v1906 = vunpack.c.l.b16 %v1843
      %v1907 = vunpack.c.l.b16 %v1847
      %v1908 = vunpack.c.l.b16 %v1850
      %v1909 = vunpack.c.l.b16 %v1854
      %v1910 = vunpack.c.l.b16 %v1857
      %v1911 = vunpack.c.l.b16 %v1861
      %v1912 = vunpack.c.l.b16 %v1864
      %v1913 = vunpack.c.l.b16 %v1868
      %v1914 = vunpack.c.l.b16 %v1871
      %v1915 = vunpack.c.l.b16 %v1875
      %v1916 = vunpack.c.l.b16 %v1878
      %v1917 = vunpack.c.l.b16 %v1882
      %v1918 = vunpack.c.l.b16 %v1885
      %v1919 = vpack.c.b16 %v1904, %v1903
      %v1920 = vpack.c.b16 %v1906, %v1905
      %v1921 = vpack.c.b16 %v1908, %v1907
      %v1922 = vpack.c.b16 %v1910, %v1909
      %v1923 = vpack.c.b16 %v1912, %v1911
      %v1924 = vpack.c.b16 %v1914, %v1913
      %v1925 = vpack.c.b16 %v1916, %v1915
      %v1926 = vpack.c.b16 %v1918, %v1917
      %v1951 = vunpack.c.l.b16 %v1887
      %v1952 = vunpack.c.l.b16 %v1888
      %v1953 = vunpack.c.l.b16 %v1889
      %v1954 = vunpack.c.l.b16 %v1890
      %v1955 = vunpack.c.l.b16 %v1891
      %v1956 = vunpack.c.l.b16 %v1892
      %v1957 = vunpack.c.l.b16 %v1893
      %v1958 = vunpack.c.l.b16 %v1894
      %v1959 = vunpack.c.l.b16 %v1895
      %v1960 = vunpack.c.l.b16 %v1896
      %v1961 = vunpack.c.l.b16 %v1897
      %v1962 = vunpack.c.l.b16 %v1898
      %v1963 = vunpack.c.l.b16 %v1899
      %v1964 = vunpack.c.l.b16 %v1900
      %v1965 = vunpack.c.l.b16 %v1901
      %v1966 = vunpack.c.l.b16 %v1902
      %v1967 = vpack.c.b16 %v1952, %v1951
      %v1968 = vpack.c.b16 %v1954, %v1953
      %v1969 = vpack.c.b16 %v1956, %v1955
      %v1970 = vpack.c.b16 %v1958, %v1957
      %v1971 = vpack.c.b16 %v1960, %v1959
      %v1972 = vpack.c.b16 %v1962, %v1961
      %v1973 = vpack.c.b16 %v1964, %v1963
      %v1974 = vpack.c.b16 %v1966, %v1965
      %1983 = vmatprep.subr.bf16.mxu0 0
      %1984 = vmatpush1.bf16.msra.mxu0 %v1967
      %1985 = vmatprep.subr.bf16.mxu0 0
      %1986 = vmatpush1.bf16.msra.mxu0 %v1968
      %1987 = vmatprep.subr.bf16.mxu0 0
      %1988 = vmatpush1.bf16.msra.mxu0 %v1969
      %1989 = vmatprep.subr.bf16.mxu0 0
      %1990 = vmatpush1.bf16.msra.mxu0 %v1970
      %1991 = vmatprep.subr.bf16.mxu0 0
      %1992 = vmatpush1.bf16.msra.mxu0 %v1971
      %1993 = vmatprep.subr.bf16.mxu0 0
      %1994 = vmatpush1.bf16.msra.mxu0 %v1972
      %1995 = vmatprep.subr.bf16.mxu0 0
      %1996 = vmatpush1.bf16.msra.mxu0 %v1973
      %1997 = vmatprep.subr.bf16.mxu0 0
      %1998 = vmatpush1.bf16.msra.mxu0 %v1974
      %1999 = vmatprep.subr.bf16.mxu0 0
      %2000 = vmatpush1.bf16.msra.mxu0 0
      %2001 = vmatprep.subr.bf16.mxu0 0
      %2002 = vmatpush1.bf16.msra.mxu0 0
      %2003 = vmatprep.subr.bf16.mxu0 0
      %2004 = vmatpush1.bf16.msra.mxu0 0
      %2005 = vmatprep.subr.bf16.mxu0 0
      %2006 = vmatpush1.bf16.msra.mxu0 0
      %2007 = vmatprep.subr.bf16.mxu0 0
      %2008 = vmatpush1.bf16.msra.mxu0 0
      %2009 = vmatprep.subr.bf16.mxu0 0
      %2010 = vmatpush1.bf16.msra.mxu0 0
      %2011 = vmatprep.subr.bf16.mxu0 0
      %2012 = vmatpush1.bf16.msra.mxu0 0
      %2013 = vmatprep.subr.bf16.mxu0 0
      %2014 = vmatpush1.bf16.msra.mxu0 0
      %2015 = vmatprep.mubr.bf16.mxu0 0
      %2016 = vmatmul.mubr.bf16.gmra.mrb[0].mxu0 %v1919
      %v2017 = vpop.f32.mrb[0].mxu0
      %v2018 = vadd.f32 0.0, %v2017
      %v2019 = vpop.f32.mrb[0].mxu0
      %v2020 = vpop.f32.mrb[0].mxu0
      %v2021 = vadd.f32 0.0, %v2020
      %v2022 = vpop.f32.mrb[0].mxu0
      %2023 = vmatprep.mubr.bf16.mxu0 0
      %2024 = vmatmul.mubr.bf16.gmra.mrb[0].mxu0 %v1920
      %v2025 = vpop.f32.mrb[0].mxu0
      %v2026 = vadd.f32 0.0, %v2025
      %v2027 = vpop.f32.mrb[0].mxu0
      %v2028 = vpop.f32.mrb[0].mxu0
      %v2029 = vadd.f32 0.0, %v2028
      %v2030 = vpop.f32.mrb[0].mxu0
      %2031 = vmatprep.mubr.bf16.mxu0 0
      %2032 = vmatmul.mubr.bf16.gmra.mrb[0].mxu0 %v1921
      %v2033 = vpop.f32.mrb[0].mxu0
      %v2034 = vadd.f32 0.0, %v2033
      %v2035 = vpop.f32.mrb[0].mxu0
      %v2036 = vpop.f32.mrb[0].mxu0
      %v2037 = vadd.f32 0.0, %v2036
      %v2038 = vpop.f32.mrb[0].mxu0
      %2039 = vmatprep.mubr.bf16.mxu0 0
      %2040 = vmatmul.mubr.bf16.gmra.mrb[0].mxu0 %v1922
      %v2041 = vpop.f32.mrb[0].mxu0
      %v2042 = vadd.f32 0.0, %v2041
      %v2043 = vpop.f32.mrb[0].mxu0
      %v2044 = vpop.f32.mrb[0].mxu0
      %v2045 = vadd.f32 0.0, %v2044
      %v2046 = vpop.f32.mrb[0].mxu0
      %2047 = vmatprep.mubr.bf16.mxu0 0
      %2048 = vmatmul.mubr.bf16.gmra.mrb[0].mxu0 %v1923
      %v2049 = vpop.f32.mrb[0].mxu0
      %v2050 = vadd.f32 0.0, %v2049
      %v2051 = vpop.f32.mrb[0].mxu0
      %v2052 = vpop.f32.mrb[0].mxu0
      %v2053 = vadd.f32 0.0, %v2052
      %v2054 = vpop.f32.mrb[0].mxu0
      %2055 = vmatprep.mubr.bf16.mxu0 0
      %2056 = vmatmul.mubr.bf16.gmra.mrb[0].mxu0 %v1924
      %v2057 = vpop.f32.mrb[0].mxu0
      %v2058 = vadd.f32 0.0, %v2057
      %v2059 = vpop.f32.mrb[0].mxu0
      %v2060 = vpop.f32.mrb[0].mxu0
      %v2061 = vadd.f32 0.0, %v2060
      %v2062 = vpop.f32.mrb[0].mxu0
      %2063 = vmatprep.mubr.bf16.mxu0 0
      %2064 = vmatmul.mubr.bf16.gmra.mrb[0].mxu0 %v1925
      %v2065 = vpop.f32.mrb[0].mxu0
      %v2066 = vadd.f32 0.0, %v2065
      %v2067 = vpop.f32.mrb[0].mxu0
      %v2068 = vpop.f32.mrb[0].mxu0
      %v2069 = vadd.f32 0.0, %v2068
      %v2070 = vpop.f32.mrb[0].mxu0
      %2071 = vmatprep.mubr.bf16.mxu0 0
      %2072 = vmatmul.mubr.bf16.gmra.mrb[0].mxu0 %v1926
      %v2073 = vpop.f32.mrb[0].mxu0
      %v2074 = vadd.f32 0.0, %v2073
      %v2075 = vpop.f32.mrb[0].mxu0
      %v2076 = vpop.f32.mrb[0].mxu0
      %v2077 = vadd.f32 0.0, %v2076
      %v2078 = vpop.f32.mrb[0].mxu0
      %2079 = vdwg.mxu0
      %v2080 = vadd.f32 %v1806, %v2018
      %v2081 = vadd.f32 %v1807, %v2021
      %v2082 = vadd.f32 %v1808, %v2026
      %v2083 = vadd.f32 %v1809, %v2029
      %v2084 = vadd.f32 %v1810, %v2034
      %v2085 = vadd.f32 %v1811, %v2037
      %v2086 = vadd.f32 %v1812, %v2042
      %v2087 = vadd.f32 %v1813, %v2045
      %v2088 = vadd.f32 %v1814, %v2050
      %v2089 = vadd.f32 %v1815, %v2053
      %v2090 = vadd.f32 %v1816, %v2058
      %v2091 = vadd.f32 %v1817, %v2061
      %v2092 = vadd.f32 %v1818, %v2066
      %v2093 = vadd.f32 %v1819, %v2069
      %v2094 = vadd.f32 %v1820, %v2074
      %v2095 = vadd.f32 %v1821, %v2077
      %s2096 = scalar_lea.vmem [#allocation2], 360
      %v2097 = vld [vmem:[%s2096] sm:$0xf]
      %v2098 = vld [vmem:[%s2096 + $0x4] sm:$0xf]
      %v2099 = vld [vmem:[%s2096 + $0x8] sm:$0xf]
      %v2100 = vld [vmem:[%s2096 + $0xc] sm:$0xf]
      %v2101 = vld [vmem:[%s2096 + $0x10] sm:$0xf]
      %v2102 = vld [vmem:[%s2096 + $0x14] sm:$0xf]
      %v2103 = vld [vmem:[%s2096 + $0x18] sm:$0xf]
      %v2104 = vld [vmem:[%s2096 + $0x1c] sm:$0xf]
      %v2105 = vld [vmem:[%s2096 + $0x20] sm:$0xf]
      %v2106 = vld [vmem:[%s2096 + $0x24] sm:$0xf]
      %v2107 = vld [vmem:[%s2096 + $0x28] sm:$0xf]
      %v2108 = vld [vmem:[%s2096 + $0x2c] sm:$0xf]
      %v2109 = vld [vmem:[%s2096 + $0x30] sm:$0xf]
      %v2110 = vld [vmem:[%s2096 + $0x34] sm:$0xf]
      %v2111 = vld [vmem:[%s2096 + $0x38] sm:$0xf]
      %v2112 = vld [vmem:[%s2096 + $0x3c] sm:$0xf]
      %v2113 = vld [vmem:[%s2096 + $0x40] sm:$0xf]
      %v2114 = vld [vmem:[%s2096 + $0x44] sm:$0xf]
      %v2115 = vld [vmem:[%s2096 + $0x48] sm:$0xf]
      %v2116 = vld [vmem:[%s2096 + $0x4c] sm:$0xf]
      %v2117 = vld [vmem:[%s2096 + $0x50] sm:$0xf]
      %v2118 = vld [vmem:[%s2096 + $0x54] sm:$0xf]
      %v2119 = vld [vmem:[%s2096 + $0x58] sm:$0xf]
      %v2120 = vld [vmem:[%s2096 + $0x5c] sm:$0xf]
      %v2121 = vld [vmem:[%s2096 + $0x60] sm:$0xf]
      %v2122 = vld [vmem:[%s2096 + $0x64] sm:$0xf]
      %v2123 = vld [vmem:[%s2096 + $0x68] sm:$0xf]
      %v2124 = vld [vmem:[%s2096 + $0x6c] sm:$0xf]
      %v2125 = vld [vmem:[%s2096 + $0x70] sm:$0xf]
      %v2126 = vld [vmem:[%s2096 + $0x74] sm:$0xf]
      %v2127 = vld [vmem:[%s2096 + $0x78] sm:$0xf]
      %v2128 = vld [vmem:[%s2096 + $0x7c] sm:$0xf]
      %v2129 = vld [vmem:[%s2096 + $0x80] sm:$0xf]
      %v2130 = vld [vmem:[%s2096 + $0x84] sm:$0xf]
      %v2131 = vld [vmem:[%s2096 + $0x88] sm:$0xf]
      %v2132 = vld [vmem:[%s2096 + $0x8c] sm:$0xf]
      %v2133 = vld [vmem:[%s2096 + $0x90] sm:$0xf]
      %v2134 = vld [vmem:[%s2096 + $0x94] sm:$0xf]
      %v2135 = vld [vmem:[%s2096 + $0x98] sm:$0xf]
      %v2136 = vld [vmem:[%s2096 + $0x9c] sm:$0xf]
      %v2161 = vrot.slane %v2097, 7
      %v2162 = vrot.slane %v2161, 4
      %v2163 = vrot.slane %v2098, 7
      %v2164 = vsel %vm429, %v2162, %v2163
      %v2165 = vrot.slane %v2163, 4
      %v2166 = vrot.slane %v2099, 7
      %v2167 = vsel %vm429, %v2165, %v2166
      %v2168 = vrot.slane %v2102, 7
      %v2169 = vrot.slane %v2168, 4
      %v2170 = vrot.slane %v2103, 7
      %v2171 = vsel %vm429, %v2169, %v2170
      %v2172 = vrot.slane %v2170, 4
      %v2173 = vrot.slane %v2104, 7
      %v2174 = vsel %vm429, %v2172, %v2173
      %v2175 = vrot.slane %v2107, 7
      %v2176 = vrot.slane %v2175, 4
      %v2177 = vrot.slane %v2108, 7
      %v2178 = vsel %vm429, %v2176, %v2177
      %v2179 = vrot.slane %v2177, 4
      %v2180 = vrot.slane %v2109, 7
      %v2181 = vsel %vm429, %v2179, %v2180
      %v2182 = vrot.slane %v2112, 7
      %v2183 = vrot.slane %v2182, 4
      %v2184 = vrot.slane %v2113, 7
      %v2185 = vsel %vm429, %v2183, %v2184
      %v2186 = vrot.slane %v2184, 4
      %v2187 = vrot.slane %v2114, 7
      %v2188 = vsel %vm429, %v2186, %v2187
      %v2189 = vrot.slane %v2117, 7
      %v2190 = vrot.slane %v2189, 4
      %v2191 = vrot.slane %v2118, 7
      %v2192 = vsel %vm429, %v2190, %v2191
      %v2193 = vrot.slane %v2191, 4
      %v2194 = vrot.slane %v2119, 7
      %v2195 = vsel %vm429, %v2193, %v2194
      %v2196 = vrot.slane %v2122, 7
      %v2197 = vrot.slane %v2196, 4
      %v2198 = vrot.slane %v2123, 7
      %v2199 = vsel %vm429, %v2197, %v2198
      %v2200 = vrot.slane %v2198, 4
      %v2201 = vrot.slane %v2124, 7
      %v2202 = vsel %vm429, %v2200, %v2201
      %v2203 = vrot.slane %v2127, 7
      %v2204 = vrot.slane %v2203, 4
      %v2205 = vrot.slane %v2128, 7
      %v2206 = vsel %vm429, %v2204, %v2205
      %v2207 = vrot.slane %v2205, 4
      %v2208 = vrot.slane %v2129, 7
      %v2209 = vsel %vm429, %v2207, %v2208
      %v2210 = vrot.slane %v2132, 7
      %v2211 = vrot.slane %v2210, 4
      %v2212 = vrot.slane %v2133, 7
      %v2213 = vsel %vm429, %v2211, %v2212
      %v2214 = vrot.slane %v2212, 4
      %v2215 = vrot.slane %v2134, 7
      %v2216 = vsel %vm429, %v2214, %v2215
      %s2217 = scalar_lea.vmem %s1, 384
      %v2218 = vld [vmem:[%s2217] sm:$0xf]
      %v2219 = vld [vmem:[%s2217 + $0x4] sm:$0xf]
      %v2220 = vld [vmem:[%s2217 + $0x8] sm:$0xf]
      %v2221 = vld [vmem:[%s2217 + $0xc] sm:$0xf]
      %v2222 = vld [vmem:[%s2217 + $0x10] sm:$0xf]
      %v2223 = vld [vmem:[%s2217 + $0x14] sm:$0xf]
      %v2224 = vld [vmem:[%s2217 + $0x18] sm:$0xf]
      %v2225 = vld [vmem:[%s2217 + $0x1c] sm:$0xf]
      %v2226 = vld [vmem:[%s2217 + $0x20] sm:$0xf]
      %v2227 = vld [vmem:[%s2217 + $0x24] sm:$0xf]
      %v2228 = vld [vmem:[%s2217 + $0x28] sm:$0xf]
      %v2229 = vld [vmem:[%s2217 + $0x2c] sm:$0xf]
      %v2230 = vld [vmem:[%s2217 + $0x30] sm:$0xf]
      %v2231 = vld [vmem:[%s2217 + $0x34] sm:$0xf]
      %v2232 = vld [vmem:[%s2217 + $0x38] sm:$0xf]
      %v2233 = vld [vmem:[%s2217 + $0x3c] sm:$0xf]
      %v2234 = vunpack.c.l.b16 %v2164
      %v2235 = vunpack.c.l.b16 %v2167
      %v2236 = vunpack.c.l.b16 %v2171
      %v2237 = vunpack.c.l.b16 %v2174
      %v2238 = vunpack.c.l.b16 %v2178
      %v2239 = vunpack.c.l.b16 %v2181
      %v2240 = vunpack.c.l.b16 %v2185
      %v2241 = vunpack.c.l.b16 %v2188
      %v2242 = vunpack.c.l.b16 %v2192
      %v2243 = vunpack.c.l.b16 %v2195
      %v2244 = vunpack.c.l.b16 %v2199
      %v2245 = vunpack.c.l.b16 %v2202
      %v2246 = vunpack.c.l.b16 %v2206
      %v2247 = vunpack.c.l.b16 %v2209
      %v2248 = vunpack.c.l.b16 %v2213
      %v2249 = vunpack.c.l.b16 %v2216
      %v2250 = vpack.c.b16 %v2235, %v2234
      %v2251 = vpack.c.b16 %v2237, %v2236
      %v2252 = vpack.c.b16 %v2239, %v2238
      %v2253 = vpack.c.b16 %v2241, %v2240
      %v2254 = vpack.c.b16 %v2243, %v2242
      %v2255 = vpack.c.b16 %v2245, %v2244
      %v2256 = vpack.c.b16 %v2247, %v2246
      %v2257 = vpack.c.b16 %v2249, %v2248
      %v2282 = vunpack.c.l.b16 %v2218
      %v2283 = vunpack.c.l.b16 %v2219
      %v2284 = vunpack.c.l.b16 %v2220
      %v2285 = vunpack.c.l.b16 %v2221
      %v2286 = vunpack.c.l.b16 %v2222
      %v2287 = vunpack.c.l.b16 %v2223
      %v2288 = vunpack.c.l.b16 %v2224
      %v2289 = vunpack.c.l.b16 %v2225
      %v2290 = vunpack.c.l.b16 %v2226
      %v2291 = vunpack.c.l.b16 %v2227
      %v2292 = vunpack.c.l.b16 %v2228
      %v2293 = vunpack.c.l.b16 %v2229
      %v2294 = vunpack.c.l.b16 %v2230
      %v2295 = vunpack.c.l.b16 %v2231
      %v2296 = vunpack.c.l.b16 %v2232
      %v2297 = vunpack.c.l.b16 %v2233
      %v2298 = vpack.c.b16 %v2283, %v2282
      %v2299 = vpack.c.b16 %v2285, %v2284
      %v2300 = vpack.c.b16 %v2287, %v2286
      %v2301 = vpack.c.b16 %v2289, %v2288
      %v2302 = vpack.c.b16 %v2291, %v2290
      %v2303 = vpack.c.b16 %v2293, %v2292
      %v2304 = vpack.c.b16 %v2295, %v2294
      %v2305 = vpack.c.b16 %v2297, %v2296
      %2314 = vmatprep.subr.bf16.mxu0 0
      %2315 = vmatpush1.bf16.msra.mxu0 %v2298
      %2316 = vmatprep.subr.bf16.mxu0 0
      %2317 = vmatpush1.bf16.msra.mxu0 %v2299
      %2318 = vmatprep.subr.bf16.mxu0 0
      %2319 = vmatpush1.bf16.msra.mxu0 %v2300
      %2320 = vmatprep.subr.bf16.mxu0 0
      %2321 = vmatpush1.bf16.msra.mxu0 %v2301
      %2322 = vmatprep.subr.bf16.mxu0 0
      %2323 = vmatpush1.bf16.msra.mxu0 %v2302
      %2324 = vmatprep.subr.bf16.mxu0 0
      %2325 = vmatpush1.bf16.msra.mxu0 %v2303
      %2326 = vmatprep.subr.bf16.mxu0 0
      %2327 = vmatpush1.bf16.msra.mxu0 %v2304
      %2328 = vmatprep.subr.bf16.mxu0 0
      %2329 = vmatpush1.bf16.msra.mxu0 %v2305
      %2330 = vmatprep.subr.bf16.mxu0 0
      %2331 = vmatpush1.bf16.msra.mxu0 0
      %2332 = vmatprep.subr.bf16.mxu0 0
      %2333 = vmatpush1.bf16.msra.mxu0 0
      %2334 = vmatprep.subr.bf16.mxu0 0
      %2335 = vmatpush1.bf16.msra.mxu0 0
      %2336 = vmatprep.subr.bf16.mxu0 0
      %2337 = vmatpush1.bf16.msra.mxu0 0
      %2338 = vmatprep.subr.bf16.mxu0 0
      %2339 = vmatpush1.bf16.msra.mxu0 0
      %2340 = vmatprep.subr.bf16.mxu0 0
      %2341 = vmatpush1.bf16.msra.mxu0 0
      %2342 = vmatprep.subr.bf16.mxu0 0
      %2343 = vmatpush1.bf16.msra.mxu0 0
      %2344 = vmatprep.subr.bf16.mxu0 0
      %2345 = vmatpush1.bf16.msra.mxu0 0
      %2346 = vmatprep.mubr.bf16.mxu0 0
      %2347 = vmatmul.mubr.bf16.gmra.mrb[0].mxu0 %v2250
      %v2348 = vpop.f32.mrb[0].mxu0
      %v2349 = vadd.f32 0.0, %v2348
      %v2350 = vpop.f32.mrb[0].mxu0
      %v2351 = vpop.f32.mrb[0].mxu0
      %v2352 = vadd.f32 0.0, %v2351
      %v2353 = vpop.f32.mrb[0].mxu0
      %2354 = vmatprep.mubr.bf16.mxu0 0
      %2355 = vmatmul.mubr.bf16.gmra.mrb[0].mxu0 %v2251
      %v2356 = vpop.f32.mrb[0].mxu0
      %v2357 = vadd.f32 0.0, %v2356
      %v2358 = vpop.f32.mrb[0].mxu0
      %v2359 = vpop.f32.mrb[0].mxu0
      %v2360 = vadd.f32 0.0, %v2359
      %v2361 = vpop.f32.mrb[0].mxu0
      %2362 = vmatprep.mubr.bf16.mxu0 0
      %2363 = vmatmul.mubr.bf16.gmra.mrb[0].mxu0 %v2252
      %v2364 = vpop.f32.mrb[0].mxu0
      %v2365 = vadd.f32 0.0, %v2364
      %v2366 = vpop.f32.mrb[0].mxu0
      %v2367 = vpop.f32.mrb[0].mxu0
      %v2368 = vadd.f32 0.0, %v2367
      %v2369 = vpop.f32.mrb[0].mxu0
      %2370 = vmatprep.mubr.bf16.mxu0 0
      %2371 = vmatmul.mubr.bf16.gmra.mrb[0].mxu0 %v2253
      %v2372 = vpop.f32.mrb[0].mxu0
      %v2373 = vadd.f32 0.0, %v2372
      %v2374 = vpop.f32.mrb[0].mxu0
      %v2375 = vpop.f32.mrb[0].mxu0
      %v2376 = vadd.f32 0.0, %v2375
      %v2377 = vpop.f32.mrb[0].mxu0
      %2378 = vmatprep.mubr.bf16.mxu0 0
      %2379 = vmatmul.mubr.bf16.gmra.mrb[0].mxu0 %v2254
      %v2380 = vpop.f32.mrb[0].mxu0
      %v2381 = vadd.f32 0.0, %v2380
      %v2382 = vpop.f32.mrb[0].mxu0
      %v2383 = vpop.f32.mrb[0].mxu0
      %v2384 = vadd.f32 0.0, %v2383
      %v2385 = vpop.f32.mrb[0].mxu0
      %2386 = vmatprep.mubr.bf16.mxu0 0
      %2387 = vmatmul.mubr.bf16.gmra.mrb[0].mxu0 %v2255
      %v2388 = vpop.f32.mrb[0].mxu0
      %v2389 = vadd.f32 0.0, %v2388
      %v2390 = vpop.f32.mrb[0].mxu0
      %v2391 = vpop.f32.mrb[0].mxu0
      %v2392 = vadd.f32 0.0, %v2391
      %v2393 = vpop.f32.mrb[0].mxu0
      %2394 = vmatprep.mubr.bf16.mxu0 0
      %2395 = vmatmul.mubr.bf16.gmra.mrb[0].mxu0 %v2256
      %v2396 = vpop.f32.mrb[0].mxu0
      %v2397 = vadd.f32 0.0, %v2396
      %v2398 = vpop.f32.mrb[0].mxu0
      %v2399 = vpop.f32.mrb[0].mxu0
      %v2400 = vadd.f32 0.0, %v2399
      %v2401 = vpop.f32.mrb[0].mxu0
      %2402 = vmatprep.mubr.bf16.mxu0 0
      %2403 = vmatmul.mubr.bf16.gmra.mrb[0].mxu0 %v2257
      %v2404 = vpop.f32.mrb[0].mxu0
      %v2405 = vadd.f32 0.0, %v2404
      %v2406 = vpop.f32.mrb[0].mxu0
      %v2407 = vpop.f32.mrb[0].mxu0
      %v2408 = vadd.f32 0.0, %v2407
      %v2409 = vpop.f32.mrb[0].mxu0
      %2410 = vdwg.mxu0
      %v2411 = vadd.f32 %v2080, %v2349
      %v2412 = vadd.f32 %v2081, %v2352
      %v2413 = vadd.f32 %v2082, %v2357
      %v2414 = vadd.f32 %v2083, %v2360
      %v2415 = vadd.f32 %v2084, %v2365
      %v2416 = vadd.f32 %v2085, %v2368
      %v2417 = vadd.f32 %v2086, %v2373
      %v2418 = vadd.f32 %v2087, %v2376
      %v2419 = vadd.f32 %v2088, %v2381
      %v2420 = vadd.f32 %v2089, %v2384
      %v2421 = vadd.f32 %v2090, %v2389
      %v2422 = vadd.f32 %v2091, %v2392
      %v2423 = vadd.f32 %v2092, %v2397
      %v2424 = vadd.f32 %v2093, %v2400
      %v2425 = vadd.f32 %v2094, %v2405
      %v2426 = vadd.f32 %v2095, %v2408
      %v2435 = vrot.slane %v2098, 6
      %v2436 = vrot.slane %v2435, 4
      %v2437 = vrot.slane %v2099, 6
      %v2438 = vsel %vm512, %v2436, %v2437
      %v2439 = vrot.slane %v2437, 4
      %v2440 = vrot.slane %v2100, 6
      %v2441 = vsel %vm512, %v2439, %v2440
      %v2442 = vrot.slane %v2103, 6
      %v2443 = vrot.slane %v2442, 4
      %v2444 = vrot.slane %v2104, 6
      %v2445 = vsel %vm512, %v2443, %v2444
      %v2446 = vrot.slane %v2444, 4
      %v2447 = vrot.slane %v2105, 6
      %v2448 = vsel %vm512, %v2446, %v2447
      %v2449 = vrot.slane %v2108, 6
      %v2450 = vrot.slane %v2449, 4
      %v2451 = vrot.slane %v2109, 6
      %v2452 = vsel %vm512, %v2450, %v2451
      %v2453 = vrot.slane %v2451, 4
      %v2454 = vrot.slane %v2110, 6
      %v2455 = vsel %vm512, %v2453, %v2454
      %v2456 = vrot.slane %v2113, 6
      %v2457 = vrot.slane %v2456, 4
      %v2458 = vrot.slane %v2114, 6
      %v2459 = vsel %vm512, %v2457, %v2458
      %v2460 = vrot.slane %v2458, 4
      %v2461 = vrot.slane %v2115, 6
      %v2462 = vsel %vm512, %v2460, %v2461
      %v2463 = vrot.slane %v2118, 6
      %v2464 = vrot.slane %v2463, 4
      %v2465 = vrot.slane %v2119, 6
      %v2466 = vsel %vm512, %v2464, %v2465
      %v2467 = vrot.slane %v2465, 4
      %v2468 = vrot.slane %v2120, 6
      %v2469 = vsel %vm512, %v2467, %v2468
      %v2470 = vrot.slane %v2123, 6
      %v2471 = vrot.slane %v2470, 4
      %v2472 = vrot.slane %v2124, 6
      %v2473 = vsel %vm512, %v2471, %v2472
      %v2474 = vrot.slane %v2472, 4
      %v2475 = vrot.slane %v2125, 6
      %v2476 = vsel %vm512, %v2474, %v2475
      %v2477 = vrot.slane %v2128, 6
      %v2478 = vrot.slane %v2477, 4
      %v2479 = vrot.slane %v2129, 6
      %v2480 = vsel %vm512, %v2478, %v2479
      %v2481 = vrot.slane %v2479, 4
      %v2482 = vrot.slane %v2130, 6
      %v2483 = vsel %vm512, %v2481, %v2482
      %v2484 = vrot.slane %v2133, 6
      %v2485 = vrot.slane %v2484, 4
      %v2486 = vrot.slane %v2134, 6
      %v2487 = vsel %vm512, %v2485, %v2486
      %v2488 = vrot.slane %v2486, 4
      %v2489 = vrot.slane %v2135, 6
      %v2490 = vsel %vm512, %v2488, %v2489
      %s2491 = scalar_lea.vmem %s1, 448
      %v2492 = vld [vmem:[%s2491] sm:$0xf]
      %v2493 = vld [vmem:[%s2491 + $0x4] sm:$0xf]
      %v2494 = vld [vmem:[%s2491 + $0x8] sm:$0xf]
      %v2495 = vld [vmem:[%s2491 + $0xc] sm:$0xf]
      %v2496 = vld [vmem:[%s2491 + $0x10] sm:$0xf]
      %v2497 = vld [vmem:[%s2491 + $0x14] sm:$0xf]
      %v2498 = vld [vmem:[%s2491 + $0x18] sm:$0xf]
      %v2499 = vld [vmem:[%s2491 + $0x1c] sm:$0xf]
      %v2500 = vld [vmem:[%s2491 + $0x20] sm:$0xf]
      %v2501 = vld [vmem:[%s2491 + $0x24] sm:$0xf]
      %v2502 = vld [vmem:[%s2491 + $0x28] sm:$0xf]
      %v2503 = vld [vmem:[%s2491 + $0x2c] sm:$0xf]
      %v2504 = vld [vmem:[%s2491 + $0x30] sm:$0xf]
      %v2505 = vld [vmem:[%s2491 + $0x34] sm:$0xf]
      %v2506 = vld [vmem:[%s2491 + $0x38] sm:$0xf]
      %v2507 = vld [vmem:[%s2491 + $0x3c] sm:$0xf]
      %v2508 = vunpack.c.l.b16 %v2438
      %v2509 = vunpack.c.l.b16 %v2441
      %v2510 = vunpack.c.l.b16 %v2445
      %v2511 = vunpack.c.l.b16 %v2448
      %v2512 = vunpack.c.l.b16 %v2452
      %v2513 = vunpack.c.l.b16 %v2455
      %v2514 = vunpack.c.l.b16 %v2459
      %v2515 = vunpack.c.l.b16 %v2462
      %v2516 = vunpack.c.l.b16 %v2466
      %v2517 = vunpack.c.l.b16 %v2469
      %v2518 = vunpack.c.l.b16 %v2473
      %v2519 = vunpack.c.l.b16 %v2476
      %v2520 = vunpack.c.l.b16 %v2480
      %v2521 = vunpack.c.l.b16 %v2483
      %v2522 = vunpack.c.l.b16 %v2487
      %v2523 = vunpack.c.l.b16 %v2490
      %v2524 = vpack.c.b16 %v2509, %v2508
      %v2525 = vpack.c.b16 %v2511, %v2510
      %v2526 = vpack.c.b16 %v2513, %v2512
      %v2527 = vpack.c.b16 %v2515, %v2514
      %v2528 = vpack.c.b16 %v2517, %v2516
      %v2529 = vpack.c.b16 %v2519, %v2518
      %v2530 = vpack.c.b16 %v2521, %v2520
      %v2531 = vpack.c.b16 %v2523, %v2522
      %v2556 = vunpack.c.l.b16 %v2492
      %v2557 = vunpack.c.l.b16 %v2493
      %v2558 = vunpack.c.l.b16 %v2494
      %v2559 = vunpack.c.l.b16 %v2495
      %v2560 = vunpack.c.l.b16 %v2496
      %v2561 = vunpack.c.l.b16 %v2497
      %v2562 = vunpack.c.l.b16 %v2498
      %v2563 = vunpack.c.l.b16 %v2499
      %v2564 = vunpack.c.l.b16 %v2500
      %v2565 = vunpack.c.l.b16 %v2501
      %v2566 = vunpack.c.l.b16 %v2502
      %v2567 = vunpack.c.l.b16 %v2503
      %v2568 = vunpack.c.l.b16 %v2504
      %v2569 = vunpack.c.l.b16 %v2505
      %v2570 = vunpack.c.l.b16 %v2506
      %v2571 = vunpack.c.l.b16 %v2507
      %v2572 = vpack.c.b16 %v2557, %v2556
      %v2573 = vpack.c.b16 %v2559, %v2558
      %v2574 = vpack.c.b16 %v2561, %v2560
      %v2575 = vpack.c.b16 %v2563, %v2562
      %v2576 = vpack.c.b16 %v2565, %v2564
      %v2577 = vpack.c.b16 %v2567, %v2566
      %v2578 = vpack.c.b16 %v2569, %v2568
      %v2579 = vpack.c.b16 %v2571, %v2570
      %2588 = vmatprep.subr.bf16.mxu0 0
      %2589 = vmatpush1.bf16.msra.mxu0 %v2572
      %2590 = vmatprep.subr.bf16.mxu0 0
      %2591 = vmatpush1.bf16.msra.mxu0 %v2573
      %2592 = vmatprep.subr.bf16.mxu0 0
      %2593 = vmatpush1.bf16.msra.mxu0 %v2574
      %2594 = vmatprep.subr.bf16.mxu0 0
      %2595 = vmatpush1.bf16.msra.mxu0 %v2575
      %2596 = vmatprep.subr.bf16.mxu0 0
      %2597 = vmatpush1.bf16.msra.mxu0 %v2576
      %2598 = vmatprep.subr.bf16.mxu0 0
      %2599 = vmatpush1.bf16.msra.mxu0 %v2577
      %2600 = vmatprep.subr.bf16.mxu0 0
      %2601 = vmatpush1.bf16.msra.mxu0 %v2578
      %2602 = vmatprep.subr.bf16.mxu0 0
      %2603 = vmatpush1.bf16.msra.mxu0 %v2579
      %2604 = vmatprep.subr.bf16.mxu0 0
      %2605 = vmatpush1.bf16.msra.mxu0 0
      %2606 = vmatprep.subr.bf16.mxu0 0
      %2607 = vmatpush1.bf16.msra.mxu0 0
      %2608 = vmatprep.subr.bf16.mxu0 0
      %2609 = vmatpush1.bf16.msra.mxu0 0
      %2610 = vmatprep.subr.bf16.mxu0 0
      %2611 = vmatpush1.bf16.msra.mxu0 0
      %2612 = vmatprep.subr.bf16.mxu0 0
      %2613 = vmatpush1.bf16.msra.mxu0 0
      %2614 = vmatprep.subr.bf16.mxu0 0
      %2615 = vmatpush1.bf16.msra.mxu0 0
      %2616 = vmatprep.subr.bf16.mxu0 0
      %2617 = vmatpush1.bf16.msra.mxu0 0
      %2618 = vmatprep.subr.bf16.mxu0 0
      %2619 = vmatpush1.bf16.msra.mxu0 0
      %2620 = vmatprep.mubr.bf16.mxu0 0
      %2621 = vmatmul.mubr.bf16.gmra.mrb[0].mxu0 %v2524
      %v2622 = vpop.f32.mrb[0].mxu0
      %v2623 = vadd.f32 0.0, %v2622
      %v2624 = vpop.f32.mrb[0].mxu0
      %v2625 = vpop.f32.mrb[0].mxu0
      %v2626 = vadd.f32 0.0, %v2625
      %v2627 = vpop.f32.mrb[0].mxu0
      %2628 = vmatprep.mubr.bf16.mxu0 0
      %2629 = vmatmul.mubr.bf16.gmra.mrb[0].mxu0 %v2525
      %v2630 = vpop.f32.mrb[0].mxu0
      %v2631 = vadd.f32 0.0, %v2630
      %v2632 = vpop.f32.mrb[0].mxu0
      %v2633 = vpop.f32.mrb[0].mxu0
      %v2634 = vadd.f32 0.0, %v2633
      %v2635 = vpop.f32.mrb[0].mxu0
      %2636 = vmatprep.mubr.bf16.mxu0 0
      %2637 = vmatmul.mubr.bf16.gmra.mrb[0].mxu0 %v2526
      %v2638 = vpop.f32.mrb[0].mxu0
      %v2639 = vadd.f32 0.0, %v2638
      %v2640 = vpop.f32.mrb[0].mxu0
      %v2641 = vpop.f32.mrb[0].mxu0
      %v2642 = vadd.f32 0.0, %v2641
      %v2643 = vpop.f32.mrb[0].mxu0
      %2644 = vmatprep.mubr.bf16.mxu0 0
      %2645 = vmatmul.mubr.bf16.gmra.mrb[0].mxu0 %v2527
      %v2646 = vpop.f32.mrb[0].mxu0
      %v2647 = vadd.f32 0.0, %v2646
      %v2648 = vpop.f32.mrb[0].mxu0
      %v2649 = vpop.f32.mrb[0].mxu0
      %v2650 = vadd.f32 0.0, %v2649
      %v2651 = vpop.f32.mrb[0].mxu0
      %2652 = vmatprep.mubr.bf16.mxu0 0
      %2653 = vmatmul.mubr.bf16.gmra.mrb[0].mxu0 %v2528
      %v2654 = vpop.f32.mrb[0].mxu0
      %v2655 = vadd.f32 0.0, %v2654
      %v2656 = vpop.f32.mrb[0].mxu0
      %v2657 = vpop.f32.mrb[0].mxu0
      %v2658 = vadd.f32 0.0, %v2657
      %v2659 = vpop.f32.mrb[0].mxu0
      %2660 = vmatprep.mubr.bf16.mxu0 0
      %2661 = vmatmul.mubr.bf16.gmra.mrb[0].mxu0 %v2529
      %v2662 = vpop.f32.mrb[0].mxu0
      %v2663 = vadd.f32 0.0, %v2662
      %v2664 = vpop.f32.mrb[0].mxu0
      %v2665 = vpop.f32.mrb[0].mxu0
      %v2666 = vadd.f32 0.0, %v2665
      %v2667 = vpop.f32.mrb[0].mxu0
      %2668 = vmatprep.mubr.bf16.mxu0 0
      %2669 = vmatmul.mubr.bf16.gmra.mrb[0].mxu0 %v2530
      %v2670 = vpop.f32.mrb[0].mxu0
      %v2671 = vadd.f32 0.0, %v2670
      %v2672 = vpop.f32.mrb[0].mxu0
      %v2673 = vpop.f32.mrb[0].mxu0
      %v2674 = vadd.f32 0.0, %v2673
      %v2675 = vpop.f32.mrb[0].mxu0
      %2676 = vmatprep.mubr.bf16.mxu0 0
      %2677 = vmatmul.mubr.bf16.gmra.mrb[0].mxu0 %v2531
      %v2678 = vpop.f32.mrb[0].mxu0
      %v2679 = vadd.f32 0.0, %v2678
      %v2680 = vpop.f32.mrb[0].mxu0
      %v2681 = vpop.f32.mrb[0].mxu0
      %v2682 = vadd.f32 0.0, %v2681
      %v2683 = vpop.f32.mrb[0].mxu0
      %2684 = vdwg.mxu0
      %v2685 = vadd.f32 %v2411, %v2623
      %v2686 = vadd.f32 %v2412, %v2626
      %v2687 = vadd.f32 %v2413, %v2631
      %v2688 = vadd.f32 %v2414, %v2634
      %v2689 = vadd.f32 %v2415, %v2639
      %v2690 = vadd.f32 %v2416, %v2642
      %v2691 = vadd.f32 %v2417, %v2647
      %v2692 = vadd.f32 %v2418, %v2650
      %v2693 = vadd.f32 %v2419, %v2655
      %v2694 = vadd.f32 %v2420, %v2658
      %v2695 = vadd.f32 %v2421, %v2663
      %v2696 = vadd.f32 %v2422, %v2666
      %v2697 = vadd.f32 %v2423, %v2671
      %v2698 = vadd.f32 %v2424, %v2674
      %v2699 = vadd.f32 %v2425, %v2679
      %v2700 = vadd.f32 %v2426, %v2682
      %v2709 = vrot.slane %v2099, 5
      %v2710 = vrot.slane %v2709, 4
      %v2711 = vrot.slane %v2100, 5
      %v2712 = vsel %vm950, %v2710, %v2711
      %v2713 = vrot.slane %v2711, 4
      %v2714 = vrot.slane %v2101, 5
      %v2715 = vsel %vm950, %v2713, %v2714
      %v2716 = vrot.slane %v2104, 5
      %v2717 = vrot.slane %v2716, 4
      %v2718 = vrot.slane %v2105, 5
      %v2719 = vsel %vm950, %v2717, %v2718
      %v2720 = vrot.slane %v2718, 4
      %v2721 = vrot.slane %v2106, 5
      %v2722 = vsel %vm950, %v2720, %v2721
      %v2723 = vrot.slane %v2109, 5
      %v2724 = vrot.slane %v2723, 4
      %v2725 = vrot.slane %v2110, 5
      %v2726 = vsel %vm950, %v2724, %v2725
      %v2727 = vrot.slane %v2725, 4
      %v2728 = vrot.slane %v2111, 5
      %v2729 = vsel %vm950, %v2727, %v2728
      %v2730 = vrot.slane %v2114, 5
      %v2731 = vrot.slane %v2730, 4
      %v2732 = vrot.slane %v2115, 5
      %v2733 = vsel %vm950, %v2731, %v2732
      %v2734 = vrot.slane %v2732, 4
      %v2735 = vrot.slane %v2116, 5
      %v2736 = vsel %vm950, %v2734, %v2735
      %v2737 = vrot.slane %v2119, 5
      %v2738 = vrot.slane %v2737, 4
      %v2739 = vrot.slane %v2120, 5
      %v2740 = vsel %vm950, %v2738, %v2739
      %v2741 = vrot.slane %v2739, 4
      %v2742 = vrot.slane %v2121, 5
      %v2743 = vsel %vm950, %v2741, %v2742
      %v2744 = vrot.slane %v2124, 5
      %v2745 = vrot.slane %v2744, 4
      %v2746 = vrot.slane %v2125, 5
      %v2747 = vsel %vm950, %v2745, %v2746
      %v2748 = vrot.slane %v2746, 4
      %v2749 = vrot.slane %v2126, 5
      %v2750 = vsel %vm950, %v2748, %v2749
      %v2751 = vrot.slane %v2129, 5
      %v2752 = vrot.slane %v2751, 4
      %v2753 = vrot.slane %v2130, 5
      %v2754 = vsel %vm950, %v2752, %v2753
      %v2755 = vrot.slane %v2753, 4
      %v2756 = vrot.slane %v2131, 5
      %v2757 = vsel %vm950, %v2755, %v2756
      %v2758 = vrot.slane %v2134, 5
      %v2759 = vrot.slane %v2758, 4
      %v2760 = vrot.slane %v2135, 5
      %v2761 = vsel %vm950, %v2759, %v2760
      %v2762 = vrot.slane %v2760, 4
      %v2763 = vrot.slane %v2136, 5
      %v2764 = vsel %vm950, %v2762, %v2763
      %s2765 = scalar_lea.vmem %s1, 512
      %v2766 = vld [vmem:[%s2765] sm:$0xf]
      %v2767 = vld [vmem:[%s2765 + $0x4] sm:$0xf]
      %v2768 = vld [vmem:[%s2765 + $0x8] sm:$0xf]
      %v2769 = vld [vmem:[%s2765 + $0xc] sm:$0xf]
      %v2770 = vld [vmem:[%s2765 + $0x10] sm:$0xf]
      %v2771 = vld [vmem:[%s2765 + $0x14] sm:$0xf]
      %v2772 = vld [vmem:[%s2765 + $0x18] sm:$0xf]
      %v2773 = vld [vmem:[%s2765 + $0x1c] sm:$0xf]
      %v2774 = vld [vmem:[%s2765 + $0x20] sm:$0xf]
      %v2775 = vld [vmem:[%s2765 + $0x24] sm:$0xf]
      %v2776 = vld [vmem:[%s2765 + $0x28] sm:$0xf]
      %v2777 = vld [vmem:[%s2765 + $0x2c] sm:$0xf]
      %v2778 = vld [vmem:[%s2765 + $0x30] sm:$0xf]
      %v2779 = vld [vmem:[%s2765 + $0x34] sm:$0xf]
      %v2780 = vld [vmem:[%s2765 + $0x38] sm:$0xf]
      %v2781 = vld [vmem:[%s2765 + $0x3c] sm:$0xf]
      %v2782 = vunpack.c.l.b16 %v2712
      %v2783 = vunpack.c.l.b16 %v2715
      %v2784 = vunpack.c.l.b16 %v2719
      %v2785 = vunpack.c.l.b16 %v2722
      %v2786 = vunpack.c.l.b16 %v2726
      %v2787 = vunpack.c.l.b16 %v2729
      %v2788 = vunpack.c.l.b16 %v2733
      %v2789 = vunpack.c.l.b16 %v2736
      %v2790 = vunpack.c.l.b16 %v2740
      %v2791 = vunpack.c.l.b16 %v2743
      %v2792 = vunpack.c.l.b16 %v2747
      %v2793 = vunpack.c.l.b16 %v2750
      %v2794 = vunpack.c.l.b16 %v2754
      %v2795 = vunpack.c.l.b16 %v2757
      %v2796 = vunpack.c.l.b16 %v2761
      %v2797 = vunpack.c.l.b16 %v2764
      %v2798 = vpack.c.b16 %v2783, %v2782
      %v2799 = vpack.c.b16 %v2785, %v2784
      %v2800 = vpack.c.b16 %v2787, %v2786
      %v2801 = vpack.c.b16 %v2789, %v2788
      %v2802 = vpack.c.b16 %v2791, %v2790
      %v2803 = vpack.c.b16 %v2793, %v2792
      %v2804 = vpack.c.b16 %v2795, %v2794
      %v2805 = vpack.c.b16 %v2797, %v2796
      %v2830 = vunpack.c.l.b16 %v2766
      %v2831 = vunpack.c.l.b16 %v2767
      %v2832 = vunpack.c.l.b16 %v2768
      %v2833 = vunpack.c.l.b16 %v2769
      %v2834 = vunpack.c.l.b16 %v2770
      %v2835 = vunpack.c.l.b16 %v2771
      %v2836 = vunpack.c.l.b16 %v2772
      %v2837 = vunpack.c.l.b16 %v2773
      %v2838 = vunpack.c.l.b16 %v2774
      %v2839 = vunpack.c.l.b16 %v2775
      %v2840 = vunpack.c.l.b16 %v2776
      %v2841 = vunpack.c.l.b16 %v2777
      %v2842 = vunpack.c.l.b16 %v2778
      %v2843 = vunpack.c.l.b16 %v2779
      %v2844 = vunpack.c.l.b16 %v2780
      %v2845 = vunpack.c.l.b16 %v2781
      %v2846 = vpack.c.b16 %v2831, %v2830
      %v2847 = vpack.c.b16 %v2833, %v2832
      %v2848 = vpack.c.b16 %v2835, %v2834
      %v2849 = vpack.c.b16 %v2837, %v2836
      %v2850 = vpack.c.b16 %v2839, %v2838
      %v2851 = vpack.c.b16 %v2841, %v2840
      %v2852 = vpack.c.b16 %v2843, %v2842
      %v2853 = vpack.c.b16 %v2845, %v2844
      %2862 = vmatprep.subr.bf16.mxu0 0
      %2863 = vmatpush1.bf16.msra.mxu0 %v2846
      %2864 = vmatprep.subr.bf16.mxu0 0
      %2865 = vmatpush1.bf16.msra.mxu0 %v2847
      %2866 = vmatprep.subr.bf16.mxu0 0
      %2867 = vmatpush1.bf16.msra.mxu0 %v2848
      %2868 = vmatprep.subr.bf16.mxu0 0
      %2869 = vmatpush1.bf16.msra.mxu0 %v2849
      %2870 = vmatprep.subr.bf16.mxu0 0
      %2871 = vmatpush1.bf16.msra.mxu0 %v2850
      %2872 = vmatprep.subr.bf16.mxu0 0
      %2873 = vmatpush1.bf16.msra.mxu0 %v2851
      %2874 = vmatprep.subr.bf16.mxu0 0
      %2875 = vmatpush1.bf16.msra.mxu0 %v2852
      %2876 = vmatprep.subr.bf16.mxu0 0
      %2877 = vmatpush1.bf16.msra.mxu0 %v2853
      %2878 = vmatprep.subr.bf16.mxu0 0
      %2879 = vmatpush1.bf16.msra.mxu0 0
      %2880 = vmatprep.subr.bf16.mxu0 0
      %2881 = vmatpush1.bf16.msra.mxu0 0
      %2882 = vmatprep.subr.bf16.mxu0 0
      %2883 = vmatpush1.bf16.msra.mxu0 0
      %2884 = vmatprep.subr.bf16.mxu0 0
      %2885 = vmatpush1.bf16.msra.mxu0 0
      %2886 = vmatprep.subr.bf16.mxu0 0
      %2887 = vmatpush1.bf16.msra.mxu0 0
      %2888 = vmatprep.subr.bf16.mxu0 0
      %2889 = vmatpush1.bf16.msra.mxu0 0
      %2890 = vmatprep.subr.bf16.mxu0 0
      %2891 = vmatpush1.bf16.msra.mxu0 0
      %2892 = vmatprep.subr.bf16.mxu0 0
      %2893 = vmatpush1.bf16.msra.mxu0 0
      %2894 = vmatprep.mubr.bf16.mxu0 0
      %2895 = vmatmul.mubr.bf16.gmra.mrb[0].mxu0 %v2798
      %v2896 = vpop.f32.mrb[0].mxu0
      %v2897 = vadd.f32 0.0, %v2896
      %v2898 = vpop.f32.mrb[0].mxu0
      %v2899 = vpop.f32.mrb[0].mxu0
      %v2900 = vadd.f32 0.0, %v2899
      %v2901 = vpop.f32.mrb[0].mxu0
      %2902 = vmatprep.mubr.bf16.mxu0 0
      %2903 = vmatmul.mubr.bf16.gmra.mrb[0].mxu0 %v2799
      %v2904 = vpop.f32.mrb[0].mxu0
      %v2905 = vadd.f32 0.0, %v2904
      %v2906 = vpop.f32.mrb[0].mxu0
      %v2907 = vpop.f32.mrb[0].mxu0
      %v2908 = vadd.f32 0.0, %v2907
      %v2909 = vpop.f32.mrb[0].mxu0
      %2910 = vmatprep.mubr.bf16.mxu0 0
      %2911 = vmatmul.mubr.bf16.gmra.mrb[0].mxu0 %v2800
      %v2912 = vpop.f32.mrb[0].mxu0
      %v2913 = vadd.f32 0.0, %v2912
      %v2914 = vpop.f32.mrb[0].mxu0
      %v2915 = vpop.f32.mrb[0].mxu0
      %v2916 = vadd.f32 0.0, %v2915
      %v2917 = vpop.f32.mrb[0].mxu0
      %2918 = vmatprep.mubr.bf16.mxu0 0
      %2919 = vmatmul.mubr.bf16.gmra.mrb[0].mxu0 %v2801
      %v2920 = vpop.f32.mrb[0].mxu0
      %v2921 = vadd.f32 0.0, %v2920
      %v2922 = vpop.f32.mrb[0].mxu0
      %v2923 = vpop.f32.mrb[0].mxu0
      %v2924 = vadd.f32 0.0, %v2923
      %v2925 = vpop.f32.mrb[0].mxu0
      %2926 = vmatprep.mubr.bf16.mxu0 0
      %2927 = vmatmul.mubr.bf16.gmra.mrb[0].mxu0 %v2802
      %v2928 = vpop.f32.mrb[0].mxu0
      %v2929 = vadd.f32 0.0, %v2928
      %v2930 = vpop.f32.mrb[0].mxu0
      %v2931 = vpop.f32.mrb[0].mxu0
      %v2932 = vadd.f32 0.0, %v2931
      %v2933 = vpop.f32.mrb[0].mxu0
      %2934 = vmatprep.mubr.bf16.mxu0 0
      %2935 = vmatmul.mubr.bf16.gmra.mrb[0].mxu0 %v2803
      %v2936 = vpop.f32.mrb[0].mxu0
      %v2937 = vadd.f32 0.0, %v2936
      %v2938 = vpop.f32.mrb[0].mxu0
      %v2939 = vpop.f32.mrb[0].mxu0
      %v2940 = vadd.f32 0.0, %v2939
      %v2941 = vpop.f32.mrb[0].mxu0
      %2942 = vmatprep.mubr.bf16.mxu0 0
      %2943 = vmatmul.mubr.bf16.gmra.mrb[0].mxu0 %v2804
      %v2944 = vpop.f32.mrb[0].mxu0
      %v2945 = vadd.f32 0.0, %v2944
      %v2946 = vpop.f32.mrb[0].mxu0
      %v2947 = vpop.f32.mrb[0].mxu0
      %v2948 = vadd.f32 0.0, %v2947
      %v2949 = vpop.f32.mrb[0].mxu0
      %2950 = vmatprep.mubr.bf16.mxu0 0
      %2951 = vmatmul.mubr.bf16.gmra.mrb[0].mxu0 %v2805
      %v2952 = vpop.f32.mrb[0].mxu0
      %v2953 = vadd.f32 0.0, %v2952
      %v2954 = vpop.f32.mrb[0].mxu0
      %v2955 = vpop.f32.mrb[0].mxu0
      %v2956 = vadd.f32 0.0, %v2955
      %v2957 = vpop.f32.mrb[0].mxu0
      %2958 = vdwg.mxu0
      %v2959 = vadd.f32 %v2685, %v2897
      %v2960 = vadd.f32 %v2686, %v2900
      %v2961 = vadd.f32 %v2687, %v2905
      %v2962 = vadd.f32 %v2688, %v2908
      %v2963 = vadd.f32 %v2689, %v2913
      %v2964 = vadd.f32 %v2690, %v2916
      %v2965 = vadd.f32 %v2691, %v2921
      %v2966 = vadd.f32 %v2692, %v2924
      %v2967 = vadd.f32 %v2693, %v2929
      %v2968 = vadd.f32 %v2694, %v2932
      %v2969 = vadd.f32 %v2695, %v2937
      %v2970 = vadd.f32 %v2696, %v2940
      %v2971 = vadd.f32 %v2697, %v2945
      %v2972 = vadd.f32 %v2698, %v2948
      %v2973 = vadd.f32 %v2699, %v2953
      %v2974 = vadd.f32 %v2700, %v2956
      %v2975 = vld [vmem:[#allocation2] sm:$0xf]
      %v2976 = vld [vmem:[#allocation2 + $0x4] sm:$0xf]
      %v2977 = vld [vmem:[#allocation2 + $0x8] sm:$0xf]
      %v2978 = vld [vmem:[#allocation2 + $0xc] sm:$0xf]
      %v2979 = vld [vmem:[#allocation2 + $0x10] sm:$0xf]
      %v2980 = vld [vmem:[#allocation2 + $0x14] sm:$0xf]
      %v2981 = vld [vmem:[#allocation2 + $0x18] sm:$0xf]
      %v2982 = vld [vmem:[#allocation2 + $0x1c] sm:$0xf]
      %v2983 = vld [vmem:[#allocation2 + $0x20] sm:$0xf]
      %v2984 = vld [vmem:[#allocation2 + $0x24] sm:$0xf]
      %v2985 = vld [vmem:[#allocation2 + $0x28] sm:$0xf]
      %v2986 = vld [vmem:[#allocation2 + $0x2c] sm:$0xf]
      %v2987 = vld [vmem:[#allocation2 + $0x30] sm:$0xf]
      %v2988 = vld [vmem:[#allocation2 + $0x34] sm:$0xf]
      %v2989 = vld [vmem:[#allocation2 + $0x38] sm:$0xf]
      %v2990 = vld [vmem:[#allocation2 + $0x3c] sm:$0xf]
      %v2991 = vld [vmem:[#allocation2 + $0x40] sm:$0xf]
      %v2992 = vld [vmem:[#allocation2 + $0x44] sm:$0xf]
      %v2993 = vld [vmem:[#allocation2 + $0x48] sm:$0xf]
      %v2994 = vld [vmem:[#allocation2 + $0x4c] sm:$0xf]
      %v2995 = vld [vmem:[#allocation2 + $0x50] sm:$0xf]
      %v2996 = vld [vmem:[#allocation2 + $0x54] sm:$0xf]
      %v2997 = vld [vmem:[#allocation2 + $0x58] sm:$0xf]
      %v2998 = vld [vmem:[#allocation2 + $0x5c] sm:$0xf]
      %v2999 = vld [vmem:[#allocation2 + $0x60] sm:$0xf]
      %v3000 = vld [vmem:[#allocation2 + $0x64] sm:$0xf]
      %v3001 = vld [vmem:[#allocation2 + $0x68] sm:$0xf]
      %v3002 = vld [vmem:[#allocation2 + $0x6c] sm:$0xf]
      %v3003 = vld [vmem:[#allocation2 + $0x70] sm:$0xf]
      %v3004 = vld [vmem:[#allocation2 + $0x74] sm:$0xf]
      %v3005 = vld [vmem:[#allocation2 + $0x78] sm:$0xf]
      %v3006 = vld [vmem:[#allocation2 + $0x7c] sm:$0xf]
      %v3007 = vld [vmem:[#allocation2 + $0x80] sm:$0xf]
      %v3008 = vld [vmem:[#allocation2 + $0x84] sm:$0xf]
      %v3009 = vld [vmem:[#allocation2 + $0x88] sm:$0xf]
      %v3010 = vld [vmem:[#allocation2 + $0x8c] sm:$0xf]
      %v3011 = vld [vmem:[#allocation2 + $0x90] sm:$0xf]
      %v3012 = vld [vmem:[#allocation2 + $0x94] sm:$0xf]
      %v3013 = vld [vmem:[#allocation2 + $0x98] sm:$0xf]
      %v3014 = vld [vmem:[#allocation2 + $0x9c] sm:$0xf]
      %s3015 = scalar_lea.vmem %s1, 576
      %v3016 = vld [vmem:[%s3015] sm:$0xf]
      %v3017 = vld [vmem:[%s3015 + $0x4] sm:$0xf]
      %v3018 = vld [vmem:[%s3015 + $0x8] sm:$0xf]
      %v3019 = vld [vmem:[%s3015 + $0xc] sm:$0xf]
      %v3020 = vld [vmem:[%s3015 + $0x10] sm:$0xf]
      %v3021 = vld [vmem:[%s3015 + $0x14] sm:$0xf]
      %v3022 = vld [vmem:[%s3015 + $0x18] sm:$0xf]
      %v3023 = vld [vmem:[%s3015 + $0x1c] sm:$0xf]
      %v3024 = vld [vmem:[%s3015 + $0x20] sm:$0xf]
      %v3025 = vld [vmem:[%s3015 + $0x24] sm:$0xf]
      %v3026 = vld [vmem:[%s3015 + $0x28] sm:$0xf]
      %v3027 = vld [vmem:[%s3015 + $0x2c] sm:$0xf]
      %v3028 = vld [vmem:[%s3015 + $0x30] sm:$0xf]
      %v3029 = vld [vmem:[%s3015 + $0x34] sm:$0xf]
      %v3030 = vld [vmem:[%s3015 + $0x38] sm:$0xf]
      %v3031 = vld [vmem:[%s3015 + $0x3c] sm:$0xf]
      %v3048 = vunpack.c.l.b16 %v2975
      %v3049 = vunpack.c.l.b16 %v2976
      %v3050 = vunpack.c.l.b16 %v2980
      %v3051 = vunpack.c.l.b16 %v2981
      %v3052 = vunpack.c.l.b16 %v2985
      %v3053 = vunpack.c.l.b16 %v2986
      %v3054 = vunpack.c.l.b16 %v2990
      %v3055 = vunpack.c.l.b16 %v2991
      %v3056 = vunpack.c.l.b16 %v2995
      %v3057 = vunpack.c.l.b16 %v2996
      %v3058 = vunpack.c.l.b16 %v3000
      %v3059 = vunpack.c.l.b16 %v3001
      %v3060 = vunpack.c.l.b16 %v3005
      %v3061 = vunpack.c.l.b16 %v3006
      %v3062 = vunpack.c.l.b16 %v3010
      %v3063 = vunpack.c.l.b16 %v3011
      %v3064 = vpack.c.b16 %v3049, %v3048
      %v3065 = vpack.c.b16 %v3051, %v3050
      %v3066 = vpack.c.b16 %v3053, %v3052
      %v3067 = vpack.c.b16 %v3055, %v3054
      %v3068 = vpack.c.b16 %v3057, %v3056
      %v3069 = vpack.c.b16 %v3059, %v3058
      %v3070 = vpack.c.b16 %v3061, %v3060
      %v3071 = vpack.c.b16 %v3063, %v3062
      %v3096 = vunpack.c.l.b16 %v3016
      %v3097 = vunpack.c.l.b16 %v3017
      %v3098 = vunpack.c.l.b16 %v3018
      %v3099 = vunpack.c.l.b16 %v3019
      %v3100 = vunpack.c.l.b16 %v3020
      %v3101 = vunpack.c.l.b16 %v3021
      %v3102 = vunpack.c.l.b16 %v3022
      %v3103 = vunpack.c.l.b16 %v3023
      %v3104 = vunpack.c.l.b16 %v3024
      %v3105 = vunpack.c.l.b16 %v3025
      %v3106 = vunpack.c.l.b16 %v3026
      %v3107 = vunpack.c.l.b16 %v3027
      %v3108 = vunpack.c.l.b16 %v3028
      %v3109 = vunpack.c.l.b16 %v3029
      %v3110 = vunpack.c.l.b16 %v3030
      %v3111 = vunpack.c.l.b16 %v3031
      %v3112 = vpack.c.b16 %v3097, %v3096
      %v3113 = vpack.c.b16 %v3099, %v3098
      %v3114 = vpack.c.b16 %v3101, %v3100
      %v3115 = vpack.c.b16 %v3103, %v3102
      %v3116 = vpack.c.b16 %v3105, %v3104
      %v3117 = vpack.c.b16 %v3107, %v3106
      %v3118 = vpack.c.b16 %v3109, %v3108
      %v3119 = vpack.c.b16 %v3111, %v3110
      %3128 = vmatprep.subr.bf16.mxu0 0
      %3129 = vmatpush1.bf16.msra.mxu0 %v3112
      %3130 = vmatprep.subr.bf16.mxu0 0
      %3131 = vmatpush1.bf16.msra.mxu0 %v3113
      %3132 = vmatprep.subr.bf16.mxu0 0
      %3133 = vmatpush1.bf16.msra.mxu0 %v3114
      %3134 = vmatprep.subr.bf16.mxu0 0
      %3135 = vmatpush1.bf16.msra.mxu0 %v3115
      %3136 = vmatprep.subr.bf16.mxu0 0
      %3137 = vmatpush1.bf16.msra.mxu0 %v3116
      %3138 = vmatprep.subr.bf16.mxu0 0
      %3139 = vmatpush1.bf16.msra.mxu0 %v3117
      %3140 = vmatprep.subr.bf16.mxu0 0
      %3141 = vmatpush1.bf16.msra.mxu0 %v3118
      %3142 = vmatprep.subr.bf16.mxu0 0
      %3143 = vmatpush1.bf16.msra.mxu0 %v3119
      %3144 = vmatprep.subr.bf16.mxu0 0
      %3145 = vmatpush1.bf16.msra.mxu0 0
      %3146 = vmatprep.subr.bf16.mxu0 0
      %3147 = vmatpush1.bf16.msra.mxu0 0
      %3148 = vmatprep.subr.bf16.mxu0 0
      %3149 = vmatpush1.bf16.msra.mxu0 0
      %3150 = vmatprep.subr.bf16.mxu0 0
      %3151 = vmatpush1.bf16.msra.mxu0 0
      %3152 = vmatprep.subr.bf16.mxu0 0
      %3153 = vmatpush1.bf16.msra.mxu0 0
      %3154 = vmatprep.subr.bf16.mxu0 0
      %3155 = vmatpush1.bf16.msra.mxu0 0
      %3156 = vmatprep.subr.bf16.mxu0 0
      %3157 = vmatpush1.bf16.msra.mxu0 0
      %3158 = vmatprep.subr.bf16.mxu0 0
      %3159 = vmatpush1.bf16.msra.mxu0 0
      %3160 = vmatprep.mubr.bf16.mxu0 0
      %3161 = vmatmul.mubr.bf16.gmra.mrb[0].mxu0 %v3064
      %v3162 = vpop.f32.mrb[0].mxu0
      %v3163 = vadd.f32 0.0, %v3162
      %v3164 = vpop.f32.mrb[0].mxu0
      %v3165 = vpop.f32.mrb[0].mxu0
      %v3166 = vadd.f32 0.0, %v3165
      %v3167 = vpop.f32.mrb[0].mxu0
      %3168 = vmatprep.mubr.bf16.mxu0 0
      %3169 = vmatmul.mubr.bf16.gmra.mrb[0].mxu0 %v3065
      %v3170 = vpop.f32.mrb[0].mxu0
      %v3171 = vadd.f32 0.0, %v3170
      %v3172 = vpop.f32.mrb[0].mxu0
      %v3173 = vpop.f32.mrb[0].mxu0
      %v3174 = vadd.f32 0.0, %v3173
      %v3175 = vpop.f32.mrb[0].mxu0
      %3176 = vmatprep.mubr.bf16.mxu0 0
      %3177 = vmatmul.mubr.bf16.gmra.mrb[0].mxu0 %v3066
      %v3178 = vpop.f32.mrb[0].mxu0
      %v3179 = vadd.f32 0.0, %v3178
      %v3180 = vpop.f32.mrb[0].mxu0
      %v3181 = vpop.f32.mrb[0].mxu0
      %v3182 = vadd.f32 0.0, %v3181
      %v3183 = vpop.f32.mrb[0].mxu0
      %3184 = vmatprep.mubr.bf16.mxu0 0
      %3185 = vmatmul.mubr.bf16.gmra.mrb[0].mxu0 %v3067
      %v3186 = vpop.f32.mrb[0].mxu0
      %v3187 = vadd.f32 0.0, %v3186
      %v3188 = vpop.f32.mrb[0].mxu0
      %v3189 = vpop.f32.mrb[0].mxu0
      %v3190 = vadd.f32 0.0, %v3189
      %v3191 = vpop.f32.mrb[0].mxu0
      %3192 = vmatprep.mubr.bf16.mxu0 0
      %3193 = vmatmul.mubr.bf16.gmra.mrb[0].mxu0 %v3068
      %v3194 = vpop.f32.mrb[0].mxu0
      %v3195 = vadd.f32 0.0, %v3194
      %v3196 = vpop.f32.mrb[0].mxu0
      %v3197 = vpop.f32.mrb[0].mxu0
      %v3198 = vadd.f32 0.0, %v3197
      %v3199 = vpop.f32.mrb[0].mxu0
      %3200 = vmatprep.mubr.bf16.mxu0 0
      %3201 = vmatmul.mubr.bf16.gmra.mrb[0].mxu0 %v3069
      %v3202 = vpop.f32.mrb[0].mxu0
      %v3203 = vadd.f32 0.0, %v3202
      %v3204 = vpop.f32.mrb[0].mxu0
      %v3205 = vpop.f32.mrb[0].mxu0
      %v3206 = vadd.f32 0.0, %v3205
      %v3207 = vpop.f32.mrb[0].mxu0
      %3208 = vmatprep.mubr.bf16.mxu0 0
      %3209 = vmatmul.mubr.bf16.gmra.mrb[0].mxu0 %v3070
      %v3210 = vpop.f32.mrb[0].mxu0
      %v3211 = vadd.f32 0.0, %v3210
      %v3212 = vpop.f32.mrb[0].mxu0
      %v3213 = vpop.f32.mrb[0].mxu0
      %v3214 = vadd.f32 0.0, %v3213
      %v3215 = vpop.f32.mrb[0].mxu0
      %3216 = vmatprep.mubr.bf16.mxu0 0
      %3217 = vmatmul.mubr.bf16.gmra.mrb[0].mxu0 %v3071
      %v3218 = vpop.f32.mrb[0].mxu0
      %v3219 = vadd.f32 0.0, %v3218
      %v3220 = vpop.f32.mrb[0].mxu0
      %v3221 = vpop.f32.mrb[0].mxu0
      %v3222 = vadd.f32 0.0, %v3221
      %v3223 = vpop.f32.mrb[0].mxu0
      %3224 = vdwg.mxu0
      %v3225 = vadd.f32 %v2959, %v3163
      %v3226 = vadd.f32 %v2960, %v3166
      %v3227 = vadd.f32 %v2961, %v3171
      %v3228 = vadd.f32 %v2962, %v3174
      %v3229 = vadd.f32 %v2963, %v3179
      %v3230 = vadd.f32 %v2964, %v3182
      %v3231 = vadd.f32 %v2965, %v3187
      %v3232 = vadd.f32 %v2966, %v3190
      %v3233 = vadd.f32 %v2967, %v3195
      %v3234 = vadd.f32 %v2968, %v3198
      %v3235 = vadd.f32 %v2969, %v3203
      %v3236 = vadd.f32 %v2970, %v3206
      %v3237 = vadd.f32 %v2971, %v3211
      %v3238 = vadd.f32 %v2972, %v3214
      %v3239 = vadd.f32 %v2973, %v3219
      %v3240 = vadd.f32 %v2974, %v3222
      %v3257 = vrot.slane %v2976, 6
      %v3258 = vrot.slane %v3257, 4
      %v3259 = vrot.slane %v2977, 6
      %v3260 = vsel %vm512, %v3258, %v3259
      %v3261 = vrot.slane %v3259, 4
      %v3262 = vrot.slane %v2978, 6
      %v3263 = vsel %vm512, %v3261, %v3262
      %v3264 = vrot.slane %v2981, 6
      %v3265 = vrot.slane %v3264, 4
      %v3266 = vrot.slane %v2982, 6
      %v3267 = vsel %vm512, %v3265, %v3266
      %v3268 = vrot.slane %v3266, 4
      %v3269 = vrot.slane %v2983, 6
      %v3270 = vsel %vm512, %v3268, %v3269
      %v3271 = vrot.slane %v2986, 6
      %v3272 = vrot.slane %v3271, 4
      %v3273 = vrot.slane %v2987, 6
      %v3274 = vsel %vm512, %v3272, %v3273
      %v3275 = vrot.slane %v3273, 4
      %v3276 = vrot.slane %v2988, 6
      %v3277 = vsel %vm512, %v3275, %v3276
      %v3278 = vrot.slane %v2991, 6
      %v3279 = vrot.slane %v3278, 4
      %v3280 = vrot.slane %v2992, 6
      %v3281 = vsel %vm512, %v3279, %v3280
      %v3282 = vrot.slane %v3280, 4
      %v3283 = vrot.slane %v2993, 6
      %v3284 = vsel %vm512, %v3282, %v3283
      %v3285 = vrot.slane %v2996, 6
      %v3286 = vrot.slane %v3285, 4
      %v3287 = vrot.slane %v2997, 6
      %v3288 = vsel %vm512, %v3286, %v3287
      %v3289 = vrot.slane %v3287, 4
      %v3290 = vrot.slane %v2998, 6
      %v3291 = vsel %vm512, %v3289, %v3290
      %v3292 = vrot.slane %v3001, 6
      %v3293 = vrot.slane %v3292, 4
      %v3294 = vrot.slane %v3002, 6
      %v3295 = vsel %vm512, %v3293, %v3294
      %v3296 = vrot.slane %v3294, 4
      %v3297 = vrot.slane %v3003, 6
      %v3298 = vsel %vm512, %v3296, %v3297
      %v3299 = vrot.slane %v3006, 6
      %v3300 = vrot.slane %v3299, 4
      %v3301 = vrot.slane %v3007, 6
      %v3302 = vsel %vm512, %v3300, %v3301
      %v3303 = vrot.slane %v3301, 4
      %v3304 = vrot.slane %v3008, 6
      %v3305 = vsel %vm512, %v3303, %v3304
      %v3306 = vrot.slane %v3011, 6
      %v3307 = vrot.slane %v3306, 4
      %v3308 = vrot.slane %v3012, 6
      %v3309 = vsel %vm512, %v3307, %v3308
      %v3310 = vrot.slane %v3308, 4
      %v3311 = vrot.slane %v3013, 6
      %v3312 = vsel %vm512, %v3310, %v3311
      %s3313 = scalar_lea.vmem %s1, 640
      %v3314 = vld [vmem:[%s3313] sm:$0xf]
      %v3315 = vld [vmem:[%s3313 + $0x4] sm:$0xf]
      %v3316 = vld [vmem:[%s3313 + $0x8] sm:$0xf]
      %v3317 = vld [vmem:[%s3313 + $0xc] sm:$0xf]
      %v3318 = vld [vmem:[%s3313 + $0x10] sm:$0xf]
      %v3319 = vld [vmem:[%s3313 + $0x14] sm:$0xf]
      %v3320 = vld [vmem:[%s3313 + $0x18] sm:$0xf]
      %v3321 = vld [vmem:[%s3313 + $0x1c] sm:$0xf]
      %v3322 = vld [vmem:[%s3313 + $0x20] sm:$0xf]
      %v3323 = vld [vmem:[%s3313 + $0x24] sm:$0xf]
      %v3324 = vld [vmem:[%s3313 + $0x28] sm:$0xf]
      %v3325 = vld [vmem:[%s3313 + $0x2c] sm:$0xf]
      %v3326 = vld [vmem:[%s3313 + $0x30] sm:$0xf]
      %v3327 = vld [vmem:[%s3313 + $0x34] sm:$0xf]
      %v3328 = vld [vmem:[%s3313 + $0x38] sm:$0xf]
      %v3329 = vld [vmem:[%s3313 + $0x3c] sm:$0xf]
      %v3330 = vunpack.c.l.b16 %v3260
      %v3331 = vunpack.c.l.b16 %v3263
      %v3332 = vunpack.c.l.b16 %v3267
      %v3333 = vunpack.c.l.b16 %v3270
      %v3334 = vunpack.c.l.b16 %v3274
      %v3335 = vunpack.c.l.b16 %v3277
      %v3336 = vunpack.c.l.b16 %v3281
      %v3337 = vunpack.c.l.b16 %v3284
      %v3338 = vunpack.c.l.b16 %v3288
      %v3339 = vunpack.c.l.b16 %v3291
      %v3340 = vunpack.c.l.b16 %v3295
      %v3341 = vunpack.c.l.b16 %v3298
      %v3342 = vunpack.c.l.b16 %v3302
      %v3343 = vunpack.c.l.b16 %v3305
      %v3344 = vunpack.c.l.b16 %v3309
      %v3345 = vunpack.c.l.b16 %v3312
      %v3346 = vpack.c.b16 %v3331, %v3330
      %v3347 = vpack.c.b16 %v3333, %v3332
      %v3348 = vpack.c.b16 %v3335, %v3334
      %v3349 = vpack.c.b16 %v3337, %v3336
      %v3350 = vpack.c.b16 %v3339, %v3338
      %v3351 = vpack.c.b16 %v3341, %v3340
      %v3352 = vpack.c.b16 %v3343, %v3342
      %v3353 = vpack.c.b16 %v3345, %v3344
      %v3378 = vunpack.c.l.b16 %v3314
      %v3379 = vunpack.c.l.b16 %v3315
      %v3380 = vunpack.c.l.b16 %v3316
      %v3381 = vunpack.c.l.b16 %v3317
      %v3382 = vunpack.c.l.b16 %v3318
      %v3383 = vunpack.c.l.b16 %v3319
      %v3384 = vunpack.c.l.b16 %v3320
      %v3385 = vunpack.c.l.b16 %v3321
      %v3386 = vunpack.c.l.b16 %v3322
      %v3387 = vunpack.c.l.b16 %v3323
      %v3388 = vunpack.c.l.b16 %v3324
      %v3389 = vunpack.c.l.b16 %v3325
      %v3390 = vunpack.c.l.b16 %v3326
      %v3391 = vunpack.c.l.b16 %v3327
      %v3392 = vunpack.c.l.b16 %v3328
      %v3393 = vunpack.c.l.b16 %v3329
      %v3394 = vpack.c.b16 %v3379, %v3378
      %v3395 = vpack.c.b16 %v3381, %v3380
      %v3396 = vpack.c.b16 %v3383, %v3382
      %v3397 = vpack.c.b16 %v3385, %v3384
      %v3398 = vpack.c.b16 %v3387, %v3386
      %v3399 = vpack.c.b16 %v3389, %v3388
      %v3400 = vpack.c.b16 %v3391, %v3390
      %v3401 = vpack.c.b16 %v3393, %v3392
      %3410 = vmatprep.subr.bf16.mxu0 0
      %3411 = vmatpush1.bf16.msra.mxu0 %v3394
      %3412 = vmatprep.subr.bf16.mxu0 0
      %3413 = vmatpush1.bf16.msra.mxu0 %v3395
      %3414 = vmatprep.subr.bf16.mxu0 0
      %3415 = vmatpush1.bf16.msra.mxu0 %v3396
      %3416 = vmatprep.subr.bf16.mxu0 0
      %3417 = vmatpush1.bf16.msra.mxu0 %v3397
      %3418 = vmatprep.subr.bf16.mxu0 0
      %3419 = vmatpush1.bf16.msra.mxu0 %v3398
      %3420 = vmatprep.subr.bf16.mxu0 0
      %3421 = vmatpush1.bf16.msra.mxu0 %v3399
      %3422 = vmatprep.subr.bf16.mxu0 0
      %3423 = vmatpush1.bf16.msra.mxu0 %v3400
      %3424 = vmatprep.subr.bf16.mxu0 0
      %3425 = vmatpush1.bf16.msra.mxu0 %v3401
      %3426 = vmatprep.subr.bf16.mxu0 0
      %3427 = vmatpush1.bf16.msra.mxu0 0
      %3428 = vmatprep.subr.bf16.mxu0 0
      %3429 = vmatpush1.bf16.msra.mxu0 0
      %3430 = vmatprep.subr.bf16.mxu0 0
      %3431 = vmatpush1.bf16.msra.mxu0 0
      %3432 = vmatprep.subr.bf16.mxu0 0
      %3433 = vmatpush1.bf16.msra.mxu0 0
      %3434 = vmatprep.subr.bf16.mxu0 0
      %3435 = vmatpush1.bf16.msra.mxu0 0
      %3436 = vmatprep.subr.bf16.mxu0 0
      %3437 = vmatpush1.bf16.msra.mxu0 0
      %3438 = vmatprep.subr.bf16.mxu0 0
      %3439 = vmatpush1.bf16.msra.mxu0 0
      %3440 = vmatprep.subr.bf16.mxu0 0
      %3441 = vmatpush1.bf16.msra.mxu0 0
      %3442 = vmatprep.mubr.bf16.mxu0 0
      %3443 = vmatmul.mubr.bf16.gmra.mrb[0].mxu0 %v3346
      %v3444 = vpop.f32.mrb[0].mxu0
      %v3445 = vadd.f32 0.0, %v3444
      %v3446 = vpop.f32.mrb[0].mxu0
      %v3447 = vpop.f32.mrb[0].mxu0
      %v3448 = vadd.f32 0.0, %v3447
      %v3449 = vpop.f32.mrb[0].mxu0
      %3450 = vmatprep.mubr.bf16.mxu0 0
      %3451 = vmatmul.mubr.bf16.gmra.mrb[0].mxu0 %v3347
      %v3452 = vpop.f32.mrb[0].mxu0
      %v3453 = vadd.f32 0.0, %v3452
      %v3454 = vpop.f32.mrb[0].mxu0
      %v3455 = vpop.f32.mrb[0].mxu0
      %v3456 = vadd.f32 0.0, %v3455
      %v3457 = vpop.f32.mrb[0].mxu0
      %3458 = vmatprep.mubr.bf16.mxu0 0
      %3459 = vmatmul.mubr.bf16.gmra.mrb[0].mxu0 %v3348
      %v3460 = vpop.f32.mrb[0].mxu0
      %v3461 = vadd.f32 0.0, %v3460
      %v3462 = vpop.f32.mrb[0].mxu0
      %v3463 = vpop.f32.mrb[0].mxu0
      %v3464 = vadd.f32 0.0, %v3463
      %v3465 = vpop.f32.mrb[0].mxu0
      %3466 = vmatprep.mubr.bf16.mxu0 0
      %3467 = vmatmul.mubr.bf16.gmra.mrb[0].mxu0 %v3349
      %v3468 = vpop.f32.mrb[0].mxu0
      %v3469 = vadd.f32 0.0, %v3468
      %v3470 = vpop.f32.mrb[0].mxu0
      %v3471 = vpop.f32.mrb[0].mxu0
      %v3472 = vadd.f32 0.0, %v3471
      %v3473 = vpop.f32.mrb[0].mxu0
      %3474 = vmatprep.mubr.bf16.mxu0 0
      %3475 = vmatmul.mubr.bf16.gmra.mrb[0].mxu0 %v3350
      %v3476 = vpop.f32.mrb[0].mxu0
      %v3477 = vadd.f32 0.0, %v3476
      %v3478 = vpop.f32.mrb[0].mxu0
      %v3479 = vpop.f32.mrb[0].mxu0
      %v3480 = vadd.f32 0.0, %v3479
      %v3481 = vpop.f32.mrb[0].mxu0
      %3482 = vmatprep.mubr.bf16.mxu0 0
      %3483 = vmatmul.mubr.bf16.gmra.mrb[0].mxu0 %v3351
      %v3484 = vpop.f32.mrb[0].mxu0
      %v3485 = vadd.f32 0.0, %v3484
      %v3486 = vpop.f32.mrb[0].mxu0
      %v3487 = vpop.f32.mrb[0].mxu0
      %v3488 = vadd.f32 0.0, %v3487
      %v3489 = vpop.f32.mrb[0].mxu0
      %3490 = vmatprep.mubr.bf16.mxu0 0
      %3491 = vmatmul.mubr.bf16.gmra.mrb[0].mxu0 %v3352
      %v3492 = vpop.f32.mrb[0].mxu0
      %v3493 = vadd.f32 0.0, %v3492
      %v3494 = vpop.f32.mrb[0].mxu0
      %v3495 = vpop.f32.mrb[0].mxu0
      %v3496 = vadd.f32 0.0, %v3495
      %v3497 = vpop.f32.mrb[0].mxu0
      %3498 = vmatprep.mubr.bf16.mxu0 0
      %3499 = vmatmul.mubr.bf16.gmra.mrb[0].mxu0 %v3353
      %v3500 = vpop.f32.mrb[0].mxu0
      %v3501 = vadd.f32 0.0, %v3500
      %v3502 = vpop.f32.mrb[0].mxu0
      %v3503 = vpop.f32.mrb[0].mxu0
      %v3504 = vadd.f32 0.0, %v3503
      %v3505 = vpop.f32.mrb[0].mxu0
      %3506 = vdwg.mxu0
      %v3507 = vadd.f32 %v3225, %v3445
      %v3508 = vadd.f32 %v3226, %v3448
      %v3509 = vadd.f32 %v3227, %v3453
      %v3510 = vadd.f32 %v3228, %v3456
      %v3511 = vadd.f32 %v3229, %v3461
      %v3512 = vadd.f32 %v3230, %v3464
      %v3513 = vadd.f32 %v3231, %v3469
      %v3514 = vadd.f32 %v3232, %v3472
      %v3515 = vadd.f32 %v3233, %v3477
      %v3516 = vadd.f32 %v3234, %v3480
      %v3517 = vadd.f32 %v3235, %v3485
      %v3518 = vadd.f32 %v3236, %v3488
      %v3519 = vadd.f32 %v3237, %v3493
      %v3520 = vadd.f32 %v3238, %v3496
      %v3521 = vadd.f32 %v3239, %v3501
      %v3522 = vadd.f32 %v3240, %v3504
      %s3523 = scalar_lea.vmem %s1, 704
      %v3524 = vld [vmem:[%s3523] sm:$0xf]
      %v3525 = vld [vmem:[%s3523 + $0x4] sm:$0xf]
      %v3526 = vld [vmem:[%s3523 + $0x8] sm:$0xf]
      %v3527 = vld [vmem:[%s3523 + $0xc] sm:$0xf]
      %v3528 = vld [vmem:[%s3523 + $0x10] sm:$0xf]
      %v3529 = vld [vmem:[%s3523 + $0x14] sm:$0xf]
      %v3530 = vld [vmem:[%s3523 + $0x18] sm:$0xf]
      %v3531 = vld [vmem:[%s3523 + $0x1c] sm:$0xf]
      %v3532 = vld [vmem:[%s3523 + $0x20] sm:$0xf]
      %v3533 = vld [vmem:[%s3523 + $0x24] sm:$0xf]
      %v3534 = vld [vmem:[%s3523 + $0x28] sm:$0xf]
      %v3535 = vld [vmem:[%s3523 + $0x2c] sm:$0xf]
      %v3536 = vld [vmem:[%s3523 + $0x30] sm:$0xf]
      %v3537 = vld [vmem:[%s3523 + $0x34] sm:$0xf]
      %v3538 = vld [vmem:[%s3523 + $0x38] sm:$0xf]
      %v3539 = vld [vmem:[%s3523 + $0x3c] sm:$0xf]
      %v3548 = vunpack.c.l.b16 %v2978
      %v3549 = vunpack.c.l.b16 %v2979
      %v3550 = vunpack.c.l.b16 %v2983
      %v3551 = vunpack.c.l.b16 %v2984
      %v3552 = vunpack.c.l.b16 %v2988
      %v3553 = vunpack.c.l.b16 %v2989
      %v3554 = vunpack.c.l.b16 %v2993
      %v3555 = vunpack.c.l.b16 %v2994
      %v3556 = vunpack.c.l.b16 %v2998
      %v3557 = vunpack.c.l.b16 %v2999
      %v3558 = vunpack.c.l.b16 %v3003
      %v3559 = vunpack.c.l.b16 %v3004
      %v3560 = vunpack.c.l.b16 %v3008
      %v3561 = vunpack.c.l.b16 %v3009
      %v3562 = vunpack.c.l.b16 %v3013
      %v3563 = vunpack.c.l.b16 %v3014
      %v3564 = vpack.c.b16 %v3549, %v3548
      %v3565 = vpack.c.b16 %v3551, %v3550
      %v3566 = vpack.c.b16 %v3553, %v3552
      %v3567 = vpack.c.b16 %v3555, %v3554
      %v3568 = vpack.c.b16 %v3557, %v3556
      %v3569 = vpack.c.b16 %v3559, %v3558
      %v3570 = vpack.c.b16 %v3561, %v3560
      %v3571 = vpack.c.b16 %v3563, %v3562
      %v3596 = vunpack.c.l.b16 %v3524
      %v3597 = vunpack.c.l.b16 %v3525
      %v3598 = vunpack.c.l.b16 %v3526
      %v3599 = vunpack.c.l.b16 %v3527
      %v3600 = vunpack.c.l.b16 %v3528
      %v3601 = vunpack.c.l.b16 %v3529
      %v3602 = vunpack.c.l.b16 %v3530
      %v3603 = vunpack.c.l.b16 %v3531
      %v3604 = vunpack.c.l.b16 %v3532
      %v3605 = vunpack.c.l.b16 %v3533
      %v3606 = vunpack.c.l.b16 %v3534
      %v3607 = vunpack.c.l.b16 %v3535
      %v3608 = vunpack.c.l.b16 %v3536
      %v3609 = vunpack.c.l.b16 %v3537
      %v3610 = vunpack.c.l.b16 %v3538
      %v3611 = vunpack.c.l.b16 %v3539
      %v3612 = vpack.c.b16 %v3597, %v3596
      %v3613 = vpack.c.b16 %v3599, %v3598
      %v3614 = vpack.c.b16 %v3601, %v3600
      %v3615 = vpack.c.b16 %v3603, %v3602
      %v3616 = vpack.c.b16 %v3605, %v3604
      %v3617 = vpack.c.b16 %v3607, %v3606
      %v3618 = vpack.c.b16 %v3609, %v3608
      %v3619 = vpack.c.b16 %v3611, %v3610
      %3628 = vmatprep.subr.bf16.mxu0 0
      %3629 = vmatpush1.bf16.msra.mxu0 %v3612
      %3630 = vmatprep.subr.bf16.mxu0 0
      %3631 = vmatpush1.bf16.msra.mxu0 %v3613
      %3632 = vmatprep.subr.bf16.mxu0 0
      %3633 = vmatpush1.bf16.msra.mxu0 %v3614
      %3634 = vmatprep.subr.bf16.mxu0 0
      %3635 = vmatpush1.bf16.msra.mxu0 %v3615
      %3636 = vmatprep.subr.bf16.mxu0 0
      %3637 = vmatpush1.bf16.msra.mxu0 %v3616
      %3638 = vmatprep.subr.bf16.mxu0 0
      %3639 = vmatpush1.bf16.msra.mxu0 %v3617
      %3640 = vmatprep.subr.bf16.mxu0 0
      %3641 = vmatpush1.bf16.msra.mxu0 %v3618
      %3642 = vmatprep.subr.bf16.mxu0 0
      %3643 = vmatpush1.bf16.msra.mxu0 %v3619
      %3644 = vmatprep.subr.bf16.mxu0 0
      %3645 = vmatpush1.bf16.msra.mxu0 0
      %3646 = vmatprep.subr.bf16.mxu0 0
      %3647 = vmatpush1.bf16.msra.mxu0 0
      %3648 = vmatprep.subr.bf16.mxu0 0
      %3649 = vmatpush1.bf16.msra.mxu0 0
      %3650 = vmatprep.subr.bf16.mxu0 0
      %3651 = vmatpush1.bf16.msra.mxu0 0
      %3652 = vmatprep.subr.bf16.mxu0 0
      %3653 = vmatpush1.bf16.msra.mxu0 0
      %3654 = vmatprep.subr.bf16.mxu0 0
      %3655 = vmatpush1.bf16.msra.mxu0 0
      %3656 = vmatprep.subr.bf16.mxu0 0
      %3657 = vmatpush1.bf16.msra.mxu0 0
      %3658 = vmatprep.subr.bf16.mxu0 0
      %3659 = vmatpush1.bf16.msra.mxu0 0
      %3660 = vmatprep.mubr.bf16.mxu0 0
      %3661 = vmatmul.mubr.bf16.gmra.mrb[0].mxu0 %v3564
      %v3662 = vpop.f32.mrb[0].mxu0
      %v3663 = vadd.f32 0.0, %v3662
      %v3664 = vpop.f32.mrb[0].mxu0
      %v3665 = vpop.f32.mrb[0].mxu0
      %v3666 = vadd.f32 0.0, %v3665
      %v3667 = vpop.f32.mrb[0].mxu0
      %3668 = vmatprep.mubr.bf16.mxu0 0
      %3669 = vmatmul.mubr.bf16.gmra.mrb[0].mxu0 %v3565
      %v3670 = vpop.f32.mrb[0].mxu0
      %v3671 = vadd.f32 0.0, %v3670
      %v3672 = vpop.f32.mrb[0].mxu0
      %v3673 = vpop.f32.mrb[0].mxu0
      %v3674 = vadd.f32 0.0, %v3673
      %v3675 = vpop.f32.mrb[0].mxu0
      %3676 = vmatprep.mubr.bf16.mxu0 0
      %3677 = vmatmul.mubr.bf16.gmra.mrb[0].mxu0 %v3566
      %v3678 = vpop.f32.mrb[0].mxu0
      %v3679 = vadd.f32 0.0, %v3678
      %v3680 = vpop.f32.mrb[0].mxu0
      %v3681 = vpop.f32.mrb[0].mxu0
      %v3682 = vadd.f32 0.0, %v3681
      %v3683 = vpop.f32.mrb[0].mxu0
      %3684 = vmatprep.mubr.bf16.mxu0 0
      %3685 = vmatmul.mubr.bf16.gmra.mrb[0].mxu0 %v3567
      %v3686 = vpop.f32.mrb[0].mxu0
      %v3687 = vadd.f32 0.0, %v3686
      %v3688 = vpop.f32.mrb[0].mxu0
      %v3689 = vpop.f32.mrb[0].mxu0
      %v3690 = vadd.f32 0.0, %v3689
      %v3691 = vpop.f32.mrb[0].mxu0
      %3692 = vmatprep.mubr.bf16.mxu0 0
      %3693 = vmatmul.mubr.bf16.gmra.mrb[0].mxu0 %v3568
      %v3694 = vpop.f32.mrb[0].mxu0
      %v3695 = vadd.f32 0.0, %v3694
      %v3696 = vpop.f32.mrb[0].mxu0
      %v3697 = vpop.f32.mrb[0].mxu0
      %v3698 = vadd.f32 0.0, %v3697
      %v3699 = vpop.f32.mrb[0].mxu0
      %3700 = vmatprep.mubr.bf16.mxu0 0
      %3701 = vmatmul.mubr.bf16.gmra.mrb[0].mxu0 %v3569
      %v3702 = vpop.f32.mrb[0].mxu0
      %v3703 = vadd.f32 0.0, %v3702
      %v3704 = vpop.f32.mrb[0].mxu0
      %v3705 = vpop.f32.mrb[0].mxu0
      %v3706 = vadd.f32 0.0, %v3705
      %v3707 = vpop.f32.mrb[0].mxu0
      %3708 = vmatprep.mubr.bf16.mxu0 0
      %3709 = vmatmul.mubr.bf16.gmra.mrb[0].mxu0 %v3570
      %v3710 = vpop.f32.mrb[0].mxu0
      %v3711 = vadd.f32 0.0, %v3710
      %v3712 = vpop.f32.mrb[0].mxu0
      %v3713 = vpop.f32.mrb[0].mxu0
      %v3714 = vadd.f32 0.0, %v3713
      %v3715 = vpop.f32.mrb[0].mxu0
      %3716 = vmatprep.mubr.bf16.mxu0 0
      %3717 = vmatmul.mubr.bf16.gmra.mrb[0].mxu0 %v3571
      %v3718 = vpop.f32.mrb[0].mxu0
      %v3719 = vadd.f32 0.0, %v3718
      %v3720 = vpop.f32.mrb[0].mxu0
      %v3721 = vpop.f32.mrb[0].mxu0
      %v3722 = vadd.f32 0.0, %v3721
      %v3723 = vpop.f32.mrb[0].mxu0
      %3724 = vdwg.mxu0
      %v3725 = vadd.f32 %v3507, %v3663
      %v3726 = vadd.f32 %v3508, %v3666
      %v3727 = vadd.f32 %v3509, %v3671
      %v3728 = vadd.f32 %v3510, %v3674
      %v3729 = vadd.f32 %v3511, %v3679
      %v3730 = vadd.f32 %v3512, %v3682
      %v3731 = vadd.f32 %v3513, %v3687
      %v3732 = vadd.f32 %v3514, %v3690
      %v3733 = vadd.f32 %v3515, %v3695
      %v3734 = vadd.f32 %v3516, %v3698
      %v3735 = vadd.f32 %v3517, %v3703
      %v3736 = vadd.f32 %v3518, %v3706
      %v3737 = vadd.f32 %v3519, %v3711
      %v3738 = vadd.f32 %v3520, %v3714
      %v3739 = vadd.f32 %v3521, %v3719
      %v3740 = vadd.f32 %v3522, %v3722
      %s3741 = scalar_lea.vmem %s1, 768
      %v3742 = vld [vmem:[%s3741] sm:$0xf]
      %v3743 = vld [vmem:[%s3741 + $0x4] sm:$0xf]
      %v3744 = vld [vmem:[%s3741 + $0x8] sm:$0xf]
      %v3745 = vld [vmem:[%s3741 + $0xc] sm:$0xf]
      %v3746 = vld [vmem:[%s3741 + $0x10] sm:$0xf]
      %v3747 = vld [vmem:[%s3741 + $0x14] sm:$0xf]
      %v3748 = vld [vmem:[%s3741 + $0x18] sm:$0xf]
      %v3749 = vld [vmem:[%s3741 + $0x1c] sm:$0xf]
      %v3750 = vld [vmem:[%s3741 + $0x20] sm:$0xf]
      %v3751 = vld [vmem:[%s3741 + $0x24] sm:$0xf]
      %v3752 = vld [vmem:[%s3741 + $0x28] sm:$0xf]
      %v3753 = vld [vmem:[%s3741 + $0x2c] sm:$0xf]
      %v3754 = vld [vmem:[%s3741 + $0x30] sm:$0xf]
      %v3755 = vld [vmem:[%s3741 + $0x34] sm:$0xf]
      %v3756 = vld [vmem:[%s3741 + $0x38] sm:$0xf]
      %v3757 = vld [vmem:[%s3741 + $0x3c] sm:$0xf]
      %v3758 = vunpack.c.l.b16 %v1218
      %v3759 = vunpack.c.l.b16 %v1219
      %v3760 = vunpack.c.l.b16 %v1223
      %v3761 = vunpack.c.l.b16 %v1224
      %v3762 = vunpack.c.l.b16 %v1228
      %v3763 = vunpack.c.l.b16 %v1229
      %v3764 = vunpack.c.l.b16 %v1233
      %v3765 = vunpack.c.l.b16 %v1234
      %v3766 = vunpack.c.l.b16 %v1238
      %v3767 = vunpack.c.l.b16 %v1239
      %v3768 = vunpack.c.l.b16 %v1243
      %v3769 = vunpack.c.l.b16 %v1244
      %v3770 = vunpack.c.l.b16 %v1248
      %v3771 = vunpack.c.l.b16 %v1249
      %v3772 = vunpack.c.l.b16 %v1253
      %v3773 = vunpack.c.l.b16 %v1254
      %v3774 = vpack.c.b16 %v3759, %v3758
      %v3775 = vpack.c.b16 %v3761, %v3760
      %v3776 = vpack.c.b16 %v3763, %v3762
      %v3777 = vpack.c.b16 %v3765, %v3764
      %v3778 = vpack.c.b16 %v3767, %v3766
      %v3779 = vpack.c.b16 %v3769, %v3768
      %v3780 = vpack.c.b16 %v3771, %v3770
      %v3781 = vpack.c.b16 %v3773, %v3772
      %v3806 = vunpack.c.l.b16 %v3742
      %v3807 = vunpack.c.l.b16 %v3743
      %v3808 = vunpack.c.l.b16 %v3744
      %v3809 = vunpack.c.l.b16 %v3745
      %v3810 = vunpack.c.l.b16 %v3746
      %v3811 = vunpack.c.l.b16 %v3747
      %v3812 = vunpack.c.l.b16 %v3748
      %v3813 = vunpack.c.l.b16 %v3749
      %v3814 = vunpack.c.l.b16 %v3750
      %v3815 = vunpack.c.l.b16 %v3751
      %v3816 = vunpack.c.l.b16 %v3752
      %v3817 = vunpack.c.l.b16 %v3753
      %v3818 = vunpack.c.l.b16 %v3754
      %v3819 = vunpack.c.l.b16 %v3755
      %v3820 = vunpack.c.l.b16 %v3756
      %v3821 = vunpack.c.l.b16 %v3757
      %v3822 = vpack.c.b16 %v3807, %v3806
      %v3823 = vpack.c.b16 %v3809, %v3808
      %v3824 = vpack.c.b16 %v3811, %v3810
      %v3825 = vpack.c.b16 %v3813, %v3812
      %v3826 = vpack.c.b16 %v3815, %v3814
      %v3827 = vpack.c.b16 %v3817, %v3816
      %v3828 = vpack.c.b16 %v3819, %v3818
      %v3829 = vpack.c.b16 %v3821, %v3820
      %3838 = vmatprep.subr.bf16.mxu0 0
      %3839 = vmatpush1.bf16.msra.mxu0 %v3822
      %3840 = vmatprep.subr.bf16.mxu0 0
      %3841 = vmatpush1.bf16.msra.mxu0 %v3823
      %3842 = vmatprep.subr.bf16.mxu0 0
      %3843 = vmatpush1.bf16.msra.mxu0 %v3824
      %3844 = vmatprep.subr.bf16.mxu0 0
      %3845 = vmatpush1.bf16.msra.mxu0 %v3825
      %3846 = vmatprep.subr.bf16.mxu0 0
      %3847 = vmatpush1.bf16.msra.mxu0 %v3826
      %3848 = vmatprep.subr.bf16.mxu0 0
      %3849 = vmatpush1.bf16.msra.mxu0 %v3827
      %3850 = vmatprep.subr.bf16.mxu0 0
      %3851 = vmatpush1.bf16.msra.mxu0 %v3828
      %3852 = vmatprep.subr.bf16.mxu0 0
      %3853 = vmatpush1.bf16.msra.mxu0 %v3829
      %3854 = vmatprep.subr.bf16.mxu0 0
      %3855 = vmatpush1.bf16.msra.mxu0 0
      %3856 = vmatprep.subr.bf16.mxu0 0
      %3857 = vmatpush1.bf16.msra.mxu0 0
      %3858 = vmatprep.subr.bf16.mxu0 0
      %3859 = vmatpush1.bf16.msra.mxu0 0
      %3860 = vmatprep.subr.bf16.mxu0 0
      %3861 = vmatpush1.bf16.msra.mxu0 0
      %3862 = vmatprep.subr.bf16.mxu0 0
      %3863 = vmatpush1.bf16.msra.mxu0 0
      %3864 = vmatprep.subr.bf16.mxu0 0
      %3865 = vmatpush1.bf16.msra.mxu0 0
      %3866 = vmatprep.subr.bf16.mxu0 0
      %3867 = vmatpush1.bf16.msra.mxu0 0
      %3868 = vmatprep.subr.bf16.mxu0 0
      %3869 = vmatpush1.bf16.msra.mxu0 0
      %3870 = vmatprep.mubr.bf16.mxu0 0
      %3871 = vmatmul.mubr.bf16.gmra.mrb[0].mxu0 %v3774
      %v3872 = vpop.f32.mrb[0].mxu0
      %v3873 = vadd.f32 0.0, %v3872
      %v3874 = vpop.f32.mrb[0].mxu0
      %v3875 = vpop.f32.mrb[0].mxu0
      %v3876 = vadd.f32 0.0, %v3875
      %v3877 = vpop.f32.mrb[0].mxu0
      %3878 = vmatprep.mubr.bf16.mxu0 0
      %3879 = vmatmul.mubr.bf16.gmra.mrb[0].mxu0 %v3775
      %v3880 = vpop.f32.mrb[0].mxu0
      %v3881 = vadd.f32 0.0, %v3880
      %v3882 = vpop.f32.mrb[0].mxu0
      %v3883 = vpop.f32.mrb[0].mxu0
      %v3884 = vadd.f32 0.0, %v3883
      %v3885 = vpop.f32.mrb[0].mxu0
      %3886 = vmatprep.mubr.bf16.mxu0 0
      %3887 = vmatmul.mubr.bf16.gmra.mrb[0].mxu0 %v3776
      %v3888 = vpop.f32.mrb[0].mxu0
      %v3889 = vadd.f32 0.0, %v3888
      %v3890 = vpop.f32.mrb[0].mxu0
      %v3891 = vpop.f32.mrb[0].mxu0
      %v3892 = vadd.f32 0.0, %v3891
      %v3893 = vpop.f32.mrb[0].mxu0
      %3894 = vmatprep.mubr.bf16.mxu0 0
      %3895 = vmatmul.mubr.bf16.gmra.mrb[0].mxu0 %v3777
      %v3896 = vpop.f32.mrb[0].mxu0
      %v3897 = vadd.f32 0.0, %v3896
      %v3898 = vpop.f32.mrb[0].mxu0
      %v3899 = vpop.f32.mrb[0].mxu0
      %v3900 = vadd.f32 0.0, %v3899
      %v3901 = vpop.f32.mrb[0].mxu0
      %3902 = vmatprep.mubr.bf16.mxu0 0
      %3903 = vmatmul.mubr.bf16.gmra.mrb[0].mxu0 %v3778
      %v3904 = vpop.f32.mrb[0].mxu0
      %v3905 = vadd.f32 0.0, %v3904
      %v3906 = vpop.f32.mrb[0].mxu0
      %v3907 = vpop.f32.mrb[0].mxu0
      %v3908 = vadd.f32 0.0, %v3907
      %v3909 = vpop.f32.mrb[0].mxu0
      %3910 = vmatprep.mubr.bf16.mxu0 0
      %3911 = vmatmul.mubr.bf16.gmra.mrb[0].mxu0 %v3779
      %v3912 = vpop.f32.mrb[0].mxu0
      %v3913 = vadd.f32 0.0, %v3912
      %v3914 = vpop.f32.mrb[0].mxu0
      %v3915 = vpop.f32.mrb[0].mxu0
      %v3916 = vadd.f32 0.0, %v3915
      %v3917 = vpop.f32.mrb[0].mxu0
      %3918 = vmatprep.mubr.bf16.mxu0 0
      %3919 = vmatmul.mubr.bf16.gmra.mrb[0].mxu0 %v3780
      %v3920 = vpop.f32.mrb[0].mxu0
      %v3921 = vadd.f32 0.0, %v3920
      %v3922 = vpop.f32.mrb[0].mxu0
      %v3923 = vpop.f32.mrb[0].mxu0
      %v3924 = vadd.f32 0.0, %v3923
      %v3925 = vpop.f32.mrb[0].mxu0
      %3926 = vmatprep.mubr.bf16.mxu0 0
      %3927 = vmatmul.mubr.bf16.gmra.mrb[0].mxu0 %v3781
      %v3928 = vpop.f32.mrb[0].mxu0
      %v3929 = vadd.f32 0.0, %v3928
      %v3930 = vpop.f32.mrb[0].mxu0
      %v3931 = vpop.f32.mrb[0].mxu0
      %v3932 = vadd.f32 0.0, %v3931
      %v3933 = vpop.f32.mrb[0].mxu0
      %3934 = vdwg.mxu0
      %v3935 = vadd.f32 %v3725, %v3873
      %v3936 = vadd.f32 %v3726, %v3876
      %v3937 = vadd.f32 %v3727, %v3881
      %v3938 = vadd.f32 %v3728, %v3884
      %v3939 = vadd.f32 %v3729, %v3889
      %v3940 = vadd.f32 %v3730, %v3892
      %v3941 = vadd.f32 %v3731, %v3897
      %v3942 = vadd.f32 %v3732, %v3900
      %v3943 = vadd.f32 %v3733, %v3905
      %v3944 = vadd.f32 %v3734, %v3908
      %v3945 = vadd.f32 %v3735, %v3913
      %v3946 = vadd.f32 %v3736, %v3916
      %v3947 = vadd.f32 %v3737, %v3921
      %v3948 = vadd.f32 %v3738, %v3924
      %v3949 = vadd.f32 %v3739, %v3929
      %v3950 = vadd.f32 %v3740, %v3932
      %s3951 = scalar_lea.vmem %s1, 832
      %v3952 = vld [vmem:[%s3951] sm:$0xf]
      %v3953 = vld [vmem:[%s3951 + $0x4] sm:$0xf]
      %v3954 = vld [vmem:[%s3951 + $0x8] sm:$0xf]
      %v3955 = vld [vmem:[%s3951 + $0xc] sm:$0xf]
      %v3956 = vld [vmem:[%s3951 + $0x10] sm:$0xf]
      %v3957 = vld [vmem:[%s3951 + $0x14] sm:$0xf]
      %v3958 = vld [vmem:[%s3951 + $0x18] sm:$0xf]
      %v3959 = vld [vmem:[%s3951 + $0x1c] sm:$0xf]
      %v3960 = vld [vmem:[%s3951 + $0x20] sm:$0xf]
      %v3961 = vld [vmem:[%s3951 + $0x24] sm:$0xf]
      %v3962 = vld [vmem:[%s3951 + $0x28] sm:$0xf]
      %v3963 = vld [vmem:[%s3951 + $0x2c] sm:$0xf]
      %v3964 = vld [vmem:[%s3951 + $0x30] sm:$0xf]
      %v3965 = vld [vmem:[%s3951 + $0x34] sm:$0xf]
      %v3966 = vld [vmem:[%s3951 + $0x38] sm:$0xf]
      %v3967 = vld [vmem:[%s3951 + $0x3c] sm:$0xf]
      %v3984 = vunpack.c.l.b16 %v3952
      %v3985 = vunpack.c.l.b16 %v3953
      %v3986 = vunpack.c.l.b16 %v3954
      %v3987 = vunpack.c.l.b16 %v3955
      %v3988 = vunpack.c.l.b16 %v3956
      %v3989 = vunpack.c.l.b16 %v3957
      %v3990 = vunpack.c.l.b16 %v3958
      %v3991 = vunpack.c.l.b16 %v3959
      %v3992 = vunpack.c.l.b16 %v3960
      %v3993 = vunpack.c.l.b16 %v3961
      %v3994 = vunpack.c.l.b16 %v3962
      %v3995 = vunpack.c.l.b16 %v3963
      %v3996 = vunpack.c.l.b16 %v3964
      %v3997 = vunpack.c.l.b16 %v3965
      %v3998 = vunpack.c.l.b16 %v3966
      %v3999 = vunpack.c.l.b16 %v3967
      %v4000 = vpack.c.b16 %v3985, %v3984
      %v4001 = vpack.c.b16 %v3987, %v3986
      %v4002 = vpack.c.b16 %v3989, %v3988
      %v4003 = vpack.c.b16 %v3991, %v3990
      %v4004 = vpack.c.b16 %v3993, %v3992
      %v4005 = vpack.c.b16 %v3995, %v3994
      %v4006 = vpack.c.b16 %v3997, %v3996
      %v4007 = vpack.c.b16 %v3999, %v3998
      %4016 = vmatprep.subr.bf16.mxu0 0
      %4017 = vmatpush1.bf16.msra.mxu0 %v4000
      %4018 = vmatprep.subr.bf16.mxu0 0
      %4019 = vmatpush1.bf16.msra.mxu0 %v4001
      %4020 = vmatprep.subr.bf16.mxu0 0
      %4021 = vmatpush1.bf16.msra.mxu0 %v4002
      %4022 = vmatprep.subr.bf16.mxu0 0
      %4023 = vmatpush1.bf16.msra.mxu0 %v4003
      %4024 = vmatprep.subr.bf16.mxu0 0
      %4025 = vmatpush1.bf16.msra.mxu0 %v4004
      %4026 = vmatprep.subr.bf16.mxu0 0
      %4027 = vmatpush1.bf16.msra.mxu0 %v4005
      %4028 = vmatprep.subr.bf16.mxu0 0
      %4029 = vmatpush1.bf16.msra.mxu0 %v4006
      %4030 = vmatprep.subr.bf16.mxu0 0
      %4031 = vmatpush1.bf16.msra.mxu0 %v4007
      %4032 = vmatprep.subr.bf16.mxu0 0
      %4033 = vmatpush1.bf16.msra.mxu0 0
      %4034 = vmatprep.subr.bf16.mxu0 0
      %4035 = vmatpush1.bf16.msra.mxu0 0
      %4036 = vmatprep.subr.bf16.mxu0 0
      %4037 = vmatpush1.bf16.msra.mxu0 0
      %4038 = vmatprep.subr.bf16.mxu0 0
      %4039 = vmatpush1.bf16.msra.mxu0 0
      %4040 = vmatprep.subr.bf16.mxu0 0
      %4041 = vmatpush1.bf16.msra.mxu0 0
      %4042 = vmatprep.subr.bf16.mxu0 0
      %4043 = vmatpush1.bf16.msra.mxu0 0
      %4044 = vmatprep.subr.bf16.mxu0 0
      %4045 = vmatpush1.bf16.msra.mxu0 0
      %4046 = vmatprep.subr.bf16.mxu0 0
      %4047 = vmatpush1.bf16.msra.mxu0 0
      %4048 = vmatprep.mubr.bf16.mxu0 0
      %4049 = vmatmul.mubr.bf16.gmra.mrb[0].mxu0 %v1645
      %v4050 = vpop.f32.mrb[0].mxu0
      %v4051 = vadd.f32 0.0, %v4050
      %v4052 = vpop.f32.mrb[0].mxu0
      %v4053 = vpop.f32.mrb[0].mxu0
      %v4054 = vadd.f32 0.0, %v4053
      %v4055 = vpop.f32.mrb[0].mxu0
      %4056 = vmatprep.mubr.bf16.mxu0 0
      %4057 = vmatmul.mubr.bf16.gmra.mrb[0].mxu0 %v1646
      %v4058 = vpop.f32.mrb[0].mxu0
      %v4059 = vadd.f32 0.0, %v4058
      %v4060 = vpop.f32.mrb[0].mxu0
      %v4061 = vpop.f32.mrb[0].mxu0
      %v4062 = vadd.f32 0.0, %v4061
      %v4063 = vpop.f32.mrb[0].mxu0
      %4064 = vmatprep.mubr.bf16.mxu0 0
      %4065 = vmatmul.mubr.bf16.gmra.mrb[0].mxu0 %v1647
      %v4066 = vpop.f32.mrb[0].mxu0
      %v4067 = vadd.f32 0.0, %v4066
      %v4068 = vpop.f32.mrb[0].mxu0
      %v4069 = vpop.f32.mrb[0].mxu0
      %v4070 = vadd.f32 0.0, %v4069
      %v4071 = vpop.f32.mrb[0].mxu0
      %4072 = vmatprep.mubr.bf16.mxu0 0
      %4073 = vmatmul.mubr.bf16.gmra.mrb[0].mxu0 %v1648
      %v4074 = vpop.f32.mrb[0].mxu0
      %v4075 = vadd.f32 0.0, %v4074
      %v4076 = vpop.f32.mrb[0].mxu0
      %v4077 = vpop.f32.mrb[0].mxu0
      %v4078 = vadd.f32 0.0, %v4077
      %v4079 = vpop.f32.mrb[0].mxu0
      %4080 = vmatprep.mubr.bf16.mxu0 0
      %4081 = vmatmul.mubr.bf16.gmra.mrb[0].mxu0 %v1649
      %v4082 = vpop.f32.mrb[0].mxu0
      %v4083 = vadd.f32 0.0, %v4082
      %v4084 = vpop.f32.mrb[0].mxu0
      %v4085 = vpop.f32.mrb[0].mxu0
      %v4086 = vadd.f32 0.0, %v4085
      %v4087 = vpop.f32.mrb[0].mxu0
      %4088 = vmatprep.mubr.bf16.mxu0 0
      %4089 = vmatmul.mubr.bf16.gmra.mrb[0].mxu0 %v1650
      %v4090 = vpop.f32.mrb[0].mxu0
      %v4091 = vadd.f32 0.0, %v4090
      %v4092 = vpop.f32.mrb[0].mxu0
      %v4093 = vpop.f32.mrb[0].mxu0
      %v4094 = vadd.f32 0.0, %v4093
      %v4095 = vpop.f32.mrb[0].mxu0
      %4096 = vmatprep.mubr.bf16.mxu0 0
      %4097 = vmatmul.mubr.bf16.gmra.mrb[0].mxu0 %v1651
      %v4098 = vpop.f32.mrb[0].mxu0
      %v4099 = vadd.f32 0.0, %v4098
      %v4100 = vpop.f32.mrb[0].mxu0
      %v4101 = vpop.f32.mrb[0].mxu0
      %v4102 = vadd.f32 0.0, %v4101
      %v4103 = vpop.f32.mrb[0].mxu0
      %4104 = vmatprep.mubr.bf16.mxu0 0
      %4105 = vmatmul.mubr.bf16.gmra.mrb[0].mxu0 %v1652
      %v4106 = vpop.f32.mrb[0].mxu0
      %v4107 = vadd.f32 0.0, %v4106
      %v4108 = vpop.f32.mrb[0].mxu0
      %v4109 = vpop.f32.mrb[0].mxu0
      %v4110 = vadd.f32 0.0, %v4109
      %v4111 = vpop.f32.mrb[0].mxu0
      %4112 = vdwg.mxu0
      %v4113 = vadd.f32 %v3935, %v4051
      %v4114 = vadd.f32 %v3936, %v4054
      %v4115 = vadd.f32 %v3937, %v4059
      %v4116 = vadd.f32 %v3938, %v4062
      %v4117 = vadd.f32 %v3939, %v4067
      %v4118 = vadd.f32 %v3940, %v4070
      %v4119 = vadd.f32 %v3941, %v4075
      %v4120 = vadd.f32 %v3942, %v4078
      %v4121 = vadd.f32 %v3943, %v4083
      %v4122 = vadd.f32 %v3944, %v4086
      %v4123 = vadd.f32 %v3945, %v4091
      %v4124 = vadd.f32 %v3946, %v4094
      %v4125 = vadd.f32 %v3947, %v4099
      %v4126 = vadd.f32 %v3948, %v4102
      %v4127 = vadd.f32 %v3949, %v4107
      %v4128 = vadd.f32 %v3950, %v4110
      %s4129 = scalar_lea.vmem %s1, 896
      %v4130 = vld [vmem:[%s4129] sm:$0xf]
      %v4131 = vld [vmem:[%s4129 + $0x4] sm:$0xf]
      %v4132 = vld [vmem:[%s4129 + $0x8] sm:$0xf]
      %v4133 = vld [vmem:[%s4129 + $0xc] sm:$0xf]
      %v4134 = vld [vmem:[%s4129 + $0x10] sm:$0xf]
      %v4135 = vld [vmem:[%s4129 + $0x14] sm:$0xf]
      %v4136 = vld [vmem:[%s4129 + $0x18] sm:$0xf]
      %v4137 = vld [vmem:[%s4129 + $0x1c] sm:$0xf]
      %v4138 = vld [vmem:[%s4129 + $0x20] sm:$0xf]
      %v4139 = vld [vmem:[%s4129 + $0x24] sm:$0xf]
      %v4140 = vld [vmem:[%s4129 + $0x28] sm:$0xf]
      %v4141 = vld [vmem:[%s4129 + $0x2c] sm:$0xf]
      %v4142 = vld [vmem:[%s4129 + $0x30] sm:$0xf]
      %v4143 = vld [vmem:[%s4129 + $0x34] sm:$0xf]
      %v4144 = vld [vmem:[%s4129 + $0x38] sm:$0xf]
      %v4145 = vld [vmem:[%s4129 + $0x3c] sm:$0xf]
      %v4146 = vunpack.c.l.b16 %v1221
      %v4147 = vunpack.c.l.b16 %v1222
      %v4148 = vunpack.c.l.b16 %v1226
      %v4149 = vunpack.c.l.b16 %v1227
      %v4150 = vunpack.c.l.b16 %v1231
      %v4151 = vunpack.c.l.b16 %v1232
      %v4152 = vunpack.c.l.b16 %v1236
      %v4153 = vunpack.c.l.b16 %v1237
      %v4154 = vunpack.c.l.b16 %v1241
      %v4155 = vunpack.c.l.b16 %v1242
      %v4156 = vunpack.c.l.b16 %v1246
      %v4157 = vunpack.c.l.b16 %v1247
      %v4158 = vunpack.c.l.b16 %v1251
      %v4159 = vunpack.c.l.b16 %v1252
      %v4160 = vunpack.c.l.b16 %v1256
      %v4161 = vunpack.c.l.b16 %v1257
      %v4162 = vpack.c.b16 %v4147, %v4146
      %v4163 = vpack.c.b16 %v4149, %v4148
      %v4164 = vpack.c.b16 %v4151, %v4150
      %v4165 = vpack.c.b16 %v4153, %v4152
      %v4166 = vpack.c.b16 %v4155, %v4154
      %v4167 = vpack.c.b16 %v4157, %v4156
      %v4168 = vpack.c.b16 %v4159, %v4158
      %v4169 = vpack.c.b16 %v4161, %v4160
      %v4194 = vunpack.c.l.b16 %v4130
      %v4195 = vunpack.c.l.b16 %v4131
      %v4196 = vunpack.c.l.b16 %v4132
      %v4197 = vunpack.c.l.b16 %v4133
      %v4198 = vunpack.c.l.b16 %v4134
      %v4199 = vunpack.c.l.b16 %v4135
      %v4200 = vunpack.c.l.b16 %v4136
      %v4201 = vunpack.c.l.b16 %v4137
      %v4202 = vunpack.c.l.b16 %v4138
      %v4203 = vunpack.c.l.b16 %v4139
      %v4204 = vunpack.c.l.b16 %v4140
      %v4205 = vunpack.c.l.b16 %v4141
      %v4206 = vunpack.c.l.b16 %v4142
      %v4207 = vunpack.c.l.b16 %v4143
      %v4208 = vunpack.c.l.b16 %v4144
      %v4209 = vunpack.c.l.b16 %v4145
      %v4210 = vpack.c.b16 %v4195, %v4194
      %v4211 = vpack.c.b16 %v4197, %v4196
      %v4212 = vpack.c.b16 %v4199, %v4198
      %v4213 = vpack.c.b16 %v4201, %v4200
      %v4214 = vpack.c.b16 %v4203, %v4202
      %v4215 = vpack.c.b16 %v4205, %v4204
      %v4216 = vpack.c.b16 %v4207, %v4206
      %v4217 = vpack.c.b16 %v4209, %v4208
      %4226 = vmatprep.subr.bf16.mxu0 0
      %4227 = vmatpush1.bf16.msra.mxu0 %v4210
      %4228 = vmatprep.subr.bf16.mxu0 0
      %4229 = vmatpush1.bf16.msra.mxu0 %v4211
      %4230 = vmatprep.subr.bf16.mxu0 0
      %4231 = vmatpush1.bf16.msra.mxu0 %v4212
      %4232 = vmatprep.subr.bf16.mxu0 0
      %4233 = vmatpush1.bf16.msra.mxu0 %v4213
      %4234 = vmatprep.subr.bf16.mxu0 0
      %4235 = vmatpush1.bf16.msra.mxu0 %v4214
      %4236 = vmatprep.subr.bf16.mxu0 0
      %4237 = vmatpush1.bf16.msra.mxu0 %v4215
      %4238 = vmatprep.subr.bf16.mxu0 0
      %4239 = vmatpush1.bf16.msra.mxu0 %v4216
      %4240 = vmatprep.subr.bf16.mxu0 0
      %4241 = vmatpush1.bf16.msra.mxu0 %v4217
      %4242 = vmatprep.subr.bf16.mxu0 0
      %4243 = vmatpush1.bf16.msra.mxu0 0
      %4244 = vmatprep.subr.bf16.mxu0 0
      %4245 = vmatpush1.bf16.msra.mxu0 0
      %4246 = vmatprep.subr.bf16.mxu0 0
      %4247 = vmatpush1.bf16.msra.mxu0 0
      %4248 = vmatprep.subr.bf16.mxu0 0
      %4249 = vmatpush1.bf16.msra.mxu0 0
      %4250 = vmatprep.subr.bf16.mxu0 0
      %4251 = vmatpush1.bf16.msra.mxu0 0
      %4252 = vmatprep.subr.bf16.mxu0 0
      %4253 = vmatpush1.bf16.msra.mxu0 0
      %4254 = vmatprep.subr.bf16.mxu0 0
      %4255 = vmatpush1.bf16.msra.mxu0 0
      %4256 = vmatprep.subr.bf16.mxu0 0
      %4257 = vmatpush1.bf16.msra.mxu0 0
      %4258 = vmatprep.mubr.bf16.mxu0 0
      %4259 = vmatmul.mubr.bf16.gmra.mrb[0].mxu0 %v4162
      %v4260 = vpop.f32.mrb[0].mxu0
      %v4261 = vadd.f32 0.0, %v4260
      %v4262 = vpop.f32.mrb[0].mxu0
      %v4263 = vpop.f32.mrb[0].mxu0
      %v4264 = vadd.f32 0.0, %v4263
      %v4265 = vpop.f32.mrb[0].mxu0
      %4266 = vmatprep.mubr.bf16.mxu0 0
      %4267 = vmatmul.mubr.bf16.gmra.mrb[0].mxu0 %v4163
      %v4268 = vpop.f32.mrb[0].mxu0
      %v4269 = vadd.f32 0.0, %v4268
      %v4270 = vpop.f32.mrb[0].mxu0
      %v4271 = vpop.f32.mrb[0].mxu0
      %v4272 = vadd.f32 0.0, %v4271
      %v4273 = vpop.f32.mrb[0].mxu0
      %4274 = vmatprep.mubr.bf16.mxu0 0
      %4275 = vmatmul.mubr.bf16.gmra.mrb[0].mxu0 %v4164
      %v4276 = vpop.f32.mrb[0].mxu0
      %v4277 = vadd.f32 0.0, %v4276
      %v4278 = vpop.f32.mrb[0].mxu0
      %v4279 = vpop.f32.mrb[0].mxu0
      %v4280 = vadd.f32 0.0, %v4279
      %v4281 = vpop.f32.mrb[0].mxu0
      %4282 = vmatprep.mubr.bf16.mxu0 0
      %4283 = vmatmul.mubr.bf16.gmra.mrb[0].mxu0 %v4165
      %v4284 = vpop.f32.mrb[0].mxu0
      %v4285 = vadd.f32 0.0, %v4284
      %v4286 = vpop.f32.mrb[0].mxu0
      %v4287 = vpop.f32.mrb[0].mxu0
      %v4288 = vadd.f32 0.0, %v4287
      %v4289 = vpop.f32.mrb[0].mxu0
      %4290 = vmatprep.mubr.bf16.mxu0 0
      %4291 = vmatmul.mubr.bf16.gmra.mrb[0].mxu0 %v4166
      %v4292 = vpop.f32.mrb[0].mxu0
      %v4293 = vadd.f32 0.0, %v4292
      %v4294 = vpop.f32.mrb[0].mxu0
      %v4295 = vpop.f32.mrb[0].mxu0
      %v4296 = vadd.f32 0.0, %v4295
      %v4297 = vpop.f32.mrb[0].mxu0
      %4298 = vmatprep.mubr.bf16.mxu0 0
      %4299 = vmatmul.mubr.bf16.gmra.mrb[0].mxu0 %v4167
      %v4300 = vpop.f32.mrb[0].mxu0
      %v4301 = vadd.f32 0.0, %v4300
      %v4302 = vpop.f32.mrb[0].mxu0
      %v4303 = vpop.f32.mrb[0].mxu0
      %v4304 = vadd.f32 0.0, %v4303
      %v4305 = vpop.f32.mrb[0].mxu0
      %4306 = vmatprep.mubr.bf16.mxu0 0
      %4307 = vmatmul.mubr.bf16.gmra.mrb[0].mxu0 %v4168
      %v4308 = vpop.f32.mrb[0].mxu0
      %v4309 = vadd.f32 0.0, %v4308
      %v4310 = vpop.f32.mrb[0].mxu0
      %v4311 = vpop.f32.mrb[0].mxu0
      %v4312 = vadd.f32 0.0, %v4311
      %v4313 = vpop.f32.mrb[0].mxu0
      %4314 = vmatprep.mubr.bf16.mxu0 0
      %4315 = vmatmul.mubr.bf16.gmra.mrb[0].mxu0 %v4169
      %v4316 = vpop.f32.mrb[0].mxu0
      %v4317 = vadd.f32 0.0, %v4316
      %v4318 = vpop.f32.mrb[0].mxu0
      %v4319 = vpop.f32.mrb[0].mxu0
      %v4320 = vadd.f32 0.0, %v4319
      %v4321 = vpop.f32.mrb[0].mxu0
      %4322 = vdwg.mxu0
      %v4323 = vadd.f32 %v4113, %v4261
      %v4324 = vadd.f32 %v4114, %v4264
      %v4325 = vadd.f32 %v4115, %v4269
      %v4326 = vadd.f32 %v4116, %v4272
      %v4327 = vadd.f32 %v4117, %v4277
      %v4328 = vadd.f32 %v4118, %v4280
      %v4329 = vadd.f32 %v4119, %v4285
      %v4330 = vadd.f32 %v4120, %v4288
      %v4331 = vadd.f32 %v4121, %v4293
      %v4332 = vadd.f32 %v4122, %v4296
      %v4333 = vadd.f32 %v4123, %v4301
      %v4334 = vadd.f32 %v4124, %v4304
      %v4335 = vadd.f32 %v4125, %v4309
      %v4336 = vadd.f32 %v4126, %v4312
      %v4337 = vadd.f32 %v4127, %v4317
      %v4338 = vadd.f32 %v4128, %v4320
      %s4339 = scalar_lea.vmem [#allocation2], 480
      %v4340 = vld [vmem:[%s4339] sm:$0xf]
      %v4341 = vld [vmem:[%s4339 + $0x4] sm:$0xf]
      %v4342 = vld [vmem:[%s4339 + $0x8] sm:$0xf]
      %v4343 = vld [vmem:[%s4339 + $0xc] sm:$0xf]
      %v4344 = vld [vmem:[%s4339 + $0x10] sm:$0xf]
      %v4345 = vld [vmem:[%s4339 + $0x14] sm:$0xf]
      %v4346 = vld [vmem:[%s4339 + $0x18] sm:$0xf]
      %v4347 = vld [vmem:[%s4339 + $0x1c] sm:$0xf]
      %v4348 = vld [vmem:[%s4339 + $0x20] sm:$0xf]
      %v4349 = vld [vmem:[%s4339 + $0x24] sm:$0xf]
      %v4350 = vld [vmem:[%s4339 + $0x28] sm:$0xf]
      %v4351 = vld [vmem:[%s4339 + $0x2c] sm:$0xf]
      %v4352 = vld [vmem:[%s4339 + $0x30] sm:$0xf]
      %v4353 = vld [vmem:[%s4339 + $0x34] sm:$0xf]
      %v4354 = vld [vmem:[%s4339 + $0x38] sm:$0xf]
      %v4355 = vld [vmem:[%s4339 + $0x3c] sm:$0xf]
      %v4356 = vld [vmem:[%s4339 + $0x40] sm:$0xf]
      %v4357 = vld [vmem:[%s4339 + $0x44] sm:$0xf]
      %v4358 = vld [vmem:[%s4339 + $0x48] sm:$0xf]
      %v4359 = vld [vmem:[%s4339 + $0x4c] sm:$0xf]
      %v4360 = vld [vmem:[%s4339 + $0x50] sm:$0xf]
      %v4361 = vld [vmem:[%s4339 + $0x54] sm:$0xf]
      %v4362 = vld [vmem:[%s4339 + $0x58] sm:$0xf]
      %v4363 = vld [vmem:[%s4339 + $0x5c] sm:$0xf]
      %v4364 = vld [vmem:[%s4339 + $0x60] sm:$0xf]
      %v4365 = vld [vmem:[%s4339 + $0x64] sm:$0xf]
      %v4366 = vld [vmem:[%s4339 + $0x68] sm:$0xf]
      %v4367 = vld [vmem:[%s4339 + $0x6c] sm:$0xf]
      %v4368 = vld [vmem:[%s4339 + $0x70] sm:$0xf]
      %v4369 = vld [vmem:[%s4339 + $0x74] sm:$0xf]
      %v4370 = vld [vmem:[%s4339 + $0x78] sm:$0xf]
      %v4371 = vld [vmem:[%s4339 + $0x7c] sm:$0xf]
      %v4372 = vld [vmem:[%s4339 + $0x80] sm:$0xf]
      %v4373 = vld [vmem:[%s4339 + $0x84] sm:$0xf]
      %v4374 = vld [vmem:[%s4339 + $0x88] sm:$0xf]
      %v4375 = vld [vmem:[%s4339 + $0x8c] sm:$0xf]
      %v4376 = vld [vmem:[%s4339 + $0x90] sm:$0xf]
      %v4377 = vld [vmem:[%s4339 + $0x94] sm:$0xf]
      %v4378 = vld [vmem:[%s4339 + $0x98] sm:$0xf]
      %v4379 = vld [vmem:[%s4339 + $0x9c] sm:$0xf]
      %s4380 = scalar_lea.vmem %s1, 960
      %v4381 = vld [vmem:[%s4380] sm:$0xf]
      %v4382 = vld [vmem:[%s4380 + $0x4] sm:$0xf]
      %v4383 = vld [vmem:[%s4380 + $0x8] sm:$0xf]
      %v4384 = vld [vmem:[%s4380 + $0xc] sm:$0xf]
      %v4385 = vld [vmem:[%s4380 + $0x10] sm:$0xf]
      %v4386 = vld [vmem:[%s4380 + $0x14] sm:$0xf]
      %v4387 = vld [vmem:[%s4380 + $0x18] sm:$0xf]
      %v4388 = vld [vmem:[%s4380 + $0x1c] sm:$0xf]
      %v4389 = vld [vmem:[%s4380 + $0x20] sm:$0xf]
      %v4390 = vld [vmem:[%s4380 + $0x24] sm:$0xf]
      %v4391 = vld [vmem:[%s4380 + $0x28] sm:$0xf]
      %v4392 = vld [vmem:[%s4380 + $0x2c] sm:$0xf]
      %v4393 = vld [vmem:[%s4380 + $0x30] sm:$0xf]
      %v4394 = vld [vmem:[%s4380 + $0x34] sm:$0xf]
      %v4395 = vld [vmem:[%s4380 + $0x38] sm:$0xf]
      %v4396 = vld [vmem:[%s4380 + $0x3c] sm:$0xf]
      %v4413 = vunpack.c.l.b16 %v4340
      %v4414 = vunpack.c.l.b16 %v4341
      %v4415 = vunpack.c.l.b16 %v4345
      %v4416 = vunpack.c.l.b16 %v4346
      %v4417 = vunpack.c.l.b16 %v4350
      %v4418 = vunpack.c.l.b16 %v4351
      %v4419 = vunpack.c.l.b16 %v4355
      %v4420 = vunpack.c.l.b16 %v4356
      %v4421 = vunpack.c.l.b16 %v4360
      %v4422 = vunpack.c.l.b16 %v4361
      %v4423 = vunpack.c.l.b16 %v4365
      %v4424 = vunpack.c.l.b16 %v4366
      %v4425 = vunpack.c.l.b16 %v4370
      %v4426 = vunpack.c.l.b16 %v4371
      %v4427 = vunpack.c.l.b16 %v4375
      %v4428 = vunpack.c.l.b16 %v4376
      %v4429 = vpack.c.b16 %v4414, %v4413
      %v4430 = vpack.c.b16 %v4416, %v4415
      %v4431 = vpack.c.b16 %v4418, %v4417
      %v4432 = vpack.c.b16 %v4420, %v4419
      %v4433 = vpack.c.b16 %v4422, %v4421
      %v4434 = vpack.c.b16 %v4424, %v4423
      %v4435 = vpack.c.b16 %v4426, %v4425
      %v4436 = vpack.c.b16 %v4428, %v4427
      %v4461 = vunpack.c.l.b16 %v4381
      %v4462 = vunpack.c.l.b16 %v4382
      %v4463 = vunpack.c.l.b16 %v4383
      %v4464 = vunpack.c.l.b16 %v4384
      %v4465 = vunpack.c.l.b16 %v4385
      %v4466 = vunpack.c.l.b16 %v4386
      %v4467 = vunpack.c.l.b16 %v4387
      %v4468 = vunpack.c.l.b16 %v4388
      %v4469 = vunpack.c.l.b16 %v4389
      %v4470 = vunpack.c.l.b16 %v4390
      %v4471 = vunpack.c.l.b16 %v4391
      %v4472 = vunpack.c.l.b16 %v4392
      %v4473 = vunpack.c.l.b16 %v4393
      %v4474 = vunpack.c.l.b16 %v4394
      %v4475 = vunpack.c.l.b16 %v4395
      %v4476 = vunpack.c.l.b16 %v4396
      %v4477 = vpack.c.b16 %v4462, %v4461
      %v4478 = vpack.c.b16 %v4464, %v4463
      %v4479 = vpack.c.b16 %v4466, %v4465
      %v4480 = vpack.c.b16 %v4468, %v4467
      %v4481 = vpack.c.b16 %v4470, %v4469
      %v4482 = vpack.c.b16 %v4472, %v4471
      %v4483 = vpack.c.b16 %v4474, %v4473
      %v4484 = vpack.c.b16 %v4476, %v4475
      %4493 = vmatprep.subr.bf16.mxu0 0
      %4494 = vmatpush1.bf16.msra.mxu0 %v4477
      %4495 = vmatprep.subr.bf16.mxu0 0
      %4496 = vmatpush1.bf16.msra.mxu0 %v4478
      %4497 = vmatprep.subr.bf16.mxu0 0
      %4498 = vmatpush1.bf16.msra.mxu0 %v4479
      %4499 = vmatprep.subr.bf16.mxu0 0
      %4500 = vmatpush1.bf16.msra.mxu0 %v4480
      %4501 = vmatprep.subr.bf16.mxu0 0
      %4502 = vmatpush1.bf16.msra.mxu0 %v4481
      %4503 = vmatprep.subr.bf16.mxu0 0
      %4504 = vmatpush1.bf16.msra.mxu0 %v4482
      %4505 = vmatprep.subr.bf16.mxu0 0
      %4506 = vmatpush1.bf16.msra.mxu0 %v4483
      %4507 = vmatprep.subr.bf16.mxu0 0
      %4508 = vmatpush1.bf16.msra.mxu0 %v4484
      %4509 = vmatprep.subr.bf16.mxu0 0
      %4510 = vmatpush1.bf16.msra.mxu0 0
      %4511 = vmatprep.subr.bf16.mxu0 0
      %4512 = vmatpush1.bf16.msra.mxu0 0
      %4513 = vmatprep.subr.bf16.mxu0 0
      %4514 = vmatpush1.bf16.msra.mxu0 0
      %4515 = vmatprep.subr.bf16.mxu0 0
      %4516 = vmatpush1.bf16.msra.mxu0 0
      %4517 = vmatprep.subr.bf16.mxu0 0
      %4518 = vmatpush1.bf16.msra.mxu0 0
      %4519 = vmatprep.subr.bf16.mxu0 0
      %4520 = vmatpush1.bf16.msra.mxu0 0
      %4521 = vmatprep.subr.bf16.mxu0 0
      %4522 = vmatpush1.bf16.msra.mxu0 0
      %4523 = vmatprep.subr.bf16.mxu0 0
      %4524 = vmatpush1.bf16.msra.mxu0 0
      %4525 = vmatprep.mubr.bf16.mxu0 0
      %4526 = vmatmul.mubr.bf16.gmra.mrb[0].mxu0 %v4429
      %v4527 = vpop.f32.mrb[0].mxu0
      %v4528 = vadd.f32 0.0, %v4527
      %v4529 = vpop.f32.mrb[0].mxu0
      %v4530 = vpop.f32.mrb[0].mxu0
      %v4531 = vadd.f32 0.0, %v4530
      %v4532 = vpop.f32.mrb[0].mxu0
      %4533 = vmatprep.mubr.bf16.mxu0 0
      %4534 = vmatmul.mubr.bf16.gmra.mrb[0].mxu0 %v4430
      %v4535 = vpop.f32.mrb[0].mxu0
      %v4536 = vadd.f32 0.0, %v4535
      %v4537 = vpop.f32.mrb[0].mxu0
      %v4538 = vpop.f32.mrb[0].mxu0
      %v4539 = vadd.f32 0.0, %v4538
      %v4540 = vpop.f32.mrb[0].mxu0
      %4541 = vmatprep.mubr.bf16.mxu0 0
      %4542 = vmatmul.mubr.bf16.gmra.mrb[0].mxu0 %v4431
      %v4543 = vpop.f32.mrb[0].mxu0
      %v4544 = vadd.f32 0.0, %v4543
      %v4545 = vpop.f32.mrb[0].mxu0
      %v4546 = vpop.f32.mrb[0].mxu0
      %v4547 = vadd.f32 0.0, %v4546
      %v4548 = vpop.f32.mrb[0].mxu0
      %4549 = vmatprep.mubr.bf16.mxu0 0
      %4550 = vmatmul.mubr.bf16.gmra.mrb[0].mxu0 %v4432
      %v4551 = vpop.f32.mrb[0].mxu0
      %v4552 = vadd.f32 0.0, %v4551
      %v4553 = vpop.f32.mrb[0].mxu0
      %v4554 = vpop.f32.mrb[0].mxu0
      %v4555 = vadd.f32 0.0, %v4554
      %v4556 = vpop.f32.mrb[0].mxu0
      %4557 = vmatprep.mubr.bf16.mxu0 0
      %4558 = vmatmul.mubr.bf16.gmra.mrb[0].mxu0 %v4433
      %v4559 = vpop.f32.mrb[0].mxu0
      %v4560 = vadd.f32 0.0, %v4559
      %v4561 = vpop.f32.mrb[0].mxu0
      %v4562 = vpop.f32.mrb[0].mxu0
      %v4563 = vadd.f32 0.0, %v4562
      %v4564 = vpop.f32.mrb[0].mxu0
      %4565 = vmatprep.mubr.bf16.mxu0 0
      %4566 = vmatmul.mubr.bf16.gmra.mrb[0].mxu0 %v4434
      %v4567 = vpop.f32.mrb[0].mxu0
      %v4568 = vadd.f32 0.0, %v4567
      %v4569 = vpop.f32.mrb[0].mxu0
      %v4570 = vpop.f32.mrb[0].mxu0
      %v4571 = vadd.f32 0.0, %v4570
      %v4572 = vpop.f32.mrb[0].mxu0
      %4573 = vmatprep.mubr.bf16.mxu0 0
      %4574 = vmatmul.mubr.bf16.gmra.mrb[0].mxu0 %v4435
      %v4575 = vpop.f32.mrb[0].mxu0
      %v4576 = vadd.f32 0.0, %v4575
      %v4577 = vpop.f32.mrb[0].mxu0
      %v4578 = vpop.f32.mrb[0].mxu0
      %v4579 = vadd.f32 0.0, %v4578
      %v4580 = vpop.f32.mrb[0].mxu0
      %4581 = vmatprep.mubr.bf16.mxu0 0
      %4582 = vmatmul.mubr.bf16.gmra.mrb[0].mxu0 %v4436
      %v4583 = vpop.f32.mrb[0].mxu0
      %v4584 = vadd.f32 0.0, %v4583
      %v4585 = vpop.f32.mrb[0].mxu0
      %v4586 = vpop.f32.mrb[0].mxu0
      %v4587 = vadd.f32 0.0, %v4586
      %v4588 = vpop.f32.mrb[0].mxu0
      %4589 = vdwg.mxu0
      %v4590 = vadd.f32 %v4323, %v4528
      %v4591 = vadd.f32 %v4324, %v4531
      %v4592 = vadd.f32 %v4325, %v4536
      %v4593 = vadd.f32 %v4326, %v4539
      %v4594 = vadd.f32 %v4327, %v4544
      %v4595 = vadd.f32 %v4328, %v4547
      %v4596 = vadd.f32 %v4329, %v4552
      %v4597 = vadd.f32 %v4330, %v4555
      %v4598 = vadd.f32 %v4331, %v4560
      %v4599 = vadd.f32 %v4332, %v4563
      %v4600 = vadd.f32 %v4333, %v4568
      %v4601 = vadd.f32 %v4334, %v4571
      %v4602 = vadd.f32 %v4335, %v4576
      %v4603 = vadd.f32 %v4336, %v4579
      %v4604 = vadd.f32 %v4337, %v4584
      %v4605 = vadd.f32 %v4338, %v4587
      %v4622 = vrot.slane %v4341, 6
      %v4623 = vrot.slane %v4622, 4
      %v4624 = vrot.slane %v4342, 6
      %v4625 = vsel %vm512, %v4623, %v4624
      %v4626 = vrot.slane %v4624, 4
      %v4627 = vrot.slane %v4343, 6
      %v4628 = vsel %vm512, %v4626, %v4627
      %v4629 = vrot.slane %v4346, 6
      %v4630 = vrot.slane %v4629, 4
      %v4631 = vrot.slane %v4347, 6
      %v4632 = vsel %vm512, %v4630, %v4631
      %v4633 = vrot.slane %v4631, 4
      %v4634 = vrot.slane %v4348, 6
      %v4635 = vsel %vm512, %v4633, %v4634
      %v4636 = vrot.slane %v4351, 6
      %v4637 = vrot.slane %v4636, 4
      %v4638 = vrot.slane %v4352, 6
      %v4639 = vsel %vm512, %v4637, %v4638
      %v4640 = vrot.slane %v4638, 4
      %v4641 = vrot.slane %v4353, 6
      %v4642 = vsel %vm512, %v4640, %v4641
      %v4643 = vrot.slane %v4356, 6
      %v4644 = vrot.slane %v4643, 4
      %v4645 = vrot.slane %v4357, 6
      %v4646 = vsel %vm512, %v4644, %v4645
      %v4647 = vrot.slane %v4645, 4
      %v4648 = vrot.slane %v4358, 6
      %v4649 = vsel %vm512, %v4647, %v4648
      %v4650 = vrot.slane %v4361, 6
      %v4651 = vrot.slane %v4650, 4
      %v4652 = vrot.slane %v4362, 6
      %v4653 = vsel %vm512, %v4651, %v4652
      %v4654 = vrot.slane %v4652, 4
      %v4655 = vrot.slane %v4363, 6
      %v4656 = vsel %vm512, %v4654, %v4655
      %v4657 = vrot.slane %v4366, 6
      %v4658 = vrot.slane %v4657, 4
      %v4659 = vrot.slane %v4367, 6
      %v4660 = vsel %vm512, %v4658, %v4659
      %v4661 = vrot.slane %v4659, 4
      %v4662 = vrot.slane %v4368, 6
      %v4663 = vsel %vm512, %v4661, %v4662
      %v4664 = vrot.slane %v4371, 6
      %v4665 = vrot.slane %v4664, 4
      %v4666 = vrot.slane %v4372, 6
      %v4667 = vsel %vm512, %v4665, %v4666
      %v4668 = vrot.slane %v4666, 4
      %v4669 = vrot.slane %v4373, 6
      %v4670 = vsel %vm512, %v4668, %v4669
      %v4671 = vrot.slane %v4376, 6
      %v4672 = vrot.slane %v4671, 4
      %v4673 = vrot.slane %v4377, 6
      %v4674 = vsel %vm512, %v4672, %v4673
      %v4675 = vrot.slane %v4673, 4
      %v4676 = vrot.slane %v4378, 6
      %v4677 = vsel %vm512, %v4675, %v4676
      %s4678 = scalar_lea.vmem %s1, 1024
      %v4679 = vld [vmem:[%s4678] sm:$0xf]
      %v4680 = vld [vmem:[%s4678 + $0x4] sm:$0xf]
      %v4681 = vld [vmem:[%s4678 + $0x8] sm:$0xf]
      %v4682 = vld [vmem:[%s4678 + $0xc] sm:$0xf]
      %v4683 = vld [vmem:[%s4678 + $0x10] sm:$0xf]
      %v4684 = vld [vmem:[%s4678 + $0x14] sm:$0xf]
      %v4685 = vld [vmem:[%s4678 + $0x18] sm:$0xf]
      %v4686 = vld [vmem:[%s4678 + $0x1c] sm:$0xf]
      %v4687 = vld [vmem:[%s4678 + $0x20] sm:$0xf]
      %v4688 = vld [vmem:[%s4678 + $0x24] sm:$0xf]
      %v4689 = vld [vmem:[%s4678 + $0x28] sm:$0xf]
      %v4690 = vld [vmem:[%s4678 + $0x2c] sm:$0xf]
      %v4691 = vld [vmem:[%s4678 + $0x30] sm:$0xf]
      %v4692 = vld [vmem:[%s4678 + $0x34] sm:$0xf]
      %v4693 = vld [vmem:[%s4678 + $0x38] sm:$0xf]
      %v4694 = vld [vmem:[%s4678 + $0x3c] sm:$0xf]
      %v4695 = vunpack.c.l.b16 %v4625
      %v4696 = vunpack.c.l.b16 %v4628
      %v4697 = vunpack.c.l.b16 %v4632
      %v4698 = vunpack.c.l.b16 %v4635
      %v4699 = vunpack.c.l.b16 %v4639
      %v4700 = vunpack.c.l.b16 %v4642
      %v4701 = vunpack.c.l.b16 %v4646
      %v4702 = vunpack.c.l.b16 %v4649
      %v4703 = vunpack.c.l.b16 %v4653
      %v4704 = vunpack.c.l.b16 %v4656
      %v4705 = vunpack.c.l.b16 %v4660
      %v4706 = vunpack.c.l.b16 %v4663
      %v4707 = vunpack.c.l.b16 %v4667
      %v4708 = vunpack.c.l.b16 %v4670
      %v4709 = vunpack.c.l.b16 %v4674
      %v4710 = vunpack.c.l.b16 %v4677
      %v4711 = vpack.c.b16 %v4696, %v4695
      %v4712 = vpack.c.b16 %v4698, %v4697
      %v4713 = vpack.c.b16 %v4700, %v4699
      %v4714 = vpack.c.b16 %v4702, %v4701
      %v4715 = vpack.c.b16 %v4704, %v4703
      %v4716 = vpack.c.b16 %v4706, %v4705
      %v4717 = vpack.c.b16 %v4708, %v4707
      %v4718 = vpack.c.b16 %v4710, %v4709
      %v4743 = vunpack.c.l.b16 %v4679
      %v4744 = vunpack.c.l.b16 %v4680
      %v4745 = vunpack.c.l.b16 %v4681
      %v4746 = vunpack.c.l.b16 %v4682
      %v4747 = vunpack.c.l.b16 %v4683
      %v4748 = vunpack.c.l.b16 %v4684
      %v4749 = vunpack.c.l.b16 %v4685
      %v4750 = vunpack.c.l.b16 %v4686
      %v4751 = vunpack.c.l.b16 %v4687
      %v4752 = vunpack.c.l.b16 %v4688
      %v4753 = vunpack.c.l.b16 %v4689
      %v4754 = vunpack.c.l.b16 %v4690
      %v4755 = vunpack.c.l.b16 %v4691
      %v4756 = vunpack.c.l.b16 %v4692
      %v4757 = vunpack.c.l.b16 %v4693
      %v4758 = vunpack.c.l.b16 %v4694
      %v4759 = vpack.c.b16 %v4744, %v4743
      %v4760 = vpack.c.b16 %v4746, %v4745
      %v4761 = vpack.c.b16 %v4748, %v4747
      %v4762 = vpack.c.b16 %v4750, %v4749
      %v4763 = vpack.c.b16 %v4752, %v4751
      %v4764 = vpack.c.b16 %v4754, %v4753
      %v4765 = vpack.c.b16 %v4756, %v4755
      %v4766 = vpack.c.b16 %v4758, %v4757
      %4775 = vmatprep.subr.bf16.mxu0 0
      %4776 = vmatpush1.bf16.msra.mxu0 %v4759
      %4777 = vmatprep.subr.bf16.mxu0 0
      %4778 = vmatpush1.bf16.msra.mxu0 %v4760
      %4779 = vmatprep.subr.bf16.mxu0 0
      %4780 = vmatpush1.bf16.msra.mxu0 %v4761
      %4781 = vmatprep.subr.bf16.mxu0 0
      %4782 = vmatpush1.bf16.msra.mxu0 %v4762
      %4783 = vmatprep.subr.bf16.mxu0 0
      %4784 = vmatpush1.bf16.msra.mxu0 %v4763
      %4785 = vmatprep.subr.bf16.mxu0 0
      %4786 = vmatpush1.bf16.msra.mxu0 %v4764
      %4787 = vmatprep.subr.bf16.mxu0 0
      %4788 = vmatpush1.bf16.msra.mxu0 %v4765
      %4789 = vmatprep.subr.bf16.mxu0 0
      %4790 = vmatpush1.bf16.msra.mxu0 %v4766
      %4791 = vmatprep.subr.bf16.mxu0 0
      %4792 = vmatpush1.bf16.msra.mxu0 0
      %4793 = vmatprep.subr.bf16.mxu0 0
      %4794 = vmatpush1.bf16.msra.mxu0 0
      %4795 = vmatprep.subr.bf16.mxu0 0
      %4796 = vmatpush1.bf16.msra.mxu0 0
      %4797 = vmatprep.subr.bf16.mxu0 0
      %4798 = vmatpush1.bf16.msra.mxu0 0
      %4799 = vmatprep.subr.bf16.mxu0 0
      %4800 = vmatpush1.bf16.msra.mxu0 0
      %4801 = vmatprep.subr.bf16.mxu0 0
      %4802 = vmatpush1.bf16.msra.mxu0 0
      %4803 = vmatprep.subr.bf16.mxu0 0
      %4804 = vmatpush1.bf16.msra.mxu0 0
      %4805 = vmatprep.subr.bf16.mxu0 0
      %4806 = vmatpush1.bf16.msra.mxu0 0
      %4807 = vmatprep.mubr.bf16.mxu0 0
      %4808 = vmatmul.mubr.bf16.gmra.mrb[0].mxu0 %v4711
      %v4809 = vpop.f32.mrb[0].mxu0
      %v4810 = vadd.f32 0.0, %v4809
      %v4811 = vpop.f32.mrb[0].mxu0
      %v4812 = vpop.f32.mrb[0].mxu0
      %v4813 = vadd.f32 0.0, %v4812
      %v4814 = vpop.f32.mrb[0].mxu0
      %4815 = vmatprep.mubr.bf16.mxu0 0
      %4816 = vmatmul.mubr.bf16.gmra.mrb[0].mxu0 %v4712
      %v4817 = vpop.f32.mrb[0].mxu0
      %v4818 = vadd.f32 0.0, %v4817
      %v4819 = vpop.f32.mrb[0].mxu0
      %v4820 = vpop.f32.mrb[0].mxu0
      %v4821 = vadd.f32 0.0, %v4820
      %v4822 = vpop.f32.mrb[0].mxu0
      %4823 = vmatprep.mubr.bf16.mxu0 0
      %4824 = vmatmul.mubr.bf16.gmra.mrb[0].mxu0 %v4713
      %v4825 = vpop.f32.mrb[0].mxu0
      %v4826 = vadd.f32 0.0, %v4825
      %v4827 = vpop.f32.mrb[0].mxu0
      %v4828 = vpop.f32.mrb[0].mxu0
      %v4829 = vadd.f32 0.0, %v4828
      %v4830 = vpop.f32.mrb[0].mxu0
      %4831 = vmatprep.mubr.bf16.mxu0 0
      %4832 = vmatmul.mubr.bf16.gmra.mrb[0].mxu0 %v4714
      %v4833 = vpop.f32.mrb[0].mxu0
      %v4834 = vadd.f32 0.0, %v4833
      %v4835 = vpop.f32.mrb[0].mxu0
      %v4836 = vpop.f32.mrb[0].mxu0
      %v4837 = vadd.f32 0.0, %v4836
      %v4838 = vpop.f32.mrb[0].mxu0
      %4839 = vmatprep.mubr.bf16.mxu0 0
      %4840 = vmatmul.mubr.bf16.gmra.mrb[0].mxu0 %v4715
      %v4841 = vpop.f32.mrb[0].mxu0
      %v4842 = vadd.f32 0.0, %v4841
      %v4843 = vpop.f32.mrb[0].mxu0
      %v4844 = vpop.f32.mrb[0].mxu0
      %v4845 = vadd.f32 0.0, %v4844
      %v4846 = vpop.f32.mrb[0].mxu0
      %4847 = vmatprep.mubr.bf16.mxu0 0
      %4848 = vmatmul.mubr.bf16.gmra.mrb[0].mxu0 %v4716
      %v4849 = vpop.f32.mrb[0].mxu0
      %v4850 = vadd.f32 0.0, %v4849
      %v4851 = vpop.f32.mrb[0].mxu0
      %v4852 = vpop.f32.mrb[0].mxu0
      %v4853 = vadd.f32 0.0, %v4852
      %v4854 = vpop.f32.mrb[0].mxu0
      %4855 = vmatprep.mubr.bf16.mxu0 0
      %4856 = vmatmul.mubr.bf16.gmra.mrb[0].mxu0 %v4717
      %v4857 = vpop.f32.mrb[0].mxu0
      %v4858 = vadd.f32 0.0, %v4857
      %v4859 = vpop.f32.mrb[0].mxu0
      %v4860 = vpop.f32.mrb[0].mxu0
      %v4861 = vadd.f32 0.0, %v4860
      %v4862 = vpop.f32.mrb[0].mxu0
      %4863 = vmatprep.mubr.bf16.mxu0 0
      %4864 = vmatmul.mubr.bf16.gmra.mrb[0].mxu0 %v4718
      %v4865 = vpop.f32.mrb[0].mxu0
      %v4866 = vadd.f32 0.0, %v4865
      %v4867 = vpop.f32.mrb[0].mxu0
      %v4868 = vpop.f32.mrb[0].mxu0
      %v4869 = vadd.f32 0.0, %v4868
      %v4870 = vpop.f32.mrb[0].mxu0
      %4871 = vdwg.mxu0
      %v4872 = vadd.f32 %v4590, %v4810
      %v4873 = vadd.f32 %v4591, %v4813
      %v4874 = vadd.f32 %v4592, %v4818
      %v4875 = vadd.f32 %v4593, %v4821
      %v4876 = vadd.f32 %v4594, %v4826
      %v4877 = vadd.f32 %v4595, %v4829
      %v4878 = vadd.f32 %v4596, %v4834
      %v4879 = vadd.f32 %v4597, %v4837
      %v4880 = vadd.f32 %v4598, %v4842
      %v4881 = vadd.f32 %v4599, %v4845
      %v4882 = vadd.f32 %v4600, %v4850
      %v4883 = vadd.f32 %v4601, %v4853
      %v4884 = vadd.f32 %v4602, %v4858
      %v4885 = vadd.f32 %v4603, %v4861
      %v4886 = vadd.f32 %v4604, %v4866
      %v4887 = vadd.f32 %v4605, %v4869
      %s4888 = scalar_lea.vmem %s1, 1088
      %v4889 = vld [vmem:[%s4888] sm:$0xf]
      %v4890 = vld [vmem:[%s4888 + $0x4] sm:$0xf]
      %v4891 = vld [vmem:[%s4888 + $0x8] sm:$0xf]
      %v4892 = vld [vmem:[%s4888 + $0xc] sm:$0xf]
      %v4893 = vld [vmem:[%s4888 + $0x10] sm:$0xf]
      %v4894 = vld [vmem:[%s4888 + $0x14] sm:$0xf]
      %v4895 = vld [vmem:[%s4888 + $0x18] sm:$0xf]
      %v4896 = vld [vmem:[%s4888 + $0x1c] sm:$0xf]
      %v4897 = vld [vmem:[%s4888 + $0x20] sm:$0xf]
      %v4898 = vld [vmem:[%s4888 + $0x24] sm:$0xf]
      %v4899 = vld [vmem:[%s4888 + $0x28] sm:$0xf]
      %v4900 = vld [vmem:[%s4888 + $0x2c] sm:$0xf]
      %v4901 = vld [vmem:[%s4888 + $0x30] sm:$0xf]
      %v4902 = vld [vmem:[%s4888 + $0x34] sm:$0xf]
      %v4903 = vld [vmem:[%s4888 + $0x38] sm:$0xf]
      %v4904 = vld [vmem:[%s4888 + $0x3c] sm:$0xf]
      %v4913 = vunpack.c.l.b16 %v4343
      %v4914 = vunpack.c.l.b16 %v4344
      %v4915 = vunpack.c.l.b16 %v4348
      %v4916 = vunpack.c.l.b16 %v4349
      %v4917 = vunpack.c.l.b16 %v4353
      %v4918 = vunpack.c.l.b16 %v4354
      %v4919 = vunpack.c.l.b16 %v4358
      %v4920 = vunpack.c.l.b16 %v4359
      %v4921 = vunpack.c.l.b16 %v4363
      %v4922 = vunpack.c.l.b16 %v4364
      %v4923 = vunpack.c.l.b16 %v4368
      %v4924 = vunpack.c.l.b16 %v4369
      %v4925 = vunpack.c.l.b16 %v4373
      %v4926 = vunpack.c.l.b16 %v4374
      %v4927 = vunpack.c.l.b16 %v4378
      %v4928 = vunpack.c.l.b16 %v4379
      %v4929 = vpack.c.b16 %v4914, %v4913
      %v4930 = vpack.c.b16 %v4916, %v4915
      %v4931 = vpack.c.b16 %v4918, %v4917
      %v4932 = vpack.c.b16 %v4920, %v4919
      %v4933 = vpack.c.b16 %v4922, %v4921
      %v4934 = vpack.c.b16 %v4924, %v4923
      %v4935 = vpack.c.b16 %v4926, %v4925
      %v4936 = vpack.c.b16 %v4928, %v4927
      %v4961 = vunpack.c.l.b16 %v4889
      %v4962 = vunpack.c.l.b16 %v4890
      %v4963 = vunpack.c.l.b16 %v4891
      %v4964 = vunpack.c.l.b16 %v4892
      %v4965 = vunpack.c.l.b16 %v4893
      %v4966 = vunpack.c.l.b16 %v4894
      %v4967 = vunpack.c.l.b16 %v4895
      %v4968 = vunpack.c.l.b16 %v4896
      %v4969 = vunpack.c.l.b16 %v4897
      %v4970 = vunpack.c.l.b16 %v4898
      %v4971 = vunpack.c.l.b16 %v4899
      %v4972 = vunpack.c.l.b16 %v4900
      %v4973 = vunpack.c.l.b16 %v4901
      %v4974 = vunpack.c.l.b16 %v4902
      %v4975 = vunpack.c.l.b16 %v4903
      %v4976 = vunpack.c.l.b16 %v4904
      %v4977 = vpack.c.b16 %v4962, %v4961
      %v4978 = vpack.c.b16 %v4964, %v4963
      %v4979 = vpack.c.b16 %v4966, %v4965
      %v4980 = vpack.c.b16 %v4968, %v4967
      %v4981 = vpack.c.b16 %v4970, %v4969
      %v4982 = vpack.c.b16 %v4972, %v4971
      %v4983 = vpack.c.b16 %v4974, %v4973
      %v4984 = vpack.c.b16 %v4976, %v4975
      %4993 = vmatprep.subr.bf16.mxu0 0
      %4994 = vmatpush1.bf16.msra.mxu0 %v4977
      %4995 = vmatprep.subr.bf16.mxu0 0
      %4996 = vmatpush1.bf16.msra.mxu0 %v4978
      %4997 = vmatprep.subr.bf16.mxu0 0
      %4998 = vmatpush1.bf16.msra.mxu0 %v4979
      %4999 = vmatprep.subr.bf16.mxu0 0
      %5000 = vmatpush1.bf16.msra.mxu0 %v4980
      %5001 = vmatprep.subr.bf16.mxu0 0
      %5002 = vmatpush1.bf16.msra.mxu0 %v4981
      %5003 = vmatprep.subr.bf16.mxu0 0
      %5004 = vmatpush1.bf16.msra.mxu0 %v4982
      %5005 = vmatprep.subr.bf16.mxu0 0
      %5006 = vmatpush1.bf16.msra.mxu0 %v4983
      %5007 = vmatprep.subr.bf16.mxu0 0
      %5008 = vmatpush1.bf16.msra.mxu0 %v4984
      %5009 = vmatprep.subr.bf16.mxu0 0
      %5010 = vmatpush1.bf16.msra.mxu0 0
      %5011 = vmatprep.subr.bf16.mxu0 0
      %5012 = vmatpush1.bf16.msra.mxu0 0
      %5013 = vmatprep.subr.bf16.mxu0 0
      %5014 = vmatpush1.bf16.msra.mxu0 0
      %5015 = vmatprep.subr.bf16.mxu0 0
      %5016 = vmatpush1.bf16.msra.mxu0 0
      %5017 = vmatprep.subr.bf16.mxu0 0
      %5018 = vmatpush1.bf16.msra.mxu0 0
      %5019 = vmatprep.subr.bf16.mxu0 0
      %5020 = vmatpush1.bf16.msra.mxu0 0
      %5021 = vmatprep.subr.bf16.mxu0 0
      %5022 = vmatpush1.bf16.msra.mxu0 0
      %5023 = vmatprep.subr.bf16.mxu0 0
      %5024 = vmatpush1.bf16.msra.mxu0 0
      %5025 = vmatprep.mubr.bf16.mxu0 0
      %5026 = vmatmul.mubr.bf16.gmra.mrb[0].mxu0 %v4929
      %v5027 = vpop.f32.mrb[0].mxu0
      %v5028 = vadd.f32 0.0, %v5027
      %v5029 = vpop.f32.mrb[0].mxu0
      %v5030 = vpop.f32.mrb[0].mxu0
      %v5031 = vadd.f32 0.0, %v5030
      %v5032 = vpop.f32.mrb[0].mxu0
      %5033 = vmatprep.mubr.bf16.mxu0 0
      %5034 = vmatmul.mubr.bf16.gmra.mrb[0].mxu0 %v4930
      %v5035 = vpop.f32.mrb[0].mxu0
      %v5036 = vadd.f32 0.0, %v5035
      %v5037 = vpop.f32.mrb[0].mxu0
      %v5038 = vpop.f32.mrb[0].mxu0
      %v5039 = vadd.f32 0.0, %v5038
      %v5040 = vpop.f32.mrb[0].mxu0
      %5041 = vmatprep.mubr.bf16.mxu0 0
      %5042 = vmatmul.mubr.bf16.gmra.mrb[0].mxu0 %v4931
      %v5043 = vpop.f32.mrb[0].mxu0
      %v5044 = vadd.f32 0.0, %v5043
      %v5045 = vpop.f32.mrb[0].mxu0
      %v5046 = vpop.f32.mrb[0].mxu0
      %v5047 = vadd.f32 0.0, %v5046
      %v5048 = vpop.f32.mrb[0].mxu0
      %5049 = vmatprep.mubr.bf16.mxu0 0
      %5050 = vmatmul.mubr.bf16.gmra.mrb[0].mxu0 %v4932
      %v5051 = vpop.f32.mrb[0].mxu0
      %v5052 = vadd.f32 0.0, %v5051
      %v5053 = vpop.f32.mrb[0].mxu0
      %v5054 = vpop.f32.mrb[0].mxu0
      %v5055 = vadd.f32 0.0, %v5054
      %v5056 = vpop.f32.mrb[0].mxu0
      %5057 = vmatprep.mubr.bf16.mxu0 0
      %5058 = vmatmul.mubr.bf16.gmra.mrb[0].mxu0 %v4933
      %v5059 = vpop.f32.mrb[0].mxu0
      %v5060 = vadd.f32 0.0, %v5059
      %v5061 = vpop.f32.mrb[0].mxu0
      %v5062 = vpop.f32.mrb[0].mxu0
      %v5063 = vadd.f32 0.0, %v5062
      %v5064 = vpop.f32.mrb[0].mxu0
      %5065 = vmatprep.mubr.bf16.mxu0 0
      %5066 = vmatmul.mubr.bf16.gmra.mrb[0].mxu0 %v4934
      %v5067 = vpop.f32.mrb[0].mxu0
      %v5068 = vadd.f32 0.0, %v5067
      %v5069 = vpop.f32.mrb[0].mxu0
      %v5070 = vpop.f32.mrb[0].mxu0
      %v5071 = vadd.f32 0.0, %v5070
      %v5072 = vpop.f32.mrb[0].mxu0
      %5073 = vmatprep.mubr.bf16.mxu0 0
      %5074 = vmatmul.mubr.bf16.gmra.mrb[0].mxu0 %v4935
      %v5075 = vpop.f32.mrb[0].mxu0
      %v5076 = vadd.f32 0.0, %v5075
      %v5077 = vpop.f32.mrb[0].mxu0
      %v5078 = vpop.f32.mrb[0].mxu0
      %v5079 = vadd.f32 0.0, %v5078
      %v5080 = vpop.f32.mrb[0].mxu0
      %5081 = vmatprep.mubr.bf16.mxu0 0
      %5082 = vmatmul.mubr.bf16.gmra.mrb[0].mxu0 %v4936
      %v5083 = vpop.f32.mrb[0].mxu0
      %v5084 = vadd.f32 0.0, %v5083
      %v5085 = vpop.f32.mrb[0].mxu0
      %v5086 = vpop.f32.mrb[0].mxu0
      %v5087 = vadd.f32 0.0, %v5086
      %v5088 = vpop.f32.mrb[0].mxu0
      %5089 = vdwg.mxu0
      %v5090 = vadd.f32 %v4872, %v5028
      %v5091 = vadd.f32 %v4873, %v5031
      %v5092 = vadd.f32 %v4874, %v5036
      %v5093 = vadd.f32 %v4875, %v5039
      %v5094 = vadd.f32 %v4876, %v5044
      %v5095 = vadd.f32 %v4877, %v5047
      %v5096 = vadd.f32 %v4878, %v5052
      %v5097 = vadd.f32 %v4879, %v5055
      %v5098 = vadd.f32 %v4880, %v5060
      %v5099 = vadd.f32 %v4881, %v5063
      %v5100 = vadd.f32 %v4882, %v5068
      %v5101 = vadd.f32 %v4883, %v5071
      %v5102 = vadd.f32 %v4884, %v5076
      %v5103 = vadd.f32 %v4885, %v5079
      %v5104 = vadd.f32 %v4886, %v5084
      %v5105 = vadd.f32 %v4887, %v5087
      %v5106 = vld [vmem:[%s2] sm:$0x1]
      %v5108 = vlaneseq
      %v5109 = vshrl.u32 %v5108, 7
      %v5110 = vsub.s32 0, %v5109
      %v5111 = vrot.slane %v5106, %v5110
      %v5113 = vadd.f32 %v5090, %v5111
      %v5114 = vadd.f32 %v5091, %v5111
      %v5115 = vadd.f32 %v5092, %v5111
      %v5116 = vadd.f32 %v5093, %v5111
      %v5117 = vadd.f32 %v5094, %v5111
      %v5118 = vadd.f32 %v5095, %v5111
      %v5119 = vadd.f32 %v5096, %v5111
      %v5120 = vadd.f32 %v5097, %v5111
      %v5121 = vadd.f32 %v5098, %v5111
      %v5122 = vadd.f32 %v5099, %v5111
      %v5123 = vadd.f32 %v5100, %v5111
      %v5124 = vadd.f32 %v5101, %v5111
      %v5125 = vadd.f32 %v5102, %v5111
      %v5126 = vadd.f32 %v5103, %v5111
      %v5127 = vadd.f32 %v5104, %v5111
      %v5128 = vadd.f32 %v5105, %v5111
      %5129 = vst [vmem:[%s148] sm:$0xff] %v5113
      %5130 = vst [vmem:[%s148 + $0x8] sm:$0xff] %v5114
      %5131 = vst [vmem:[%s148 + $0x10] sm:$0xff] %v5115
      %5132 = vst [vmem:[%s148 + $0x18] sm:$0xff] %v5116
      %5133 = vst [vmem:[%s148 + $0x20] sm:$0xff] %v5117
      %5134 = vst [vmem:[%s148 + $0x28] sm:$0xff] %v5118
      %5135 = vst [vmem:[%s148 + $0x30] sm:$0xff] %v5119
      %5136 = vst [vmem:[%s148 + $0x38] sm:$0xff] %v5120
      %5137 = vst [vmem:[%s148 + $0x40] sm:$0xff] %v5121
      %5138 = vst [vmem:[%s148 + $0x48] sm:$0xff] %v5122
      %5139 = vst [vmem:[%s148 + $0x50] sm:$0xff] %v5123
      %5140 = vst [vmem:[%s148 + $0x58] sm:$0xff] %v5124
      %5141 = vst [vmem:[%s148 + $0x60] sm:$0xff] %v5125
      %5142 = vst [vmem:[%s148 + $0x68] sm:$0xff] %v5126
      %5143 = vst [vmem:[%s148 + $0x70] sm:$0xff] %v5127
      %5144 = vst [vmem:[%s148 + $0x78] sm:$0xff] %v5128
      %s5145 = smul.u32 8, %s19
      %p5146 = scmp.lt.s32.totalorder %s18, 1
      %s5147 = scalar_select %p5146, %s18, 1
      %p5148 = scmp.lt.s32.totalorder %s5145, 15
      %s5149 = scalar_select %p5148, %s5145, 15
      %s5150 = smul.addr %s5149, 2
      %s5151 = smul.addr %s5147, 32
      %s5152 = sadd.s32 %s5150, %s5151
      %s5153 = smul.addr %s5152, 8
      %s5154 = scalar_lea.vmem %s3, %s5153
      // Predicated region
      $region63: #{cca_classifier_forward.5} parent=27 // pred_check
        %p5155 = pneg %p88
      $region64: #{cca_classifier_forward.5} parent=27 // pred_check_branch
        %5157 = sbr.rel (%p5155) target = $region66
      $region65: #{cca_classifier_forward.5} parent=27 // pred_region
        %s5158 = smul.u32 8, %s19
      $region66: #{cca_classifier_forward.5} parent=27 // pred_fallthru
        _
    $region28: #{cca_classifier_forward.5} parent=5 // pred_fallthru
      _
    %p5159 = scmp.le.s32.totalorder 2, %s9
    // Predicated region
    $region67: #{cca_classifier_forward.5} parent=5 // pred_check
      %p5160 = pneg %p5159
    $region68: #{cca_classifier_forward.5} parent=5 // pred_check_branch
      %5162 = sbr.rel (%p5160) target = $region70
    $region69: #{cca_classifier_forward.5} parent=5 // pred_region
      %s5163 = ssub.s32 %s9, 2
      // Predicated region
      $region71: #{cca_classifier_forward.5} parent=69 // pred_check
        %p5164 = pneg %p94
      $region72: #{cca_classifier_forward.5} parent=69 // pred_check_branch
        %5166 = sbr.rel (%p5164) target = $region74
      $region73: #{cca_classifier_forward.5} parent=69 // pred_region
        %s5167 = smul.u32 8, %s21
        %p5168 = scmp.lt.s32.totalorder %s20, 1
        %s5169 = scalar_select %p5168, %s20, 1
        %p5170 = scmp.lt.s32.totalorder %s5167, 15
        %s5171 = scalar_select %p5170, %s5167, 15
        %s5172 = smul.addr %s5171, 2
        %s5173 = smul.addr %s5169, 32
        %s5174 = sadd.s32 %s5172, %s5173
        %s5175 = smul.addr %s5174, 8
        %s5176 = scalar_lea.vmem %s3, %s5175
      $region74: #{cca_classifier_forward.5} parent=69 // pred_fallthru
        _
    $region70: #{cca_classifier_forward.5} parent=5 // pred_fallthru
      _
  $region6: #{cca_classifier_forward.5} parent=0 // loop_footer
    %s13 = sadd.s32 1, %s9
  $region7: #{cca_classifier_forward.5} parent=0 // loop_footer_branch
    %8 = sbr.rel target = $region3
  $region8: #{cca_classifier_forward.5} parent=0 // loop_exit
    _
  %5177 = vsyncmov [#allocation3]
  %s5178 = vpop.sfrf %5177
  %p5179 = scmp.eq.s32.totalorder %s5178, 0
  %p5180 = pneg %p5179
  %5182 = shalt.err (%p5180)

</llo_original>
